<compile_context>
chip_gen: v5e
topology: v5e:2x2
jax: 0.10.0
libtpu: 0.0.40
codegen_flags: <defaults>
</compile_context>

<pallas_src>
import jax
import jax.numpy as jnp
from jax import lax
from jax.experimental import pallas as pl
from jax.experimental.pallas import tpu as pltpu

# Matmul input dtype. jnp.bfloat16 gives ~2x MXU throughput at realistic sizes
# (accumulation stays f32); default f32 keeps exact parity with the PyTorch
# fp32 forward at this toy size.
COMPUTE_DTYPE = jnp.float32

LANES = 128


def _round_up(x, m):
    return ((x + m - 1) // m) * m


# ----------------------------- fused Pallas kernel ---------------------------
def _make_fused_resblock_kernel(N, H, W, CP, eps=1e-5):
    NHW = N * H * W
    inv_nhw = 1.0 / float(NHW)

    def kernel(x_ref, w1_ref, g1_ref, b1_ref, w2_ref, g2_ref, b2_ref,
               w3_ref, g3_ref, b3_ref, out_ref, xpad_ref):
        # Zero-fill the halo scratch once; the 1-pixel border stays zero for
        # all three layers (only the interior is rewritten between layers).
        xpad_ref[...] = jnp.zeros_like(xpad_ref)
        xpad_ref[:, 1:H + 1, 1:W + 1, :] = x_ref[...]

        def conv_bn_relu(w_ref, g_ref, b_ref):
            # im2col: 9 shifted (N,H,W,CP) views -> one (NHW, 9*CP) slab,
            # then a single MXU matmul with the (9*CP, CP) weight slab.
            patches = [
                xpad_ref[:, dy:dy + H, dx:dx + W, :].reshape(NHW, CP)
                for dy in range(3) for dx in range(3)
            ]
            slab = jnp.concatenate(patches, axis=-1).astype(COMPUTE_DTYPE)
            acc = jnp.dot(slab, w_ref[...],
                          preferred_element_type=jnp.float32)      # (NHW, CP)

            # BatchNorm, training mode: biased batch stats over (N, H, W),
            # computed in a single pass (sum and sum-of-squares).
            s = jnp.sum(acc, axis=0, keepdims=True)
            ss = jnp.sum(acc * acc, axis=0, keepdims=True)
            mean = s * inv_nhw
            var = ss * inv_nhw - mean * mean
            y = (acc - mean) * lax.rsqrt(var + eps) * g_ref[...] + b_ref[...]
            return jnp.maximum(y, 0.0)                               # ReLU

        y = conv_bn_relu(w1_ref, g1_ref, b1_ref)
        xpad_ref[:, 1:H + 1, 1:W + 1, :] = y.reshape(N, H, W, CP)
        y = conv_bn_relu(w2_ref, g2_ref, b2_ref)
        xpad_ref[:, 1:H + 1, 1:W + 1, :] = y.reshape(N, H, W, CP)
        y = conv_bn_relu(w3_ref, g3_ref, b3_ref)

        # Residual add (padded channels are zero on both sides); lane-dense
        # (NHW, CP) output -> unmasked full-width stores.
        out_ref[...] = y + x_ref[...].reshape(NHW, CP)

    return kernel


def _full_spec(shape):
    zeros = (0,) * len(shape)
    return pl.BlockSpec(shape, lambda i, _z=zeros: _z)


# ----------------------------- parameter prep --------------------------------
def _prep_weight(w_oihw, CP):
    """(Cout, Cin, 3, 3) PyTorch conv weight -> (9*CP, CP) im2col weight slab."""
    cout, cin, kh, kw = w_oihw.shape
    w = jnp.transpose(w_oihw, (2, 3, 1, 0))                        # (3,3,Cin,Cout)
    w = jnp.pad(w, ((0, 0), (0, 0), (0, CP - cin), (0, CP - cout)))
    return w.reshape(kh * kw * CP, CP).astype(COMPUTE_DTYPE)


def _prep_vec(v, CP):
    return jnp.pad(v.astype(jnp.float32), (0, CP - v.shape[0])).reshape(1, CP)


# ----------------------------- ResBlock forward ------------------------------
@jax.jit
def resblock_forward(x_nchw, params):
    N, Cin, H, W = x_nchw.shape
    cout = params["w3"].shape[0]
    assert cout == Cin, "residual add requires out_channels == in_channels"
    CP = _round_up(max(Cin, 32, cout), LANES)
    NHW = N * H * W

    # NCHW (PyTorch) -> NHWC, zero-pad channels to a lane-dense multiple of 128.
    x = jnp.transpose(x_nchw, (0, 2, 3, 1)).astype(jnp.float32)
    x = jnp.pad(x, ((0, 0), (0, 0), (0, 0), (0, CP - Cin)))

    w1 = _prep_weight(params["w1"], CP)
    w2 = _prep_weight(params["w2"], CP)
    w3 = _prep_weight(params["w3"], CP)
    g1, b1 = _prep_vec(params["g1"], CP), _prep_vec(params["b1"], CP)
    g2, b2 = _prep_vec(params["g2"], CP), _prep_vec(params["b2"], CP)
    g3, b3 = _prep_vec(params["g3"], CP), _prep_vec(params["b3"], CP)

    inputs = [x, w1, g1, b1, w2, g2, b2, w3, g3, b3]
    in_specs = [_full_spec(a.shape) for a in inputs]

    out = pl.pallas_call(
        _make_fused_resblock_kernel(N, H, W, CP),
        out_shape=jax.ShapeDtypeStruct((NHW, CP), jnp.float32),
        grid=(1,),
        in_specs=in_specs,
        out_specs=_full_spec((NHW, CP)),
        scratch_shapes=[pltpu.VMEM((N, H + 2, W + 2, CP), jnp.float32)],
        compiler_params=pltpu.CompilerParams(
            dimension_semantics=("arbitrary",),
            vmem_limit_bytes=32 * 1024 * 1024),
    )(*inputs)

    # Lane-dense kernel output -> NCHW, dropping the channel padding.
    out = out.reshape(N, H, W, CP)[..., :cout]
    return jnp.transpose(out, (0, 3, 1, 2))


# ----------------------------- parameter init --------------------------------
def xavier_conv_weight(key, cout, cin, k=3):
    """Matches nn.init.xavier_uniform_ on a (Cout, Cin, k, k) conv weight."""
    fan_in = cin * k * k
    fan_out = cout * k * k
    a = (6.0 / (fan_in + fan_out)) ** 0.5
    return jax.random.uniform(key, (cout, cin, k, k), jnp.float32, -a, a)


def init_resblock_params(key, in_channels, out_channels):
    k1, k2, k3 = jax.random.split(key, 3)
    return {
        "w1": xavier_conv_weight(k1, 32, in_channels),
        "g1": jnp.ones((32,), jnp.float32), "b1": jnp.zeros((32,), jnp.float32),
        "w2": xavier_conv_weight(k2, 32, 32),
        "g2": jnp.ones((32,), jnp.float32), "b2": jnp.zeros((32,), jnp.float32),
        "w3": xavier_conv_weight(k3, out_channels, 32),
        "g3": jnp.ones((out_channels,), jnp.float32),
        "b3": jnp.zeros((out_channels,), jnp.float32),
    }


# ----------------------------- pure-JAX reference ----------------------------
def _ref_cbnrelu(x_nhwc, w_oihw, gamma, beta, eps=1e-5):
    w_hwio = jnp.transpose(w_oihw, (2, 3, 1, 0))
    y = lax.conv_general_dilated(
        x_nhwc, w_hwio, window_strides=(1, 1), padding=((1, 1), (1, 1)),
        dimension_numbers=("NHWC", "HWIO", "NHWC"))
    mean = jnp.mean(y, axis=(0, 1, 2), keepdims=True)
    var = jnp.mean((y - mean) ** 2, axis=(0, 1, 2), keepdims=True)
    return jnp.maximum((y - mean) * lax.rsqrt(var + eps) * gamma + beta, 0.0)


def _ref_resblock(x_nchw, p):
    x = jnp.transpose(x_nchw, (0, 2, 3, 1)).astype(jnp.float32)
    h = _ref_cbnrelu(x, p["w1"], p["g1"], p["b1"])
    h = _ref_cbnrelu(h, p["w2"], p["g2"], p["b2"])
    h = _ref_cbnrelu(h, p["w3"], p["g3"], p["b3"]) + x
    return jnp.transpose(h, (0, 3, 1, 2))


# ----------------------------------- main ------------------------------------
if __name__ == "__main__":
    key = jax.random.PRNGKey(0)
    kx, kp = jax.random.split(key)

    N, C, H, W = 2, 4, 16, 16   # residual add requires out_channels == in_channels
    x = jax.random.normal(kx, (N, C, H, W), jnp.float32)
    params = init_resblock_params(kp, in_channels=C, out_channels=C)

    out = jax.block_until_ready(resblock_forward(x, params))

    ref = _ref_resblock(x, params)
    assert out.shape == (N, C, H, W)
    assert jnp.allclose(out, ref, rtol=2e-3, atol=2e-3), "mismatch vs JAX reference"

    print("KERNEL_OK")
</pallas_src>

<mosaic_0001>
module attributes {stable_mosaic.version = 11 : i64} {
  func.func @kernel(%arg0: i32, %arg1: memref<2x16x16x128xf32, #tpu.memory_space<vmem>>, %arg2: memref<1152x128xf32, #tpu.memory_space<vmem>>, %arg3: memref<1x128xf32, #tpu.memory_space<vmem>>, %arg4: memref<1x128xf32, #tpu.memory_space<vmem>>, %arg5: memref<1152x128xf32, #tpu.memory_space<vmem>>, %arg6: memref<1x128xf32, #tpu.memory_space<vmem>>, %arg7: memref<1x128xf32, #tpu.memory_space<vmem>>, %arg8: memref<1152x128xf32, #tpu.memory_space<vmem>>, %arg9: memref<1x128xf32, #tpu.memory_space<vmem>>, %arg10: memref<1x128xf32, #tpu.memory_space<vmem>>, %arg11: memref<512x128xf32, #tpu.memory_space<vmem>>, %arg12: memref<2x18x18x128xf32, #tpu.memory_space<vmem>>) attributes {dimension_semantics = [#tpu.dimension_semantics<arbitrary>], iteration_bounds = array<i64: 1>, scalar_prefetch = 0 : i64, scratch_operands = 1 : i64, tpu.core_type = #tpu.core_type<tc>, window_params = [{pipeline_mode = #tpu.pipeline_mode<synchronous>, transform_indices = @transform_0, window_bounds = array<i64: 2, 16, 16, 128>}, {pipeline_mode = #tpu.pipeline_mode<synchronous>, transform_indices = @transform_1, window_bounds = array<i64: 1152, 128>}, {pipeline_mode = #tpu.pipeline_mode<synchronous>, transform_indices = @transform_2, window_bounds = array<i64: 1, 128>}, {pipeline_mode = #tpu.pipeline_mode<synchronous>, transform_indices = @transform_3, window_bounds = array<i64: 1, 128>}, {pipeline_mode = #tpu.pipeline_mode<synchronous>, transform_indices = @transform_4, window_bounds = array<i64: 1152, 128>}, {pipeline_mode = #tpu.pipeline_mode<synchronous>, transform_indices = @transform_5, window_bounds = array<i64: 1, 128>}, {pipeline_mode = #tpu.pipeline_mode<synchronous>, transform_indices = @transform_6, window_bounds = array<i64: 1, 128>}, {pipeline_mode = #tpu.pipeline_mode<synchronous>, transform_indices = @transform_7, window_bounds = array<i64: 1152, 128>}, {pipeline_mode = #tpu.pipeline_mode<synchronous>, transform_indices = @transform_8, window_bounds = array<i64: 1, 128>}, {pipeline_mode = #tpu.pipeline_mode<synchronous>, transform_indices = @transform_9, window_bounds = array<i64: 1, 128>}, {pipeline_mode = #tpu.pipeline_mode<synchronous>, transform_indices = @transform_10, window_bounds = array<i64: 512, 128>}]} {
    %cst = arith.constant 0.000000e+00 : f32
    %0 = vector.broadcast %cst : f32 to vector<2x18x18x128xf32>
    %c0 = arith.constant 0 : index
    %c0_0 = arith.constant 0 : index
    %c0_1 = arith.constant 0 : index
    %c0_2 = arith.constant 0 : index
    %1 = vector.load %arg12[%c0, %c0_0, %c0_1, %c0_2] : memref<2x18x18x128xf32, #tpu.memory_space<vmem>>, vector<2x18x18x128xf32>
    tpu.vector_store %arg12[%c0, %c0_0, %c0_1, %c0_2], %0 {strides = array<i32>} : memref<2x18x18x128xf32, #tpu.memory_space<vmem>>, vector<2x18x18x128xf32>,
    %c0_3 = arith.constant 0 : index
    %c0_4 = arith.constant 0 : index
    %c0_5 = arith.constant 0 : index
    %c0_6 = arith.constant 0 : index
    %2 = vector.load %arg1[%c0_3, %c0_4, %c0_5, %c0_6] : memref<2x16x16x128xf32, #tpu.memory_space<vmem>>, vector<2x16x16x128xf32>
    %c0_7 = arith.constant 0 : index
    %c1 = arith.constant 1 : index
    %c1_8 = arith.constant 1 : index
    %c0_9 = arith.constant 0 : index
    %3 = vector.load %arg12[%c0_7, %c1, %c1_8, %c0_9] : memref<2x18x18x128xf32, #tpu.memory_space<vmem>>, vector<2x16x16x128xf32>
    tpu.vector_store %arg12[%c0_7, %c1, %c1_8, %c0_9], %2 {strides = array<i32>} : memref<2x18x18x128xf32, #tpu.memory_space<vmem>>, vector<2x16x16x128xf32>,
    %c0_10 = arith.constant 0 : index
    %c0_11 = arith.constant 0 : index
    %c0_12 = arith.constant 0 : index
    %c0_13 = arith.constant 0 : index
    %4 = vector.load %arg12[%c0_10, %c0_11, %c0_12, %c0_13] : memref<2x18x18x128xf32, #tpu.memory_space<vmem>>, vector<2x16x16x128xf32>
    %5 = vector.shape_cast %4 : vector<2x16x16x128xf32> to vector<512x128xf32>
    %c0_14 = arith.constant 0 : index
    %c0_15 = arith.constant 0 : index
    %c1_16 = arith.constant 1 : index
    %c0_17 = arith.constant 0 : index
    %6 = vector.load %arg12[%c0_14, %c0_15, %c1_16, %c0_17] : memref<2x18x18x128xf32, #tpu.memory_space<vmem>>, vector<2x16x16x128xf32>
    %7 = vector.shape_cast %6 : vector<2x16x16x128xf32> to vector<512x128xf32>
    %c0_18 = arith.constant 0 : index
    %c0_19 = arith.constant 0 : index
    %c2 = arith.constant 2 : index
    %c0_20 = arith.constant 0 : index
    %8 = vector.load %arg12[%c0_18, %c0_19, %c2, %c0_20] : memref<2x18x18x128xf32, #tpu.memory_space<vmem>>, vector<2x16x16x128xf32>
    %9 = vector.shape_cast %8 : vector<2x16x16x128xf32> to vector<512x128xf32>
    %c0_21 = arith.constant 0 : index
    %c1_22 = arith.constant 1 : index
    %c0_23 = arith.constant 0 : index
    %c0_24 = arith.constant 0 : index
    %10 = vector.load %arg12[%c0_21, %c1_22, %c0_23, %c0_24] : memref<2x18x18x128xf32, #tpu.memory_space<vmem>>, vector<2x16x16x128xf32>
    %11 = vector.shape_cast %10 : vector<2x16x16x128xf32> to vector<512x128xf32>
    %c0_25 = arith.constant 0 : index
    %c1_26 = arith.constant 1 : index
    %c1_27 = arith.constant 1 : index
    %c0_28 = arith.constant 0 : index
    %12 = vector.load %arg12[%c0_25, %c1_26, %c1_27, %c0_28] : memref<2x18x18x128xf32, #tpu.memory_space<vmem>>, vector<2x16x16x128xf32>
    %13 = vector.shape_cast %12 : vector<2x16x16x128xf32> to vector<512x128xf32>
    %c0_29 = arith.constant 0 : index
    %c1_30 = arith.constant 1 : index
    %c2_31 = arith.constant 2 : index
    %c0_32 = arith.constant 0 : index
    %14 = vector.load %arg12[%c0_29, %c1_30, %c2_31, %c0_32] : memref<2x18x18x128xf32, #tpu.memory_space<vmem>>, vector<2x16x16x128xf32>
    %15 = vector.shape_cast %14 : vector<2x16x16x128xf32> to vector<512x128xf32>
    %c0_33 = arith.constant 0 : index
    %c2_34 = arith.constant 2 : index
    %c0_35 = arith.constant 0 : index
    %c0_36 = arith.constant 0 : index
    %16 = vector.load %arg12[%c0_33, %c2_34, %c0_35, %c0_36] : memref<2x18x18x128xf32, #tpu.memory_space<vmem>>, vector<2x16x16x128xf32>
    %17 = vector.shape_cast %16 : vector<2x16x16x128xf32> to vector<512x128xf32>
    %c0_37 = arith.constant 0 : index
    %c2_38 = arith.constant 2 : index
    %c1_39 = arith.constant 1 : index
    %c0_40 = arith.constant 0 : index
    %18 = vector.load %arg12[%c0_37, %c2_38, %c1_39, %c0_40] : memref<2x18x18x128xf32, #tpu.memory_space<vmem>>, vector<2x16x16x128xf32>
    %19 = vector.shape_cast %18 : vector<2x16x16x128xf32> to vector<512x128xf32>
    %c0_41 = arith.constant 0 : index
    %c2_42 = arith.constant 2 : index
    %c2_43 = arith.constant 2 : index
    %c0_44 = arith.constant 0 : index
    %20 = vector.load %arg12[%c0_41, %c2_42, %c2_43, %c0_44] : memref<2x18x18x128xf32, #tpu.memory_space<vmem>>, vector<2x16x16x128xf32>
    %21 = vector.shape_cast %20 : vector<2x16x16x128xf32> to vector<512x128xf32>
    %22 = tpu.concatenate %5, %7, %9, %11, %13, %15, %17, %19, %21 in 1 : vector<512x128xf32>, vector<512x128xf32>, vector<512x128xf32>, vector<512x128xf32>, vector<512x128xf32>, vector<512x128xf32>, vector<512x128xf32>, vector<512x128xf32>, vector<512x128xf32> -> vector<512x1152xf32>
    %c0_45 = arith.constant 0 : index
    %c0_46 = arith.constant 0 : index
    %23 = vector.load %arg2[%c0_45, %c0_46] : memref<1152x128xf32, #tpu.memory_space<vmem>>, vector<1152x128xf32>
    %cst_47 = arith.constant dense<0.000000e+00> : vector<512x128xf32>
    %24 = tpu.matmul %22, %23, %cst_47 {dimension_numbers = #tpu.dot_dimension_numbers<[1], [0], [0], [1], [0, 0, 1, 1], [], []>} : vector<512x1152xf32>, vector<1152x128xf32>, vector<512x128xf32> -> vector<512x128xf32>
    %cst_48 = arith.constant dense<0.000000e+00> : vector<128xf32>
    %25 = vector.multi_reduction <add>, %24, %cst_48 [0] : vector<512x128xf32> to vector<128xf32>
    %26 = vector.shape_cast %25 : vector<128xf32> to vector<1x128xf32>
    %27 = arith.mulf %24, %24 : vector<512x128xf32>
    %cst_49 = arith.constant dense<0.000000e+00> : vector<128xf32>
    %28 = vector.multi_reduction <add>, %27, %cst_49 [0] : vector<512x128xf32> to vector<128xf32>
    %29 = vector.shape_cast %28 : vector<128xf32> to vector<1x128xf32>
    %cst_50 = arith.constant 0.001953125 : f32
    %30 = vector.broadcast %cst_50 : f32 to vector<1x128xf32>
    %31 = arith.mulf %26, %30 : vector<1x128xf32>
    %cst_51 = arith.constant 0.001953125 : f32
    %32 = vector.broadcast %cst_51 : f32 to vector<1x128xf32>
    %33 = arith.mulf %29, %32 : vector<1x128xf32>
    %34 = arith.mulf %31, %31 : vector<1x128xf32>
    %35 = arith.subf %33, %34 : vector<1x128xf32>
    %36 = vector.broadcast %31 : vector<1x128xf32> to vector<512x128xf32>
    %37 = arith.subf %24, %36 : vector<512x128xf32>
    %cst_52 = arith.constant 9.99999974E-6 : f32
    %38 = vector.broadcast %cst_52 : f32 to vector<1x128xf32>
    %39 = arith.addf %35, %38 : vector<1x128xf32>
    %40 = math.rsqrt %39 : vector<1x128xf32>
    %41 = vector.broadcast %40 : vector<1x128xf32> to vector<512x128xf32>
    %42 = arith.mulf %37, %41 : vector<512x128xf32>
    %c0_53 = arith.constant 0 : index
    %c0_54 = arith.constant 0 : index
    %43 = vector.load %arg3[%c0_53, %c0_54] : memref<1x128xf32, #tpu.memory_space<vmem>>, vector<1x128xf32>
    %44 = vector.broadcast %43 : vector<1x128xf32> to vector<512x128xf32>
    %45 = arith.mulf %42, %44 : vector<512x128xf32>
    %c0_55 = arith.constant 0 : index
    %c0_56 = arith.constant 0 : index
    %46 = vector.load %arg4[%c0_55, %c0_56] : memref<1x128xf32, #tpu.memory_space<vmem>>, vector<1x128xf32>
    %47 = vector.broadcast %46 : vector<1x128xf32> to vector<512x128xf32>
    %48 = arith.addf %45, %47 : vector<512x128xf32>
    %cst_57 = arith.constant 0.000000e+00 : f32
    %49 = vector.broadcast %cst_57 : f32 to vector<512x128xf32>
    %50 = arith.maximumf %48, %49 : vector<512x128xf32>
    %51 = vector.shape_cast %50 : vector<512x128xf32> to vector<2x16x16x128xf32>
    %c0_58 = arith.constant 0 : index
    %c1_59 = arith.constant 1 : index
    %c1_60 = arith.constant 1 : index
    %c0_61 = arith.constant 0 : index
    %52 = vector.load %arg12[%c0_58, %c1_59, %c1_60, %c0_61] : memref<2x18x18x128xf32, #tpu.memory_space<vmem>>, vector<2x16x16x128xf32>
    tpu.vector_store %arg12[%c0_58, %c1_59, %c1_60, %c0_61], %51 {strides = array<i32>} : memref<2x18x18x128xf32, #tpu.memory_space<vmem>>, vector<2x16x16x128xf32>,
    %c0_62 = arith.constant 0 : index
    %c0_63 = arith.constant 0 : index
    %c0_64 = arith.constant 0 : index
    %c0_65 = arith.constant 0 : index
    %53 = vector.load %arg12[%c0_62, %c0_63, %c0_64, %c0_65] : memref<2x18x18x128xf32, #tpu.memory_space<vmem>>, vector<2x16x16x128xf32>
    %54 = vector.shape_cast %53 : vector<2x16x16x128xf32> to vector<512x128xf32>
    %c0_66 = arith.constant 0 : index
    %c0_67 = arith.constant 0 : index
    %c1_68 = arith.constant 1 : index
    %c0_69 = arith.constant 0 : index
    %55 = vector.load %arg12[%c0_66, %c0_67, %c1_68, %c0_69] : memref<2x18x18x128xf32, #tpu.memory_space<vmem>>, vector<2x16x16x128xf32>
    %56 = vector.shape_cast %55 : vector<2x16x16x128xf32> to vector<512x128xf32>
    %c0_70 = arith.constant 0 : index
    %c0_71 = arith.constant 0 : index
    %c2_72 = arith.constant 2 : index
    %c0_73 = arith.constant 0 : index
    %57 = vector.load %arg12[%c0_70, %c0_71, %c2_72, %c0_73] : memref<2x18x18x128xf32, #tpu.memory_space<vmem>>, vector<2x16x16x128xf32>
    %58 = vector.shape_cast %57 : vector<2x16x16x128xf32> to vector<512x128xf32>
    %c0_74 = arith.constant 0 : index
    %c1_75 = arith.constant 1 : index
    %c0_76 = arith.constant 0 : index
    %c0_77 = arith.constant 0 : index
    %59 = vector.load %arg12[%c0_74, %c1_75, %c0_76, %c0_77] : memref<2x18x18x128xf32, #tpu.memory_space<vmem>>, vector<2x16x16x128xf32>
    %60 = vector.shape_cast %59 : vector<2x16x16x128xf32> to vector<512x128xf32>
    %c0_78 = arith.constant 0 : index
    %c1_79 = arith.constant 1 : index
    %c1_80 = arith.constant 1 : index
    %c0_81 = arith.constant 0 : index
    %61 = vector.load %arg12[%c0_78, %c1_79, %c1_80, %c0_81] : memref<2x18x18x128xf32, #tpu.memory_space<vmem>>, vector<2x16x16x128xf32>
    %62 = vector.shape_cast %61 : vector<2x16x16x128xf32> to vector<512x128xf32>
    %c0_82 = arith.constant 0 : index
    %c1_83 = arith.constant 1 : index
    %c2_84 = arith.constant 2 : index
    %c0_85 = arith.constant 0 : index
    %63 = vector.load %arg12[%c0_82, %c1_83, %c2_84, %c0_85] : memref<2x18x18x128xf32, #tpu.memory_space<vmem>>, vector<2x16x16x128xf32>
    %64 = vector.shape_cast %63 : vector<2x16x16x128xf32> to vector<512x128xf32>
    %c0_86 = arith.constant 0 : index
    %c2_87 = arith.constant 2 : index
    %c0_88 = arith.constant 0 : index
    %c0_89 = arith.constant 0 : index
    %65 = vector.load %arg12[%c0_86, %c2_87, %c0_88, %c0_89] : memref<2x18x18x128xf32, #tpu.memory_space<vmem>>, vector<2x16x16x128xf32>
    %66 = vector.shape_cast %65 : vector<2x16x16x128xf32> to vector<512x128xf32>
    %c0_90 = arith.constant 0 : index
    %c2_91 = arith.constant 2 : index
    %c1_92 = arith.constant 1 : index
    %c0_93 = arith.constant 0 : index
    %67 = vector.load %arg12[%c0_90, %c2_91, %c1_92, %c0_93] : memref<2x18x18x128xf32, #tpu.memory_space<vmem>>, vector<2x16x16x128xf32>
    %68 = vector.shape_cast %67 : vector<2x16x16x128xf32> to vector<512x128xf32>
    %c0_94 = arith.constant 0 : index
    %c2_95 = arith.constant 2 : index
    %c2_96 = arith.constant 2 : index
    %c0_97 = arith.constant 0 : index
    %69 = vector.load %arg12[%c0_94, %c2_95, %c2_96, %c0_97] : memref<2x18x18x128xf32, #tpu.memory_space<vmem>>, vector<2x16x16x128xf32>
    %70 = vector.shape_cast %69 : vector<2x16x16x128xf32> to vector<512x128xf32>
    %71 = tpu.concatenate %54, %56, %58, %60, %62, %64, %66, %68, %70 in 1 : vector<512x128xf32>, vector<512x128xf32>, vector<512x128xf32>, vector<512x128xf32>, vector<512x128xf32>, vector<512x128xf32>, vector<512x128xf32>, vector<512x128xf32>, vector<512x128xf32> -> vector<512x1152xf32>
    %c0_98 = arith.constant 0 : index
    %c0_99 = arith.constant 0 : index
    %72 = vector.load %arg5[%c0_98, %c0_99] : memref<1152x128xf32, #tpu.memory_space<vmem>>, vector<1152x128xf32>
    %cst_100 = arith.constant dense<0.000000e+00> : vector<512x128xf32>
    %73 = tpu.matmul %71, %72, %cst_100 {dimension_numbers = #tpu.dot_dimension_numbers<[1], [0], [0], [1], [0, 0, 1, 1], [], []>} : vector<512x1152xf32>, vector<1152x128xf32>, vector<512x128xf32> -> vector<512x128xf32>
    %cst_101 = arith.constant dense<0.000000e+00> : vector<128xf32>
    %74 = vector.multi_reduction <add>, %73, %cst_101 [0] : vector<512x128xf32> to vector<128xf32>
    %75 = vector.shape_cast %74 : vector<128xf32> to vector<1x128xf32>
    %76 = arith.mulf %73, %73 : vector<512x128xf32>
    %cst_102 = arith.constant dense<0.000000e+00> : vector<128xf32>
    %77 = vector.multi_reduction <add>, %76, %cst_102 [0] : vector<512x128xf32> to vector<128xf32>
    %78 = vector.shape_cast %77 : vector<128xf32> to vector<1x128xf32>
    %cst_103 = arith.constant 0.001953125 : f32
    %79 = vector.broadcast %cst_103 : f32 to vector<1x128xf32>
    %80 = arith.mulf %75, %79 : vector<1x128xf32>
    %cst_104 = arith.constant 0.001953125 : f32
    %81 = vector.broadcast %cst_104 : f32 to vector<1x128xf32>
    %82 = arith.mulf %78, %81 : vector<1x128xf32>
    %83 = arith.mulf %80, %80 : vector<1x128xf32>
    %84 = arith.subf %82, %83 : vector<1x128xf32>
    %85 = vector.broadcast %80 : vector<1x128xf32> to vector<512x128xf32>
    %86 = arith.subf %73, %85 : vector<512x128xf32>
    %cst_105 = arith.constant 9.99999974E-6 : f32
    %87 = vector.broadcast %cst_105 : f32 to vector<1x128xf32>
    %88 = arith.addf %84, %87 : vector<1x128xf32>
    %89 = math.rsqrt %88 : vector<1x128xf32>
    %90 = vector.broadcast %89 : vector<1x128xf32> to vector<512x128xf32>
    %91 = arith.mulf %86, %90 : vector<512x128xf32>
    %c0_106 = arith.constant 0 : index
    %c0_107 = arith.constant 0 : index
    %92 = vector.load %arg6[%c0_106, %c0_107] : memref<1x128xf32, #tpu.memory_space<vmem>>, vector<1x128xf32>
    %93 = vector.broadcast %92 : vector<1x128xf32> to vector<512x128xf32>
    %94 = arith.mulf %91, %93 : vector<512x128xf32>
    %c0_108 = arith.constant 0 : index
    %c0_109 = arith.constant 0 : index
    %95 = vector.load %arg7[%c0_108, %c0_109] : memref<1x128xf32, #tpu.memory_space<vmem>>, vector<1x128xf32>
    %96 = vector.broadcast %95 : vector<1x128xf32> to vector<512x128xf32>
    %97 = arith.addf %94, %96 : vector<512x128xf32>
    %cst_110 = arith.constant 0.000000e+00 : f32
    %98 = vector.broadcast %cst_110 : f32 to vector<512x128xf32>
    %99 = arith.maximumf %97, %98 : vector<512x128xf32>
    %100 = vector.shape_cast %99 : vector<512x128xf32> to vector<2x16x16x128xf32>
    %c0_111 = arith.constant 0 : index
    %c1_112 = arith.constant 1 : index
    %c1_113 = arith.constant 1 : index
    %c0_114 = arith.constant 0 : index
    %101 = vector.load %arg12[%c0_111, %c1_112, %c1_113, %c0_114] : memref<2x18x18x128xf32, #tpu.memory_space<vmem>>, vector<2x16x16x128xf32>
    tpu.vector_store %arg12[%c0_111, %c1_112, %c1_113, %c0_114], %100 {strides = array<i32>} : memref<2x18x18x128xf32, #tpu.memory_space<vmem>>, vector<2x16x16x128xf32>,
    %c0_115 = arith.constant 0 : index
    %c0_116 = arith.constant 0 : index
    %c0_117 = arith.constant 0 : index
    %c0_118 = arith.constant 0 : index
    %102 = vector.load %arg12[%c0_115, %c0_116, %c0_117, %c0_118] : memref<2x18x18x128xf32, #tpu.memory_space<vmem>>, vector<2x16x16x128xf32>
    %103 = vector.shape_cast %102 : vector<2x16x16x128xf32> to vector<512x128xf32>
    %c0_119 = arith.constant 0 : index
    %c0_120 = arith.constant 0 : index
    %c1_121 = arith.constant 1 : index
    %c0_122 = arith.constant 0 : index
    %104 = vector.load %arg12[%c0_119, %c0_120, %c1_121, %c0_122] : memref<2x18x18x128xf32, #tpu.memory_space<vmem>>, vector<2x16x16x128xf32>
    %105 = vector.shape_cast %104 : vector<2x16x16x128xf32> to vector<512x128xf32>
    %c0_123 = arith.constant 0 : index
    %c0_124 = arith.constant 0 : index
    %c2_125 = arith.constant 2 : index
    %c0_126 = arith.constant 0 : index
    %106 = vector.load %arg12[%c0_123, %c0_124, %c2_125, %c0_126] : memref<2x18x18x128xf32, #tpu.memory_space<vmem>>, vector<2x16x16x128xf32>
    %107 = vector.shape_cast %106 : vector<2x16x16x128xf32> to vector<512x128xf32>
    %c0_127 = arith.constant 0 : index
    %c1_128 = arith.constant 1 : index
    %c0_129 = arith.constant 0 : index
    %c0_130 = arith.constant 0 : index
    %108 = vector.load %arg12[%c0_127, %c1_128, %c0_129, %c0_130] : memref<2x18x18x128xf32, #tpu.memory_space<vmem>>, vector<2x16x16x128xf32>
    %109 = vector.shape_cast %108 : vector<2x16x16x128xf32> to vector<512x128xf32>
    %c0_131 = arith.constant 0 : index
    %c1_132 = arith.constant 1 : index
    %c1_133 = arith.constant 1 : index
    %c0_134 = arith.constant 0 : index
    %110 = vector.load %arg12[%c0_131, %c1_132, %c1_133, %c0_134] : memref<2x18x18x128xf32, #tpu.memory_space<vmem>>, vector<2x16x16x128xf32>
    %111 = vector.shape_cast %110 : vector<2x16x16x128xf32> to vector<512x128xf32>
    %c0_135 = arith.constant 0 : index
    %c1_136 = arith.constant 1 : index
    %c2_137 = arith.constant 2 : index
    %c0_138 = arith.constant 0 : index
    %112 = vector.load %arg12[%c0_135, %c1_136, %c2_137, %c0_138] : memref<2x18x18x128xf32, #tpu.memory_space<vmem>>, vector<2x16x16x128xf32>
    %113 = vector.shape_cast %112 : vector<2x16x16x128xf32> to vector<512x128xf32>
    %c0_139 = arith.constant 0 : index
    %c2_140 = arith.constant 2 : index
    %c0_141 = arith.constant 0 : index
    %c0_142 = arith.constant 0 : index
    %114 = vector.load %arg12[%c0_139, %c2_140, %c0_141, %c0_142] : memref<2x18x18x128xf32, #tpu.memory_space<vmem>>, vector<2x16x16x128xf32>
    %115 = vector.shape_cast %114 : vector<2x16x16x128xf32> to vector<512x128xf32>
    %c0_143 = arith.constant 0 : index
    %c2_144 = arith.constant 2 : index
    %c1_145 = arith.constant 1 : index
    %c0_146 = arith.constant 0 : index
    %116 = vector.load %arg12[%c0_143, %c2_144, %c1_145, %c0_146] : memref<2x18x18x128xf32, #tpu.memory_space<vmem>>, vector<2x16x16x128xf32>
    %117 = vector.shape_cast %116 : vector<2x16x16x128xf32> to vector<512x128xf32>
    %c0_147 = arith.constant 0 : index
    %c2_148 = arith.constant 2 : index
    %c2_149 = arith.constant 2 : index
    %c0_150 = arith.constant 0 : index
    %118 = vector.load %arg12[%c0_147, %c2_148, %c2_149, %c0_150] : memref<2x18x18x128xf32, #tpu.memory_space<vmem>>, vector<2x16x16x128xf32>
    %119 = vector.shape_cast %118 : vector<2x16x16x128xf32> to vector<512x128xf32>
    %120 = tpu.concatenate %103, %105, %107, %109, %111, %113, %115, %117, %119 in 1 : vector<512x128xf32>, vector<512x128xf32>, vector<512x128xf32>, vector<512x128xf32>, vector<512x128xf32>, vector<512x128xf32>, vector<512x128xf32>, vector<512x128xf32>, vector<512x128xf32> -> vector<512x1152xf32>
    %c0_151 = arith.constant 0 : index
    %c0_152 = arith.constant 0 : index
    %121 = vector.load %arg8[%c0_151, %c0_152] : memref<1152x128xf32, #tpu.memory_space<vmem>>, vector<1152x128xf32>
    %cst_153 = arith.constant dense<0.000000e+00> : vector<512x128xf32>
    %122 = tpu.matmul %120, %121, %cst_153 {dimension_numbers = #tpu.dot_dimension_numbers<[1], [0], [0], [1], [0, 0, 1, 1], [], []>} : vector<512x1152xf32>, vector<1152x128xf32>, vector<512x128xf32> -> vector<512x128xf32>
    %cst_154 = arith.constant dense<0.000000e+00> : vector<128xf32>
    %123 = vector.multi_reduction <add>, %122, %cst_154 [0] : vector<512x128xf32> to vector<128xf32>
    %124 = vector.shape_cast %123 : vector<128xf32> to vector<1x128xf32>
    %125 = arith.mulf %122, %122 : vector<512x128xf32>
    %cst_155 = arith.constant dense<0.000000e+00> : vector<128xf32>
    %126 = vector.multi_reduction <add>, %125, %cst_155 [0] : vector<512x128xf32> to vector<128xf32>
    %127 = vector.shape_cast %126 : vector<128xf32> to vector<1x128xf32>
    %cst_156 = arith.constant 0.001953125 : f32
    %128 = vector.broadcast %cst_156 : f32 to vector<1x128xf32>
    %129 = arith.mulf %124, %128 : vector<1x128xf32>
    %cst_157 = arith.constant 0.001953125 : f32
    %130 = vector.broadcast %cst_157 : f32 to vector<1x128xf32>
    %131 = arith.mulf %127, %130 : vector<1x128xf32>
    %132 = arith.mulf %129, %129 : vector<1x128xf32>
    %133 = arith.subf %131, %132 : vector<1x128xf32>
    %134 = vector.broadcast %129 : vector<1x128xf32> to vector<512x128xf32>
    %135 = arith.subf %122, %134 : vector<512x128xf32>
    %cst_158 = arith.constant 9.99999974E-6 : f32
    %136 = vector.broadcast %cst_158 : f32 to vector<1x128xf32>
    %137 = arith.addf %133, %136 : vector<1x128xf32>
    %138 = math.rsqrt %137 : vector<1x128xf32>
    %139 = vector.broadcast %138 : vector<1x128xf32> to vector<512x128xf32>
    %140 = arith.mulf %135, %139 : vector<512x128xf32>
    %c0_159 = arith.constant 0 : index
    %c0_160 = arith.constant 0 : index
    %141 = vector.load %arg9[%c0_159, %c0_160] : memref<1x128xf32, #tpu.memory_space<vmem>>, vector<1x128xf32>
    %142 = vector.broadcast %141 : vector<1x128xf32> to vector<512x128xf32>
    %143 = arith.mulf %140, %142 : vector<512x128xf32>
    %c0_161 = arith.constant 0 : index
    %c0_162 = arith.constant 0 : index
    %144 = vector.load %arg10[%c0_161, %c0_162] : memref<1x128xf32, #tpu.memory_space<vmem>>, vector<1x128xf32>
    %145 = vector.broadcast %144 : vector<1x128xf32> to vector<512x128xf32>
    %146 = arith.addf %143, %145 : vector<512x128xf32>
    %cst_163 = arith.constant 0.000000e+00 : f32
    %147 = vector.broadcast %cst_163 : f32 to vector<512x128xf32>
    %148 = arith.maximumf %146, %147 : vector<512x128xf32>
    %c0_164 = arith.constant 0 : index
    %c0_165 = arith.constant 0 : index
    %c0_166 = arith.constant 0 : index
    %c0_167 = arith.constant 0 : index
    %149 = vector.load %arg1[%c0_164, %c0_165, %c0_166, %c0_167] : memref<2x16x16x128xf32, #tpu.memory_space<vmem>>, vector<2x16x16x128xf32>
    %150 = vector.shape_cast %149 : vector<2x16x16x128xf32> to vector<512x128xf32>
    %151 = arith.addf %148, %150 : vector<512x128xf32>
    %c0_168 = arith.constant 0 : index
    %c0_169 = arith.constant 0 : index
    %152 = vector.load %arg11[%c0_168, %c0_169] : memref<512x128xf32, #tpu.memory_space<vmem>>, vector<512x128xf32>
    tpu.vector_store %arg11[%c0_168, %c0_169], %151 {strides = array<i32>} : memref<512x128xf32, #tpu.memory_space<vmem>>, vector<512x128xf32>,
    return
  }
  func.func @transform_0(%arg0: i32) -> (i32, i32, i32, i32) {
    %c0_i32 = arith.constant 0 : i32
    %c0_i32_0 = arith.constant 0 : i32
    %c0_i32_1 = arith.constant 0 : i32
    %c0_i32_2 = arith.constant 0 : i32
    %c0_i32_3 = arith.constant 0 : i32
    return %c0_i32, %c0_i32_0, %c0_i32_1, %c0_i32_2 : i32, i32, i32, i32
  }
  func.func @transform_1(%arg0: i32) -> (i32, i32) {
    %c0_i32 = arith.constant 0 : i32
    %c0_i32_0 = arith.constant 0 : i32
    %c0_i32_1 = arith.constant 0 : i32
    return %c0_i32, %c0_i32_0 : i32, i32
  }
  func.func @transform_2(%arg0: i32) -> (i32, i32) {
    %c0_i32 = arith.constant 0 : i32
    %c0_i32_0 = arith.constant 0 : i32
    %c0_i32_1 = arith.constant 0 : i32
    return %c0_i32, %c0_i32_0 : i32, i32
  }
  func.func @transform_3(%arg0: i32) -> (i32, i32) {
    %c0_i32 = arith.constant 0 : i32
    %c0_i32_0 = arith.constant 0 : i32
    %c0_i32_1 = arith.constant 0 : i32
    return %c0_i32, %c0_i32_0 : i32, i32
  }
  func.func @transform_4(%arg0: i32) -> (i32, i32) {
    %c0_i32 = arith.constant 0 : i32
    %c0_i32_0 = arith.constant 0 : i32
    %c0_i32_1 = arith.constant 0 : i32
    return %c0_i32, %c0_i32_0 : i32, i32
  }
  func.func @transform_5(%arg0: i32) -> (i32, i32) {
    %c0_i32 = arith.constant 0 : i32
    %c0_i32_0 = arith.constant 0 : i32
    %c0_i32_1 = arith.constant 0 : i32
    return %c0_i32, %c0_i32_0 : i32, i32
  }
  func.func @transform_6(%arg0: i32) -> (i32, i32) {
    %c0_i32 = arith.constant 0 : i32
    %c0_i32_0 = arith.constant 0 : i32
    %c0_i32_1 = arith.constant 0 : i32
    return %c0_i32, %c0_i32_0 : i32, i32
  }
  func.func @transform_7(%arg0: i32) -> (i32, i32) {
    %c0_i32 = arith.constant 0 : i32
    %c0_i32_0 = arith.constant 0 : i32
    %c0_i32_1 = arith.constant 0 : i32
    return %c0_i32, %c0_i32_0 : i32, i32
  }
  func.func @transform_8(%arg0: i32) -> (i32, i32) {
    %c0_i32 = arith.constant 0 : i32
    %c0_i32_0 = arith.constant 0 : i32
    %c0_i32_1 = arith.constant 0 : i32
    return %c0_i32, %c0_i32_0 : i32, i32
  }
  func.func @transform_9(%arg0: i32) -> (i32, i32) {
    %c0_i32 = arith.constant 0 : i32
    %c0_i32_0 = arith.constant 0 : i32
    %c0_i32_1 = arith.constant 0 : i32
    return %c0_i32, %c0_i32_0 : i32, i32
  }
  func.func @transform_10(%arg0: i32) -> (i32, i32) {
    %c0_i32 = arith.constant 0 : i32
    %c0_i32_0 = arith.constant 0 : i32
    %c0_i32_1 = arith.constant 0 : i32
    return %c0_i32, %c0_i32_0 : i32, i32
  }
}

</mosaic_0001>

<llo_original>
// kernel: resblock_forward.1
$region0: #{resblock_forward.1}
  #allocation0 [shape = 'u32[]', space=smem, size = 0x4, offset = 0x4, fixed_abs, tag = 'smem constant byte address 0x4 - core index']
  #allocation1 [shape = 'u32[72,128]{1,0:T(1,128)}', space=vmem, size = 0x9000, scoped, tag = 'internal scratch']
  #allocation2 [shape = 'f32[2,18,18,128]{3,2,1,0:T(8,128)}', space=vmem, size = 0x6c000, scoped, tag = 'scratch operand']
  %s0 = inlined_call_operand.vmem [shape: f32[2,16,16,128], index: 0, kind: input, shape index: {}]
  %s1 = inlined_call_operand.vmem [shape: f32[1152,128], index: 1, kind: input, shape index: {}]
  %s2 = inlined_call_operand.vmem [shape: f32[1,128], index: 2, kind: input, shape index: {}]
  %s3 = inlined_call_operand.vmem [shape: f32[1,128], index: 3, kind: input, shape index: {}]
  %s4 = inlined_call_operand.vmem [shape: f32[1152,128], index: 4, kind: input, shape index: {}]
  %s5 = inlined_call_operand.vmem [shape: f32[1,128], index: 5, kind: input, shape index: {}]
  %s6 = inlined_call_operand.vmem [shape: f32[1,128], index: 6, kind: input, shape index: {}]
  %s7 = inlined_call_operand.vmem [shape: f32[1152,128], index: 7, kind: input, shape index: {}]
  %s8 = inlined_call_operand.vmem [shape: f32[1,128], index: 8, kind: input, shape index: {}]
  %s9 = inlined_call_operand.vmem [shape: f32[1,128], index: 9, kind: input, shape index: {}]
  %s10 = inlined_call_operand.vmem [shape: f32[512,128], index: 10, kind: output, shape index: {}]
  %s11 = sld [smem:[#allocation0]]
  $region50: #{resblock_forward.1} parent=0
    _
  %s13 = ssub.s32 1, %s11
  %s14 = scalar_select 0, %s13, %s11
  // Predicated region
  $region2: #{resblock_forward.1} parent=0 // pred_check
    _
  $region3: #{resblock_forward.1} parent=0 // pred_check_branch
    %16 = sbr.rel (0) target = $region5
  $region4: #{resblock_forward.1} parent=0 // pred_region
    _
  $region5: #{resblock_forward.1} parent=0 // pred_fallthru
    _
  // Predicated region
  $region6: #{resblock_forward.1} parent=0 // pred_check
    _
  $region7: #{resblock_forward.1} parent=0 // pred_check_branch
    %18 = sbr.rel (0) target = $region9
  $region8: #{resblock_forward.1} parent=0 // pred_region
    _
  $region9: #{resblock_forward.1} parent=0 // pred_fallthru
    _
  // Predicated region
  $region10: #{resblock_forward.1} parent=0 // pred_check
    _
  $region11: #{resblock_forward.1} parent=0 // pred_check_branch
    %20 = sbr.rel (0) target = $region13
  $region12: #{resblock_forward.1} parent=0 // pred_region
    _
  $region13: #{resblock_forward.1} parent=0 // pred_fallthru
    _
  // Predicated region
  $region14: #{resblock_forward.1} parent=0 // pred_check
    _
  $region15: #{resblock_forward.1} parent=0 // pred_check_branch
    %22 = sbr.rel (0) target = $region17
  $region16: #{resblock_forward.1} parent=0 // pred_region
    _
  $region17: #{resblock_forward.1} parent=0 // pred_fallthru
    _
  // Predicated region
  $region18: #{resblock_forward.1} parent=0 // pred_check
    _
  $region19: #{resblock_forward.1} parent=0 // pred_check_branch
    %24 = sbr.rel (0) target = $region21
  $region20: #{resblock_forward.1} parent=0 // pred_region
    _
  $region21: #{resblock_forward.1} parent=0 // pred_fallthru
    _
  // Predicated region
  $region22: #{resblock_forward.1} parent=0 // pred_check
    _
  $region23: #{resblock_forward.1} parent=0 // pred_check_branch
    %26 = sbr.rel (0) target = $region25
  $region24: #{resblock_forward.1} parent=0 // pred_region
    _
  $region25: #{resblock_forward.1} parent=0 // pred_fallthru
    _
  // Predicated region
  $region26: #{resblock_forward.1} parent=0 // pred_check
    _
  $region27: #{resblock_forward.1} parent=0 // pred_check_branch
    %28 = sbr.rel (0) target = $region29
  $region28: #{resblock_forward.1} parent=0 // pred_region
    _
  $region29: #{resblock_forward.1} parent=0 // pred_fallthru
    _
  // Predicated region
  $region30: #{resblock_forward.1} parent=0 // pred_check
    _
  $region31: #{resblock_forward.1} parent=0 // pred_check_branch
    %30 = sbr.rel (0) target = $region33
  $region32: #{resblock_forward.1} parent=0 // pred_region
    _
  $region33: #{resblock_forward.1} parent=0 // pred_fallthru
    _
  // Predicated region
  $region34: #{resblock_forward.1} parent=0 // pred_check
    _
  $region35: #{resblock_forward.1} parent=0 // pred_check_branch
    %32 = sbr.rel (0) target = $region37
  $region36: #{resblock_forward.1} parent=0 // pred_region
    _
  $region37: #{resblock_forward.1} parent=0 // pred_fallthru
    _
  // Predicated region
  $region38: #{resblock_forward.1} parent=0 // pred_check
    _
  $region39: #{resblock_forward.1} parent=0 // pred_check_branch
    %34 = sbr.rel (0) target = $region41
  $region40: #{resblock_forward.1} parent=0 // pred_region
    _
  $region41: #{resblock_forward.1} parent=0 // pred_fallthru
    _
  %35 = vst [vmem:[#allocation2] sm:$0xff] 0.0
  %36 = vst [vmem:[#allocation2 + $0x8] sm:$0xff] 0.0
  %37 = vst [vmem:[#allocation2 + $0x10] sm:$0x3] 0.0
  %38 = vst [vmem:[#allocation2 + $0x18] sm:$0xff] 0.0
  %39 = vst [vmem:[#allocation2 + $0x20] sm:$0xff] 0.0
  %40 = vst [vmem:[#allocation2 + $0x28] sm:$0x3] 0.0
  %41 = vst [vmem:[#allocation2 + $0x30] sm:$0xff] 0.0
  %42 = vst [vmem:[#allocation2 + $0x38] sm:$0xff] 0.0
  %43 = vst [vmem:[#allocation2 + $0x40] sm:$0x3] 0.0
  %44 = vst [vmem:[#allocation2 + $0x48] sm:$0xff] 0.0
  %45 = vst [vmem:[#allocation2 + $0x50] sm:$0xff] 0.0
  %46 = vst [vmem:[#allocation2 + $0x58] sm:$0x3] 0.0
  %47 = vst [vmem:[#allocation2 + $0x60] sm:$0xff] 0.0
  %48 = vst [vmem:[#allocation2 + $0x68] sm:$0xff] 0.0
  %49 = vst [vmem:[#allocation2 + $0x70] sm:$0x3] 0.0
  %50 = vst [vmem:[#allocation2 + $0x78] sm:$0xff] 0.0
  %51 = vst [vmem:[#allocation2 + $0x80] sm:$0xff] 0.0
  %52 = vst [vmem:[#allocation2 + $0x88] sm:$0x3] 0.0
  %53 = vst [vmem:[#allocation2 + $0x90] sm:$0xff] 0.0
  %54 = vst [vmem:[#allocation2 + $0x98] sm:$0xff] 0.0
  %55 = vst [vmem:[#allocation2 + $0xa0] sm:$0x3] 0.0
  %56 = vst [vmem:[#allocation2 + $0xa8] sm:$0xff] 0.0
  %57 = vst [vmem:[#allocation2 + $0xb0] sm:$0xff] 0.0
  %58 = vst [vmem:[#allocation2 + $0xb8] sm:$0x3] 0.0
  %59 = vst [vmem:[#allocation2 + $0xc0] sm:$0xff] 0.0
  %60 = vst [vmem:[#allocation2 + $0xc8] sm:$0xff] 0.0
  %61 = vst [vmem:[#allocation2 + $0xd0] sm:$0x3] 0.0
  %62 = vst [vmem:[#allocation2 + $0xd8] sm:$0xff] 0.0
  %63 = vst [vmem:[#allocation2 + $0xe0] sm:$0xff] 0.0
  %64 = vst [vmem:[#allocation2 + $0xe8] sm:$0x3] 0.0
  %65 = vst [vmem:[#allocation2 + $0xf0] sm:$0xff] 0.0
  %66 = vst [vmem:[#allocation2 + $0xf8] sm:$0xff] 0.0
  %67 = vst [vmem:[#allocation2 + $0x100] sm:$0x3] 0.0
  %68 = vst [vmem:[#allocation2 + $0x108] sm:$0xff] 0.0
  %69 = vst [vmem:[#allocation2 + $0x110] sm:$0xff] 0.0
  %70 = vst [vmem:[#allocation2 + $0x118] sm:$0x3] 0.0
  %71 = vst [vmem:[#allocation2 + $0x120] sm:$0xff] 0.0
  %72 = vst [vmem:[#allocation2 + $0x128] sm:$0xff] 0.0
  %73 = vst [vmem:[#allocation2 + $0x130] sm:$0x3] 0.0
  %74 = vst [vmem:[#allocation2 + $0x138] sm:$0xff] 0.0
  %75 = vst [vmem:[#allocation2 + $0x140] sm:$0xff] 0.0
  %76 = vst [vmem:[#allocation2 + $0x148] sm:$0x3] 0.0
  %77 = vst [vmem:[#allocation2 + $0x150] sm:$0xff] 0.0
  %78 = vst [vmem:[#allocation2 + $0x158] sm:$0xff] 0.0
  %79 = vst [vmem:[#allocation2 + $0x160] sm:$0x3] 0.0
  %80 = vst [vmem:[#allocation2 + $0x168] sm:$0xff] 0.0
  %81 = vst [vmem:[#allocation2 + $0x170] sm:$0xff] 0.0
  %82 = vst [vmem:[#allocation2 + $0x178] sm:$0x3] 0.0
  %83 = vst [vmem:[#allocation2 + $0x180] sm:$0xff] 0.0
  %84 = vst [vmem:[#allocation2 + $0x188] sm:$0xff] 0.0
  %85 = vst [vmem:[#allocation2 + $0x190] sm:$0x3] 0.0
  %86 = vst [vmem:[#allocation2 + $0x198] sm:$0xff] 0.0
  %87 = vst [vmem:[#allocation2 + $0x1a0] sm:$0xff] 0.0
  %88 = vst [vmem:[#allocation2 + $0x1a8] sm:$0x3] 0.0
  %89 = vst [vmem:[#allocation2 + $0x1b0] sm:$0xff] 0.0
  %90 = vst [vmem:[#allocation2 + $0x1b8] sm:$0xff] 0.0
  %91 = vst [vmem:[#allocation2 + $0x1c0] sm:$0x3] 0.0
  %92 = vst [vmem:[#allocation2 + $0x1c8] sm:$0xff] 0.0
  %93 = vst [vmem:[#allocation2 + $0x1d0] sm:$0xff] 0.0
  %94 = vst [vmem:[#allocation2 + $0x1d8] sm:$0x3] 0.0
  %95 = vst [vmem:[#allocation2 + $0x1e0] sm:$0xff] 0.0
  %96 = vst [vmem:[#allocation2 + $0x1e8] sm:$0xff] 0.0
  %97 = vst [vmem:[#allocation2 + $0x1f0] sm:$0x3] 0.0
  %98 = vst [vmem:[#allocation2 + $0x1f8] sm:$0xff] 0.0
  %99 = vst [vmem:[#allocation2 + $0x200] sm:$0xff] 0.0
  %100 = vst [vmem:[#allocation2 + $0x208] sm:$0x3] 0.0
  %101 = vst [vmem:[#allocation2 + $0x210] sm:$0xff] 0.0
  %102 = vst [vmem:[#allocation2 + $0x218] sm:$0xff] 0.0
  %103 = vst [vmem:[#allocation2 + $0x220] sm:$0x3] 0.0
  %104 = vst [vmem:[#allocation2 + $0x228] sm:$0xff] 0.0
  %105 = vst [vmem:[#allocation2 + $0x230] sm:$0xff] 0.0
  %106 = vst [vmem:[#allocation2 + $0x238] sm:$0x3] 0.0
  %107 = vst [vmem:[#allocation2 + $0x240] sm:$0xff] 0.0
  %108 = vst [vmem:[#allocation2 + $0x248] sm:$0xff] 0.0
  %109 = vst [vmem:[#allocation2 + $0x250] sm:$0x3] 0.0
  %110 = vst [vmem:[#allocation2 + $0x258] sm:$0xff] 0.0
  %111 = vst [vmem:[#allocation2 + $0x260] sm:$0xff] 0.0
  %112 = vst [vmem:[#allocation2 + $0x268] sm:$0x3] 0.0
  %113 = vst [vmem:[#allocation2 + $0x270] sm:$0xff] 0.0
  %114 = vst [vmem:[#allocation2 + $0x278] sm:$0xff] 0.0
  %115 = vst [vmem:[#allocation2 + $0x280] sm:$0x3] 0.0
  %116 = vst [vmem:[#allocation2 + $0x288] sm:$0xff] 0.0
  %117 = vst [vmem:[#allocation2 + $0x290] sm:$0xff] 0.0
  %118 = vst [vmem:[#allocation2 + $0x298] sm:$0x3] 0.0
  %119 = vst [vmem:[#allocation2 + $0x2a0] sm:$0xff] 0.0
  %120 = vst [vmem:[#allocation2 + $0x2a8] sm:$0xff] 0.0
  %121 = vst [vmem:[#allocation2 + $0x2b0] sm:$0x3] 0.0
  %122 = vst [vmem:[#allocation2 + $0x2b8] sm:$0xff] 0.0
  %123 = vst [vmem:[#allocation2 + $0x2c0] sm:$0xff] 0.0
  %124 = vst [vmem:[#allocation2 + $0x2c8] sm:$0x3] 0.0
  %125 = vst [vmem:[#allocation2 + $0x2d0] sm:$0xff] 0.0
  %126 = vst [vmem:[#allocation2 + $0x2d8] sm:$0xff] 0.0
  %127 = vst [vmem:[#allocation2 + $0x2e0] sm:$0x3] 0.0
  %128 = vst [vmem:[#allocation2 + $0x2e8] sm:$0xff] 0.0
  %129 = vst [vmem:[#allocation2 + $0x2f0] sm:$0xff] 0.0
  %130 = vst [vmem:[#allocation2 + $0x2f8] sm:$0x3] 0.0
  %131 = vst [vmem:[#allocation2 + $0x300] sm:$0xff] 0.0
  %132 = vst [vmem:[#allocation2 + $0x308] sm:$0xff] 0.0
  %133 = vst [vmem:[#allocation2 + $0x310] sm:$0x3] 0.0
  %134 = vst [vmem:[#allocation2 + $0x318] sm:$0xff] 0.0
  %135 = vst [vmem:[#allocation2 + $0x320] sm:$0xff] 0.0
  %136 = vst [vmem:[#allocation2 + $0x328] sm:$0x3] 0.0
  %137 = vst [vmem:[#allocation2 + $0x330] sm:$0xff] 0.0
  %138 = vst [vmem:[#allocation2 + $0x338] sm:$0xff] 0.0
  %139 = vst [vmem:[#allocation2 + $0x340] sm:$0x3] 0.0
  %140 = vst [vmem:[#allocation2 + $0x348] sm:$0xff] 0.0
  %141 = vst [vmem:[#allocation2 + $0x350] sm:$0xff] 0.0
  %142 = vst [vmem:[#allocation2 + $0x358] sm:$0x3] 0.0
  %v143 = vld [vmem:[%s0] sm:$0xff]
  %v144 = vld [vmem:[%s0 + $0x8] sm:$0xff]
  %v145 = vld [vmem:[%s0 + $0x10] sm:$0xff]
  %v146 = vld [vmem:[%s0 + $0x18] sm:$0xff]
  %v147 = vld [vmem:[%s0 + $0x20] sm:$0xff]
  %v148 = vld [vmem:[%s0 + $0x28] sm:$0xff]
  %v149 = vld [vmem:[%s0 + $0x30] sm:$0xff]
  %v150 = vld [vmem:[%s0 + $0x38] sm:$0xff]
  %v151 = vld [vmem:[%s0 + $0x40] sm:$0xff]
  %v152 = vld [vmem:[%s0 + $0x48] sm:$0xff]
  %v153 = vld [vmem:[%s0 + $0x50] sm:$0xff]
  %v154 = vld [vmem:[%s0 + $0x58] sm:$0xff]
  %v155 = vld [vmem:[%s0 + $0x60] sm:$0xff]
  %v156 = vld [vmem:[%s0 + $0x68] sm:$0xff]
  %v157 = vld [vmem:[%s0 + $0x70] sm:$0xff]
  %v158 = vld [vmem:[%s0 + $0x78] sm:$0xff]
  %v159 = vld [vmem:[%s0 + $0x80] sm:$0xff]
  %v160 = vld [vmem:[%s0 + $0x88] sm:$0xff]
  %v161 = vld [vmem:[%s0 + $0x90] sm:$0xff]
  %v162 = vld [vmem:[%s0 + $0x98] sm:$0xff]
  %v163 = vld [vmem:[%s0 + $0xa0] sm:$0xff]
  %v164 = vld [vmem:[%s0 + $0xa8] sm:$0xff]
  %v165 = vld [vmem:[%s0 + $0xb0] sm:$0xff]
  %v166 = vld [vmem:[%s0 + $0xb8] sm:$0xff]
  %v167 = vld [vmem:[%s0 + $0xc0] sm:$0xff]
  %v168 = vld [vmem:[%s0 + $0xc8] sm:$0xff]
  %v169 = vld [vmem:[%s0 + $0xd0] sm:$0xff]
  %v170 = vld [vmem:[%s0 + $0xd8] sm:$0xff]
  %v171 = vld [vmem:[%s0 + $0xe0] sm:$0xff]
  %v172 = vld [vmem:[%s0 + $0xe8] sm:$0xff]
  %v173 = vld [vmem:[%s0 + $0xf0] sm:$0xff]
  %v174 = vld [vmem:[%s0 + $0xf8] sm:$0xff]
  %v175 = vld [vmem:[%s0 + $0x100] sm:$0xff]
  %v176 = vld [vmem:[%s0 + $0x108] sm:$0xff]
  %v177 = vld [vmem:[%s0 + $0x110] sm:$0xff]
  %v178 = vld [vmem:[%s0 + $0x118] sm:$0xff]
  %v179 = vld [vmem:[%s0 + $0x120] sm:$0xff]
  %v180 = vld [vmem:[%s0 + $0x128] sm:$0xff]
  %v181 = vld [vmem:[%s0 + $0x130] sm:$0xff]
  %v182 = vld [vmem:[%s0 + $0x138] sm:$0xff]
  %v183 = vld [vmem:[%s0 + $0x140] sm:$0xff]
  %v184 = vld [vmem:[%s0 + $0x148] sm:$0xff]
  %v185 = vld [vmem:[%s0 + $0x150] sm:$0xff]
  %v186 = vld [vmem:[%s0 + $0x158] sm:$0xff]
  %v187 = vld [vmem:[%s0 + $0x160] sm:$0xff]
  %v188 = vld [vmem:[%s0 + $0x168] sm:$0xff]
  %v189 = vld [vmem:[%s0 + $0x170] sm:$0xff]
  %v190 = vld [vmem:[%s0 + $0x178] sm:$0xff]
  %v191 = vld [vmem:[%s0 + $0x180] sm:$0xff]
  %v192 = vld [vmem:[%s0 + $0x188] sm:$0xff]
  %v193 = vld [vmem:[%s0 + $0x190] sm:$0xff]
  %v194 = vld [vmem:[%s0 + $0x198] sm:$0xff]
  %v195 = vld [vmem:[%s0 + $0x1a0] sm:$0xff]
  %v196 = vld [vmem:[%s0 + $0x1a8] sm:$0xff]
  %v197 = vld [vmem:[%s0 + $0x1b0] sm:$0xff]
  %v198 = vld [vmem:[%s0 + $0x1b8] sm:$0xff]
  %v199 = vld [vmem:[%s0 + $0x1c0] sm:$0xff]
  %v200 = vld [vmem:[%s0 + $0x1c8] sm:$0xff]
  %v201 = vld [vmem:[%s0 + $0x1d0] sm:$0xff]
  %v202 = vld [vmem:[%s0 + $0x1d8] sm:$0xff]
  %v203 = vld [vmem:[%s0 + $0x1e0] sm:$0xff]
  %v204 = vld [vmem:[%s0 + $0x1e8] sm:$0xff]
  %v205 = vld [vmem:[%s0 + $0x1f0] sm:$0xff]
  %v206 = vld [vmem:[%s0 + $0x1f8] sm:$0xff]
  %s207 = scalar_lea.vmem [#allocation2], 24
  %208 = vst [vmem:[%s207 + $0x1] sm:$0xff] %v143
  %209 = vst [vmem:[%s207 + $0x9] sm:$0xff] %v144
  %210 = vst [vmem:[%s207 + $0x19] sm:$0xff] %v145
  %211 = vst [vmem:[%s207 + $0x21] sm:$0xff] %v146
  %212 = vst [vmem:[%s207 + $0x31] sm:$0xff] %v147
  %213 = vst [vmem:[%s207 + $0x39] sm:$0xff] %v148
  %214 = vst [vmem:[%s207 + $0x49] sm:$0xff] %v149
  %215 = vst [vmem:[%s207 + $0x51] sm:$0xff] %v150
  %216 = vst [vmem:[%s207 + $0x61] sm:$0xff] %v151
  %217 = vst [vmem:[%s207 + $0x69] sm:$0xff] %v152
  %218 = vst [vmem:[%s207 + $0x79] sm:$0xff] %v153
  %219 = vst [vmem:[%s207 + $0x81] sm:$0xff] %v154
  %220 = vst [vmem:[%s207 + $0x91] sm:$0xff] %v155
  %221 = vst [vmem:[%s207 + $0x99] sm:$0xff] %v156
  %222 = vst [vmem:[%s207 + $0xa9] sm:$0xff] %v157
  %223 = vst [vmem:[%s207 + $0xb1] sm:$0xff] %v158
  %224 = vst [vmem:[%s207 + $0xc1] sm:$0xff] %v159
  %225 = vst [vmem:[%s207 + $0xc9] sm:$0xff] %v160
  %226 = vst [vmem:[%s207 + $0xd9] sm:$0xff] %v161
  %227 = vst [vmem:[%s207 + $0xe1] sm:$0xff] %v162
  %228 = vst [vmem:[%s207 + $0xf1] sm:$0xff] %v163
  %229 = vst [vmem:[%s207 + $0xf9] sm:$0xff] %v164
  %230 = vst [vmem:[%s207 + $0x109] sm:$0xff] %v165
  %231 = vst [vmem:[%s207 + $0x111] sm:$0xff] %v166
  %232 = vst [vmem:[%s207 + $0x121] sm:$0xff] %v167
  %233 = vst [vmem:[%s207 + $0x129] sm:$0xff] %v168
  %234 = vst [vmem:[%s207 + $0x139] sm:$0xff] %v169
  %235 = vst [vmem:[%s207 + $0x141] sm:$0xff] %v170
  %236 = vst [vmem:[%s207 + $0x151] sm:$0xff] %v171
  %237 = vst [vmem:[%s207 + $0x159] sm:$0xff] %v172
  %238 = vst [vmem:[%s207 + $0x169] sm:$0xff] %v173
  %239 = vst [vmem:[%s207 + $0x171] sm:$0xff] %v174
  %240 = vst [vmem:[%s207 + $0x1b1] sm:$0xff] %v175
  %241 = vst [vmem:[%s207 + $0x1b9] sm:$0xff] %v176
  %242 = vst [vmem:[%s207 + $0x1c9] sm:$0xff] %v177
  %243 = vst [vmem:[%s207 + $0x1d1] sm:$0xff] %v178
  %244 = vst [vmem:[%s207 + $0x1e1] sm:$0xff] %v179
  %245 = vst [vmem:[%s207 + $0x1e9] sm:$0xff] %v180
  %246 = vst [vmem:[%s207 + $0x1f9] sm:$0xff] %v181
  %247 = vst [vmem:[%s207 + $0x201] sm:$0xff] %v182
  %248 = vst [vmem:[%s207 + $0x211] sm:$0xff] %v183
  %249 = vst [vmem:[%s207 + $0x219] sm:$0xff] %v184
  %250 = vst [vmem:[%s207 + $0x229] sm:$0xff] %v185
  %251 = vst [vmem:[%s207 + $0x231] sm:$0xff] %v186
  %252 = vst [vmem:[%s207 + $0x241] sm:$0xff] %v187
  %253 = vst [vmem:[%s207 + $0x249] sm:$0xff] %v188
  %254 = vst [vmem:[%s207 + $0x259] sm:$0xff] %v189
  %255 = vst [vmem:[%s207 + $0x261] sm:$0xff] %v190
  %256 = vst [vmem:[%s207 + $0x271] sm:$0xff] %v191
  %257 = vst [vmem:[%s207 + $0x279] sm:$0xff] %v192
  %258 = vst [vmem:[%s207 + $0x289] sm:$0xff] %v193
  %259 = vst [vmem:[%s207 + $0x291] sm:$0xff] %v194
  %260 = vst [vmem:[%s207 + $0x2a1] sm:$0xff] %v195
  %261 = vst [vmem:[%s207 + $0x2a9] sm:$0xff] %v196
  %262 = vst [vmem:[%s207 + $0x2b9] sm:$0xff] %v197
  %263 = vst [vmem:[%s207 + $0x2c1] sm:$0xff] %v198
  %264 = vst [vmem:[%s207 + $0x2d1] sm:$0xff] %v199
  %265 = vst [vmem:[%s207 + $0x2d9] sm:$0xff] %v200
  %266 = vst [vmem:[%s207 + $0x2e9] sm:$0xff] %v201
  %267 = vst [vmem:[%s207 + $0x2f1] sm:$0xff] %v202
  %268 = vst [vmem:[%s207 + $0x301] sm:$0xff] %v203
  %269 = vst [vmem:[%s207 + $0x309] sm:$0xff] %v204
  %270 = vst [vmem:[%s207 + $0x319] sm:$0xff] %v205
  %271 = vst [vmem:[%s207 + $0x321] sm:$0xff] %v206
  %v272 = vld [vmem:[#allocation2] sm:$0xff]
  %v273 = vld [vmem:[#allocation2 + $0x8] sm:$0xff]
  %v274 = vld [vmem:[#allocation2 + $0x18] sm:$0xff]
  %v275 = vld [vmem:[#allocation2 + $0x20] sm:$0xff]
  %v276 = vld [vmem:[#allocation2 + $0x30] sm:$0xff]
  %v277 = vld [vmem:[#allocation2 + $0x38] sm:$0xff]
  %v278 = vld [vmem:[#allocation2 + $0x48] sm:$0xff]
  %v279 = vld [vmem:[#allocation2 + $0x50] sm:$0xff]
  %v280 = vld [vmem:[#allocation2 + $0x60] sm:$0xff]
  %v281 = vld [vmem:[#allocation2 + $0x68] sm:$0xff]
  %v282 = vld [vmem:[#allocation2 + $0x78] sm:$0xff]
  %v283 = vld [vmem:[#allocation2 + $0x80] sm:$0xff]
  %v284 = vld [vmem:[#allocation2 + $0x90] sm:$0xff]
  %v285 = vld [vmem:[#allocation2 + $0x98] sm:$0xff]
  %v286 = vld [vmem:[#allocation2 + $0xa8] sm:$0xff]
  %v287 = vld [vmem:[#allocation2 + $0xb0] sm:$0xff]
  %v288 = vld [vmem:[#allocation2 + $0xc0] sm:$0xff]
  %v289 = vld [vmem:[#allocation2 + $0xc8] sm:$0xff]
  %v290 = vld [vmem:[#allocation2 + $0xd8] sm:$0xff]
  %v291 = vld [vmem:[#allocation2 + $0xe0] sm:$0xff]
  %v292 = vld [vmem:[#allocation2 + $0xf0] sm:$0xff]
  %v293 = vld [vmem:[#allocation2 + $0xf8] sm:$0xff]
  %v294 = vld [vmem:[#allocation2 + $0x108] sm:$0xff]
  %v295 = vld [vmem:[#allocation2 + $0x110] sm:$0xff]
  %v296 = vld [vmem:[#allocation2 + $0x120] sm:$0xff]
  %v297 = vld [vmem:[#allocation2 + $0x128] sm:$0xff]
  %v298 = vld [vmem:[#allocation2 + $0x138] sm:$0xff]
  %v299 = vld [vmem:[#allocation2 + $0x140] sm:$0xff]
  %v300 = vld [vmem:[#allocation2 + $0x150] sm:$0xff]
  %v301 = vld [vmem:[#allocation2 + $0x158] sm:$0xff]
  %v302 = vld [vmem:[#allocation2 + $0x168] sm:$0xff]
  %v303 = vld [vmem:[#allocation2 + $0x170] sm:$0xff]
  %v304 = vld [vmem:[#allocation2 + $0x1b0] sm:$0xff]
  %v305 = vld [vmem:[#allocation2 + $0x1b8] sm:$0xff]
  %v306 = vld [vmem:[#allocation2 + $0x1c8] sm:$0xff]
  %v307 = vld [vmem:[#allocation2 + $0x1d0] sm:$0xff]
  %v308 = vld [vmem:[#allocation2 + $0x1e0] sm:$0xff]
  %v309 = vld [vmem:[#allocation2 + $0x1e8] sm:$0xff]
  %v310 = vld [vmem:[#allocation2 + $0x1f8] sm:$0xff]
  %v311 = vld [vmem:[#allocation2 + $0x200] sm:$0xff]
  %v312 = vld [vmem:[#allocation2 + $0x210] sm:$0xff]
  %v313 = vld [vmem:[#allocation2 + $0x218] sm:$0xff]
  %v314 = vld [vmem:[#allocation2 + $0x228] sm:$0xff]
  %v315 = vld [vmem:[#allocation2 + $0x230] sm:$0xff]
  %v316 = vld [vmem:[#allocation2 + $0x240] sm:$0xff]
  %v317 = vld [vmem:[#allocation2 + $0x248] sm:$0xff]
  %v318 = vld [vmem:[#allocation2 + $0x258] sm:$0xff]
  %v319 = vld [vmem:[#allocation2 + $0x260] sm:$0xff]
  %v320 = vld [vmem:[#allocation2 + $0x270] sm:$0xff]
  %v321 = vld [vmem:[#allocation2 + $0x278] sm:$0xff]
  %v322 = vld [vmem:[#allocation2 + $0x288] sm:$0xff]
  %v323 = vld [vmem:[#allocation2 + $0x290] sm:$0xff]
  %v324 = vld [vmem:[#allocation2 + $0x2a0] sm:$0xff]
  %v325 = vld [vmem:[#allocation2 + $0x2a8] sm:$0xff]
  %v326 = vld [vmem:[#allocation2 + $0x2b8] sm:$0xff]
  %v327 = vld [vmem:[#allocation2 + $0x2c0] sm:$0xff]
  %v328 = vld [vmem:[#allocation2 + $0x2d0] sm:$0xff]
  %v329 = vld [vmem:[#allocation2 + $0x2d8] sm:$0xff]
  %v330 = vld [vmem:[#allocation2 + $0x2e8] sm:$0xff]
  %v331 = vld [vmem:[#allocation2 + $0x2f0] sm:$0xff]
  %v332 = vld [vmem:[#allocation2 + $0x300] sm:$0xff]
  %v333 = vld [vmem:[#allocation2 + $0x308] sm:$0xff]
  %v334 = vld [vmem:[#allocation2 + $0x318] sm:$0xff]
  %v335 = vld [vmem:[#allocation2 + $0x320] sm:$0xff]
  %v336 = vld [vmem:[#allocation2 + $0x1] sm:$0xff]
  %v337 = vld [vmem:[#allocation2 + $0x9] sm:$0xff]
  %v338 = vld [vmem:[#allocation2 + $0x19] sm:$0xff]
  %v339 = vld [vmem:[#allocation2 + $0x21] sm:$0xff]
  %v340 = vld [vmem:[#allocation2 + $0x31] sm:$0xff]
  %v341 = vld [vmem:[#allocation2 + $0x39] sm:$0xff]
  %v342 = vld [vmem:[#allocation2 + $0x49] sm:$0xff]
  %v343 = vld [vmem:[#allocation2 + $0x51] sm:$0xff]
  %v344 = vld [vmem:[#allocation2 + $0x61] sm:$0xff]
  %v345 = vld [vmem:[#allocation2 + $0x69] sm:$0xff]
  %v346 = vld [vmem:[#allocation2 + $0x79] sm:$0xff]
  %v347 = vld [vmem:[#allocation2 + $0x81] sm:$0xff]
  %v348 = vld [vmem:[#allocation2 + $0x91] sm:$0xff]
  %v349 = vld [vmem:[#allocation2 + $0x99] sm:$0xff]
  %v350 = vld [vmem:[#allocation2 + $0xa9] sm:$0xff]
  %v351 = vld [vmem:[#allocation2 + $0xb1] sm:$0xff]
  %v352 = vld [vmem:[#allocation2 + $0xc1] sm:$0xff]
  %v353 = vld [vmem:[#allocation2 + $0xc9] sm:$0xff]
  %v354 = vld [vmem:[#allocation2 + $0xd9] sm:$0xff]
  %v355 = vld [vmem:[#allocation2 + $0xe1] sm:$0xff]
  %v356 = vld [vmem:[#allocation2 + $0xf1] sm:$0xff]
  %v357 = vld [vmem:[#allocation2 + $0xf9] sm:$0xff]
  %v358 = vld [vmem:[#allocation2 + $0x109] sm:$0xff]
  %v359 = vld [vmem:[#allocation2 + $0x111] sm:$0xff]
  %v360 = vld [vmem:[#allocation2 + $0x121] sm:$0xff]
  %v361 = vld [vmem:[#allocation2 + $0x129] sm:$0xff]
  %v362 = vld [vmem:[#allocation2 + $0x139] sm:$0xff]
  %v363 = vld [vmem:[#allocation2 + $0x141] sm:$0xff]
  %v364 = vld [vmem:[#allocation2 + $0x151] sm:$0xff]
  %v365 = vld [vmem:[#allocation2 + $0x159] sm:$0xff]
  %v366 = vld [vmem:[#allocation2 + $0x169] sm:$0xff]
  %v367 = vld [vmem:[#allocation2 + $0x171] sm:$0xff]
  %v368 = vld [vmem:[#allocation2 + $0x1b1] sm:$0xff]
  %v369 = vld [vmem:[#allocation2 + $0x1b9] sm:$0xff]
  %v370 = vld [vmem:[#allocation2 + $0x1c9] sm:$0xff]
  %v371 = vld [vmem:[#allocation2 + $0x1d1] sm:$0xff]
  %v372 = vld [vmem:[#allocation2 + $0x1e1] sm:$0xff]
  %v373 = vld [vmem:[#allocation2 + $0x1e9] sm:$0xff]
  %v374 = vld [vmem:[#allocation2 + $0x1f9] sm:$0xff]
  %v375 = vld [vmem:[#allocation2 + $0x201] sm:$0xff]
  %v376 = vld [vmem:[#allocation2 + $0x211] sm:$0xff]
  %v377 = vld [vmem:[#allocation2 + $0x219] sm:$0xff]
  %v378 = vld [vmem:[#allocation2 + $0x229] sm:$0xff]
  %v379 = vld [vmem:[#allocation2 + $0x231] sm:$0xff]
  %v380 = vld [vmem:[#allocation2 + $0x241] sm:$0xff]
  %v381 = vld [vmem:[#allocation2 + $0x249] sm:$0xff]
  %v382 = vld [vmem:[#allocation2 + $0x259] sm:$0xff]
  %v383 = vld [vmem:[#allocation2 + $0x261] sm:$0xff]
  %v384 = vld [vmem:[#allocation2 + $0x271] sm:$0xff]
  %v385 = vld [vmem:[#allocation2 + $0x279] sm:$0xff]
  %v386 = vld [vmem:[#allocation2 + $0x289] sm:$0xff]
  %v387 = vld [vmem:[#allocation2 + $0x291] sm:$0xff]
  %v388 = vld [vmem:[#allocation2 + $0x2a1] sm:$0xff]
  %v389 = vld [vmem:[#allocation2 + $0x2a9] sm:$0xff]
  %v390 = vld [vmem:[#allocation2 + $0x2b9] sm:$0xff]
  %v391 = vld [vmem:[#allocation2 + $0x2c1] sm:$0xff]
  %v392 = vld [vmem:[#allocation2 + $0x2d1] sm:$0xff]
  %v393 = vld [vmem:[#allocation2 + $0x2d9] sm:$0xff]
  %v394 = vld [vmem:[#allocation2 + $0x2e9] sm:$0xff]
  %v395 = vld [vmem:[#allocation2 + $0x2f1] sm:$0xff]
  %v396 = vld [vmem:[#allocation2 + $0x301] sm:$0xff]
  %v397 = vld [vmem:[#allocation2 + $0x309] sm:$0xff]
  %v398 = vld [vmem:[#allocation2 + $0x319] sm:$0xff]
  %v399 = vld [vmem:[#allocation2 + $0x321] sm:$0xff]
  %v400 = vld [vmem:[#allocation2 + $0x2] sm:$0xff]
  %v401 = vld [vmem:[#allocation2 + $0xa] sm:$0xff]
  %v402 = vld [vmem:[#allocation2 + $0x1a] sm:$0xff]
  %v403 = vld [vmem:[#allocation2 + $0x22] sm:$0xff]
  %v404 = vld [vmem:[#allocation2 + $0x32] sm:$0xff]
  %v405 = vld [vmem:[#allocation2 + $0x3a] sm:$0xff]
  %v406 = vld [vmem:[#allocation2 + $0x4a] sm:$0xff]
  %v407 = vld [vmem:[#allocation2 + $0x52] sm:$0xff]
  %v408 = vld [vmem:[#allocation2 + $0x62] sm:$0xff]
  %v409 = vld [vmem:[#allocation2 + $0x6a] sm:$0xff]
  %v410 = vld [vmem:[#allocation2 + $0x7a] sm:$0xff]
  %v411 = vld [vmem:[#allocation2 + $0x82] sm:$0xff]
  %v412 = vld [vmem:[#allocation2 + $0x92] sm:$0xff]
  %v413 = vld [vmem:[#allocation2 + $0x9a] sm:$0xff]
  %v414 = vld [vmem:[#allocation2 + $0xaa] sm:$0xff]
  %v415 = vld [vmem:[#allocation2 + $0xb2] sm:$0xff]
  %v416 = vld [vmem:[#allocation2 + $0xc2] sm:$0xff]
  %v417 = vld [vmem:[#allocation2 + $0xca] sm:$0xff]
  %v418 = vld [vmem:[#allocation2 + $0xda] sm:$0xff]
  %v419 = vld [vmem:[#allocation2 + $0xe2] sm:$0xff]
  %v420 = vld [vmem:[#allocation2 + $0xf2] sm:$0xff]
  %v421 = vld [vmem:[#allocation2 + $0xfa] sm:$0xff]
  %v422 = vld [vmem:[#allocation2 + $0x10a] sm:$0xff]
  %v423 = vld [vmem:[#allocation2 + $0x112] sm:$0xff]
  %v424 = vld [vmem:[#allocation2 + $0x122] sm:$0xff]
  %v425 = vld [vmem:[#allocation2 + $0x12a] sm:$0xff]
  %v426 = vld [vmem:[#allocation2 + $0x13a] sm:$0xff]
  %v427 = vld [vmem:[#allocation2 + $0x142] sm:$0xff]
  %v428 = vld [vmem:[#allocation2 + $0x152] sm:$0xff]
  %v429 = vld [vmem:[#allocation2 + $0x15a] sm:$0xff]
  %v430 = vld [vmem:[#allocation2 + $0x16a] sm:$0xff]
  %v431 = vld [vmem:[#allocation2 + $0x172] sm:$0xff]
  %v432 = vld [vmem:[#allocation2 + $0x1b2] sm:$0xff]
  %v433 = vld [vmem:[#allocation2 + $0x1ba] sm:$0xff]
  %v434 = vld [vmem:[#allocation2 + $0x1ca] sm:$0xff]
  %v435 = vld [vmem:[#allocation2 + $0x1d2] sm:$0xff]
  %v436 = vld [vmem:[#allocation2 + $0x1e2] sm:$0xff]
  %v437 = vld [vmem:[#allocation2 + $0x1ea] sm:$0xff]
  %v438 = vld [vmem:[#allocation2 + $0x1fa] sm:$0xff]
  %v439 = vld [vmem:[#allocation2 + $0x202] sm:$0xff]
  %v440 = vld [vmem:[#allocation2 + $0x212] sm:$0xff]
  %v441 = vld [vmem:[#allocation2 + $0x21a] sm:$0xff]
  %v442 = vld [vmem:[#allocation2 + $0x22a] sm:$0xff]
  %v443 = vld [vmem:[#allocation2 + $0x232] sm:$0xff]
  %v444 = vld [vmem:[#allocation2 + $0x242] sm:$0xff]
  %v445 = vld [vmem:[#allocation2 + $0x24a] sm:$0xff]
  %v446 = vld [vmem:[#allocation2 + $0x25a] sm:$0xff]
  %v447 = vld [vmem:[#allocation2 + $0x262] sm:$0xff]
  %v448 = vld [vmem:[#allocation2 + $0x272] sm:$0xff]
  %v449 = vld [vmem:[#allocation2 + $0x27a] sm:$0xff]
  %v450 = vld [vmem:[#allocation2 + $0x28a] sm:$0xff]
  %v451 = vld [vmem:[#allocation2 + $0x292] sm:$0xff]
  %v452 = vld [vmem:[#allocation2 + $0x2a2] sm:$0xff]
  %v453 = vld [vmem:[#allocation2 + $0x2aa] sm:$0xff]
  %v454 = vld [vmem:[#allocation2 + $0x2ba] sm:$0xff]
  %v455 = vld [vmem:[#allocation2 + $0x2c2] sm:$0xff]
  %v456 = vld [vmem:[#allocation2 + $0x2d2] sm:$0xff]
  %v457 = vld [vmem:[#allocation2 + $0x2da] sm:$0xff]
  %v458 = vld [vmem:[#allocation2 + $0x2ea] sm:$0xff]
  %v459 = vld [vmem:[#allocation2 + $0x2f2] sm:$0xff]
  %v460 = vld [vmem:[#allocation2 + $0x302] sm:$0xff]
  %v461 = vld [vmem:[#allocation2 + $0x30a] sm:$0xff]
  %v462 = vld [vmem:[#allocation2 + $0x31a] sm:$0xff]
  %v463 = vld [vmem:[#allocation2 + $0x322] sm:$0xff]
  %v464 = vld [vmem:[%s207] sm:$0xff]
  %v465 = vld [vmem:[%s207 + $0x8] sm:$0xff]
  %v466 = vld [vmem:[%s207 + $0x18] sm:$0xff]
  %v467 = vld [vmem:[%s207 + $0x20] sm:$0xff]
  %v468 = vld [vmem:[%s207 + $0x30] sm:$0xff]
  %v469 = vld [vmem:[%s207 + $0x38] sm:$0xff]
  %v470 = vld [vmem:[%s207 + $0x48] sm:$0xff]
  %v471 = vld [vmem:[%s207 + $0x50] sm:$0xff]
  %v472 = vld [vmem:[%s207 + $0x60] sm:$0xff]
  %v473 = vld [vmem:[%s207 + $0x68] sm:$0xff]
  %v474 = vld [vmem:[%s207 + $0x78] sm:$0xff]
  %v475 = vld [vmem:[%s207 + $0x80] sm:$0xff]
  %v476 = vld [vmem:[%s207 + $0x90] sm:$0xff]
  %v477 = vld [vmem:[%s207 + $0x98] sm:$0xff]
  %v478 = vld [vmem:[%s207 + $0xa8] sm:$0xff]
  %v479 = vld [vmem:[%s207 + $0xb0] sm:$0xff]
  %v480 = vld [vmem:[%s207 + $0xc0] sm:$0xff]
  %v481 = vld [vmem:[%s207 + $0xc8] sm:$0xff]
  %v482 = vld [vmem:[%s207 + $0xd8] sm:$0xff]
  %v483 = vld [vmem:[%s207 + $0xe0] sm:$0xff]
  %v484 = vld [vmem:[%s207 + $0xf0] sm:$0xff]
  %v485 = vld [vmem:[%s207 + $0xf8] sm:$0xff]
  %v486 = vld [vmem:[%s207 + $0x108] sm:$0xff]
  %v487 = vld [vmem:[%s207 + $0x110] sm:$0xff]
  %v488 = vld [vmem:[%s207 + $0x120] sm:$0xff]
  %v489 = vld [vmem:[%s207 + $0x128] sm:$0xff]
  %v490 = vld [vmem:[%s207 + $0x138] sm:$0xff]
  %v491 = vld [vmem:[%s207 + $0x140] sm:$0xff]
  %v492 = vld [vmem:[%s207 + $0x150] sm:$0xff]
  %v493 = vld [vmem:[%s207 + $0x158] sm:$0xff]
  %v494 = vld [vmem:[%s207 + $0x168] sm:$0xff]
  %v495 = vld [vmem:[%s207 + $0x170] sm:$0xff]
  %v496 = vld [vmem:[%s207 + $0x1b0] sm:$0xff]
  %v497 = vld [vmem:[%s207 + $0x1b8] sm:$0xff]
  %v498 = vld [vmem:[%s207 + $0x1c8] sm:$0xff]
  %v499 = vld [vmem:[%s207 + $0x1d0] sm:$0xff]
  %v500 = vld [vmem:[%s207 + $0x1e0] sm:$0xff]
  %v501 = vld [vmem:[%s207 + $0x1e8] sm:$0xff]
  %v502 = vld [vmem:[%s207 + $0x1f8] sm:$0xff]
  %v503 = vld [vmem:[%s207 + $0x200] sm:$0xff]
  %v504 = vld [vmem:[%s207 + $0x210] sm:$0xff]
  %v505 = vld [vmem:[%s207 + $0x218] sm:$0xff]
  %v506 = vld [vmem:[%s207 + $0x228] sm:$0xff]
  %v507 = vld [vmem:[%s207 + $0x230] sm:$0xff]
  %v508 = vld [vmem:[%s207 + $0x240] sm:$0xff]
  %v509 = vld [vmem:[%s207 + $0x248] sm:$0xff]
  %v510 = vld [vmem:[%s207 + $0x258] sm:$0xff]
  %v511 = vld [vmem:[%s207 + $0x260] sm:$0xff]
  %v512 = vld [vmem:[%s207 + $0x270] sm:$0xff]
  %v513 = vld [vmem:[%s207 + $0x278] sm:$0xff]
  %v514 = vld [vmem:[%s207 + $0x288] sm:$0xff]
  %v515 = vld [vmem:[%s207 + $0x290] sm:$0xff]
  %v516 = vld [vmem:[%s207 + $0x2a0] sm:$0xff]
  %v517 = vld [vmem:[%s207 + $0x2a8] sm:$0xff]
  %v518 = vld [vmem:[%s207 + $0x2b8] sm:$0xff]
  %v519 = vld [vmem:[%s207 + $0x2c0] sm:$0xff]
  %v520 = vld [vmem:[%s207 + $0x2d0] sm:$0xff]
  %v521 = vld [vmem:[%s207 + $0x2d8] sm:$0xff]
  %v522 = vld [vmem:[%s207 + $0x2e8] sm:$0xff]
  %v523 = vld [vmem:[%s207 + $0x2f0] sm:$0xff]
  %v524 = vld [vmem:[%s207 + $0x300] sm:$0xff]
  %v525 = vld [vmem:[%s207 + $0x308] sm:$0xff]
  %v526 = vld [vmem:[%s207 + $0x318] sm:$0xff]
  %v527 = vld [vmem:[%s207 + $0x320] sm:$0xff]
  %v528 = vld [vmem:[%s207 + $0x1] sm:$0xff]
  %v529 = vld [vmem:[%s207 + $0x9] sm:$0xff]
  %v530 = vld [vmem:[%s207 + $0x19] sm:$0xff]
  %v531 = vld [vmem:[%s207 + $0x21] sm:$0xff]
  %v532 = vld [vmem:[%s207 + $0x31] sm:$0xff]
  %v533 = vld [vmem:[%s207 + $0x39] sm:$0xff]
  %v534 = vld [vmem:[%s207 + $0x49] sm:$0xff]
  %v535 = vld [vmem:[%s207 + $0x51] sm:$0xff]
  %v536 = vld [vmem:[%s207 + $0x61] sm:$0xff]
  %v537 = vld [vmem:[%s207 + $0x69] sm:$0xff]
  %v538 = vld [vmem:[%s207 + $0x79] sm:$0xff]
  %v539 = vld [vmem:[%s207 + $0x81] sm:$0xff]
  %v540 = vld [vmem:[%s207 + $0x91] sm:$0xff]
  %v541 = vld [vmem:[%s207 + $0x99] sm:$0xff]
  %v542 = vld [vmem:[%s207 + $0xa9] sm:$0xff]
  %v543 = vld [vmem:[%s207 + $0xb1] sm:$0xff]
  %v544 = vld [vmem:[%s207 + $0xc1] sm:$0xff]
  %v545 = vld [vmem:[%s207 + $0xc9] sm:$0xff]
  %v546 = vld [vmem:[%s207 + $0xd9] sm:$0xff]
  %v547 = vld [vmem:[%s207 + $0xe1] sm:$0xff]
  %v548 = vld [vmem:[%s207 + $0xf1] sm:$0xff]
  %v549 = vld [vmem:[%s207 + $0xf9] sm:$0xff]
  %v550 = vld [vmem:[%s207 + $0x109] sm:$0xff]
  %v551 = vld [vmem:[%s207 + $0x111] sm:$0xff]
  %v552 = vld [vmem:[%s207 + $0x121] sm:$0xff]
  %v553 = vld [vmem:[%s207 + $0x129] sm:$0xff]
  %v554 = vld [vmem:[%s207 + $0x139] sm:$0xff]
  %v555 = vld [vmem:[%s207 + $0x141] sm:$0xff]
  %v556 = vld [vmem:[%s207 + $0x151] sm:$0xff]
  %v557 = vld [vmem:[%s207 + $0x159] sm:$0xff]
  %v558 = vld [vmem:[%s207 + $0x169] sm:$0xff]
  %v559 = vld [vmem:[%s207 + $0x171] sm:$0xff]
  %v560 = vld [vmem:[%s207 + $0x1b1] sm:$0xff]
  %v561 = vld [vmem:[%s207 + $0x1b9] sm:$0xff]
  %v562 = vld [vmem:[%s207 + $0x1c9] sm:$0xff]
  %v563 = vld [vmem:[%s207 + $0x1d1] sm:$0xff]
  %v564 = vld [vmem:[%s207 + $0x1e1] sm:$0xff]
  %v565 = vld [vmem:[%s207 + $0x1e9] sm:$0xff]
  %v566 = vld [vmem:[%s207 + $0x1f9] sm:$0xff]
  %v567 = vld [vmem:[%s207 + $0x201] sm:$0xff]
  %v568 = vld [vmem:[%s207 + $0x211] sm:$0xff]
  %v569 = vld [vmem:[%s207 + $0x219] sm:$0xff]
  %v570 = vld [vmem:[%s207 + $0x229] sm:$0xff]
  %v571 = vld [vmem:[%s207 + $0x231] sm:$0xff]
  %v572 = vld [vmem:[%s207 + $0x241] sm:$0xff]
  %v573 = vld [vmem:[%s207 + $0x249] sm:$0xff]
  %v574 = vld [vmem:[%s207 + $0x259] sm:$0xff]
  %v575 = vld [vmem:[%s207 + $0x261] sm:$0xff]
  %v576 = vld [vmem:[%s207 + $0x271] sm:$0xff]
  %v577 = vld [vmem:[%s207 + $0x279] sm:$0xff]
  %v578 = vld [vmem:[%s207 + $0x289] sm:$0xff]
  %v579 = vld [vmem:[%s207 + $0x291] sm:$0xff]
  %v580 = vld [vmem:[%s207 + $0x2a1] sm:$0xff]
  %v581 = vld [vmem:[%s207 + $0x2a9] sm:$0xff]
  %v582 = vld [vmem:[%s207 + $0x2b9] sm:$0xff]
  %v583 = vld [vmem:[%s207 + $0x2c1] sm:$0xff]
  %v584 = vld [vmem:[%s207 + $0x2d1] sm:$0xff]
  %v585 = vld [vmem:[%s207 + $0x2d9] sm:$0xff]
  %v586 = vld [vmem:[%s207 + $0x2e9] sm:$0xff]
  %v587 = vld [vmem:[%s207 + $0x2f1] sm:$0xff]
  %v588 = vld [vmem:[%s207 + $0x301] sm:$0xff]
  %v589 = vld [vmem:[%s207 + $0x309] sm:$0xff]
  %v590 = vld [vmem:[%s207 + $0x319] sm:$0xff]
  %v591 = vld [vmem:[%s207 + $0x321] sm:$0xff]
  %v592 = vld [vmem:[%s207 + $0x2] sm:$0xff]
  %v593 = vld [vmem:[%s207 + $0xa] sm:$0xff]
  %v594 = vld [vmem:[%s207 + $0x1a] sm:$0xff]
  %v595 = vld [vmem:[%s207 + $0x22] sm:$0xff]
  %v596 = vld [vmem:[%s207 + $0x32] sm:$0xff]
  %v597 = vld [vmem:[%s207 + $0x3a] sm:$0xff]
  %v598 = vld [vmem:[%s207 + $0x4a] sm:$0xff]
  %v599 = vld [vmem:[%s207 + $0x52] sm:$0xff]
  %v600 = vld [vmem:[%s207 + $0x62] sm:$0xff]
  %v601 = vld [vmem:[%s207 + $0x6a] sm:$0xff]
  %v602 = vld [vmem:[%s207 + $0x7a] sm:$0xff]
  %v603 = vld [vmem:[%s207 + $0x82] sm:$0xff]
  %v604 = vld [vmem:[%s207 + $0x92] sm:$0xff]
  %v605 = vld [vmem:[%s207 + $0x9a] sm:$0xff]
  %v606 = vld [vmem:[%s207 + $0xaa] sm:$0xff]
  %v607 = vld [vmem:[%s207 + $0xb2] sm:$0xff]
  %v608 = vld [vmem:[%s207 + $0xc2] sm:$0xff]
  %v609 = vld [vmem:[%s207 + $0xca] sm:$0xff]
  %v610 = vld [vmem:[%s207 + $0xda] sm:$0xff]
  %v611 = vld [vmem:[%s207 + $0xe2] sm:$0xff]
  %v612 = vld [vmem:[%s207 + $0xf2] sm:$0xff]
  %v613 = vld [vmem:[%s207 + $0xfa] sm:$0xff]
  %v614 = vld [vmem:[%s207 + $0x10a] sm:$0xff]
  %v615 = vld [vmem:[%s207 + $0x112] sm:$0xff]
  %v616 = vld [vmem:[%s207 + $0x122] sm:$0xff]
  %v617 = vld [vmem:[%s207 + $0x12a] sm:$0xff]
  %v618 = vld [vmem:[%s207 + $0x13a] sm:$0xff]
  %v619 = vld [vmem:[%s207 + $0x142] sm:$0xff]
  %v620 = vld [vmem:[%s207 + $0x152] sm:$0xff]
  %v621 = vld [vmem:[%s207 + $0x15a] sm:$0xff]
  %v622 = vld [vmem:[%s207 + $0x16a] sm:$0xff]
  %v623 = vld [vmem:[%s207 + $0x172] sm:$0xff]
  %v624 = vld [vmem:[%s207 + $0x1b2] sm:$0xff]
  %v625 = vld [vmem:[%s207 + $0x1ba] sm:$0xff]
  %v626 = vld [vmem:[%s207 + $0x1ca] sm:$0xff]
  %v627 = vld [vmem:[%s207 + $0x1d2] sm:$0xff]
  %v628 = vld [vmem:[%s207 + $0x1e2] sm:$0xff]
  %v629 = vld [vmem:[%s207 + $0x1ea] sm:$0xff]
  %v630 = vld [vmem:[%s207 + $0x1fa] sm:$0xff]
  %v631 = vld [vmem:[%s207 + $0x202] sm:$0xff]
  %v632 = vld [vmem:[%s207 + $0x212] sm:$0xff]
  %v633 = vld [vmem:[%s207 + $0x21a] sm:$0xff]
  %v634 = vld [vmem:[%s207 + $0x22a] sm:$0xff]
  %v635 = vld [vmem:[%s207 + $0x232] sm:$0xff]
  %v636 = vld [vmem:[%s207 + $0x242] sm:$0xff]
  %v637 = vld [vmem:[%s207 + $0x24a] sm:$0xff]
  %v638 = vld [vmem:[%s207 + $0x25a] sm:$0xff]
  %v639 = vld [vmem:[%s207 + $0x262] sm:$0xff]
  %v640 = vld [vmem:[%s207 + $0x272] sm:$0xff]
  %v641 = vld [vmem:[%s207 + $0x27a] sm:$0xff]
  %v642 = vld [vmem:[%s207 + $0x28a] sm:$0xff]
  %v643 = vld [vmem:[%s207 + $0x292] sm:$0xff]
  %v644 = vld [vmem:[%s207 + $0x2a2] sm:$0xff]
  %v645 = vld [vmem:[%s207 + $0x2aa] sm:$0xff]
  %v646 = vld [vmem:[%s207 + $0x2ba] sm:$0xff]
  %v647 = vld [vmem:[%s207 + $0x2c2] sm:$0xff]
  %v648 = vld [vmem:[%s207 + $0x2d2] sm:$0xff]
  %v649 = vld [vmem:[%s207 + $0x2da] sm:$0xff]
  %v650 = vld [vmem:[%s207 + $0x2ea] sm:$0xff]
  %v651 = vld [vmem:[%s207 + $0x2f2] sm:$0xff]
  %v652 = vld [vmem:[%s207 + $0x302] sm:$0xff]
  %v653 = vld [vmem:[%s207 + $0x30a] sm:$0xff]
  %v654 = vld [vmem:[%s207 + $0x31a] sm:$0xff]
  %v655 = vld [vmem:[%s207 + $0x322] sm:$0xff]
  %s656 = scalar_lea.vmem [#allocation2], 48
  %v657 = vld [vmem:[%s656] sm:$0xff]
  %v658 = vld [vmem:[%s656 + $0x8] sm:$0xff]
  %v659 = vld [vmem:[%s656 + $0x18] sm:$0xff]
  %v660 = vld [vmem:[%s656 + $0x20] sm:$0xff]
  %v661 = vld [vmem:[%s656 + $0x30] sm:$0xff]
  %v662 = vld [vmem:[%s656 + $0x38] sm:$0xff]
  %v663 = vld [vmem:[%s656 + $0x48] sm:$0xff]
  %v664 = vld [vmem:[%s656 + $0x50] sm:$0xff]
  %v665 = vld [vmem:[%s656 + $0x60] sm:$0xff]
  %v666 = vld [vmem:[%s656 + $0x68] sm:$0xff]
  %v667 = vld [vmem:[%s656 + $0x78] sm:$0xff]
  %v668 = vld [vmem:[%s656 + $0x80] sm:$0xff]
  %v669 = vld [vmem:[%s656 + $0x90] sm:$0xff]
  %v670 = vld [vmem:[%s656 + $0x98] sm:$0xff]
  %v671 = vld [vmem:[%s656 + $0xa8] sm:$0xff]
  %v672 = vld [vmem:[%s656 + $0xb0] sm:$0xff]
  %v673 = vld [vmem:[%s656 + $0xc0] sm:$0xff]
  %v674 = vld [vmem:[%s656 + $0xc8] sm:$0xff]
  %v675 = vld [vmem:[%s656 + $0xd8] sm:$0xff]
  %v676 = vld [vmem:[%s656 + $0xe0] sm:$0xff]
  %v677 = vld [vmem:[%s656 + $0xf0] sm:$0xff]
  %v678 = vld [vmem:[%s656 + $0xf8] sm:$0xff]
  %v679 = vld [vmem:[%s656 + $0x108] sm:$0xff]
  %v680 = vld [vmem:[%s656 + $0x110] sm:$0xff]
  %v681 = vld [vmem:[%s656 + $0x120] sm:$0xff]
  %v682 = vld [vmem:[%s656 + $0x128] sm:$0xff]
  %v683 = vld [vmem:[%s656 + $0x138] sm:$0xff]
  %v684 = vld [vmem:[%s656 + $0x140] sm:$0xff]
  %v685 = vld [vmem:[%s656 + $0x150] sm:$0xff]
  %v686 = vld [vmem:[%s656 + $0x158] sm:$0xff]
  %v687 = vld [vmem:[%s656 + $0x168] sm:$0xff]
  %v688 = vld [vmem:[%s656 + $0x170] sm:$0xff]
  %v689 = vld [vmem:[%s656 + $0x1b0] sm:$0xff]
  %v690 = vld [vmem:[%s656 + $0x1b8] sm:$0xff]
  %v691 = vld [vmem:[%s656 + $0x1c8] sm:$0xff]
  %v692 = vld [vmem:[%s656 + $0x1d0] sm:$0xff]
  %v693 = vld [vmem:[%s656 + $0x1e0] sm:$0xff]
  %v694 = vld [vmem:[%s656 + $0x1e8] sm:$0xff]
  %v695 = vld [vmem:[%s656 + $0x1f8] sm:$0xff]
  %v696 = vld [vmem:[%s656 + $0x200] sm:$0xff]
  %v697 = vld [vmem:[%s656 + $0x210] sm:$0xff]
  %v698 = vld [vmem:[%s656 + $0x218] sm:$0xff]
  %v699 = vld [vmem:[%s656 + $0x228] sm:$0xff]
  %v700 = vld [vmem:[%s656 + $0x230] sm:$0xff]
  %v701 = vld [vmem:[%s656 + $0x240] sm:$0xff]
  %v702 = vld [vmem:[%s656 + $0x248] sm:$0xff]
  %v703 = vld [vmem:[%s656 + $0x258] sm:$0xff]
  %v704 = vld [vmem:[%s656 + $0x260] sm:$0xff]
  %v705 = vld [vmem:[%s656 + $0x270] sm:$0xff]
  %v706 = vld [vmem:[%s656 + $0x278] sm:$0xff]
  %v707 = vld [vmem:[%s656 + $0x288] sm:$0xff]
  %v708 = vld [vmem:[%s656 + $0x290] sm:$0xff]
  %v709 = vld [vmem:[%s656 + $0x2a0] sm:$0xff]
  %v710 = vld [vmem:[%s656 + $0x2a8] sm:$0xff]
  %v711 = vld [vmem:[%s656 + $0x2b8] sm:$0xff]
  %v712 = vld [vmem:[%s656 + $0x2c0] sm:$0xff]
  %v713 = vld [vmem:[%s656 + $0x2d0] sm:$0xff]
  %v714 = vld [vmem:[%s656 + $0x2d8] sm:$0xff]
  %v715 = vld [vmem:[%s656 + $0x2e8] sm:$0xff]
  %v716 = vld [vmem:[%s656 + $0x2f0] sm:$0xff]
  %v717 = vld [vmem:[%s656 + $0x300] sm:$0xff]
  %v718 = vld [vmem:[%s656 + $0x308] sm:$0xff]
  %v719 = vld [vmem:[%s656 + $0x318] sm:$0xff]
  %v720 = vld [vmem:[%s656 + $0x320] sm:$0xff]
  %v721 = vld [vmem:[%s656 + $0x1] sm:$0xff]
  %v722 = vld [vmem:[%s656 + $0x9] sm:$0xff]
  %v723 = vld [vmem:[%s656 + $0x19] sm:$0xff]
  %v724 = vld [vmem:[%s656 + $0x21] sm:$0xff]
  %v725 = vld [vmem:[%s656 + $0x31] sm:$0xff]
  %v726 = vld [vmem:[%s656 + $0x39] sm:$0xff]
  %v727 = vld [vmem:[%s656 + $0x49] sm:$0xff]
  %v728 = vld [vmem:[%s656 + $0x51] sm:$0xff]
  %v729 = vld [vmem:[%s656 + $0x61] sm:$0xff]
  %v730 = vld [vmem:[%s656 + $0x69] sm:$0xff]
  %v731 = vld [vmem:[%s656 + $0x79] sm:$0xff]
  %v732 = vld [vmem:[%s656 + $0x81] sm:$0xff]
  %v733 = vld [vmem:[%s656 + $0x91] sm:$0xff]
  %v734 = vld [vmem:[%s656 + $0x99] sm:$0xff]
  %v735 = vld [vmem:[%s656 + $0xa9] sm:$0xff]
  %v736 = vld [vmem:[%s656 + $0xb1] sm:$0xff]
  %v737 = vld [vmem:[%s656 + $0xc1] sm:$0xff]
  %v738 = vld [vmem:[%s656 + $0xc9] sm:$0xff]
  %v739 = vld [vmem:[%s656 + $0xd9] sm:$0xff]
  %v740 = vld [vmem:[%s656 + $0xe1] sm:$0xff]
  %v741 = vld [vmem:[%s656 + $0xf1] sm:$0xff]
  %v742 = vld [vmem:[%s656 + $0xf9] sm:$0xff]
  %v743 = vld [vmem:[%s656 + $0x109] sm:$0xff]
  %v744 = vld [vmem:[%s656 + $0x111] sm:$0xff]
  %v745 = vld [vmem:[%s656 + $0x121] sm:$0xff]
  %v746 = vld [vmem:[%s656 + $0x129] sm:$0xff]
  %v747 = vld [vmem:[%s656 + $0x139] sm:$0xff]
  %v748 = vld [vmem:[%s656 + $0x141] sm:$0xff]
  %v749 = vld [vmem:[%s656 + $0x151] sm:$0xff]
  %v750 = vld [vmem:[%s656 + $0x159] sm:$0xff]
  %v751 = vld [vmem:[%s656 + $0x169] sm:$0xff]
  %v752 = vld [vmem:[%s656 + $0x171] sm:$0xff]
  %v753 = vld [vmem:[%s656 + $0x1b1] sm:$0xff]
  %v754 = vld [vmem:[%s656 + $0x1b9] sm:$0xff]
  %v755 = vld [vmem:[%s656 + $0x1c9] sm:$0xff]
  %v756 = vld [vmem:[%s656 + $0x1d1] sm:$0xff]
  %v757 = vld [vmem:[%s656 + $0x1e1] sm:$0xff]
  %v758 = vld [vmem:[%s656 + $0x1e9] sm:$0xff]
  %v759 = vld [vmem:[%s656 + $0x1f9] sm:$0xff]
  %v760 = vld [vmem:[%s656 + $0x201] sm:$0xff]
  %v761 = vld [vmem:[%s656 + $0x211] sm:$0xff]
  %v762 = vld [vmem:[%s656 + $0x219] sm:$0xff]
  %v763 = vld [vmem:[%s656 + $0x229] sm:$0xff]
  %v764 = vld [vmem:[%s656 + $0x231] sm:$0xff]
  %v765 = vld [vmem:[%s656 + $0x241] sm:$0xff]
  %v766 = vld [vmem:[%s656 + $0x249] sm:$0xff]
  %v767 = vld [vmem:[%s656 + $0x259] sm:$0xff]
  %v768 = vld [vmem:[%s656 + $0x261] sm:$0xff]
  %v769 = vld [vmem:[%s656 + $0x271] sm:$0xff]
  %v770 = vld [vmem:[%s656 + $0x279] sm:$0xff]
  %v771 = vld [vmem:[%s656 + $0x289] sm:$0xff]
  %v772 = vld [vmem:[%s656 + $0x291] sm:$0xff]
  %v773 = vld [vmem:[%s656 + $0x2a1] sm:$0xff]
  %v774 = vld [vmem:[%s656 + $0x2a9] sm:$0xff]
  %v775 = vld [vmem:[%s656 + $0x2b9] sm:$0xff]
  %v776 = vld [vmem:[%s656 + $0x2c1] sm:$0xff]
  %v777 = vld [vmem:[%s656 + $0x2d1] sm:$0xff]
  %v778 = vld [vmem:[%s656 + $0x2d9] sm:$0xff]
  %v779 = vld [vmem:[%s656 + $0x2e9] sm:$0xff]
  %v780 = vld [vmem:[%s656 + $0x2f1] sm:$0xff]
  %v781 = vld [vmem:[%s656 + $0x301] sm:$0xff]
  %v782 = vld [vmem:[%s656 + $0x309] sm:$0xff]
  %v783 = vld [vmem:[%s656 + $0x319] sm:$0xff]
  %v784 = vld [vmem:[%s656 + $0x321] sm:$0xff]
  %v785 = vld [vmem:[%s656 + $0x2] sm:$0xff]
  %v786 = vld [vmem:[%s656 + $0xa] sm:$0xff]
  %v787 = vld [vmem:[%s656 + $0x1a] sm:$0xff]
  %v788 = vld [vmem:[%s656 + $0x22] sm:$0xff]
  %v789 = vld [vmem:[%s656 + $0x32] sm:$0xff]
  %v790 = vld [vmem:[%s656 + $0x3a] sm:$0xff]
  %v791 = vld [vmem:[%s656 + $0x4a] sm:$0xff]
  %v792 = vld [vmem:[%s656 + $0x52] sm:$0xff]
  %v793 = vld [vmem:[%s656 + $0x62] sm:$0xff]
  %v794 = vld [vmem:[%s656 + $0x6a] sm:$0xff]
  %v795 = vld [vmem:[%s656 + $0x7a] sm:$0xff]
  %v796 = vld [vmem:[%s656 + $0x82] sm:$0xff]
  %v797 = vld [vmem:[%s656 + $0x92] sm:$0xff]
  %v798 = vld [vmem:[%s656 + $0x9a] sm:$0xff]
  %v799 = vld [vmem:[%s656 + $0xaa] sm:$0xff]
  %v800 = vld [vmem:[%s656 + $0xb2] sm:$0xff]
  %v801 = vld [vmem:[%s656 + $0xc2] sm:$0xff]
  %v802 = vld [vmem:[%s656 + $0xca] sm:$0xff]
  %v803 = vld [vmem:[%s656 + $0xda] sm:$0xff]
  %v804 = vld [vmem:[%s656 + $0xe2] sm:$0xff]
  %v805 = vld [vmem:[%s656 + $0xf2] sm:$0xff]
  %v806 = vld [vmem:[%s656 + $0xfa] sm:$0xff]
  %v807 = vld [vmem:[%s656 + $0x10a] sm:$0xff]
  %v808 = vld [vmem:[%s656 + $0x112] sm:$0xff]
  %v809 = vld [vmem:[%s656 + $0x122] sm:$0xff]
  %v810 = vld [vmem:[%s656 + $0x12a] sm:$0xff]
  %v811 = vld [vmem:[%s656 + $0x13a] sm:$0xff]
  %v812 = vld [vmem:[%s656 + $0x142] sm:$0xff]
  %v813 = vld [vmem:[%s656 + $0x152] sm:$0xff]
  %v814 = vld [vmem:[%s656 + $0x15a] sm:$0xff]
  %v815 = vld [vmem:[%s656 + $0x16a] sm:$0xff]
  %v816 = vld [vmem:[%s656 + $0x172] sm:$0xff]
  %v817 = vld [vmem:[%s656 + $0x1b2] sm:$0xff]
  %v818 = vld [vmem:[%s656 + $0x1ba] sm:$0xff]
  %v819 = vld [vmem:[%s656 + $0x1ca] sm:$0xff]
  %v820 = vld [vmem:[%s656 + $0x1d2] sm:$0xff]
  %v821 = vld [vmem:[%s656 + $0x1e2] sm:$0xff]
  %v822 = vld [vmem:[%s656 + $0x1ea] sm:$0xff]
  %v823 = vld [vmem:[%s656 + $0x1fa] sm:$0xff]
  %v824 = vld [vmem:[%s656 + $0x202] sm:$0xff]
  %v825 = vld [vmem:[%s656 + $0x212] sm:$0xff]
  %v826 = vld [vmem:[%s656 + $0x21a] sm:$0xff]
  %v827 = vld [vmem:[%s656 + $0x22a] sm:$0xff]
  %v828 = vld [vmem:[%s656 + $0x232] sm:$0xff]
  %v829 = vld [vmem:[%s656 + $0x242] sm:$0xff]
  %v830 = vld [vmem:[%s656 + $0x24a] sm:$0xff]
  %v831 = vld [vmem:[%s656 + $0x25a] sm:$0xff]
  %v832 = vld [vmem:[%s656 + $0x262] sm:$0xff]
  %v833 = vld [vmem:[%s656 + $0x272] sm:$0xff]
  %v834 = vld [vmem:[%s656 + $0x27a] sm:$0xff]
  %v835 = vld [vmem:[%s656 + $0x28a] sm:$0xff]
  %v836 = vld [vmem:[%s656 + $0x292] sm:$0xff]
  %v837 = vld [vmem:[%s656 + $0x2a2] sm:$0xff]
  %v838 = vld [vmem:[%s656 + $0x2aa] sm:$0xff]
  %v839 = vld [vmem:[%s656 + $0x2ba] sm:$0xff]
  %v840 = vld [vmem:[%s656 + $0x2c2] sm:$0xff]
  %v841 = vld [vmem:[%s656 + $0x2d2] sm:$0xff]
  %v842 = vld [vmem:[%s656 + $0x2da] sm:$0xff]
  %v843 = vld [vmem:[%s656 + $0x2ea] sm:$0xff]
  %v844 = vld [vmem:[%s656 + $0x2f2] sm:$0xff]
  %v845 = vld [vmem:[%s656 + $0x302] sm:$0xff]
  %v846 = vld [vmem:[%s656 + $0x30a] sm:$0xff]
  %v847 = vld [vmem:[%s656 + $0x31a] sm:$0xff]
  %v848 = vld [vmem:[%s656 + $0x322] sm:$0xff]
  %v849 = vld [vmem:[%s1] sm:$0xff]
  %v850 = vld [vmem:[%s1 + $0x8] sm:$0xff]
  %v851 = vld [vmem:[%s1 + $0x10] sm:$0xff]
  %v852 = vld [vmem:[%s1 + $0x18] sm:$0xff]
  %v853 = vld [vmem:[%s1 + $0x20] sm:$0xff]
  %v854 = vld [vmem:[%s1 + $0x28] sm:$0xff]
  %v855 = vld [vmem:[%s1 + $0x30] sm:$0xff]
  %v856 = vld [vmem:[%s1 + $0x38] sm:$0xff]
  %v857 = vld [vmem:[%s1 + $0x40] sm:$0xff]
  %v858 = vld [vmem:[%s1 + $0x48] sm:$0xff]
  %v859 = vld [vmem:[%s1 + $0x50] sm:$0xff]
  %v860 = vld [vmem:[%s1 + $0x58] sm:$0xff]
  %v861 = vld [vmem:[%s1 + $0x60] sm:$0xff]
  %v862 = vld [vmem:[%s1 + $0x68] sm:$0xff]
  %v863 = vld [vmem:[%s1 + $0x70] sm:$0xff]
  %v864 = vld [vmem:[%s1 + $0x78] sm:$0xff]
  %v865 = vld [vmem:[%s1 + $0x80] sm:$0xff]
  %v866 = vld [vmem:[%s1 + $0x88] sm:$0xff]
  %v867 = vld [vmem:[%s1 + $0x90] sm:$0xff]
  %v868 = vld [vmem:[%s1 + $0x98] sm:$0xff]
  %v869 = vld [vmem:[%s1 + $0xa0] sm:$0xff]
  %v870 = vld [vmem:[%s1 + $0xa8] sm:$0xff]
  %v871 = vld [vmem:[%s1 + $0xb0] sm:$0xff]
  %v872 = vld [vmem:[%s1 + $0xb8] sm:$0xff]
  %v873 = vld [vmem:[%s1 + $0xc0] sm:$0xff]
  %v874 = vld [vmem:[%s1 + $0xc8] sm:$0xff]
  %v875 = vld [vmem:[%s1 + $0xd0] sm:$0xff]
  %v876 = vld [vmem:[%s1 + $0xd8] sm:$0xff]
  %v877 = vld [vmem:[%s1 + $0xe0] sm:$0xff]
  %v878 = vld [vmem:[%s1 + $0xe8] sm:$0xff]
  %v879 = vld [vmem:[%s1 + $0xf0] sm:$0xff]
  %v880 = vld [vmem:[%s1 + $0xf8] sm:$0xff]
  %v881 = vld [vmem:[%s1 + $0x100] sm:$0xff]
  %v882 = vld [vmem:[%s1 + $0x108] sm:$0xff]
  %v883 = vld [vmem:[%s1 + $0x110] sm:$0xff]
  %v884 = vld [vmem:[%s1 + $0x118] sm:$0xff]
  %v885 = vld [vmem:[%s1 + $0x120] sm:$0xff]
  %v886 = vld [vmem:[%s1 + $0x128] sm:$0xff]
  %v887 = vld [vmem:[%s1 + $0x130] sm:$0xff]
  %v888 = vld [vmem:[%s1 + $0x138] sm:$0xff]
  %v889 = vld [vmem:[%s1 + $0x140] sm:$0xff]
  %v890 = vld [vmem:[%s1 + $0x148] sm:$0xff]
  %v891 = vld [vmem:[%s1 + $0x150] sm:$0xff]
  %v892 = vld [vmem:[%s1 + $0x158] sm:$0xff]
  %v893 = vld [vmem:[%s1 + $0x160] sm:$0xff]
  %v894 = vld [vmem:[%s1 + $0x168] sm:$0xff]
  %v895 = vld [vmem:[%s1 + $0x170] sm:$0xff]
  %v896 = vld [vmem:[%s1 + $0x178] sm:$0xff]
  %v897 = vld [vmem:[%s1 + $0x180] sm:$0xff]
  %v898 = vld [vmem:[%s1 + $0x188] sm:$0xff]
  %v899 = vld [vmem:[%s1 + $0x190] sm:$0xff]
  %v900 = vld [vmem:[%s1 + $0x198] sm:$0xff]
  %v901 = vld [vmem:[%s1 + $0x1a0] sm:$0xff]
  %v902 = vld [vmem:[%s1 + $0x1a8] sm:$0xff]
  %v903 = vld [vmem:[%s1 + $0x1b0] sm:$0xff]
  %v904 = vld [vmem:[%s1 + $0x1b8] sm:$0xff]
  %v905 = vld [vmem:[%s1 + $0x1c0] sm:$0xff]
  %v906 = vld [vmem:[%s1 + $0x1c8] sm:$0xff]
  %v907 = vld [vmem:[%s1 + $0x1d0] sm:$0xff]
  %v908 = vld [vmem:[%s1 + $0x1d8] sm:$0xff]
  %v909 = vld [vmem:[%s1 + $0x1e0] sm:$0xff]
  %v910 = vld [vmem:[%s1 + $0x1e8] sm:$0xff]
  %v911 = vld [vmem:[%s1 + $0x1f0] sm:$0xff]
  %v912 = vld [vmem:[%s1 + $0x1f8] sm:$0xff]
  %v913 = vld [vmem:[%s1 + $0x200] sm:$0xff]
  %v914 = vld [vmem:[%s1 + $0x208] sm:$0xff]
  %v915 = vld [vmem:[%s1 + $0x210] sm:$0xff]
  %v916 = vld [vmem:[%s1 + $0x218] sm:$0xff]
  %v917 = vld [vmem:[%s1 + $0x220] sm:$0xff]
  %v918 = vld [vmem:[%s1 + $0x228] sm:$0xff]
  %v919 = vld [vmem:[%s1 + $0x230] sm:$0xff]
  %v920 = vld [vmem:[%s1 + $0x238] sm:$0xff]
  %v921 = vld [vmem:[%s1 + $0x240] sm:$0xff]
  %v922 = vld [vmem:[%s1 + $0x248] sm:$0xff]
  %v923 = vld [vmem:[%s1 + $0x250] sm:$0xff]
  %v924 = vld [vmem:[%s1 + $0x258] sm:$0xff]
  %v925 = vld [vmem:[%s1 + $0x260] sm:$0xff]
  %v926 = vld [vmem:[%s1 + $0x268] sm:$0xff]
  %v927 = vld [vmem:[%s1 + $0x270] sm:$0xff]
  %v928 = vld [vmem:[%s1 + $0x278] sm:$0xff]
  %v929 = vld [vmem:[%s1 + $0x280] sm:$0xff]
  %v930 = vld [vmem:[%s1 + $0x288] sm:$0xff]
  %v931 = vld [vmem:[%s1 + $0x290] sm:$0xff]
  %v932 = vld [vmem:[%s1 + $0x298] sm:$0xff]
  %v933 = vld [vmem:[%s1 + $0x2a0] sm:$0xff]
  %v934 = vld [vmem:[%s1 + $0x2a8] sm:$0xff]
  %v935 = vld [vmem:[%s1 + $0x2b0] sm:$0xff]
  %v936 = vld [vmem:[%s1 + $0x2b8] sm:$0xff]
  %v937 = vld [vmem:[%s1 + $0x2c0] sm:$0xff]
  %v938 = vld [vmem:[%s1 + $0x2c8] sm:$0xff]
  %v939 = vld [vmem:[%s1 + $0x2d0] sm:$0xff]
  %v940 = vld [vmem:[%s1 + $0x2d8] sm:$0xff]
  %v941 = vld [vmem:[%s1 + $0x2e0] sm:$0xff]
  %v942 = vld [vmem:[%s1 + $0x2e8] sm:$0xff]
  %v943 = vld [vmem:[%s1 + $0x2f0] sm:$0xff]
  %v944 = vld [vmem:[%s1 + $0x2f8] sm:$0xff]
  %v945 = vld [vmem:[%s1 + $0x300] sm:$0xff]
  %v946 = vld [vmem:[%s1 + $0x308] sm:$0xff]
  %v947 = vld [vmem:[%s1 + $0x310] sm:$0xff]
  %v948 = vld [vmem:[%s1 + $0x318] sm:$0xff]
  %v949 = vld [vmem:[%s1 + $0x320] sm:$0xff]
  %v950 = vld [vmem:[%s1 + $0x328] sm:$0xff]
  %v951 = vld [vmem:[%s1 + $0x330] sm:$0xff]
  %v952 = vld [vmem:[%s1 + $0x338] sm:$0xff]
  %v953 = vld [vmem:[%s1 + $0x340] sm:$0xff]
  %v954 = vld [vmem:[%s1 + $0x348] sm:$0xff]
  %v955 = vld [vmem:[%s1 + $0x350] sm:$0xff]
  %v956 = vld [vmem:[%s1 + $0x358] sm:$0xff]
  %v957 = vld [vmem:[%s1 + $0x360] sm:$0xff]
  %v958 = vld [vmem:[%s1 + $0x368] sm:$0xff]
  %v959 = vld [vmem:[%s1 + $0x370] sm:$0xff]
  %v960 = vld [vmem:[%s1 + $0x378] sm:$0xff]
  %v961 = vld [vmem:[%s1 + $0x380] sm:$0xff]
  %v962 = vld [vmem:[%s1 + $0x388] sm:$0xff]
  %v963 = vld [vmem:[%s1 + $0x390] sm:$0xff]
  %v964 = vld [vmem:[%s1 + $0x398] sm:$0xff]
  %v965 = vld [vmem:[%s1 + $0x3a0] sm:$0xff]
  %v966 = vld [vmem:[%s1 + $0x3a8] sm:$0xff]
  %v967 = vld [vmem:[%s1 + $0x3b0] sm:$0xff]
  %v968 = vld [vmem:[%s1 + $0x3b8] sm:$0xff]
  %v969 = vld [vmem:[%s1 + $0x3c0] sm:$0xff]
  %v970 = vld [vmem:[%s1 + $0x3c8] sm:$0xff]
  %v971 = vld [vmem:[%s1 + $0x3d0] sm:$0xff]
  %v972 = vld [vmem:[%s1 + $0x3d8] sm:$0xff]
  %v973 = vld [vmem:[%s1 + $0x3e0] sm:$0xff]
  %v974 = vld [vmem:[%s1 + $0x3e8] sm:$0xff]
  %v975 = vld [vmem:[%s1 + $0x3f0] sm:$0xff]
  %v976 = vld [vmem:[%s1 + $0x3f8] sm:$0xff]
  %v977 = vld [vmem:[%s1 + $0x400] sm:$0xff]
  %v978 = vld [vmem:[%s1 + $0x408] sm:$0xff]
  %v979 = vld [vmem:[%s1 + $0x410] sm:$0xff]
  %v980 = vld [vmem:[%s1 + $0x418] sm:$0xff]
  %v981 = vld [vmem:[%s1 + $0x420] sm:$0xff]
  %v982 = vld [vmem:[%s1 + $0x428] sm:$0xff]
  %v983 = vld [vmem:[%s1 + $0x430] sm:$0xff]
  %v984 = vld [vmem:[%s1 + $0x438] sm:$0xff]
  %v985 = vld [vmem:[%s1 + $0x440] sm:$0xff]
  %v986 = vld [vmem:[%s1 + $0x448] sm:$0xff]
  %v987 = vld [vmem:[%s1 + $0x450] sm:$0xff]
  %v988 = vld [vmem:[%s1 + $0x458] sm:$0xff]
  %v989 = vld [vmem:[%s1 + $0x460] sm:$0xff]
  %v990 = vld [vmem:[%s1 + $0x468] sm:$0xff]
  %v991 = vld [vmem:[%s1 + $0x470] sm:$0xff]
  %v992 = vld [vmem:[%s1 + $0x478] sm:$0xff]
  %993 = vmatpush.msra.mxu0 %v864
  %994 = vmatpush.msra.mxu0 %v863
  %995 = vmatpush.msra.mxu0 %v862
  %996 = vmatpush.msra.mxu0 %v861
  %997 = vmatpush.msra.mxu0 %v860
  %998 = vmatpush.msra.mxu0 %v859
  %999 = vmatpush.msra.mxu0 %v858
  %1000 = vmatpush.msra.mxu0 %v857
  %1001 = vmatpush.msra.mxu0 %v856
  %1002 = vmatpush.msra.mxu0 %v855
  %1003 = vmatpush.msra.mxu0 %v854
  %1004 = vmatpush.msra.mxu0 %v853
  %1005 = vmatpush.msra.mxu0 %v852
  %1006 = vmatpush.msra.mxu0 %v851
  %1007 = vmatpush.msra.mxu0 %v850
  %1008 = vmatpush.msra.mxu0 %v849
  %1009 = vmatmul.f32.gmra.mxu0 %v272
  %v1010 = vpop.f32.mrf.mxu0
  %v1011 = vadd.f32 0.0, %v1010
  %1012 = vmatmul.f32.gmra.mxu0 %v273
  %v1013 = vpop.f32.mrf.mxu0
  %v1014 = vadd.f32 0.0, %v1013
  %1015 = vmatmul.f32.gmra.mxu0 %v274
  %v1016 = vpop.f32.mrf.mxu0
  %v1017 = vadd.f32 0.0, %v1016
  %1018 = vmatmul.f32.gmra.mxu0 %v275
  %v1019 = vpop.f32.mrf.mxu0
  %v1020 = vadd.f32 0.0, %v1019
  %1021 = vmatmul.f32.gmra.mxu0 %v276
  %v1022 = vpop.f32.mrf.mxu0
  %v1023 = vadd.f32 0.0, %v1022
  %1024 = vmatmul.f32.gmra.mxu0 %v277
  %v1025 = vpop.f32.mrf.mxu0
  %v1026 = vadd.f32 0.0, %v1025
  %1027 = vmatmul.f32.gmra.mxu0 %v278
  %v1028 = vpop.f32.mrf.mxu0
  %v1029 = vadd.f32 0.0, %v1028
  %1030 = vmatmul.f32.gmra.mxu0 %v279
  %v1031 = vpop.f32.mrf.mxu0
  %v1032 = vadd.f32 0.0, %v1031
  %1033 = vmatmul.f32.gmra.mxu0 %v280
  %v1034 = vpop.f32.mrf.mxu0
  %v1035 = vadd.f32 0.0, %v1034
  %1036 = vmatmul.f32.gmra.mxu0 %v281
  %v1037 = vpop.f32.mrf.mxu0
  %v1038 = vadd.f32 0.0, %v1037
  %1039 = vmatmul.f32.gmra.mxu0 %v282
  %v1040 = vpop.f32.mrf.mxu0
  %v1041 = vadd.f32 0.0, %v1040
  %1042 = vmatmul.f32.gmra.mxu0 %v283
  %v1043 = vpop.f32.mrf.mxu0
  %v1044 = vadd.f32 0.0, %v1043
  %1045 = vmatmul.f32.gmra.mxu0 %v284
  %v1046 = vpop.f32.mrf.mxu0
  %v1047 = vadd.f32 0.0, %v1046
  %1048 = vmatmul.f32.gmra.mxu0 %v285
  %v1049 = vpop.f32.mrf.mxu0
  %v1050 = vadd.f32 0.0, %v1049
  %1051 = vmatmul.f32.gmra.mxu0 %v286
  %v1052 = vpop.f32.mrf.mxu0
  %v1053 = vadd.f32 0.0, %v1052
  %1054 = vmatmul.f32.gmra.mxu0 %v287
  %v1055 = vpop.f32.mrf.mxu0
  %v1056 = vadd.f32 0.0, %v1055
  %1057 = vmatmul.f32.gmra.mxu0 %v288
  %v1058 = vpop.f32.mrf.mxu0
  %v1059 = vadd.f32 0.0, %v1058
  %1060 = vmatmul.f32.gmra.mxu0 %v289
  %v1061 = vpop.f32.mrf.mxu0
  %v1062 = vadd.f32 0.0, %v1061
  %1063 = vmatmul.f32.gmra.mxu0 %v290
  %v1064 = vpop.f32.mrf.mxu0
  %v1065 = vadd.f32 0.0, %v1064
  %1066 = vmatmul.f32.gmra.mxu0 %v291
  %v1067 = vpop.f32.mrf.mxu0
  %v1068 = vadd.f32 0.0, %v1067
  %1069 = vmatmul.f32.gmra.mxu0 %v292
  %v1070 = vpop.f32.mrf.mxu0
  %v1071 = vadd.f32 0.0, %v1070
  %1072 = vmatmul.f32.gmra.mxu0 %v293
  %v1073 = vpop.f32.mrf.mxu0
  %v1074 = vadd.f32 0.0, %v1073
  %1075 = vmatmul.f32.gmra.mxu0 %v294
  %v1076 = vpop.f32.mrf.mxu0
  %v1077 = vadd.f32 0.0, %v1076
  %1078 = vmatmul.f32.gmra.mxu0 %v295
  %v1079 = vpop.f32.mrf.mxu0
  %v1080 = vadd.f32 0.0, %v1079
  %1081 = vmatmul.f32.gmra.mxu0 %v296
  %v1082 = vpop.f32.mrf.mxu0
  %v1083 = vadd.f32 0.0, %v1082
  %1084 = vmatmul.f32.gmra.mxu0 %v297
  %v1085 = vpop.f32.mrf.mxu0
  %v1086 = vadd.f32 0.0, %v1085
  %1087 = vmatmul.f32.gmra.mxu0 %v298
  %v1088 = vpop.f32.mrf.mxu0
  %v1089 = vadd.f32 0.0, %v1088
  %1090 = vmatmul.f32.gmra.mxu0 %v299
  %v1091 = vpop.f32.mrf.mxu0
  %v1092 = vadd.f32 0.0, %v1091
  %1093 = vmatmul.f32.gmra.mxu0 %v300
  %v1094 = vpop.f32.mrf.mxu0
  %v1095 = vadd.f32 0.0, %v1094
  %1096 = vmatmul.f32.gmra.mxu0 %v301
  %v1097 = vpop.f32.mrf.mxu0
  %v1098 = vadd.f32 0.0, %v1097
  %1099 = vmatmul.f32.gmra.mxu0 %v302
  %v1100 = vpop.f32.mrf.mxu0
  %v1101 = vadd.f32 0.0, %v1100
  %1102 = vmatmul.f32.gmra.mxu0 %v303
  %v1103 = vpop.f32.mrf.mxu0
  %v1104 = vadd.f32 0.0, %v1103
  %1105 = vmatmul.f32.gmra.mxu0 %v304
  %v1106 = vpop.f32.mrf.mxu0
  %v1107 = vadd.f32 0.0, %v1106
  %1108 = vmatmul.f32.gmra.mxu0 %v305
  %v1109 = vpop.f32.mrf.mxu0
  %v1110 = vadd.f32 0.0, %v1109
  %1111 = vmatmul.f32.gmra.mxu0 %v306
  %v1112 = vpop.f32.mrf.mxu0
  %v1113 = vadd.f32 0.0, %v1112
  %1114 = vmatmul.f32.gmra.mxu0 %v307
  %v1115 = vpop.f32.mrf.mxu0
  %v1116 = vadd.f32 0.0, %v1115
  %1117 = vmatmul.f32.gmra.mxu0 %v308
  %v1118 = vpop.f32.mrf.mxu0
  %v1119 = vadd.f32 0.0, %v1118
  %1120 = vmatmul.f32.gmra.mxu0 %v309
  %v1121 = vpop.f32.mrf.mxu0
  %v1122 = vadd.f32 0.0, %v1121
  %1123 = vmatmul.f32.gmra.mxu0 %v310
  %v1124 = vpop.f32.mrf.mxu0
  %v1125 = vadd.f32 0.0, %v1124
  %1126 = vmatmul.f32.gmra.mxu0 %v311
  %v1127 = vpop.f32.mrf.mxu0
  %v1128 = vadd.f32 0.0, %v1127
  %1129 = vmatmul.f32.gmra.mxu0 %v312
  %v1130 = vpop.f32.mrf.mxu0
  %v1131 = vadd.f32 0.0, %v1130
  %1132 = vmatmul.f32.gmra.mxu0 %v313
  %v1133 = vpop.f32.mrf.mxu0
  %v1134 = vadd.f32 0.0, %v1133
  %1135 = vmatmul.f32.gmra.mxu0 %v314
  %v1136 = vpop.f32.mrf.mxu0
  %v1137 = vadd.f32 0.0, %v1136
  %1138 = vmatmul.f32.gmra.mxu0 %v315
  %v1139 = vpop.f32.mrf.mxu0
  %v1140 = vadd.f32 0.0, %v1139
  %1141 = vmatmul.f32.gmra.mxu0 %v316
  %v1142 = vpop.f32.mrf.mxu0
  %v1143 = vadd.f32 0.0, %v1142
  %1144 = vmatmul.f32.gmra.mxu0 %v317
  %v1145 = vpop.f32.mrf.mxu0
  %v1146 = vadd.f32 0.0, %v1145
  %1147 = vmatmul.f32.gmra.mxu0 %v318
  %v1148 = vpop.f32.mrf.mxu0
  %v1149 = vadd.f32 0.0, %v1148
  %1150 = vmatmul.f32.gmra.mxu0 %v319
  %v1151 = vpop.f32.mrf.mxu0
  %v1152 = vadd.f32 0.0, %v1151
  %1153 = vmatmul.f32.gmra.mxu0 %v320
  %v1154 = vpop.f32.mrf.mxu0
  %v1155 = vadd.f32 0.0, %v1154
  %1156 = vmatmul.f32.gmra.mxu0 %v321
  %v1157 = vpop.f32.mrf.mxu0
  %v1158 = vadd.f32 0.0, %v1157
  %1159 = vmatmul.f32.gmra.mxu0 %v322
  %v1160 = vpop.f32.mrf.mxu0
  %v1161 = vadd.f32 0.0, %v1160
  %1162 = vmatmul.f32.gmra.mxu0 %v323
  %v1163 = vpop.f32.mrf.mxu0
  %v1164 = vadd.f32 0.0, %v1163
  %1165 = vmatmul.f32.gmra.mxu0 %v324
  %v1166 = vpop.f32.mrf.mxu0
  %v1167 = vadd.f32 0.0, %v1166
  %1168 = vmatmul.f32.gmra.mxu0 %v325
  %v1169 = vpop.f32.mrf.mxu0
  %v1170 = vadd.f32 0.0, %v1169
  %1171 = vmatmul.f32.gmra.mxu0 %v326
  %v1172 = vpop.f32.mrf.mxu0
  %v1173 = vadd.f32 0.0, %v1172
  %1174 = vmatmul.f32.gmra.mxu0 %v327
  %v1175 = vpop.f32.mrf.mxu0
  %v1176 = vadd.f32 0.0, %v1175
  %1177 = vmatmul.f32.gmra.mxu0 %v328
  %v1178 = vpop.f32.mrf.mxu0
  %v1179 = vadd.f32 0.0, %v1178
  %1180 = vmatmul.f32.gmra.mxu0 %v329
  %v1181 = vpop.f32.mrf.mxu0
  %v1182 = vadd.f32 0.0, %v1181
  %1183 = vmatmul.f32.gmra.mxu0 %v330
  %v1184 = vpop.f32.mrf.mxu0
  %v1185 = vadd.f32 0.0, %v1184
  %1186 = vmatmul.f32.gmra.mxu0 %v331
  %v1187 = vpop.f32.mrf.mxu0
  %v1188 = vadd.f32 0.0, %v1187
  %1189 = vmatmul.f32.gmra.mxu0 %v332
  %v1190 = vpop.f32.mrf.mxu0
  %v1191 = vadd.f32 0.0, %v1190
  %1192 = vmatmul.f32.gmra.mxu0 %v333
  %v1193 = vpop.f32.mrf.mxu0
  %v1194 = vadd.f32 0.0, %v1193
  %1195 = vmatmul.f32.gmra.mxu0 %v334
  %v1196 = vpop.f32.mrf.mxu0
  %v1197 = vadd.f32 0.0, %v1196
  %1198 = vmatmul.f32.gmra.mxu0 %v335
  %v1199 = vpop.f32.mrf.mxu0
  %v1200 = vadd.f32 0.0, %v1199
  %1201 = vdwg.mxu0
  %1202 = vmatpush.msra.mxu0 %v880
  %1203 = vmatpush.msra.mxu0 %v879
  %1204 = vmatpush.msra.mxu0 %v878
  %1205 = vmatpush.msra.mxu0 %v877
  %1206 = vmatpush.msra.mxu0 %v876
  %1207 = vmatpush.msra.mxu0 %v875
  %1208 = vmatpush.msra.mxu0 %v874
  %1209 = vmatpush.msra.mxu0 %v873
  %1210 = vmatpush.msra.mxu0 %v872
  %1211 = vmatpush.msra.mxu0 %v871
  %1212 = vmatpush.msra.mxu0 %v870
  %1213 = vmatpush.msra.mxu0 %v869
  %1214 = vmatpush.msra.mxu0 %v868
  %1215 = vmatpush.msra.mxu0 %v867
  %1216 = vmatpush.msra.mxu0 %v866
  %1217 = vmatpush.msra.mxu0 %v865
  %1218 = vmatmul.f32.gmra.mxu0 %v336
  %v1219 = vpop.f32.mrf.mxu0
  %v1220 = vadd.f32 %v1011, %v1219
  %1221 = vmatmul.f32.gmra.mxu0 %v337
  %v1222 = vpop.f32.mrf.mxu0
  %v1223 = vadd.f32 %v1014, %v1222
  %1224 = vmatmul.f32.gmra.mxu0 %v338
  %v1225 = vpop.f32.mrf.mxu0
  %v1226 = vadd.f32 %v1017, %v1225
  %1227 = vmatmul.f32.gmra.mxu0 %v339
  %v1228 = vpop.f32.mrf.mxu0
  %v1229 = vadd.f32 %v1020, %v1228
  %1230 = vmatmul.f32.gmra.mxu0 %v340
  %v1231 = vpop.f32.mrf.mxu0
  %v1232 = vadd.f32 %v1023, %v1231
  %1233 = vmatmul.f32.gmra.mxu0 %v341
  %v1234 = vpop.f32.mrf.mxu0
  %v1235 = vadd.f32 %v1026, %v1234
  %1236 = vmatmul.f32.gmra.mxu0 %v342
  %v1237 = vpop.f32.mrf.mxu0
  %v1238 = vadd.f32 %v1029, %v1237
  %1239 = vmatmul.f32.gmra.mxu0 %v343
  %v1240 = vpop.f32.mrf.mxu0
  %v1241 = vadd.f32 %v1032, %v1240
  %1242 = vmatmul.f32.gmra.mxu0 %v344
  %v1243 = vpop.f32.mrf.mxu0
  %v1244 = vadd.f32 %v1035, %v1243
  %1245 = vmatmul.f32.gmra.mxu0 %v345
  %v1246 = vpop.f32.mrf.mxu0
  %v1247 = vadd.f32 %v1038, %v1246
  %1248 = vmatmul.f32.gmra.mxu0 %v346
  %v1249 = vpop.f32.mrf.mxu0
  %v1250 = vadd.f32 %v1041, %v1249
  %1251 = vmatmul.f32.gmra.mxu0 %v347
  %v1252 = vpop.f32.mrf.mxu0
  %v1253 = vadd.f32 %v1044, %v1252
  %1254 = vmatmul.f32.gmra.mxu0 %v348
  %v1255 = vpop.f32.mrf.mxu0
  %v1256 = vadd.f32 %v1047, %v1255
  %1257 = vmatmul.f32.gmra.mxu0 %v349
  %v1258 = vpop.f32.mrf.mxu0
  %v1259 = vadd.f32 %v1050, %v1258
  %1260 = vmatmul.f32.gmra.mxu0 %v350
  %v1261 = vpop.f32.mrf.mxu0
  %v1262 = vadd.f32 %v1053, %v1261
  %1263 = vmatmul.f32.gmra.mxu0 %v351
  %v1264 = vpop.f32.mrf.mxu0
  %v1265 = vadd.f32 %v1056, %v1264
  %1266 = vmatmul.f32.gmra.mxu0 %v352
  %v1267 = vpop.f32.mrf.mxu0
  %v1268 = vadd.f32 %v1059, %v1267
  %1269 = vmatmul.f32.gmra.mxu0 %v353
  %v1270 = vpop.f32.mrf.mxu0
  %v1271 = vadd.f32 %v1062, %v1270
  %1272 = vmatmul.f32.gmra.mxu0 %v354
  %v1273 = vpop.f32.mrf.mxu0
  %v1274 = vadd.f32 %v1065, %v1273
  %1275 = vmatmul.f32.gmra.mxu0 %v355
  %v1276 = vpop.f32.mrf.mxu0
  %v1277 = vadd.f32 %v1068, %v1276
  %1278 = vmatmul.f32.gmra.mxu0 %v356
  %v1279 = vpop.f32.mrf.mxu0
  %v1280 = vadd.f32 %v1071, %v1279
  %1281 = vmatmul.f32.gmra.mxu0 %v357
  %v1282 = vpop.f32.mrf.mxu0
  %v1283 = vadd.f32 %v1074, %v1282
  %1284 = vmatmul.f32.gmra.mxu0 %v358
  %v1285 = vpop.f32.mrf.mxu0
  %v1286 = vadd.f32 %v1077, %v1285
  %1287 = vmatmul.f32.gmra.mxu0 %v359
  %v1288 = vpop.f32.mrf.mxu0
  %v1289 = vadd.f32 %v1080, %v1288
  %1290 = vmatmul.f32.gmra.mxu0 %v360
  %v1291 = vpop.f32.mrf.mxu0
  %v1292 = vadd.f32 %v1083, %v1291
  %1293 = vmatmul.f32.gmra.mxu0 %v361
  %v1294 = vpop.f32.mrf.mxu0
  %v1295 = vadd.f32 %v1086, %v1294
  %1296 = vmatmul.f32.gmra.mxu0 %v362
  %v1297 = vpop.f32.mrf.mxu0
  %v1298 = vadd.f32 %v1089, %v1297
  %1299 = vmatmul.f32.gmra.mxu0 %v363
  %v1300 = vpop.f32.mrf.mxu0
  %v1301 = vadd.f32 %v1092, %v1300
  %1302 = vmatmul.f32.gmra.mxu0 %v364
  %v1303 = vpop.f32.mrf.mxu0
  %v1304 = vadd.f32 %v1095, %v1303
  %1305 = vmatmul.f32.gmra.mxu0 %v365
  %v1306 = vpop.f32.mrf.mxu0
  %v1307 = vadd.f32 %v1098, %v1306
  %1308 = vmatmul.f32.gmra.mxu0 %v366
  %v1309 = vpop.f32.mrf.mxu0
  %v1310 = vadd.f32 %v1101, %v1309
  %1311 = vmatmul.f32.gmra.mxu0 %v367
  %v1312 = vpop.f32.mrf.mxu0
  %v1313 = vadd.f32 %v1104, %v1312
  %1314 = vmatmul.f32.gmra.mxu0 %v368
  %v1315 = vpop.f32.mrf.mxu0
  %v1316 = vadd.f32 %v1107, %v1315
  %1317 = vmatmul.f32.gmra.mxu0 %v369
  %v1318 = vpop.f32.mrf.mxu0
  %v1319 = vadd.f32 %v1110, %v1318
  %1320 = vmatmul.f32.gmra.mxu0 %v370
  %v1321 = vpop.f32.mrf.mxu0
  %v1322 = vadd.f32 %v1113, %v1321
  %1323 = vmatmul.f32.gmra.mxu0 %v371
  %v1324 = vpop.f32.mrf.mxu0
  %v1325 = vadd.f32 %v1116, %v1324
  %1326 = vmatmul.f32.gmra.mxu0 %v372
  %v1327 = vpop.f32.mrf.mxu0
  %v1328 = vadd.f32 %v1119, %v1327
  %1329 = vmatmul.f32.gmra.mxu0 %v373
  %v1330 = vpop.f32.mrf.mxu0
  %v1331 = vadd.f32 %v1122, %v1330
  %1332 = vmatmul.f32.gmra.mxu0 %v374
  %v1333 = vpop.f32.mrf.mxu0
  %v1334 = vadd.f32 %v1125, %v1333
  %1335 = vmatmul.f32.gmra.mxu0 %v375
  %v1336 = vpop.f32.mrf.mxu0
  %v1337 = vadd.f32 %v1128, %v1336
  %1338 = vmatmul.f32.gmra.mxu0 %v376
  %v1339 = vpop.f32.mrf.mxu0
  %v1340 = vadd.f32 %v1131, %v1339
  %1341 = vmatmul.f32.gmra.mxu0 %v377
  %v1342 = vpop.f32.mrf.mxu0
  %v1343 = vadd.f32 %v1134, %v1342
  %1344 = vmatmul.f32.gmra.mxu0 %v378
  %v1345 = vpop.f32.mrf.mxu0
  %v1346 = vadd.f32 %v1137, %v1345
  %1347 = vmatmul.f32.gmra.mxu0 %v379
  %v1348 = vpop.f32.mrf.mxu0
  %v1349 = vadd.f32 %v1140, %v1348
  %1350 = vmatmul.f32.gmra.mxu0 %v380
  %v1351 = vpop.f32.mrf.mxu0
  %v1352 = vadd.f32 %v1143, %v1351
  %1353 = vmatmul.f32.gmra.mxu0 %v381
  %v1354 = vpop.f32.mrf.mxu0
  %v1355 = vadd.f32 %v1146, %v1354
  %1356 = vmatmul.f32.gmra.mxu0 %v382
  %v1357 = vpop.f32.mrf.mxu0
  %v1358 = vadd.f32 %v1149, %v1357
  %1359 = vmatmul.f32.gmra.mxu0 %v383
  %v1360 = vpop.f32.mrf.mxu0
  %v1361 = vadd.f32 %v1152, %v1360
  %1362 = vmatmul.f32.gmra.mxu0 %v384
  %v1363 = vpop.f32.mrf.mxu0
  %v1364 = vadd.f32 %v1155, %v1363
  %1365 = vmatmul.f32.gmra.mxu0 %v385
  %v1366 = vpop.f32.mrf.mxu0
  %v1367 = vadd.f32 %v1158, %v1366
  %1368 = vmatmul.f32.gmra.mxu0 %v386
  %v1369 = vpop.f32.mrf.mxu0
  %v1370 = vadd.f32 %v1161, %v1369
  %1371 = vmatmul.f32.gmra.mxu0 %v387
  %v1372 = vpop.f32.mrf.mxu0
  %v1373 = vadd.f32 %v1164, %v1372
  %1374 = vmatmul.f32.gmra.mxu0 %v388
  %v1375 = vpop.f32.mrf.mxu0
  %v1376 = vadd.f32 %v1167, %v1375
  %1377 = vmatmul.f32.gmra.mxu0 %v389
  %v1378 = vpop.f32.mrf.mxu0
  %v1379 = vadd.f32 %v1170, %v1378
  %1380 = vmatmul.f32.gmra.mxu0 %v390
  %v1381 = vpop.f32.mrf.mxu0
  %v1382 = vadd.f32 %v1173, %v1381
  %1383 = vmatmul.f32.gmra.mxu0 %v391
  %v1384 = vpop.f32.mrf.mxu0
  %v1385 = vadd.f32 %v1176, %v1384
  %1386 = vmatmul.f32.gmra.mxu0 %v392
  %v1387 = vpop.f32.mrf.mxu0
  %v1388 = vadd.f32 %v1179, %v1387
  %1389 = vmatmul.f32.gmra.mxu0 %v393
  %v1390 = vpop.f32.mrf.mxu0
  %v1391 = vadd.f32 %v1182, %v1390
  %1392 = vmatmul.f32.gmra.mxu0 %v394
  %v1393 = vpop.f32.mrf.mxu0
  %v1394 = vadd.f32 %v1185, %v1393
  %1395 = vmatmul.f32.gmra.mxu0 %v395
  %v1396 = vpop.f32.mrf.mxu0
  %v1397 = vadd.f32 %v1188, %v1396
  %1398 = vmatmul.f32.gmra.mxu0 %v396
  %v1399 = vpop.f32.mrf.mxu0
  %v1400 = vadd.f32 %v1191, %v1399
  %1401 = vmatmul.f32.gmra.mxu0 %v397
  %v1402 = vpop.f32.mrf.mxu0
  %v1403 = vadd.f32 %v1194, %v1402
  %1404 = vmatmul.f32.gmra.mxu0 %v398
  %v1405 = vpop.f32.mrf.mxu0
  %v1406 = vadd.f32 %v1197, %v1405
  %1407 = vmatmul.f32.gmra.mxu0 %v399
  %v1408 = vpop.f32.mrf.mxu0
  %v1409 = vadd.f32 %v1200, %v1408
  %1410 = vdwg.mxu0
  %1411 = vmatpush.msra.mxu0 %v896
  %1412 = vmatpush.msra.mxu0 %v895
  %1413 = vmatpush.msra.mxu0 %v894
  %1414 = vmatpush.msra.mxu0 %v893
  %1415 = vmatpush.msra.mxu0 %v892
  %1416 = vmatpush.msra.mxu0 %v891
  %1417 = vmatpush.msra.mxu0 %v890
  %1418 = vmatpush.msra.mxu0 %v889
  %1419 = vmatpush.msra.mxu0 %v888
  %1420 = vmatpush.msra.mxu0 %v887
  %1421 = vmatpush.msra.mxu0 %v886
  %1422 = vmatpush.msra.mxu0 %v885
  %1423 = vmatpush.msra.mxu0 %v884
  %1424 = vmatpush.msra.mxu0 %v883
  %1425 = vmatpush.msra.mxu0 %v882
  %1426 = vmatpush.msra.mxu0 %v881
  %1427 = vmatmul.f32.gmra.mxu0 %v400
  %v1428 = vpop.f32.mrf.mxu0
  %v1429 = vadd.f32 %v1220, %v1428
  %1430 = vmatmul.f32.gmra.mxu0 %v401
  %v1431 = vpop.f32.mrf.mxu0
  %v1432 = vadd.f32 %v1223, %v1431
  %1433 = vmatmul.f32.gmra.mxu0 %v402
  %v1434 = vpop.f32.mrf.mxu0
  %v1435 = vadd.f32 %v1226, %v1434
  %1436 = vmatmul.f32.gmra.mxu0 %v403
  %v1437 = vpop.f32.mrf.mxu0
  %v1438 = vadd.f32 %v1229, %v1437
  %1439 = vmatmul.f32.gmra.mxu0 %v404
  %v1440 = vpop.f32.mrf.mxu0
  %v1441 = vadd.f32 %v1232, %v1440
  %1442 = vmatmul.f32.gmra.mxu0 %v405
  %v1443 = vpop.f32.mrf.mxu0
  %v1444 = vadd.f32 %v1235, %v1443
  %1445 = vmatmul.f32.gmra.mxu0 %v406
  %v1446 = vpop.f32.mrf.mxu0
  %v1447 = vadd.f32 %v1238, %v1446
  %1448 = vmatmul.f32.gmra.mxu0 %v407
  %v1449 = vpop.f32.mrf.mxu0
  %v1450 = vadd.f32 %v1241, %v1449
  %1451 = vmatmul.f32.gmra.mxu0 %v408
  %v1452 = vpop.f32.mrf.mxu0
  %v1453 = vadd.f32 %v1244, %v1452
  %1454 = vmatmul.f32.gmra.mxu0 %v409
  %v1455 = vpop.f32.mrf.mxu0
  %v1456 = vadd.f32 %v1247, %v1455
  %1457 = vmatmul.f32.gmra.mxu0 %v410
  %v1458 = vpop.f32.mrf.mxu0
  %v1459 = vadd.f32 %v1250, %v1458
  %1460 = vmatmul.f32.gmra.mxu0 %v411
  %v1461 = vpop.f32.mrf.mxu0
  %v1462 = vadd.f32 %v1253, %v1461
  %1463 = vmatmul.f32.gmra.mxu0 %v412
  %v1464 = vpop.f32.mrf.mxu0
  %v1465 = vadd.f32 %v1256, %v1464
  %1466 = vmatmul.f32.gmra.mxu0 %v413
  %v1467 = vpop.f32.mrf.mxu0
  %v1468 = vadd.f32 %v1259, %v1467
  %1469 = vmatmul.f32.gmra.mxu0 %v414
  %v1470 = vpop.f32.mrf.mxu0
  %v1471 = vadd.f32 %v1262, %v1470
  %1472 = vmatmul.f32.gmra.mxu0 %v415
  %v1473 = vpop.f32.mrf.mxu0
  %v1474 = vadd.f32 %v1265, %v1473
  %1475 = vmatmul.f32.gmra.mxu0 %v416
  %v1476 = vpop.f32.mrf.mxu0
  %v1477 = vadd.f32 %v1268, %v1476
  %1478 = vmatmul.f32.gmra.mxu0 %v417
  %v1479 = vpop.f32.mrf.mxu0
  %v1480 = vadd.f32 %v1271, %v1479
  %1481 = vmatmul.f32.gmra.mxu0 %v418
  %v1482 = vpop.f32.mrf.mxu0
  %v1483 = vadd.f32 %v1274, %v1482
  %1484 = vmatmul.f32.gmra.mxu0 %v419
  %v1485 = vpop.f32.mrf.mxu0
  %v1486 = vadd.f32 %v1277, %v1485
  %1487 = vmatmul.f32.gmra.mxu0 %v420
  %v1488 = vpop.f32.mrf.mxu0
  %v1489 = vadd.f32 %v1280, %v1488
  %1490 = vmatmul.f32.gmra.mxu0 %v421
  %v1491 = vpop.f32.mrf.mxu0
  %v1492 = vadd.f32 %v1283, %v1491
  %1493 = vmatmul.f32.gmra.mxu0 %v422
  %v1494 = vpop.f32.mrf.mxu0
  %v1495 = vadd.f32 %v1286, %v1494
  %1496 = vmatmul.f32.gmra.mxu0 %v423
  %v1497 = vpop.f32.mrf.mxu0
  %v1498 = vadd.f32 %v1289, %v1497
  %1499 = vmatmul.f32.gmra.mxu0 %v424
  %v1500 = vpop.f32.mrf.mxu0
  %v1501 = vadd.f32 %v1292, %v1500
  %1502 = vmatmul.f32.gmra.mxu0 %v425
  %v1503 = vpop.f32.mrf.mxu0
  %v1504 = vadd.f32 %v1295, %v1503
  %1505 = vmatmul.f32.gmra.mxu0 %v426
  %v1506 = vpop.f32.mrf.mxu0
  %v1507 = vadd.f32 %v1298, %v1506
  %1508 = vmatmul.f32.gmra.mxu0 %v427
  %v1509 = vpop.f32.mrf.mxu0
  %v1510 = vadd.f32 %v1301, %v1509
  %1511 = vmatmul.f32.gmra.mxu0 %v428
  %v1512 = vpop.f32.mrf.mxu0
  %v1513 = vadd.f32 %v1304, %v1512
  %1514 = vmatmul.f32.gmra.mxu0 %v429
  %v1515 = vpop.f32.mrf.mxu0
  %v1516 = vadd.f32 %v1307, %v1515
  %1517 = vmatmul.f32.gmra.mxu0 %v430
  %v1518 = vpop.f32.mrf.mxu0
  %v1519 = vadd.f32 %v1310, %v1518
  %1520 = vmatmul.f32.gmra.mxu0 %v431
  %v1521 = vpop.f32.mrf.mxu0
  %v1522 = vadd.f32 %v1313, %v1521
  %1523 = vmatmul.f32.gmra.mxu0 %v432
  %v1524 = vpop.f32.mrf.mxu0
  %v1525 = vadd.f32 %v1316, %v1524
  %1526 = vmatmul.f32.gmra.mxu0 %v433
  %v1527 = vpop.f32.mrf.mxu0
  %v1528 = vadd.f32 %v1319, %v1527
  %1529 = vmatmul.f32.gmra.mxu0 %v434
  %v1530 = vpop.f32.mrf.mxu0
  %v1531 = vadd.f32 %v1322, %v1530
  %1532 = vmatmul.f32.gmra.mxu0 %v435
  %v1533 = vpop.f32.mrf.mxu0
  %v1534 = vadd.f32 %v1325, %v1533
  %1535 = vmatmul.f32.gmra.mxu0 %v436
  %v1536 = vpop.f32.mrf.mxu0
  %v1537 = vadd.f32 %v1328, %v1536
  %1538 = vmatmul.f32.gmra.mxu0 %v437
  %v1539 = vpop.f32.mrf.mxu0
  %v1540 = vadd.f32 %v1331, %v1539
  %1541 = vmatmul.f32.gmra.mxu0 %v438
  %v1542 = vpop.f32.mrf.mxu0
  %v1543 = vadd.f32 %v1334, %v1542
  %1544 = vmatmul.f32.gmra.mxu0 %v439
  %v1545 = vpop.f32.mrf.mxu0
  %v1546 = vadd.f32 %v1337, %v1545
  %1547 = vmatmul.f32.gmra.mxu0 %v440
  %v1548 = vpop.f32.mrf.mxu0
  %v1549 = vadd.f32 %v1340, %v1548
  %1550 = vmatmul.f32.gmra.mxu0 %v441
  %v1551 = vpop.f32.mrf.mxu0
  %v1552 = vadd.f32 %v1343, %v1551
  %1553 = vmatmul.f32.gmra.mxu0 %v442
  %v1554 = vpop.f32.mrf.mxu0
  %v1555 = vadd.f32 %v1346, %v1554
  %1556 = vmatmul.f32.gmra.mxu0 %v443
  %v1557 = vpop.f32.mrf.mxu0
  %v1558 = vadd.f32 %v1349, %v1557
  %1559 = vmatmul.f32.gmra.mxu0 %v444
  %v1560 = vpop.f32.mrf.mxu0
  %v1561 = vadd.f32 %v1352, %v1560
  %1562 = vmatmul.f32.gmra.mxu0 %v445
  %v1563 = vpop.f32.mrf.mxu0
  %v1564 = vadd.f32 %v1355, %v1563
  %1565 = vmatmul.f32.gmra.mxu0 %v446
  %v1566 = vpop.f32.mrf.mxu0
  %v1567 = vadd.f32 %v1358, %v1566
  %1568 = vmatmul.f32.gmra.mxu0 %v447
  %v1569 = vpop.f32.mrf.mxu0
  %v1570 = vadd.f32 %v1361, %v1569
  %1571 = vmatmul.f32.gmra.mxu0 %v448
  %v1572 = vpop.f32.mrf.mxu0
  %v1573 = vadd.f32 %v1364, %v1572
  %1574 = vmatmul.f32.gmra.mxu0 %v449
  %v1575 = vpop.f32.mrf.mxu0
  %v1576 = vadd.f32 %v1367, %v1575
  %1577 = vmatmul.f32.gmra.mxu0 %v450
  %v1578 = vpop.f32.mrf.mxu0
  %v1579 = vadd.f32 %v1370, %v1578
  %1580 = vmatmul.f32.gmra.mxu0 %v451
  %v1581 = vpop.f32.mrf.mxu0
  %v1582 = vadd.f32 %v1373, %v1581
  %1583 = vmatmul.f32.gmra.mxu0 %v452
  %v1584 = vpop.f32.mrf.mxu0
  %v1585 = vadd.f32 %v1376, %v1584
  %1586 = vmatmul.f32.gmra.mxu0 %v453
  %v1587 = vpop.f32.mrf.mxu0
  %v1588 = vadd.f32 %v1379, %v1587
  %1589 = vmatmul.f32.gmra.mxu0 %v454
  %v1590 = vpop.f32.mrf.mxu0
  %v1591 = vadd.f32 %v1382, %v1590
  %1592 = vmatmul.f32.gmra.mxu0 %v455
  %v1593 = vpop.f32.mrf.mxu0
  %v1594 = vadd.f32 %v1385, %v1593
  %1595 = vmatmul.f32.gmra.mxu0 %v456
  %v1596 = vpop.f32.mrf.mxu0
  %v1597 = vadd.f32 %v1388, %v1596
  %1598 = vmatmul.f32.gmra.mxu0 %v457
  %v1599 = vpop.f32.mrf.mxu0
  %v1600 = vadd.f32 %v1391, %v1599
  %1601 = vmatmul.f32.gmra.mxu0 %v458
  %v1602 = vpop.f32.mrf.mxu0
  %v1603 = vadd.f32 %v1394, %v1602
  %1604 = vmatmul.f32.gmra.mxu0 %v459
  %v1605 = vpop.f32.mrf.mxu0
  %v1606 = vadd.f32 %v1397, %v1605
  %1607 = vmatmul.f32.gmra.mxu0 %v460
  %v1608 = vpop.f32.mrf.mxu0
  %v1609 = vadd.f32 %v1400, %v1608
  %1610 = vmatmul.f32.gmra.mxu0 %v461
  %v1611 = vpop.f32.mrf.mxu0
  %v1612 = vadd.f32 %v1403, %v1611
  %1613 = vmatmul.f32.gmra.mxu0 %v462
  %v1614 = vpop.f32.mrf.mxu0
  %v1615 = vadd.f32 %v1406, %v1614
  %1616 = vmatmul.f32.gmra.mxu0 %v463
  %v1617 = vpop.f32.mrf.mxu0
  %v1618 = vadd.f32 %v1409, %v1617
  %1619 = vdwg.mxu0
  %1620 = vmatpush.msra.mxu0 %v912
  %1621 = vmatpush.msra.mxu0 %v911
  %1622 = vmatpush.msra.mxu0 %v910
  %1623 = vmatpush.msra.mxu0 %v909
  %1624 = vmatpush.msra.mxu0 %v908
  %1625 = vmatpush.msra.mxu0 %v907
  %1626 = vmatpush.msra.mxu0 %v906
  %1627 = vmatpush.msra.mxu0 %v905
  %1628 = vmatpush.msra.mxu0 %v904
  %1629 = vmatpush.msra.mxu0 %v903
  %1630 = vmatpush.msra.mxu0 %v902
  %1631 = vmatpush.msra.mxu0 %v901
  %1632 = vmatpush.msra.mxu0 %v900
  %1633 = vmatpush.msra.mxu0 %v899
  %1634 = vmatpush.msra.mxu0 %v898
  %1635 = vmatpush.msra.mxu0 %v897
  %1636 = vmatmul.f32.gmra.mxu0 %v464
  %v1637 = vpop.f32.mrf.mxu0
  %v1638 = vadd.f32 %v1429, %v1637
  %1639 = vmatmul.f32.gmra.mxu0 %v465
  %v1640 = vpop.f32.mrf.mxu0
  %v1641 = vadd.f32 %v1432, %v1640
  %1642 = vmatmul.f32.gmra.mxu0 %v466
  %v1643 = vpop.f32.mrf.mxu0
  %v1644 = vadd.f32 %v1435, %v1643
  %1645 = vmatmul.f32.gmra.mxu0 %v467
  %v1646 = vpop.f32.mrf.mxu0
  %v1647 = vadd.f32 %v1438, %v1646
  %1648 = vmatmul.f32.gmra.mxu0 %v468
  %v1649 = vpop.f32.mrf.mxu0
  %v1650 = vadd.f32 %v1441, %v1649
  %1651 = vmatmul.f32.gmra.mxu0 %v469
  %v1652 = vpop.f32.mrf.mxu0
  %v1653 = vadd.f32 %v1444, %v1652
  %1654 = vmatmul.f32.gmra.mxu0 %v470
  %v1655 = vpop.f32.mrf.mxu0
  %v1656 = vadd.f32 %v1447, %v1655
  %1657 = vmatmul.f32.gmra.mxu0 %v471
  %v1658 = vpop.f32.mrf.mxu0
  %v1659 = vadd.f32 %v1450, %v1658
  %1660 = vmatmul.f32.gmra.mxu0 %v472
  %v1661 = vpop.f32.mrf.mxu0
  %v1662 = vadd.f32 %v1453, %v1661
  %1663 = vmatmul.f32.gmra.mxu0 %v473
  %v1664 = vpop.f32.mrf.mxu0
  %v1665 = vadd.f32 %v1456, %v1664
  %1666 = vmatmul.f32.gmra.mxu0 %v474
  %v1667 = vpop.f32.mrf.mxu0
  %v1668 = vadd.f32 %v1459, %v1667
  %1669 = vmatmul.f32.gmra.mxu0 %v475
  %v1670 = vpop.f32.mrf.mxu0
  %v1671 = vadd.f32 %v1462, %v1670
  %1672 = vmatmul.f32.gmra.mxu0 %v476
  %v1673 = vpop.f32.mrf.mxu0
  %v1674 = vadd.f32 %v1465, %v1673
  %1675 = vmatmul.f32.gmra.mxu0 %v477
  %v1676 = vpop.f32.mrf.mxu0
  %v1677 = vadd.f32 %v1468, %v1676
  %1678 = vmatmul.f32.gmra.mxu0 %v478
  %v1679 = vpop.f32.mrf.mxu0
  %v1680 = vadd.f32 %v1471, %v1679
  %1681 = vmatmul.f32.gmra.mxu0 %v479
  %v1682 = vpop.f32.mrf.mxu0
  %v1683 = vadd.f32 %v1474, %v1682
  %1684 = vmatmul.f32.gmra.mxu0 %v480
  %v1685 = vpop.f32.mrf.mxu0
  %v1686 = vadd.f32 %v1477, %v1685
  %1687 = vmatmul.f32.gmra.mxu0 %v481
  %v1688 = vpop.f32.mrf.mxu0
  %v1689 = vadd.f32 %v1480, %v1688
  %1690 = vmatmul.f32.gmra.mxu0 %v482
  %v1691 = vpop.f32.mrf.mxu0
  %v1692 = vadd.f32 %v1483, %v1691
  %1693 = vmatmul.f32.gmra.mxu0 %v483
  %v1694 = vpop.f32.mrf.mxu0
  %v1695 = vadd.f32 %v1486, %v1694
  %1696 = vmatmul.f32.gmra.mxu0 %v484
  %v1697 = vpop.f32.mrf.mxu0
  %v1698 = vadd.f32 %v1489, %v1697
  %1699 = vmatmul.f32.gmra.mxu0 %v485
  %v1700 = vpop.f32.mrf.mxu0
  %v1701 = vadd.f32 %v1492, %v1700
  %1702 = vmatmul.f32.gmra.mxu0 %v486
  %v1703 = vpop.f32.mrf.mxu0
  %v1704 = vadd.f32 %v1495, %v1703
  %1705 = vmatmul.f32.gmra.mxu0 %v487
  %v1706 = vpop.f32.mrf.mxu0
  %v1707 = vadd.f32 %v1498, %v1706
  %1708 = vmatmul.f32.gmra.mxu0 %v488
  %v1709 = vpop.f32.mrf.mxu0
  %v1710 = vadd.f32 %v1501, %v1709
  %1711 = vmatmul.f32.gmra.mxu0 %v489
  %v1712 = vpop.f32.mrf.mxu0
  %v1713 = vadd.f32 %v1504, %v1712
  %1714 = vmatmul.f32.gmra.mxu0 %v490
  %v1715 = vpop.f32.mrf.mxu0
  %v1716 = vadd.f32 %v1507, %v1715
  %1717 = vmatmul.f32.gmra.mxu0 %v491
  %v1718 = vpop.f32.mrf.mxu0
  %v1719 = vadd.f32 %v1510, %v1718
  %1720 = vmatmul.f32.gmra.mxu0 %v492
  %v1721 = vpop.f32.mrf.mxu0
  %v1722 = vadd.f32 %v1513, %v1721
  %1723 = vmatmul.f32.gmra.mxu0 %v493
  %v1724 = vpop.f32.mrf.mxu0
  %v1725 = vadd.f32 %v1516, %v1724
  %1726 = vmatmul.f32.gmra.mxu0 %v494
  %v1727 = vpop.f32.mrf.mxu0
  %v1728 = vadd.f32 %v1519, %v1727
  %1729 = vmatmul.f32.gmra.mxu0 %v495
  %v1730 = vpop.f32.mrf.mxu0
  %v1731 = vadd.f32 %v1522, %v1730
  %1732 = vmatmul.f32.gmra.mxu0 %v496
  %v1733 = vpop.f32.mrf.mxu0
  %v1734 = vadd.f32 %v1525, %v1733
  %1735 = vmatmul.f32.gmra.mxu0 %v497
  %v1736 = vpop.f32.mrf.mxu0
  %v1737 = vadd.f32 %v1528, %v1736
  %1738 = vmatmul.f32.gmra.mxu0 %v498
  %v1739 = vpop.f32.mrf.mxu0
  %v1740 = vadd.f32 %v1531, %v1739
  %1741 = vmatmul.f32.gmra.mxu0 %v499
  %v1742 = vpop.f32.mrf.mxu0
  %v1743 = vadd.f32 %v1534, %v1742
  %1744 = vmatmul.f32.gmra.mxu0 %v500
  %v1745 = vpop.f32.mrf.mxu0
  %v1746 = vadd.f32 %v1537, %v1745
  %1747 = vmatmul.f32.gmra.mxu0 %v501
  %v1748 = vpop.f32.mrf.mxu0
  %v1749 = vadd.f32 %v1540, %v1748
  %1750 = vmatmul.f32.gmra.mxu0 %v502
  %v1751 = vpop.f32.mrf.mxu0
  %v1752 = vadd.f32 %v1543, %v1751
  %1753 = vmatmul.f32.gmra.mxu0 %v503
  %v1754 = vpop.f32.mrf.mxu0
  %v1755 = vadd.f32 %v1546, %v1754
  %1756 = vmatmul.f32.gmra.mxu0 %v504
  %v1757 = vpop.f32.mrf.mxu0
  %v1758 = vadd.f32 %v1549, %v1757
  %1759 = vmatmul.f32.gmra.mxu0 %v505
  %v1760 = vpop.f32.mrf.mxu0
  %v1761 = vadd.f32 %v1552, %v1760
  %1762 = vmatmul.f32.gmra.mxu0 %v506
  %v1763 = vpop.f32.mrf.mxu0
  %v1764 = vadd.f32 %v1555, %v1763
  %1765 = vmatmul.f32.gmra.mxu0 %v507
  %v1766 = vpop.f32.mrf.mxu0
  %v1767 = vadd.f32 %v1558, %v1766
  %1768 = vmatmul.f32.gmra.mxu0 %v508
  %v1769 = vpop.f32.mrf.mxu0
  %v1770 = vadd.f32 %v1561, %v1769
  %1771 = vmatmul.f32.gmra.mxu0 %v509
  %v1772 = vpop.f32.mrf.mxu0
  %v1773 = vadd.f32 %v1564, %v1772
  %1774 = vmatmul.f32.gmra.mxu0 %v510
  %v1775 = vpop.f32.mrf.mxu0
  %v1776 = vadd.f32 %v1567, %v1775
  %1777 = vmatmul.f32.gmra.mxu0 %v511
  %v1778 = vpop.f32.mrf.mxu0
  %v1779 = vadd.f32 %v1570, %v1778
  %1780 = vmatmul.f32.gmra.mxu0 %v512
  %v1781 = vpop.f32.mrf.mxu0
  %v1782 = vadd.f32 %v1573, %v1781
  %1783 = vmatmul.f32.gmra.mxu0 %v513
  %v1784 = vpop.f32.mrf.mxu0
  %v1785 = vadd.f32 %v1576, %v1784
  %1786 = vmatmul.f32.gmra.mxu0 %v514
  %v1787 = vpop.f32.mrf.mxu0
  %v1788 = vadd.f32 %v1579, %v1787
  %1789 = vmatmul.f32.gmra.mxu0 %v515
  %v1790 = vpop.f32.mrf.mxu0
  %v1791 = vadd.f32 %v1582, %v1790
  %1792 = vmatmul.f32.gmra.mxu0 %v516
  %v1793 = vpop.f32.mrf.mxu0
  %v1794 = vadd.f32 %v1585, %v1793
  %1795 = vmatmul.f32.gmra.mxu0 %v517
  %v1796 = vpop.f32.mrf.mxu0
  %v1797 = vadd.f32 %v1588, %v1796
  %1798 = vmatmul.f32.gmra.mxu0 %v518
  %v1799 = vpop.f32.mrf.mxu0
  %v1800 = vadd.f32 %v1591, %v1799
  %1801 = vmatmul.f32.gmra.mxu0 %v519
  %v1802 = vpop.f32.mrf.mxu0
  %v1803 = vadd.f32 %v1594, %v1802
  %1804 = vmatmul.f32.gmra.mxu0 %v520
  %v1805 = vpop.f32.mrf.mxu0
  %v1806 = vadd.f32 %v1597, %v1805
  %1807 = vmatmul.f32.gmra.mxu0 %v521
  %v1808 = vpop.f32.mrf.mxu0
  %v1809 = vadd.f32 %v1600, %v1808
  %1810 = vmatmul.f32.gmra.mxu0 %v522
  %v1811 = vpop.f32.mrf.mxu0
  %v1812 = vadd.f32 %v1603, %v1811
  %1813 = vmatmul.f32.gmra.mxu0 %v523
  %v1814 = vpop.f32.mrf.mxu0
  %v1815 = vadd.f32 %v1606, %v1814
  %1816 = vmatmul.f32.gmra.mxu0 %v524
  %v1817 = vpop.f32.mrf.mxu0
  %v1818 = vadd.f32 %v1609, %v1817
  %1819 = vmatmul.f32.gmra.mxu0 %v525
  %v1820 = vpop.f32.mrf.mxu0
  %v1821 = vadd.f32 %v1612, %v1820
  %1822 = vmatmul.f32.gmra.mxu0 %v526
  %v1823 = vpop.f32.mrf.mxu0
  %v1824 = vadd.f32 %v1615, %v1823
  %1825 = vmatmul.f32.gmra.mxu0 %v527
  %v1826 = vpop.f32.mrf.mxu0
  %v1827 = vadd.f32 %v1618, %v1826
  %1828 = vdwg.mxu0
  %1829 = vmatpush.msra.mxu0 %v928
  %1830 = vmatpush.msra.mxu0 %v927
  %1831 = vmatpush.msra.mxu0 %v926
  %1832 = vmatpush.msra.mxu0 %v925
  %1833 = vmatpush.msra.mxu0 %v924
  %1834 = vmatpush.msra.mxu0 %v923
  %1835 = vmatpush.msra.mxu0 %v922
  %1836 = vmatpush.msra.mxu0 %v921
  %1837 = vmatpush.msra.mxu0 %v920
  %1838 = vmatpush.msra.mxu0 %v919
  %1839 = vmatpush.msra.mxu0 %v918
  %1840 = vmatpush.msra.mxu0 %v917
  %1841 = vmatpush.msra.mxu0 %v916
  %1842 = vmatpush.msra.mxu0 %v915
  %1843 = vmatpush.msra.mxu0 %v914
  %1844 = vmatpush.msra.mxu0 %v913
  %1845 = vmatmul.f32.gmra.mxu0 %v528
  %v1846 = vpop.f32.mrf.mxu0
  %v1847 = vadd.f32 %v1638, %v1846
  %1848 = vmatmul.f32.gmra.mxu0 %v529
  %v1849 = vpop.f32.mrf.mxu0
  %v1850 = vadd.f32 %v1641, %v1849
  %1851 = vmatmul.f32.gmra.mxu0 %v530
  %v1852 = vpop.f32.mrf.mxu0
  %v1853 = vadd.f32 %v1644, %v1852
  %1854 = vmatmul.f32.gmra.mxu0 %v531
  %v1855 = vpop.f32.mrf.mxu0
  %v1856 = vadd.f32 %v1647, %v1855
  %1857 = vmatmul.f32.gmra.mxu0 %v532
  %v1858 = vpop.f32.mrf.mxu0
  %v1859 = vadd.f32 %v1650, %v1858
  %1860 = vmatmul.f32.gmra.mxu0 %v533
  %v1861 = vpop.f32.mrf.mxu0
  %v1862 = vadd.f32 %v1653, %v1861
  %1863 = vmatmul.f32.gmra.mxu0 %v534
  %v1864 = vpop.f32.mrf.mxu0
  %v1865 = vadd.f32 %v1656, %v1864
  %1866 = vmatmul.f32.gmra.mxu0 %v535
  %v1867 = vpop.f32.mrf.mxu0
  %v1868 = vadd.f32 %v1659, %v1867
  %1869 = vmatmul.f32.gmra.mxu0 %v536
  %v1870 = vpop.f32.mrf.mxu0
  %v1871 = vadd.f32 %v1662, %v1870
  %1872 = vmatmul.f32.gmra.mxu0 %v537
  %v1873 = vpop.f32.mrf.mxu0
  %v1874 = vadd.f32 %v1665, %v1873
  %1875 = vmatmul.f32.gmra.mxu0 %v538
  %v1876 = vpop.f32.mrf.mxu0
  %v1877 = vadd.f32 %v1668, %v1876
  %1878 = vmatmul.f32.gmra.mxu0 %v539
  %v1879 = vpop.f32.mrf.mxu0
  %v1880 = vadd.f32 %v1671, %v1879
  %1881 = vmatmul.f32.gmra.mxu0 %v540
  %v1882 = vpop.f32.mrf.mxu0
  %v1883 = vadd.f32 %v1674, %v1882
  %1884 = vmatmul.f32.gmra.mxu0 %v541
  %v1885 = vpop.f32.mrf.mxu0
  %v1886 = vadd.f32 %v1677, %v1885
  %1887 = vmatmul.f32.gmra.mxu0 %v542
  %v1888 = vpop.f32.mrf.mxu0
  %v1889 = vadd.f32 %v1680, %v1888
  %1890 = vmatmul.f32.gmra.mxu0 %v543
  %v1891 = vpop.f32.mrf.mxu0
  %v1892 = vadd.f32 %v1683, %v1891
  %1893 = vmatmul.f32.gmra.mxu0 %v544
  %v1894 = vpop.f32.mrf.mxu0
  %v1895 = vadd.f32 %v1686, %v1894
  %1896 = vmatmul.f32.gmra.mxu0 %v545
  %v1897 = vpop.f32.mrf.mxu0
  %v1898 = vadd.f32 %v1689, %v1897
  %1899 = vmatmul.f32.gmra.mxu0 %v546
  %v1900 = vpop.f32.mrf.mxu0
  %v1901 = vadd.f32 %v1692, %v1900
  %1902 = vmatmul.f32.gmra.mxu0 %v547
  %v1903 = vpop.f32.mrf.mxu0
  %v1904 = vadd.f32 %v1695, %v1903
  %1905 = vmatmul.f32.gmra.mxu0 %v548
  %v1906 = vpop.f32.mrf.mxu0
  %v1907 = vadd.f32 %v1698, %v1906
  %1908 = vmatmul.f32.gmra.mxu0 %v549
  %v1909 = vpop.f32.mrf.mxu0
  %v1910 = vadd.f32 %v1701, %v1909
  %1911 = vmatmul.f32.gmra.mxu0 %v550
  %v1912 = vpop.f32.mrf.mxu0
  %v1913 = vadd.f32 %v1704, %v1912
  %1914 = vmatmul.f32.gmra.mxu0 %v551
  %v1915 = vpop.f32.mrf.mxu0
  %v1916 = vadd.f32 %v1707, %v1915
  %1917 = vmatmul.f32.gmra.mxu0 %v552
  %v1918 = vpop.f32.mrf.mxu0
  %v1919 = vadd.f32 %v1710, %v1918
  %1920 = vmatmul.f32.gmra.mxu0 %v553
  %v1921 = vpop.f32.mrf.mxu0
  %v1922 = vadd.f32 %v1713, %v1921
  %1923 = vmatmul.f32.gmra.mxu0 %v554
  %v1924 = vpop.f32.mrf.mxu0
  %v1925 = vadd.f32 %v1716, %v1924
  %1926 = vmatmul.f32.gmra.mxu0 %v555
  %v1927 = vpop.f32.mrf.mxu0
  %v1928 = vadd.f32 %v1719, %v1927
  %1929 = vmatmul.f32.gmra.mxu0 %v556
  %v1930 = vpop.f32.mrf.mxu0
  %v1931 = vadd.f32 %v1722, %v1930
  %1932 = vmatmul.f32.gmra.mxu0 %v557
  %v1933 = vpop.f32.mrf.mxu0
  %v1934 = vadd.f32 %v1725, %v1933
  %1935 = vmatmul.f32.gmra.mxu0 %v558
  %v1936 = vpop.f32.mrf.mxu0
  %v1937 = vadd.f32 %v1728, %v1936
  %1938 = vmatmul.f32.gmra.mxu0 %v559
  %v1939 = vpop.f32.mrf.mxu0
  %v1940 = vadd.f32 %v1731, %v1939
  %1941 = vmatmul.f32.gmra.mxu0 %v560
  %v1942 = vpop.f32.mrf.mxu0
  %v1943 = vadd.f32 %v1734, %v1942
  %1944 = vmatmul.f32.gmra.mxu0 %v561
  %v1945 = vpop.f32.mrf.mxu0
  %v1946 = vadd.f32 %v1737, %v1945
  %1947 = vmatmul.f32.gmra.mxu0 %v562
  %v1948 = vpop.f32.mrf.mxu0
  %v1949 = vadd.f32 %v1740, %v1948
  %1950 = vmatmul.f32.gmra.mxu0 %v563
  %v1951 = vpop.f32.mrf.mxu0
  %v1952 = vadd.f32 %v1743, %v1951
  %1953 = vmatmul.f32.gmra.mxu0 %v564
  %v1954 = vpop.f32.mrf.mxu0
  %v1955 = vadd.f32 %v1746, %v1954
  %1956 = vmatmul.f32.gmra.mxu0 %v565
  %v1957 = vpop.f32.mrf.mxu0
  %v1958 = vadd.f32 %v1749, %v1957
  %1959 = vmatmul.f32.gmra.mxu0 %v566
  %v1960 = vpop.f32.mrf.mxu0
  %v1961 = vadd.f32 %v1752, %v1960
  %1962 = vmatmul.f32.gmra.mxu0 %v567
  %v1963 = vpop.f32.mrf.mxu0
  %v1964 = vadd.f32 %v1755, %v1963
  %1965 = vmatmul.f32.gmra.mxu0 %v568
  %v1966 = vpop.f32.mrf.mxu0
  %v1967 = vadd.f32 %v1758, %v1966
  %1968 = vmatmul.f32.gmra.mxu0 %v569
  %v1969 = vpop.f32.mrf.mxu0
  %v1970 = vadd.f32 %v1761, %v1969
  %1971 = vmatmul.f32.gmra.mxu0 %v570
  %v1972 = vpop.f32.mrf.mxu0
  %v1973 = vadd.f32 %v1764, %v1972
  %1974 = vmatmul.f32.gmra.mxu0 %v571
  %v1975 = vpop.f32.mrf.mxu0
  %v1976 = vadd.f32 %v1767, %v1975
  %1977 = vmatmul.f32.gmra.mxu0 %v572
  %v1978 = vpop.f32.mrf.mxu0
  %v1979 = vadd.f32 %v1770, %v1978
  %1980 = vmatmul.f32.gmra.mxu0 %v573
  %v1981 = vpop.f32.mrf.mxu0
  %v1982 = vadd.f32 %v1773, %v1981
  %1983 = vmatmul.f32.gmra.mxu0 %v574
  %v1984 = vpop.f32.mrf.mxu0
  %v1985 = vadd.f32 %v1776, %v1984
  %1986 = vmatmul.f32.gmra.mxu0 %v575
  %v1987 = vpop.f32.mrf.mxu0
  %v1988 = vadd.f32 %v1779, %v1987
  %1989 = vmatmul.f32.gmra.mxu0 %v576
  %v1990 = vpop.f32.mrf.mxu0
  %v1991 = vadd.f32 %v1782, %v1990
  %1992 = vmatmul.f32.gmra.mxu0 %v577
  %v1993 = vpop.f32.mrf.mxu0
  %v1994 = vadd.f32 %v1785, %v1993
  %1995 = vmatmul.f32.gmra.mxu0 %v578
  %v1996 = vpop.f32.mrf.mxu0
  %v1997 = vadd.f32 %v1788, %v1996
  %1998 = vmatmul.f32.gmra.mxu0 %v579
  %v1999 = vpop.f32.mrf.mxu0
  %v2000 = vadd.f32 %v1791, %v1999
  %2001 = vmatmul.f32.gmra.mxu0 %v580
  %v2002 = vpop.f32.mrf.mxu0
  %v2003 = vadd.f32 %v1794, %v2002
  %2004 = vmatmul.f32.gmra.mxu0 %v581
  %v2005 = vpop.f32.mrf.mxu0
  %v2006 = vadd.f32 %v1797, %v2005
  %2007 = vmatmul.f32.gmra.mxu0 %v582
  %v2008 = vpop.f32.mrf.mxu0
  %v2009 = vadd.f32 %v1800, %v2008
  %2010 = vmatmul.f32.gmra.mxu0 %v583
  %v2011 = vpop.f32.mrf.mxu0
  %v2012 = vadd.f32 %v1803, %v2011
  %2013 = vmatmul.f32.gmra.mxu0 %v584
  %v2014 = vpop.f32.mrf.mxu0
  %v2015 = vadd.f32 %v1806, %v2014
  %2016 = vmatmul.f32.gmra.mxu0 %v585
  %v2017 = vpop.f32.mrf.mxu0
  %v2018 = vadd.f32 %v1809, %v2017
  %2019 = vmatmul.f32.gmra.mxu0 %v586
  %v2020 = vpop.f32.mrf.mxu0
  %v2021 = vadd.f32 %v1812, %v2020
  %2022 = vmatmul.f32.gmra.mxu0 %v587
  %v2023 = vpop.f32.mrf.mxu0
  %v2024 = vadd.f32 %v1815, %v2023
  %2025 = vmatmul.f32.gmra.mxu0 %v588
  %v2026 = vpop.f32.mrf.mxu0
  %v2027 = vadd.f32 %v1818, %v2026
  %2028 = vmatmul.f32.gmra.mxu0 %v589
  %v2029 = vpop.f32.mrf.mxu0
  %v2030 = vadd.f32 %v1821, %v2029
  %2031 = vmatmul.f32.gmra.mxu0 %v590
  %v2032 = vpop.f32.mrf.mxu0
  %v2033 = vadd.f32 %v1824, %v2032
  %2034 = vmatmul.f32.gmra.mxu0 %v591
  %v2035 = vpop.f32.mrf.mxu0
  %v2036 = vadd.f32 %v1827, %v2035
  %2037 = vdwg.mxu0
  %2038 = vmatpush.msra.mxu0 %v944
  %2039 = vmatpush.msra.mxu0 %v943
  %2040 = vmatpush.msra.mxu0 %v942
  %2041 = vmatpush.msra.mxu0 %v941
  %2042 = vmatpush.msra.mxu0 %v940
  %2043 = vmatpush.msra.mxu0 %v939
  %2044 = vmatpush.msra.mxu0 %v938
  %2045 = vmatpush.msra.mxu0 %v937
  %2046 = vmatpush.msra.mxu0 %v936
  %2047 = vmatpush.msra.mxu0 %v935
  %2048 = vmatpush.msra.mxu0 %v934
  %2049 = vmatpush.msra.mxu0 %v933
  %2050 = vmatpush.msra.mxu0 %v932
  %2051 = vmatpush.msra.mxu0 %v931
  %2052 = vmatpush.msra.mxu0 %v930
  %2053 = vmatpush.msra.mxu0 %v929
  %2054 = vmatmul.f32.gmra.mxu0 %v592
  %v2055 = vpop.f32.mrf.mxu0
  %v2056 = vadd.f32 %v1847, %v2055
  %2057 = vmatmul.f32.gmra.mxu0 %v593
  %v2058 = vpop.f32.mrf.mxu0
  %v2059 = vadd.f32 %v1850, %v2058
  %2060 = vmatmul.f32.gmra.mxu0 %v594
  %v2061 = vpop.f32.mrf.mxu0
  %v2062 = vadd.f32 %v1853, %v2061
  %2063 = vmatmul.f32.gmra.mxu0 %v595
  %v2064 = vpop.f32.mrf.mxu0
  %v2065 = vadd.f32 %v1856, %v2064
  %2066 = vmatmul.f32.gmra.mxu0 %v596
  %v2067 = vpop.f32.mrf.mxu0
  %v2068 = vadd.f32 %v1859, %v2067
  %2069 = vmatmul.f32.gmra.mxu0 %v597
  %v2070 = vpop.f32.mrf.mxu0
  %v2071 = vadd.f32 %v1862, %v2070
  %2072 = vmatmul.f32.gmra.mxu0 %v598
  %v2073 = vpop.f32.mrf.mxu0
  %v2074 = vadd.f32 %v1865, %v2073
  %2075 = vmatmul.f32.gmra.mxu0 %v599
  %v2076 = vpop.f32.mrf.mxu0
  %v2077 = vadd.f32 %v1868, %v2076
  %2078 = vmatmul.f32.gmra.mxu0 %v600
  %v2079 = vpop.f32.mrf.mxu0
  %v2080 = vadd.f32 %v1871, %v2079
  %2081 = vmatmul.f32.gmra.mxu0 %v601
  %v2082 = vpop.f32.mrf.mxu0
  %v2083 = vadd.f32 %v1874, %v2082
  %2084 = vmatmul.f32.gmra.mxu0 %v602
  %v2085 = vpop.f32.mrf.mxu0
  %v2086 = vadd.f32 %v1877, %v2085
  %2087 = vmatmul.f32.gmra.mxu0 %v603
  %v2088 = vpop.f32.mrf.mxu0
  %v2089 = vadd.f32 %v1880, %v2088
  %2090 = vmatmul.f32.gmra.mxu0 %v604
  %v2091 = vpop.f32.mrf.mxu0
  %v2092 = vadd.f32 %v1883, %v2091
  %2093 = vmatmul.f32.gmra.mxu0 %v605
  %v2094 = vpop.f32.mrf.mxu0
  %v2095 = vadd.f32 %v1886, %v2094
  %2096 = vmatmul.f32.gmra.mxu0 %v606
  %v2097 = vpop.f32.mrf.mxu0
  %v2098 = vadd.f32 %v1889, %v2097
  %2099 = vmatmul.f32.gmra.mxu0 %v607
  %v2100 = vpop.f32.mrf.mxu0
  %v2101 = vadd.f32 %v1892, %v2100
  %2102 = vmatmul.f32.gmra.mxu0 %v608
  %v2103 = vpop.f32.mrf.mxu0
  %v2104 = vadd.f32 %v1895, %v2103
  %2105 = vmatmul.f32.gmra.mxu0 %v609
  %v2106 = vpop.f32.mrf.mxu0
  %v2107 = vadd.f32 %v1898, %v2106
  %2108 = vmatmul.f32.gmra.mxu0 %v610
  %v2109 = vpop.f32.mrf.mxu0
  %v2110 = vadd.f32 %v1901, %v2109
  %2111 = vmatmul.f32.gmra.mxu0 %v611
  %v2112 = vpop.f32.mrf.mxu0
  %v2113 = vadd.f32 %v1904, %v2112
  %2114 = vmatmul.f32.gmra.mxu0 %v612
  %v2115 = vpop.f32.mrf.mxu0
  %v2116 = vadd.f32 %v1907, %v2115
  %2117 = vmatmul.f32.gmra.mxu0 %v613
  %v2118 = vpop.f32.mrf.mxu0
  %v2119 = vadd.f32 %v1910, %v2118
  %2120 = vmatmul.f32.gmra.mxu0 %v614
  %v2121 = vpop.f32.mrf.mxu0
  %v2122 = vadd.f32 %v1913, %v2121
  %2123 = vmatmul.f32.gmra.mxu0 %v615
  %v2124 = vpop.f32.mrf.mxu0
  %v2125 = vadd.f32 %v1916, %v2124
  %2126 = vmatmul.f32.gmra.mxu0 %v616
  %v2127 = vpop.f32.mrf.mxu0
  %v2128 = vadd.f32 %v1919, %v2127
  %2129 = vmatmul.f32.gmra.mxu0 %v617
  %v2130 = vpop.f32.mrf.mxu0
  %v2131 = vadd.f32 %v1922, %v2130
  %2132 = vmatmul.f32.gmra.mxu0 %v618
  %v2133 = vpop.f32.mrf.mxu0
  %v2134 = vadd.f32 %v1925, %v2133
  %2135 = vmatmul.f32.gmra.mxu0 %v619
  %v2136 = vpop.f32.mrf.mxu0
  %v2137 = vadd.f32 %v1928, %v2136
  %2138 = vmatmul.f32.gmra.mxu0 %v620
  %v2139 = vpop.f32.mrf.mxu0
  %v2140 = vadd.f32 %v1931, %v2139
  %2141 = vmatmul.f32.gmra.mxu0 %v621
  %v2142 = vpop.f32.mrf.mxu0
  %v2143 = vadd.f32 %v1934, %v2142
  %2144 = vmatmul.f32.gmra.mxu0 %v622
  %v2145 = vpop.f32.mrf.mxu0
  %v2146 = vadd.f32 %v1937, %v2145
  %2147 = vmatmul.f32.gmra.mxu0 %v623
  %v2148 = vpop.f32.mrf.mxu0
  %v2149 = vadd.f32 %v1940, %v2148
  %2150 = vmatmul.f32.gmra.mxu0 %v624
  %v2151 = vpop.f32.mrf.mxu0
  %v2152 = vadd.f32 %v1943, %v2151
  %2153 = vmatmul.f32.gmra.mxu0 %v625
  %v2154 = vpop.f32.mrf.mxu0
  %v2155 = vadd.f32 %v1946, %v2154
  %2156 = vmatmul.f32.gmra.mxu0 %v626
  %v2157 = vpop.f32.mrf.mxu0
  %v2158 = vadd.f32 %v1949, %v2157
  %2159 = vmatmul.f32.gmra.mxu0 %v627
  %v2160 = vpop.f32.mrf.mxu0
  %v2161 = vadd.f32 %v1952, %v2160
  %2162 = vmatmul.f32.gmra.mxu0 %v628
  %v2163 = vpop.f32.mrf.mxu0
  %v2164 = vadd.f32 %v1955, %v2163
  %2165 = vmatmul.f32.gmra.mxu0 %v629
  %v2166 = vpop.f32.mrf.mxu0
  %v2167 = vadd.f32 %v1958, %v2166
  %2168 = vmatmul.f32.gmra.mxu0 %v630
  %v2169 = vpop.f32.mrf.mxu0
  %v2170 = vadd.f32 %v1961, %v2169
  %2171 = vmatmul.f32.gmra.mxu0 %v631
  %v2172 = vpop.f32.mrf.mxu0
  %v2173 = vadd.f32 %v1964, %v2172
  %2174 = vmatmul.f32.gmra.mxu0 %v632
  %v2175 = vpop.f32.mrf.mxu0
  %v2176 = vadd.f32 %v1967, %v2175
  %2177 = vmatmul.f32.gmra.mxu0 %v633
  %v2178 = vpop.f32.mrf.mxu0
  %v2179 = vadd.f32 %v1970, %v2178
  %2180 = vmatmul.f32.gmra.mxu0 %v634
  %v2181 = vpop.f32.mrf.mxu0
  %v2182 = vadd.f32 %v1973, %v2181
  %2183 = vmatmul.f32.gmra.mxu0 %v635
  %v2184 = vpop.f32.mrf.mxu0
  %v2185 = vadd.f32 %v1976, %v2184
  %2186 = vmatmul.f32.gmra.mxu0 %v636
  %v2187 = vpop.f32.mrf.mxu0
  %v2188 = vadd.f32 %v1979, %v2187
  %2189 = vmatmul.f32.gmra.mxu0 %v637
  %v2190 = vpop.f32.mrf.mxu0
  %v2191 = vadd.f32 %v1982, %v2190
  %2192 = vmatmul.f32.gmra.mxu0 %v638
  %v2193 = vpop.f32.mrf.mxu0
  %v2194 = vadd.f32 %v1985, %v2193
  %2195 = vmatmul.f32.gmra.mxu0 %v639
  %v2196 = vpop.f32.mrf.mxu0
  %v2197 = vadd.f32 %v1988, %v2196
  %2198 = vmatmul.f32.gmra.mxu0 %v640
  %v2199 = vpop.f32.mrf.mxu0
  %v2200 = vadd.f32 %v1991, %v2199
  %2201 = vmatmul.f32.gmra.mxu0 %v641
  %v2202 = vpop.f32.mrf.mxu0
  %v2203 = vadd.f32 %v1994, %v2202
  %2204 = vmatmul.f32.gmra.mxu0 %v642
  %v2205 = vpop.f32.mrf.mxu0
  %v2206 = vadd.f32 %v1997, %v2205
  %2207 = vmatmul.f32.gmra.mxu0 %v643
  %v2208 = vpop.f32.mrf.mxu0
  %v2209 = vadd.f32 %v2000, %v2208
  %2210 = vmatmul.f32.gmra.mxu0 %v644
  %v2211 = vpop.f32.mrf.mxu0
  %v2212 = vadd.f32 %v2003, %v2211
  %2213 = vmatmul.f32.gmra.mxu0 %v645
  %v2214 = vpop.f32.mrf.mxu0
  %v2215 = vadd.f32 %v2006, %v2214
  %2216 = vmatmul.f32.gmra.mxu0 %v646
  %v2217 = vpop.f32.mrf.mxu0
  %v2218 = vadd.f32 %v2009, %v2217
  %2219 = vmatmul.f32.gmra.mxu0 %v647
  %v2220 = vpop.f32.mrf.mxu0
  %v2221 = vadd.f32 %v2012, %v2220
  %2222 = vmatmul.f32.gmra.mxu0 %v648
  %v2223 = vpop.f32.mrf.mxu0
  %v2224 = vadd.f32 %v2015, %v2223
  %2225 = vmatmul.f32.gmra.mxu0 %v649
  %v2226 = vpop.f32.mrf.mxu0
  %v2227 = vadd.f32 %v2018, %v2226
  %2228 = vmatmul.f32.gmra.mxu0 %v650
  %v2229 = vpop.f32.mrf.mxu0
  %v2230 = vadd.f32 %v2021, %v2229
  %2231 = vmatmul.f32.gmra.mxu0 %v651
  %v2232 = vpop.f32.mrf.mxu0
  %v2233 = vadd.f32 %v2024, %v2232
  %2234 = vmatmul.f32.gmra.mxu0 %v652
  %v2235 = vpop.f32.mrf.mxu0
  %v2236 = vadd.f32 %v2027, %v2235
  %2237 = vmatmul.f32.gmra.mxu0 %v653
  %v2238 = vpop.f32.mrf.mxu0
  %v2239 = vadd.f32 %v2030, %v2238
  %2240 = vmatmul.f32.gmra.mxu0 %v654
  %v2241 = vpop.f32.mrf.mxu0
  %v2242 = vadd.f32 %v2033, %v2241
  %2243 = vmatmul.f32.gmra.mxu0 %v655
  %v2244 = vpop.f32.mrf.mxu0
  %v2245 = vadd.f32 %v2036, %v2244
  %2246 = vdwg.mxu0
  %2247 = vmatpush.msra.mxu0 %v960
  %2248 = vmatpush.msra.mxu0 %v959
  %2249 = vmatpush.msra.mxu0 %v958
  %2250 = vmatpush.msra.mxu0 %v957
  %2251 = vmatpush.msra.mxu0 %v956
  %2252 = vmatpush.msra.mxu0 %v955
  %2253 = vmatpush.msra.mxu0 %v954
  %2254 = vmatpush.msra.mxu0 %v953
  %2255 = vmatpush.msra.mxu0 %v952
  %2256 = vmatpush.msra.mxu0 %v951
  %2257 = vmatpush.msra.mxu0 %v950
  %2258 = vmatpush.msra.mxu0 %v949
  %2259 = vmatpush.msra.mxu0 %v948
  %2260 = vmatpush.msra.mxu0 %v947
  %2261 = vmatpush.msra.mxu0 %v946
  %2262 = vmatpush.msra.mxu0 %v945
  %2263 = vmatmul.f32.gmra.mxu0 %v657
  %v2264 = vpop.f32.mrf.mxu0
  %v2265 = vadd.f32 %v2056, %v2264
  %2266 = vmatmul.f32.gmra.mxu0 %v658
  %v2267 = vpop.f32.mrf.mxu0
  %v2268 = vadd.f32 %v2059, %v2267
  %2269 = vmatmul.f32.gmra.mxu0 %v659
  %v2270 = vpop.f32.mrf.mxu0
  %v2271 = vadd.f32 %v2062, %v2270
  %2272 = vmatmul.f32.gmra.mxu0 %v660
  %v2273 = vpop.f32.mrf.mxu0
  %v2274 = vadd.f32 %v2065, %v2273
  %2275 = vmatmul.f32.gmra.mxu0 %v661
  %v2276 = vpop.f32.mrf.mxu0
  %v2277 = vadd.f32 %v2068, %v2276
  %2278 = vmatmul.f32.gmra.mxu0 %v662
  %v2279 = vpop.f32.mrf.mxu0
  %v2280 = vadd.f32 %v2071, %v2279
  %2281 = vmatmul.f32.gmra.mxu0 %v663
  %v2282 = vpop.f32.mrf.mxu0
  %v2283 = vadd.f32 %v2074, %v2282
  %2284 = vmatmul.f32.gmra.mxu0 %v664
  %v2285 = vpop.f32.mrf.mxu0
  %v2286 = vadd.f32 %v2077, %v2285
  %2287 = vmatmul.f32.gmra.mxu0 %v665
  %v2288 = vpop.f32.mrf.mxu0
  %v2289 = vadd.f32 %v2080, %v2288
  %2290 = vmatmul.f32.gmra.mxu0 %v666
  %v2291 = vpop.f32.mrf.mxu0
  %v2292 = vadd.f32 %v2083, %v2291
  %2293 = vmatmul.f32.gmra.mxu0 %v667
  %v2294 = vpop.f32.mrf.mxu0
  %v2295 = vadd.f32 %v2086, %v2294
  %2296 = vmatmul.f32.gmra.mxu0 %v668
  %v2297 = vpop.f32.mrf.mxu0
  %v2298 = vadd.f32 %v2089, %v2297
  %2299 = vmatmul.f32.gmra.mxu0 %v669
  %v2300 = vpop.f32.mrf.mxu0
  %v2301 = vadd.f32 %v2092, %v2300
  %2302 = vmatmul.f32.gmra.mxu0 %v670
  %v2303 = vpop.f32.mrf.mxu0
  %v2304 = vadd.f32 %v2095, %v2303
  %2305 = vmatmul.f32.gmra.mxu0 %v671
  %v2306 = vpop.f32.mrf.mxu0
  %v2307 = vadd.f32 %v2098, %v2306
  %2308 = vmatmul.f32.gmra.mxu0 %v672
  %v2309 = vpop.f32.mrf.mxu0
  %v2310 = vadd.f32 %v2101, %v2309
  %2311 = vmatmul.f32.gmra.mxu0 %v673
  %v2312 = vpop.f32.mrf.mxu0
  %v2313 = vadd.f32 %v2104, %v2312
  %2314 = vmatmul.f32.gmra.mxu0 %v674
  %v2315 = vpop.f32.mrf.mxu0
  %v2316 = vadd.f32 %v2107, %v2315
  %2317 = vmatmul.f32.gmra.mxu0 %v675
  %v2318 = vpop.f32.mrf.mxu0
  %v2319 = vadd.f32 %v2110, %v2318
  %2320 = vmatmul.f32.gmra.mxu0 %v676
  %v2321 = vpop.f32.mrf.mxu0
  %v2322 = vadd.f32 %v2113, %v2321
  %2323 = vmatmul.f32.gmra.mxu0 %v677
  %v2324 = vpop.f32.mrf.mxu0
  %v2325 = vadd.f32 %v2116, %v2324
  %2326 = vmatmul.f32.gmra.mxu0 %v678
  %v2327 = vpop.f32.mrf.mxu0
  %v2328 = vadd.f32 %v2119, %v2327
  %2329 = vmatmul.f32.gmra.mxu0 %v679
  %v2330 = vpop.f32.mrf.mxu0
  %v2331 = vadd.f32 %v2122, %v2330
  %2332 = vmatmul.f32.gmra.mxu0 %v680
  %v2333 = vpop.f32.mrf.mxu0
  %v2334 = vadd.f32 %v2125, %v2333
  %2335 = vmatmul.f32.gmra.mxu0 %v681
  %v2336 = vpop.f32.mrf.mxu0
  %v2337 = vadd.f32 %v2128, %v2336
  %2338 = vmatmul.f32.gmra.mxu0 %v682
  %v2339 = vpop.f32.mrf.mxu0
  %v2340 = vadd.f32 %v2131, %v2339
  %2341 = vmatmul.f32.gmra.mxu0 %v683
  %v2342 = vpop.f32.mrf.mxu0
  %v2343 = vadd.f32 %v2134, %v2342
  %2344 = vmatmul.f32.gmra.mxu0 %v684
  %v2345 = vpop.f32.mrf.mxu0
  %v2346 = vadd.f32 %v2137, %v2345
  %2347 = vmatmul.f32.gmra.mxu0 %v685
  %v2348 = vpop.f32.mrf.mxu0
  %v2349 = vadd.f32 %v2140, %v2348
  %2350 = vmatmul.f32.gmra.mxu0 %v686
  %v2351 = vpop.f32.mrf.mxu0
  %v2352 = vadd.f32 %v2143, %v2351
  %2353 = vmatmul.f32.gmra.mxu0 %v687
  %v2354 = vpop.f32.mrf.mxu0
  %v2355 = vadd.f32 %v2146, %v2354
  %2356 = vmatmul.f32.gmra.mxu0 %v688
  %v2357 = vpop.f32.mrf.mxu0
  %v2358 = vadd.f32 %v2149, %v2357
  %2359 = vmatmul.f32.gmra.mxu0 %v689
  %v2360 = vpop.f32.mrf.mxu0
  %v2361 = vadd.f32 %v2152, %v2360
  %2362 = vmatmul.f32.gmra.mxu0 %v690
  %v2363 = vpop.f32.mrf.mxu0
  %v2364 = vadd.f32 %v2155, %v2363
  %2365 = vmatmul.f32.gmra.mxu0 %v691
  %v2366 = vpop.f32.mrf.mxu0
  %v2367 = vadd.f32 %v2158, %v2366
  %2368 = vmatmul.f32.gmra.mxu0 %v692
  %v2369 = vpop.f32.mrf.mxu0
  %v2370 = vadd.f32 %v2161, %v2369
  %2371 = vmatmul.f32.gmra.mxu0 %v693
  %v2372 = vpop.f32.mrf.mxu0
  %v2373 = vadd.f32 %v2164, %v2372
  %2374 = vmatmul.f32.gmra.mxu0 %v694
  %v2375 = vpop.f32.mrf.mxu0
  %v2376 = vadd.f32 %v2167, %v2375
  %2377 = vmatmul.f32.gmra.mxu0 %v695
  %v2378 = vpop.f32.mrf.mxu0
  %v2379 = vadd.f32 %v2170, %v2378
  %2380 = vmatmul.f32.gmra.mxu0 %v696
  %v2381 = vpop.f32.mrf.mxu0
  %v2382 = vadd.f32 %v2173, %v2381
  %2383 = vmatmul.f32.gmra.mxu0 %v697
  %v2384 = vpop.f32.mrf.mxu0
  %v2385 = vadd.f32 %v2176, %v2384
  %2386 = vmatmul.f32.gmra.mxu0 %v698
  %v2387 = vpop.f32.mrf.mxu0
  %v2388 = vadd.f32 %v2179, %v2387
  %2389 = vmatmul.f32.gmra.mxu0 %v699
  %v2390 = vpop.f32.mrf.mxu0
  %v2391 = vadd.f32 %v2182, %v2390
  %2392 = vmatmul.f32.gmra.mxu0 %v700
  %v2393 = vpop.f32.mrf.mxu0
  %v2394 = vadd.f32 %v2185, %v2393
  %2395 = vmatmul.f32.gmra.mxu0 %v701
  %v2396 = vpop.f32.mrf.mxu0
  %v2397 = vadd.f32 %v2188, %v2396
  %2398 = vmatmul.f32.gmra.mxu0 %v702
  %v2399 = vpop.f32.mrf.mxu0
  %v2400 = vadd.f32 %v2191, %v2399
  %2401 = vmatmul.f32.gmra.mxu0 %v703
  %v2402 = vpop.f32.mrf.mxu0
  %v2403 = vadd.f32 %v2194, %v2402
  %2404 = vmatmul.f32.gmra.mxu0 %v704
  %v2405 = vpop.f32.mrf.mxu0
  %v2406 = vadd.f32 %v2197, %v2405
  %2407 = vmatmul.f32.gmra.mxu0 %v705
  %v2408 = vpop.f32.mrf.mxu0
  %v2409 = vadd.f32 %v2200, %v2408
  %2410 = vmatmul.f32.gmra.mxu0 %v706
  %v2411 = vpop.f32.mrf.mxu0
  %v2412 = vadd.f32 %v2203, %v2411
  %2413 = vmatmul.f32.gmra.mxu0 %v707
  %v2414 = vpop.f32.mrf.mxu0
  %v2415 = vadd.f32 %v2206, %v2414
  %2416 = vmatmul.f32.gmra.mxu0 %v708
  %v2417 = vpop.f32.mrf.mxu0
  %v2418 = vadd.f32 %v2209, %v2417
  %2419 = vmatmul.f32.gmra.mxu0 %v709
  %v2420 = vpop.f32.mrf.mxu0
  %v2421 = vadd.f32 %v2212, %v2420
  %2422 = vmatmul.f32.gmra.mxu0 %v710
  %v2423 = vpop.f32.mrf.mxu0
  %v2424 = vadd.f32 %v2215, %v2423
  %2425 = vmatmul.f32.gmra.mxu0 %v711
  %v2426 = vpop.f32.mrf.mxu0
  %v2427 = vadd.f32 %v2218, %v2426
  %2428 = vmatmul.f32.gmra.mxu0 %v712
  %v2429 = vpop.f32.mrf.mxu0
  %v2430 = vadd.f32 %v2221, %v2429
  %2431 = vmatmul.f32.gmra.mxu0 %v713
  %v2432 = vpop.f32.mrf.mxu0
  %v2433 = vadd.f32 %v2224, %v2432
  %2434 = vmatmul.f32.gmra.mxu0 %v714
  %v2435 = vpop.f32.mrf.mxu0
  %v2436 = vadd.f32 %v2227, %v2435
  %2437 = vmatmul.f32.gmra.mxu0 %v715
  %v2438 = vpop.f32.mrf.mxu0
  %v2439 = vadd.f32 %v2230, %v2438
  %2440 = vmatmul.f32.gmra.mxu0 %v716
  %v2441 = vpop.f32.mrf.mxu0
  %v2442 = vadd.f32 %v2233, %v2441
  %2443 = vmatmul.f32.gmra.mxu0 %v717
  %v2444 = vpop.f32.mrf.mxu0
  %v2445 = vadd.f32 %v2236, %v2444
  %2446 = vmatmul.f32.gmra.mxu0 %v718
  %v2447 = vpop.f32.mrf.mxu0
  %v2448 = vadd.f32 %v2239, %v2447
  %2449 = vmatmul.f32.gmra.mxu0 %v719
  %v2450 = vpop.f32.mrf.mxu0
  %v2451 = vadd.f32 %v2242, %v2450
  %2452 = vmatmul.f32.gmra.mxu0 %v720
  %v2453 = vpop.f32.mrf.mxu0
  %v2454 = vadd.f32 %v2245, %v2453
  %2455 = vdwg.mxu0
  %2456 = vmatpush.msra.mxu0 %v976
  %2457 = vmatpush.msra.mxu0 %v975
  %2458 = vmatpush.msra.mxu0 %v974
  %2459 = vmatpush.msra.mxu0 %v973
  %2460 = vmatpush.msra.mxu0 %v972
  %2461 = vmatpush.msra.mxu0 %v971
  %2462 = vmatpush.msra.mxu0 %v970
  %2463 = vmatpush.msra.mxu0 %v969
  %2464 = vmatpush.msra.mxu0 %v968
  %2465 = vmatpush.msra.mxu0 %v967
  %2466 = vmatpush.msra.mxu0 %v966
  %2467 = vmatpush.msra.mxu0 %v965
  %2468 = vmatpush.msra.mxu0 %v964
  %2469 = vmatpush.msra.mxu0 %v963
  %2470 = vmatpush.msra.mxu0 %v962
  %2471 = vmatpush.msra.mxu0 %v961
  %2472 = vmatmul.f32.gmra.mxu0 %v721
  %v2473 = vpop.f32.mrf.mxu0
  %v2474 = vadd.f32 %v2265, %v2473
  %2475 = vmatmul.f32.gmra.mxu0 %v722
  %v2476 = vpop.f32.mrf.mxu0
  %v2477 = vadd.f32 %v2268, %v2476
  %2478 = vmatmul.f32.gmra.mxu0 %v723
  %v2479 = vpop.f32.mrf.mxu0
  %v2480 = vadd.f32 %v2271, %v2479
  %2481 = vmatmul.f32.gmra.mxu0 %v724
  %v2482 = vpop.f32.mrf.mxu0
  %v2483 = vadd.f32 %v2274, %v2482
  %2484 = vmatmul.f32.gmra.mxu0 %v725
  %v2485 = vpop.f32.mrf.mxu0
  %v2486 = vadd.f32 %v2277, %v2485
  %2487 = vmatmul.f32.gmra.mxu0 %v726
  %v2488 = vpop.f32.mrf.mxu0
  %v2489 = vadd.f32 %v2280, %v2488
  %2490 = vmatmul.f32.gmra.mxu0 %v727
  %v2491 = vpop.f32.mrf.mxu0
  %v2492 = vadd.f32 %v2283, %v2491
  %2493 = vmatmul.f32.gmra.mxu0 %v728
  %v2494 = vpop.f32.mrf.mxu0
  %v2495 = vadd.f32 %v2286, %v2494
  %2496 = vmatmul.f32.gmra.mxu0 %v729
  %v2497 = vpop.f32.mrf.mxu0
  %v2498 = vadd.f32 %v2289, %v2497
  %2499 = vmatmul.f32.gmra.mxu0 %v730
  %v2500 = vpop.f32.mrf.mxu0
  %v2501 = vadd.f32 %v2292, %v2500
  %2502 = vmatmul.f32.gmra.mxu0 %v731
  %v2503 = vpop.f32.mrf.mxu0
  %v2504 = vadd.f32 %v2295, %v2503
  %2505 = vmatmul.f32.gmra.mxu0 %v732
  %v2506 = vpop.f32.mrf.mxu0
  %v2507 = vadd.f32 %v2298, %v2506
  %2508 = vmatmul.f32.gmra.mxu0 %v733
  %v2509 = vpop.f32.mrf.mxu0
  %v2510 = vadd.f32 %v2301, %v2509
  %2511 = vmatmul.f32.gmra.mxu0 %v734
  %v2512 = vpop.f32.mrf.mxu0
  %v2513 = vadd.f32 %v2304, %v2512
  %2514 = vmatmul.f32.gmra.mxu0 %v735
  %v2515 = vpop.f32.mrf.mxu0
  %v2516 = vadd.f32 %v2307, %v2515
  %2517 = vmatmul.f32.gmra.mxu0 %v736
  %v2518 = vpop.f32.mrf.mxu0
  %v2519 = vadd.f32 %v2310, %v2518
  %2520 = vmatmul.f32.gmra.mxu0 %v737
  %v2521 = vpop.f32.mrf.mxu0
  %v2522 = vadd.f32 %v2313, %v2521
  %2523 = vmatmul.f32.gmra.mxu0 %v738
  %v2524 = vpop.f32.mrf.mxu0
  %v2525 = vadd.f32 %v2316, %v2524
  %2526 = vmatmul.f32.gmra.mxu0 %v739
  %v2527 = vpop.f32.mrf.mxu0
  %v2528 = vadd.f32 %v2319, %v2527
  %2529 = vmatmul.f32.gmra.mxu0 %v740
  %v2530 = vpop.f32.mrf.mxu0
  %v2531 = vadd.f32 %v2322, %v2530
  %2532 = vmatmul.f32.gmra.mxu0 %v741
  %v2533 = vpop.f32.mrf.mxu0
  %v2534 = vadd.f32 %v2325, %v2533
  %2535 = vmatmul.f32.gmra.mxu0 %v742
  %v2536 = vpop.f32.mrf.mxu0
  %v2537 = vadd.f32 %v2328, %v2536
  %2538 = vmatmul.f32.gmra.mxu0 %v743
  %v2539 = vpop.f32.mrf.mxu0
  %v2540 = vadd.f32 %v2331, %v2539
  %2541 = vmatmul.f32.gmra.mxu0 %v744
  %v2542 = vpop.f32.mrf.mxu0
  %v2543 = vadd.f32 %v2334, %v2542
  %2544 = vmatmul.f32.gmra.mxu0 %v745
  %v2545 = vpop.f32.mrf.mxu0
  %v2546 = vadd.f32 %v2337, %v2545
  %2547 = vmatmul.f32.gmra.mxu0 %v746
  %v2548 = vpop.f32.mrf.mxu0
  %v2549 = vadd.f32 %v2340, %v2548
  %2550 = vmatmul.f32.gmra.mxu0 %v747
  %v2551 = vpop.f32.mrf.mxu0
  %v2552 = vadd.f32 %v2343, %v2551
  %2553 = vmatmul.f32.gmra.mxu0 %v748
  %v2554 = vpop.f32.mrf.mxu0
  %v2555 = vadd.f32 %v2346, %v2554
  %2556 = vmatmul.f32.gmra.mxu0 %v749
  %v2557 = vpop.f32.mrf.mxu0
  %v2558 = vadd.f32 %v2349, %v2557
  %2559 = vmatmul.f32.gmra.mxu0 %v750
  %v2560 = vpop.f32.mrf.mxu0
  %v2561 = vadd.f32 %v2352, %v2560
  %2562 = vmatmul.f32.gmra.mxu0 %v751
  %v2563 = vpop.f32.mrf.mxu0
  %v2564 = vadd.f32 %v2355, %v2563
  %2565 = vmatmul.f32.gmra.mxu0 %v752
  %v2566 = vpop.f32.mrf.mxu0
  %v2567 = vadd.f32 %v2358, %v2566
  %2568 = vmatmul.f32.gmra.mxu0 %v753
  %v2569 = vpop.f32.mrf.mxu0
  %v2570 = vadd.f32 %v2361, %v2569
  %2571 = vmatmul.f32.gmra.mxu0 %v754
  %v2572 = vpop.f32.mrf.mxu0
  %v2573 = vadd.f32 %v2364, %v2572
  %2574 = vmatmul.f32.gmra.mxu0 %v755
  %v2575 = vpop.f32.mrf.mxu0
  %v2576 = vadd.f32 %v2367, %v2575
  %2577 = vmatmul.f32.gmra.mxu0 %v756
  %v2578 = vpop.f32.mrf.mxu0
  %v2579 = vadd.f32 %v2370, %v2578
  %2580 = vmatmul.f32.gmra.mxu0 %v757
  %v2581 = vpop.f32.mrf.mxu0
  %v2582 = vadd.f32 %v2373, %v2581
  %2583 = vmatmul.f32.gmra.mxu0 %v758
  %v2584 = vpop.f32.mrf.mxu0
  %v2585 = vadd.f32 %v2376, %v2584
  %2586 = vmatmul.f32.gmra.mxu0 %v759
  %v2587 = vpop.f32.mrf.mxu0
  %v2588 = vadd.f32 %v2379, %v2587
  %2589 = vmatmul.f32.gmra.mxu0 %v760
  %v2590 = vpop.f32.mrf.mxu0
  %v2591 = vadd.f32 %v2382, %v2590
  %2592 = vmatmul.f32.gmra.mxu0 %v761
  %v2593 = vpop.f32.mrf.mxu0
  %v2594 = vadd.f32 %v2385, %v2593
  %2595 = vmatmul.f32.gmra.mxu0 %v762
  %v2596 = vpop.f32.mrf.mxu0
  %v2597 = vadd.f32 %v2388, %v2596
  %2598 = vmatmul.f32.gmra.mxu0 %v763
  %v2599 = vpop.f32.mrf.mxu0
  %v2600 = vadd.f32 %v2391, %v2599
  %2601 = vmatmul.f32.gmra.mxu0 %v764
  %v2602 = vpop.f32.mrf.mxu0
  %v2603 = vadd.f32 %v2394, %v2602
  %2604 = vmatmul.f32.gmra.mxu0 %v765
  %v2605 = vpop.f32.mrf.mxu0
  %v2606 = vadd.f32 %v2397, %v2605
  %2607 = vmatmul.f32.gmra.mxu0 %v766
  %v2608 = vpop.f32.mrf.mxu0
  %v2609 = vadd.f32 %v2400, %v2608
  %2610 = vmatmul.f32.gmra.mxu0 %v767
  %v2611 = vpop.f32.mrf.mxu0
  %v2612 = vadd.f32 %v2403, %v2611
  %2613 = vmatmul.f32.gmra.mxu0 %v768
  %v2614 = vpop.f32.mrf.mxu0
  %v2615 = vadd.f32 %v2406, %v2614
  %2616 = vmatmul.f32.gmra.mxu0 %v769
  %v2617 = vpop.f32.mrf.mxu0
  %v2618 = vadd.f32 %v2409, %v2617
  %2619 = vmatmul.f32.gmra.mxu0 %v770
  %v2620 = vpop.f32.mrf.mxu0
  %v2621 = vadd.f32 %v2412, %v2620
  %2622 = vmatmul.f32.gmra.mxu0 %v771
  %v2623 = vpop.f32.mrf.mxu0
  %v2624 = vadd.f32 %v2415, %v2623
  %2625 = vmatmul.f32.gmra.mxu0 %v772
  %v2626 = vpop.f32.mrf.mxu0
  %v2627 = vadd.f32 %v2418, %v2626
  %2628 = vmatmul.f32.gmra.mxu0 %v773
  %v2629 = vpop.f32.mrf.mxu0
  %v2630 = vadd.f32 %v2421, %v2629
  %2631 = vmatmul.f32.gmra.mxu0 %v774
  %v2632 = vpop.f32.mrf.mxu0
  %v2633 = vadd.f32 %v2424, %v2632
  %2634 = vmatmul.f32.gmra.mxu0 %v775
  %v2635 = vpop.f32.mrf.mxu0
  %v2636 = vadd.f32 %v2427, %v2635
  %2637 = vmatmul.f32.gmra.mxu0 %v776
  %v2638 = vpop.f32.mrf.mxu0
  %v2639 = vadd.f32 %v2430, %v2638
  %2640 = vmatmul.f32.gmra.mxu0 %v777
  %v2641 = vpop.f32.mrf.mxu0
  %v2642 = vadd.f32 %v2433, %v2641
  %2643 = vmatmul.f32.gmra.mxu0 %v778
  %v2644 = vpop.f32.mrf.mxu0
  %v2645 = vadd.f32 %v2436, %v2644
  %2646 = vmatmul.f32.gmra.mxu0 %v779
  %v2647 = vpop.f32.mrf.mxu0
  %v2648 = vadd.f32 %v2439, %v2647
  %2649 = vmatmul.f32.gmra.mxu0 %v780
  %v2650 = vpop.f32.mrf.mxu0
  %v2651 = vadd.f32 %v2442, %v2650
  %2652 = vmatmul.f32.gmra.mxu0 %v781
  %v2653 = vpop.f32.mrf.mxu0
  %v2654 = vadd.f32 %v2445, %v2653
  %2655 = vmatmul.f32.gmra.mxu0 %v782
  %v2656 = vpop.f32.mrf.mxu0
  %v2657 = vadd.f32 %v2448, %v2656
  %2658 = vmatmul.f32.gmra.mxu0 %v783
  %v2659 = vpop.f32.mrf.mxu0
  %v2660 = vadd.f32 %v2451, %v2659
  %2661 = vmatmul.f32.gmra.mxu0 %v784
  %v2662 = vpop.f32.mrf.mxu0
  %v2663 = vadd.f32 %v2454, %v2662
  %2664 = vdwg.mxu0
  %2665 = vmatpush.msra.mxu0 %v992
  %2666 = vmatpush.msra.mxu0 %v991
  %2667 = vmatpush.msra.mxu0 %v990
  %2668 = vmatpush.msra.mxu0 %v989
  %2669 = vmatpush.msra.mxu0 %v988
  %2670 = vmatpush.msra.mxu0 %v987
  %2671 = vmatpush.msra.mxu0 %v986
  %2672 = vmatpush.msra.mxu0 %v985
  %2673 = vmatpush.msra.mxu0 %v984
  %2674 = vmatpush.msra.mxu0 %v983
  %2675 = vmatpush.msra.mxu0 %v982
  %2676 = vmatpush.msra.mxu0 %v981
  %2677 = vmatpush.msra.mxu0 %v980
  %2678 = vmatpush.msra.mxu0 %v979
  %2679 = vmatpush.msra.mxu0 %v978
  %2680 = vmatpush.msra.mxu0 %v977
  %2681 = vmatmul.f32.gmra.mxu0 %v785
  %v2682 = vpop.f32.mrf.mxu0
  %v2683 = vadd.f32 %v2474, %v2682
  %2684 = vmatmul.f32.gmra.mxu0 %v786
  %v2685 = vpop.f32.mrf.mxu0
  %v2686 = vadd.f32 %v2477, %v2685
  %2687 = vmatmul.f32.gmra.mxu0 %v787
  %v2688 = vpop.f32.mrf.mxu0
  %v2689 = vadd.f32 %v2480, %v2688
  %2690 = vmatmul.f32.gmra.mxu0 %v788
  %v2691 = vpop.f32.mrf.mxu0
  %v2692 = vadd.f32 %v2483, %v2691
  %2693 = vmatmul.f32.gmra.mxu0 %v789
  %v2694 = vpop.f32.mrf.mxu0
  %v2695 = vadd.f32 %v2486, %v2694
  %2696 = vmatmul.f32.gmra.mxu0 %v790
  %v2697 = vpop.f32.mrf.mxu0
  %v2698 = vadd.f32 %v2489, %v2697
  %2699 = vmatmul.f32.gmra.mxu0 %v791
  %v2700 = vpop.f32.mrf.mxu0
  %v2701 = vadd.f32 %v2492, %v2700
  %2702 = vmatmul.f32.gmra.mxu0 %v792
  %v2703 = vpop.f32.mrf.mxu0
  %v2704 = vadd.f32 %v2495, %v2703
  %2705 = vmatmul.f32.gmra.mxu0 %v793
  %v2706 = vpop.f32.mrf.mxu0
  %v2707 = vadd.f32 %v2498, %v2706
  %2708 = vmatmul.f32.gmra.mxu0 %v794
  %v2709 = vpop.f32.mrf.mxu0
  %v2710 = vadd.f32 %v2501, %v2709
  %2711 = vmatmul.f32.gmra.mxu0 %v795
  %v2712 = vpop.f32.mrf.mxu0
  %v2713 = vadd.f32 %v2504, %v2712
  %2714 = vmatmul.f32.gmra.mxu0 %v796
  %v2715 = vpop.f32.mrf.mxu0
  %v2716 = vadd.f32 %v2507, %v2715
  %2717 = vmatmul.f32.gmra.mxu0 %v797
  %v2718 = vpop.f32.mrf.mxu0
  %v2719 = vadd.f32 %v2510, %v2718
  %2720 = vmatmul.f32.gmra.mxu0 %v798
  %v2721 = vpop.f32.mrf.mxu0
  %v2722 = vadd.f32 %v2513, %v2721
  %2723 = vmatmul.f32.gmra.mxu0 %v799
  %v2724 = vpop.f32.mrf.mxu0
  %v2725 = vadd.f32 %v2516, %v2724
  %2726 = vmatmul.f32.gmra.mxu0 %v800
  %v2727 = vpop.f32.mrf.mxu0
  %v2728 = vadd.f32 %v2519, %v2727
  %2729 = vmatmul.f32.gmra.mxu0 %v801
  %v2730 = vpop.f32.mrf.mxu0
  %v2731 = vadd.f32 %v2522, %v2730
  %2732 = vmatmul.f32.gmra.mxu0 %v802
  %v2733 = vpop.f32.mrf.mxu0
  %v2734 = vadd.f32 %v2525, %v2733
  %2735 = vmatmul.f32.gmra.mxu0 %v803
  %v2736 = vpop.f32.mrf.mxu0
  %v2737 = vadd.f32 %v2528, %v2736
  %2738 = vmatmul.f32.gmra.mxu0 %v804
  %v2739 = vpop.f32.mrf.mxu0
  %v2740 = vadd.f32 %v2531, %v2739
  %2741 = vmatmul.f32.gmra.mxu0 %v805
  %v2742 = vpop.f32.mrf.mxu0
  %v2743 = vadd.f32 %v2534, %v2742
  %2744 = vmatmul.f32.gmra.mxu0 %v806
  %v2745 = vpop.f32.mrf.mxu0
  %v2746 = vadd.f32 %v2537, %v2745
  %2747 = vmatmul.f32.gmra.mxu0 %v807
  %v2748 = vpop.f32.mrf.mxu0
  %v2749 = vadd.f32 %v2540, %v2748
  %2750 = vmatmul.f32.gmra.mxu0 %v808
  %v2751 = vpop.f32.mrf.mxu0
  %v2752 = vadd.f32 %v2543, %v2751
  %2753 = vmatmul.f32.gmra.mxu0 %v809
  %v2754 = vpop.f32.mrf.mxu0
  %v2755 = vadd.f32 %v2546, %v2754
  %2756 = vmatmul.f32.gmra.mxu0 %v810
  %v2757 = vpop.f32.mrf.mxu0
  %v2758 = vadd.f32 %v2549, %v2757
  %2759 = vmatmul.f32.gmra.mxu0 %v811
  %v2760 = vpop.f32.mrf.mxu0
  %v2761 = vadd.f32 %v2552, %v2760
  %2762 = vmatmul.f32.gmra.mxu0 %v812
  %v2763 = vpop.f32.mrf.mxu0
  %v2764 = vadd.f32 %v2555, %v2763
  %2765 = vmatmul.f32.gmra.mxu0 %v813
  %v2766 = vpop.f32.mrf.mxu0
  %v2767 = vadd.f32 %v2558, %v2766
  %2768 = vmatmul.f32.gmra.mxu0 %v814
  %v2769 = vpop.f32.mrf.mxu0
  %v2770 = vadd.f32 %v2561, %v2769
  %2771 = vmatmul.f32.gmra.mxu0 %v815
  %v2772 = vpop.f32.mrf.mxu0
  %v2773 = vadd.f32 %v2564, %v2772
  %2774 = vmatmul.f32.gmra.mxu0 %v816
  %v2775 = vpop.f32.mrf.mxu0
  %v2776 = vadd.f32 %v2567, %v2775
  %2777 = vmatmul.f32.gmra.mxu0 %v817
  %v2778 = vpop.f32.mrf.mxu0
  %v2779 = vadd.f32 %v2570, %v2778
  %2780 = vmatmul.f32.gmra.mxu0 %v818
  %v2781 = vpop.f32.mrf.mxu0
  %v2782 = vadd.f32 %v2573, %v2781
  %2783 = vmatmul.f32.gmra.mxu0 %v819
  %v2784 = vpop.f32.mrf.mxu0
  %v2785 = vadd.f32 %v2576, %v2784
  %2786 = vmatmul.f32.gmra.mxu0 %v820
  %v2787 = vpop.f32.mrf.mxu0
  %v2788 = vadd.f32 %v2579, %v2787
  %2789 = vmatmul.f32.gmra.mxu0 %v821
  %v2790 = vpop.f32.mrf.mxu0
  %v2791 = vadd.f32 %v2582, %v2790
  %2792 = vmatmul.f32.gmra.mxu0 %v822
  %v2793 = vpop.f32.mrf.mxu0
  %v2794 = vadd.f32 %v2585, %v2793
  %2795 = vmatmul.f32.gmra.mxu0 %v823
  %v2796 = vpop.f32.mrf.mxu0
  %v2797 = vadd.f32 %v2588, %v2796
  %2798 = vmatmul.f32.gmra.mxu0 %v824
  %v2799 = vpop.f32.mrf.mxu0
  %v2800 = vadd.f32 %v2591, %v2799
  %2801 = vmatmul.f32.gmra.mxu0 %v825
  %v2802 = vpop.f32.mrf.mxu0
  %v2803 = vadd.f32 %v2594, %v2802
  %2804 = vmatmul.f32.gmra.mxu0 %v826
  %v2805 = vpop.f32.mrf.mxu0
  %v2806 = vadd.f32 %v2597, %v2805
  %2807 = vmatmul.f32.gmra.mxu0 %v827
  %v2808 = vpop.f32.mrf.mxu0
  %v2809 = vadd.f32 %v2600, %v2808
  %2810 = vmatmul.f32.gmra.mxu0 %v828
  %v2811 = vpop.f32.mrf.mxu0
  %v2812 = vadd.f32 %v2603, %v2811
  %2813 = vmatmul.f32.gmra.mxu0 %v829
  %v2814 = vpop.f32.mrf.mxu0
  %v2815 = vadd.f32 %v2606, %v2814
  %2816 = vmatmul.f32.gmra.mxu0 %v830
  %v2817 = vpop.f32.mrf.mxu0
  %v2818 = vadd.f32 %v2609, %v2817
  %2819 = vmatmul.f32.gmra.mxu0 %v831
  %v2820 = vpop.f32.mrf.mxu0
  %v2821 = vadd.f32 %v2612, %v2820
  %2822 = vmatmul.f32.gmra.mxu0 %v832
  %v2823 = vpop.f32.mrf.mxu0
  %v2824 = vadd.f32 %v2615, %v2823
  %2825 = vmatmul.f32.gmra.mxu0 %v833
  %v2826 = vpop.f32.mrf.mxu0
  %v2827 = vadd.f32 %v2618, %v2826
  %2828 = vmatmul.f32.gmra.mxu0 %v834
  %v2829 = vpop.f32.mrf.mxu0
  %v2830 = vadd.f32 %v2621, %v2829
  %2831 = vmatmul.f32.gmra.mxu0 %v835
  %v2832 = vpop.f32.mrf.mxu0
  %v2833 = vadd.f32 %v2624, %v2832
  %2834 = vmatmul.f32.gmra.mxu0 %v836
  %v2835 = vpop.f32.mrf.mxu0
  %v2836 = vadd.f32 %v2627, %v2835
  %2837 = vmatmul.f32.gmra.mxu0 %v837
  %v2838 = vpop.f32.mrf.mxu0
  %v2839 = vadd.f32 %v2630, %v2838
  %2840 = vmatmul.f32.gmra.mxu0 %v838
  %v2841 = vpop.f32.mrf.mxu0
  %v2842 = vadd.f32 %v2633, %v2841
  %2843 = vmatmul.f32.gmra.mxu0 %v839
  %v2844 = vpop.f32.mrf.mxu0
  %v2845 = vadd.f32 %v2636, %v2844
  %2846 = vmatmul.f32.gmra.mxu0 %v840
  %v2847 = vpop.f32.mrf.mxu0
  %v2848 = vadd.f32 %v2639, %v2847
  %2849 = vmatmul.f32.gmra.mxu0 %v841
  %v2850 = vpop.f32.mrf.mxu0
  %v2851 = vadd.f32 %v2642, %v2850
  %2852 = vmatmul.f32.gmra.mxu0 %v842
  %v2853 = vpop.f32.mrf.mxu0
  %v2854 = vadd.f32 %v2645, %v2853
  %2855 = vmatmul.f32.gmra.mxu0 %v843
  %v2856 = vpop.f32.mrf.mxu0
  %v2857 = vadd.f32 %v2648, %v2856
  %2858 = vmatmul.f32.gmra.mxu0 %v844
  %v2859 = vpop.f32.mrf.mxu0
  %v2860 = vadd.f32 %v2651, %v2859
  %2861 = vmatmul.f32.gmra.mxu0 %v845
  %v2862 = vpop.f32.mrf.mxu0
  %v2863 = vadd.f32 %v2654, %v2862
  %2864 = vmatmul.f32.gmra.mxu0 %v846
  %v2865 = vpop.f32.mrf.mxu0
  %v2866 = vadd.f32 %v2657, %v2865
  %2867 = vmatmul.f32.gmra.mxu0 %v847
  %v2868 = vpop.f32.mrf.mxu0
  %v2869 = vadd.f32 %v2660, %v2868
  %2870 = vmatmul.f32.gmra.mxu0 %v848
  %v2871 = vpop.f32.mrf.mxu0
  %v2872 = vadd.f32 %v2663, %v2871
  %2873 = vdwg.mxu0
  %v2874 = vadd.f32 %v2683, %v2686
  %v2875 = vadd.f32 %v2874, %v2689
  %v2876 = vadd.f32 %v2875, %v2692
  %v2877 = vadd.f32 %v2876, %v2695
  %v2878 = vadd.f32 %v2877, %v2698
  %v2879 = vadd.f32 %v2878, %v2701
  %v2880 = vadd.f32 %v2879, %v2704
  %v2881 = vadd.f32 %v2880, %v2707
  %v2882 = vadd.f32 %v2881, %v2710
  %v2883 = vadd.f32 %v2882, %v2713
  %v2884 = vadd.f32 %v2883, %v2716
  %v2885 = vadd.f32 %v2884, %v2719
  %v2886 = vadd.f32 %v2885, %v2722
  %v2887 = vadd.f32 %v2886, %v2725
  %v2888 = vadd.f32 %v2887, %v2728
  %v2889 = vadd.f32 %v2888, %v2731
  %v2890 = vadd.f32 %v2889, %v2734
  %v2891 = vadd.f32 %v2890, %v2737
  %v2892 = vadd.f32 %v2891, %v2740
  %v2893 = vadd.f32 %v2892, %v2743
  %v2894 = vadd.f32 %v2893, %v2746
  %v2895 = vadd.f32 %v2894, %v2749
  %v2896 = vadd.f32 %v2895, %v2752
  %v2897 = vadd.f32 %v2896, %v2755
  %v2898 = vadd.f32 %v2897, %v2758
  %v2899 = vadd.f32 %v2898, %v2761
  %v2900 = vadd.f32 %v2899, %v2764
  %v2901 = vadd.f32 %v2900, %v2767
  %v2902 = vadd.f32 %v2901, %v2770
  %v2903 = vadd.f32 %v2902, %v2773
  %v2904 = vadd.f32 %v2903, %v2776
  %v2905 = vadd.f32 %v2904, %v2779
  %v2906 = vadd.f32 %v2905, %v2782
  %v2907 = vadd.f32 %v2906, %v2785
  %v2908 = vadd.f32 %v2907, %v2788
  %v2909 = vadd.f32 %v2908, %v2791
  %v2910 = vadd.f32 %v2909, %v2794
  %v2911 = vadd.f32 %v2910, %v2797
  %v2912 = vadd.f32 %v2911, %v2800
  %v2913 = vadd.f32 %v2912, %v2803
  %v2914 = vadd.f32 %v2913, %v2806
  %v2915 = vadd.f32 %v2914, %v2809
  %v2916 = vadd.f32 %v2915, %v2812
  %v2917 = vadd.f32 %v2916, %v2815
  %v2918 = vadd.f32 %v2917, %v2818
  %v2919 = vadd.f32 %v2918, %v2821
  %v2920 = vadd.f32 %v2919, %v2824
  %v2921 = vadd.f32 %v2920, %v2827
  %v2922 = vadd.f32 %v2921, %v2830
  %v2923 = vadd.f32 %v2922, %v2833
  %v2924 = vadd.f32 %v2923, %v2836
  %v2925 = vadd.f32 %v2924, %v2839
  %v2926 = vadd.f32 %v2925, %v2842
  %v2927 = vadd.f32 %v2926, %v2845
  %v2928 = vadd.f32 %v2927, %v2848
  %v2929 = vadd.f32 %v2928, %v2851
  %v2930 = vadd.f32 %v2929, %v2854
  %v2931 = vadd.f32 %v2930, %v2857
  %v2932 = vadd.f32 %v2931, %v2860
  %v2933 = vadd.f32 %v2932, %v2863
  %v2934 = vadd.f32 %v2933, %v2866
  %v2935 = vadd.f32 %v2934, %v2869
  %v2936 = vadd.f32 %v2935, %v2872
  %v2937 = vrot.slane %v2936, 4
  %v2938 = vadd.f32 %v2936, %v2937
  %v2939 = vrot.slane %v2938, 2
  %v2940 = vadd.f32 %v2938, %v2939
  %v2941 = vrot.slane %v2940, 1
  %v2942 = vadd.f32 %v2940, %v2941
  %v2943 = vmul.f32 %v2683, %v2683
  %v2944 = vmul.f32 %v2686, %v2686
  %v2945 = vmul.f32 %v2689, %v2689
  %v2946 = vmul.f32 %v2692, %v2692
  %v2947 = vmul.f32 %v2695, %v2695
  %v2948 = vmul.f32 %v2698, %v2698
  %v2949 = vmul.f32 %v2701, %v2701
  %v2950 = vmul.f32 %v2704, %v2704
  %v2951 = vmul.f32 %v2707, %v2707
  %v2952 = vmul.f32 %v2710, %v2710
  %v2953 = vmul.f32 %v2713, %v2713
  %v2954 = vmul.f32 %v2716, %v2716
  %v2955 = vmul.f32 %v2719, %v2719
  %v2956 = vmul.f32 %v2722, %v2722
  %v2957 = vmul.f32 %v2725, %v2725
  %v2958 = vmul.f32 %v2728, %v2728
  %v2959 = vmul.f32 %v2731, %v2731
  %v2960 = vmul.f32 %v2734, %v2734
  %v2961 = vmul.f32 %v2737, %v2737
  %v2962 = vmul.f32 %v2740, %v2740
  %v2963 = vmul.f32 %v2743, %v2743
  %v2964 = vmul.f32 %v2746, %v2746
  %v2965 = vmul.f32 %v2749, %v2749
  %v2966 = vmul.f32 %v2752, %v2752
  %v2967 = vmul.f32 %v2755, %v2755
  %v2968 = vmul.f32 %v2758, %v2758
  %v2969 = vmul.f32 %v2761, %v2761
  %v2970 = vmul.f32 %v2764, %v2764
  %v2971 = vmul.f32 %v2767, %v2767
  %v2972 = vmul.f32 %v2770, %v2770
  %v2973 = vmul.f32 %v2773, %v2773
  %v2974 = vmul.f32 %v2776, %v2776
  %v2975 = vmul.f32 %v2779, %v2779
  %v2976 = vmul.f32 %v2782, %v2782
  %v2977 = vmul.f32 %v2785, %v2785
  %v2978 = vmul.f32 %v2788, %v2788
  %v2979 = vmul.f32 %v2791, %v2791
  %v2980 = vmul.f32 %v2794, %v2794
  %v2981 = vmul.f32 %v2797, %v2797
  %v2982 = vmul.f32 %v2800, %v2800
  %v2983 = vmul.f32 %v2803, %v2803
  %v2984 = vmul.f32 %v2806, %v2806
  %v2985 = vmul.f32 %v2809, %v2809
  %v2986 = vmul.f32 %v2812, %v2812
  %v2987 = vmul.f32 %v2815, %v2815
  %v2988 = vmul.f32 %v2818, %v2818
  %v2989 = vmul.f32 %v2821, %v2821
  %v2990 = vmul.f32 %v2824, %v2824
  %v2991 = vmul.f32 %v2827, %v2827
  %v2992 = vmul.f32 %v2830, %v2830
  %v2993 = vmul.f32 %v2833, %v2833
  %v2994 = vmul.f32 %v2836, %v2836
  %v2995 = vmul.f32 %v2839, %v2839
  %v2996 = vmul.f32 %v2842, %v2842
  %v2997 = vmul.f32 %v2845, %v2845
  %v2998 = vmul.f32 %v2848, %v2848
  %v2999 = vmul.f32 %v2851, %v2851
  %v3000 = vmul.f32 %v2854, %v2854
  %v3001 = vmul.f32 %v2857, %v2857
  %v3002 = vmul.f32 %v2860, %v2860
  %v3003 = vmul.f32 %v2863, %v2863
  %v3004 = vmul.f32 %v2866, %v2866
  %v3005 = vmul.f32 %v2869, %v2869
  %v3006 = vmul.f32 %v2872, %v2872
  %v3007 = vadd.f32 %v2943, %v2944
  %v3008 = vadd.f32 %v3007, %v2945
  %v3009 = vadd.f32 %v3008, %v2946
  %v3010 = vadd.f32 %v3009, %v2947
  %v3011 = vadd.f32 %v3010, %v2948
  %v3012 = vadd.f32 %v3011, %v2949
  %v3013 = vadd.f32 %v3012, %v2950
  %v3014 = vadd.f32 %v3013, %v2951
  %v3015 = vadd.f32 %v3014, %v2952
  %v3016 = vadd.f32 %v3015, %v2953
  %v3017 = vadd.f32 %v3016, %v2954
  %v3018 = vadd.f32 %v3017, %v2955
  %v3019 = vadd.f32 %v3018, %v2956
  %v3020 = vadd.f32 %v3019, %v2957
  %v3021 = vadd.f32 %v3020, %v2958
  %v3022 = vadd.f32 %v3021, %v2959
  %v3023 = vadd.f32 %v3022, %v2960
  %v3024 = vadd.f32 %v3023, %v2961
  %v3025 = vadd.f32 %v3024, %v2962
  %v3026 = vadd.f32 %v3025, %v2963
  %v3027 = vadd.f32 %v3026, %v2964
  %v3028 = vadd.f32 %v3027, %v2965
  %v3029 = vadd.f32 %v3028, %v2966
  %v3030 = vadd.f32 %v3029, %v2967
  %v3031 = vadd.f32 %v3030, %v2968
  %v3032 = vadd.f32 %v3031, %v2969
  %v3033 = vadd.f32 %v3032, %v2970
  %v3034 = vadd.f32 %v3033, %v2971
  %v3035 = vadd.f32 %v3034, %v2972
  %v3036 = vadd.f32 %v3035, %v2973
  %v3037 = vadd.f32 %v3036, %v2974
  %v3038 = vadd.f32 %v3037, %v2975
  %v3039 = vadd.f32 %v3038, %v2976
  %v3040 = vadd.f32 %v3039, %v2977
  %v3041 = vadd.f32 %v3040, %v2978
  %v3042 = vadd.f32 %v3041, %v2979
  %v3043 = vadd.f32 %v3042, %v2980
  %v3044 = vadd.f32 %v3043, %v2981
  %v3045 = vadd.f32 %v3044, %v2982
  %v3046 = vadd.f32 %v3045, %v2983
  %v3047 = vadd.f32 %v3046, %v2984
  %v3048 = vadd.f32 %v3047, %v2985
  %v3049 = vadd.f32 %v3048, %v2986
  %v3050 = vadd.f32 %v3049, %v2987
  %v3051 = vadd.f32 %v3050, %v2988
  %v3052 = vadd.f32 %v3051, %v2989
  %v3053 = vadd.f32 %v3052, %v2990
  %v3054 = vadd.f32 %v3053, %v2991
  %v3055 = vadd.f32 %v3054, %v2992
  %v3056 = vadd.f32 %v3055, %v2993
  %v3057 = vadd.f32 %v3056, %v2994
  %v3058 = vadd.f32 %v3057, %v2995
  %v3059 = vadd.f32 %v3058, %v2996
  %v3060 = vadd.f32 %v3059, %v2997
  %v3061 = vadd.f32 %v3060, %v2998
  %v3062 = vadd.f32 %v3061, %v2999
  %v3063 = vadd.f32 %v3062, %v3000
  %v3064 = vadd.f32 %v3063, %v3001
  %v3065 = vadd.f32 %v3064, %v3002
  %v3066 = vadd.f32 %v3065, %v3003
  %v3067 = vadd.f32 %v3066, %v3004
  %v3068 = vadd.f32 %v3067, %v3005
  %v3069 = vadd.f32 %v3068, %v3006
  %v3070 = vrot.slane %v3069, 4
  %v3071 = vadd.f32 %v3069, %v3070
  %v3072 = vrot.slane %v3071, 2
  %v3073 = vadd.f32 %v3071, %v3072
  %v3074 = vrot.slane %v3073, 1
  %v3075 = vadd.f32 %v3073, %v3074
  %v3076 = vmul.f32 %v2942, 0.001953125
  %v3077 = vmul.f32 %v3075, 0.001953125
  %v3078 = vmul.f32 %v3076, %v3076
  %v3079 = vsub.f32 %v3077, %v3078
  %v3080 = vsub.f32 %v2683, %v3076
  %v3081 = vsub.f32 %v2686, %v3076
  %v3082 = vsub.f32 %v2689, %v3076
  %v3083 = vsub.f32 %v2692, %v3076
  %v3084 = vsub.f32 %v2695, %v3076
  %v3085 = vsub.f32 %v2698, %v3076
  %v3086 = vsub.f32 %v2701, %v3076
  %v3087 = vsub.f32 %v2704, %v3076
  %v3088 = vsub.f32 %v2707, %v3076
  %v3089 = vsub.f32 %v2710, %v3076
  %v3090 = vsub.f32 %v2713, %v3076
  %v3091 = vsub.f32 %v2716, %v3076
  %v3092 = vsub.f32 %v2719, %v3076
  %v3093 = vsub.f32 %v2722, %v3076
  %v3094 = vsub.f32 %v2725, %v3076
  %v3095 = vsub.f32 %v2728, %v3076
  %v3096 = vsub.f32 %v2731, %v3076
  %v3097 = vsub.f32 %v2734, %v3076
  %v3098 = vsub.f32 %v2737, %v3076
  %v3099 = vsub.f32 %v2740, %v3076
  %v3100 = vsub.f32 %v2743, %v3076
  %v3101 = vsub.f32 %v2746, %v3076
  %v3102 = vsub.f32 %v2749, %v3076
  %v3103 = vsub.f32 %v2752, %v3076
  %v3104 = vsub.f32 %v2755, %v3076
  %v3105 = vsub.f32 %v2758, %v3076
  %v3106 = vsub.f32 %v2761, %v3076
  %v3107 = vsub.f32 %v2764, %v3076
  %v3108 = vsub.f32 %v2767, %v3076
  %v3109 = vsub.f32 %v2770, %v3076
  %v3110 = vsub.f32 %v2773, %v3076
  %v3111 = vsub.f32 %v2776, %v3076
  %v3112 = vsub.f32 %v2779, %v3076
  %v3113 = vsub.f32 %v2782, %v3076
  %v3114 = vsub.f32 %v2785, %v3076
  %v3115 = vsub.f32 %v2788, %v3076
  %v3116 = vsub.f32 %v2791, %v3076
  %v3117 = vsub.f32 %v2794, %v3076
  %v3118 = vsub.f32 %v2797, %v3076
  %v3119 = vsub.f32 %v2800, %v3076
  %v3120 = vsub.f32 %v2803, %v3076
  %v3121 = vsub.f32 %v2806, %v3076
  %v3122 = vsub.f32 %v2809, %v3076
  %v3123 = vsub.f32 %v2812, %v3076
  %v3124 = vsub.f32 %v2815, %v3076
  %v3125 = vsub.f32 %v2818, %v3076
  %v3126 = vsub.f32 %v2821, %v3076
  %v3127 = vsub.f32 %v2824, %v3076
  %v3128 = vsub.f32 %v2827, %v3076
  %v3129 = vsub.f32 %v2830, %v3076
  %v3130 = vsub.f32 %v2833, %v3076
  %v3131 = vsub.f32 %v2836, %v3076
  %v3132 = vsub.f32 %v2839, %v3076
  %v3133 = vsub.f32 %v2842, %v3076
  %v3134 = vsub.f32 %v2845, %v3076
  %v3135 = vsub.f32 %v2848, %v3076
  %v3136 = vsub.f32 %v2851, %v3076
  %v3137 = vsub.f32 %v2854, %v3076
  %v3138 = vsub.f32 %v2857, %v3076
  %v3139 = vsub.f32 %v2860, %v3076
  %v3140 = vsub.f32 %v2863, %v3076
  %v3141 = vsub.f32 %v2866, %v3076
  %v3142 = vsub.f32 %v2869, %v3076
  %v3143 = vsub.f32 %v2872, %v3076
  %v3144 = vadd.f32 %v3079, 1e-05
  %v3145 = vrsqrt.pop %v3144
  %v3146 = vmul.f32 %v3145, %v3144
  %v3147 = vmul.f32 %v3146, %v3145
  %v3148 = vmul.f32 0.5, %v3147
  %v3149 = vsub.f32 1.5, %v3148
  %v3150 = vmul.f32 %v3145, %v3149
  %vm3151 = vweird.f32 %v3144
  %vm3152 = vweird.f32 %v3145
  %vm3153 = vmor %vm3151, %vm3152
  %v3154 = vsel %vm3153, %v3145, %v3150
  %v3155 = vmul.f32 %v3080, %v3154
  %v3156 = vmul.f32 %v3081, %v3154
  %v3157 = vmul.f32 %v3082, %v3154
  %v3158 = vmul.f32 %v3083, %v3154
  %v3159 = vmul.f32 %v3084, %v3154
  %v3160 = vmul.f32 %v3085, %v3154
  %v3161 = vmul.f32 %v3086, %v3154
  %v3162 = vmul.f32 %v3087, %v3154
  %v3163 = vmul.f32 %v3088, %v3154
  %v3164 = vmul.f32 %v3089, %v3154
  %v3165 = vmul.f32 %v3090, %v3154
  %v3166 = vmul.f32 %v3091, %v3154
  %v3167 = vmul.f32 %v3092, %v3154
  %v3168 = vmul.f32 %v3093, %v3154
  %v3169 = vmul.f32 %v3094, %v3154
  %v3170 = vmul.f32 %v3095, %v3154
  %v3171 = vmul.f32 %v3096, %v3154
  %v3172 = vmul.f32 %v3097, %v3154
  %v3173 = vmul.f32 %v3098, %v3154
  %v3174 = vmul.f32 %v3099, %v3154
  %v3175 = vmul.f32 %v3100, %v3154
  %v3176 = vmul.f32 %v3101, %v3154
  %v3177 = vmul.f32 %v3102, %v3154
  %v3178 = vmul.f32 %v3103, %v3154
  %v3179 = vmul.f32 %v3104, %v3154
  %v3180 = vmul.f32 %v3105, %v3154
  %v3181 = vmul.f32 %v3106, %v3154
  %v3182 = vmul.f32 %v3107, %v3154
  %v3183 = vmul.f32 %v3108, %v3154
  %v3184 = vmul.f32 %v3109, %v3154
  %v3185 = vmul.f32 %v3110, %v3154
  %v3186 = vmul.f32 %v3111, %v3154
  %v3187 = vmul.f32 %v3112, %v3154
  %v3188 = vmul.f32 %v3113, %v3154
  %v3189 = vmul.f32 %v3114, %v3154
  %v3190 = vmul.f32 %v3115, %v3154
  %v3191 = vmul.f32 %v3116, %v3154
  %v3192 = vmul.f32 %v3117, %v3154
  %v3193 = vmul.f32 %v3118, %v3154
  %v3194 = vmul.f32 %v3119, %v3154
  %v3195 = vmul.f32 %v3120, %v3154
  %v3196 = vmul.f32 %v3121, %v3154
  %v3197 = vmul.f32 %v3122, %v3154
  %v3198 = vmul.f32 %v3123, %v3154
  %v3199 = vmul.f32 %v3124, %v3154
  %v3200 = vmul.f32 %v3125, %v3154
  %v3201 = vmul.f32 %v3126, %v3154
  %v3202 = vmul.f32 %v3127, %v3154
  %v3203 = vmul.f32 %v3128, %v3154
  %v3204 = vmul.f32 %v3129, %v3154
  %v3205 = vmul.f32 %v3130, %v3154
  %v3206 = vmul.f32 %v3131, %v3154
  %v3207 = vmul.f32 %v3132, %v3154
  %v3208 = vmul.f32 %v3133, %v3154
  %v3209 = vmul.f32 %v3134, %v3154
  %v3210 = vmul.f32 %v3135, %v3154
  %v3211 = vmul.f32 %v3136, %v3154
  %v3212 = vmul.f32 %v3137, %v3154
  %v3213 = vmul.f32 %v3138, %v3154
  %v3214 = vmul.f32 %v3139, %v3154
  %v3215 = vmul.f32 %v3140, %v3154
  %v3216 = vmul.f32 %v3141, %v3154
  %v3217 = vmul.f32 %v3142, %v3154
  %v3218 = vmul.f32 %v3143, %v3154
  %v3219 = vld [vmem:[%s2] sm:$0x1]
  %v3221 = vperm.slane %v3219, 0
  %v3223 = vmul.f32 %v3155, %v3221
  %v3224 = vmul.f32 %v3156, %v3221
  %v3225 = vmul.f32 %v3157, %v3221
  %v3226 = vmul.f32 %v3158, %v3221
  %v3227 = vmul.f32 %v3159, %v3221
  %v3228 = vmul.f32 %v3160, %v3221
  %v3229 = vmul.f32 %v3161, %v3221
  %v3230 = vmul.f32 %v3162, %v3221
  %v3231 = vmul.f32 %v3163, %v3221
  %v3232 = vmul.f32 %v3164, %v3221
  %v3233 = vmul.f32 %v3165, %v3221
  %v3234 = vmul.f32 %v3166, %v3221
  %v3235 = vmul.f32 %v3167, %v3221
  %v3236 = vmul.f32 %v3168, %v3221
  %v3237 = vmul.f32 %v3169, %v3221
  %v3238 = vmul.f32 %v3170, %v3221
  %v3239 = vmul.f32 %v3171, %v3221
  %v3240 = vmul.f32 %v3172, %v3221
  %v3241 = vmul.f32 %v3173, %v3221
  %v3242 = vmul.f32 %v3174, %v3221
  %v3243 = vmul.f32 %v3175, %v3221
  %v3244 = vmul.f32 %v3176, %v3221
  %v3245 = vmul.f32 %v3177, %v3221
  %v3246 = vmul.f32 %v3178, %v3221
  %v3247 = vmul.f32 %v3179, %v3221
  %v3248 = vmul.f32 %v3180, %v3221
  %v3249 = vmul.f32 %v3181, %v3221
  %v3250 = vmul.f32 %v3182, %v3221
  %v3251 = vmul.f32 %v3183, %v3221
  %v3252 = vmul.f32 %v3184, %v3221
  %v3253 = vmul.f32 %v3185, %v3221
  %v3254 = vmul.f32 %v3186, %v3221
  %v3255 = vmul.f32 %v3187, %v3221
  %v3256 = vmul.f32 %v3188, %v3221
  %v3257 = vmul.f32 %v3189, %v3221
  %v3258 = vmul.f32 %v3190, %v3221
  %v3259 = vmul.f32 %v3191, %v3221
  %v3260 = vmul.f32 %v3192, %v3221
  %v3261 = vmul.f32 %v3193, %v3221
  %v3262 = vmul.f32 %v3194, %v3221
  %v3263 = vmul.f32 %v3195, %v3221
  %v3264 = vmul.f32 %v3196, %v3221
  %v3265 = vmul.f32 %v3197, %v3221
  %v3266 = vmul.f32 %v3198, %v3221
  %v3267 = vmul.f32 %v3199, %v3221
  %v3268 = vmul.f32 %v3200, %v3221
  %v3269 = vmul.f32 %v3201, %v3221
  %v3270 = vmul.f32 %v3202, %v3221
  %v3271 = vmul.f32 %v3203, %v3221
  %v3272 = vmul.f32 %v3204, %v3221
  %v3273 = vmul.f32 %v3205, %v3221
  %v3274 = vmul.f32 %v3206, %v3221
  %v3275 = vmul.f32 %v3207, %v3221
  %v3276 = vmul.f32 %v3208, %v3221
  %v3277 = vmul.f32 %v3209, %v3221
  %v3278 = vmul.f32 %v3210, %v3221
  %v3279 = vmul.f32 %v3211, %v3221
  %v3280 = vmul.f32 %v3212, %v3221
  %v3281 = vmul.f32 %v3213, %v3221
  %v3282 = vmul.f32 %v3214, %v3221
  %v3283 = vmul.f32 %v3215, %v3221
  %v3284 = vmul.f32 %v3216, %v3221
  %v3285 = vmul.f32 %v3217, %v3221
  %v3286 = vmul.f32 %v3218, %v3221
  %v3287 = vld [vmem:[%s3] sm:$0x1]
  %v3289 = vperm.slane %v3287, 0
  %v3291 = vadd.f32 %v3223, %v3289
  %v3292 = vadd.f32 %v3224, %v3289
  %v3293 = vadd.f32 %v3225, %v3289
  %v3294 = vadd.f32 %v3226, %v3289
  %v3295 = vadd.f32 %v3227, %v3289
  %v3296 = vadd.f32 %v3228, %v3289
  %v3297 = vadd.f32 %v3229, %v3289
  %v3298 = vadd.f32 %v3230, %v3289
  %v3299 = vadd.f32 %v3231, %v3289
  %v3300 = vadd.f32 %v3232, %v3289
  %v3301 = vadd.f32 %v3233, %v3289
  %v3302 = vadd.f32 %v3234, %v3289
  %v3303 = vadd.f32 %v3235, %v3289
  %v3304 = vadd.f32 %v3236, %v3289
  %v3305 = vadd.f32 %v3237, %v3289
  %v3306 = vadd.f32 %v3238, %v3289
  %v3307 = vadd.f32 %v3239, %v3289
  %v3308 = vadd.f32 %v3240, %v3289
  %v3309 = vadd.f32 %v3241, %v3289
  %v3310 = vadd.f32 %v3242, %v3289
  %v3311 = vadd.f32 %v3243, %v3289
  %v3312 = vadd.f32 %v3244, %v3289
  %v3313 = vadd.f32 %v3245, %v3289
  %v3314 = vadd.f32 %v3246, %v3289
  %v3315 = vadd.f32 %v3247, %v3289
  %v3316 = vadd.f32 %v3248, %v3289
  %v3317 = vadd.f32 %v3249, %v3289
  %v3318 = vadd.f32 %v3250, %v3289
  %v3319 = vadd.f32 %v3251, %v3289
  %v3320 = vadd.f32 %v3252, %v3289
  %v3321 = vadd.f32 %v3253, %v3289
  %v3322 = vadd.f32 %v3254, %v3289
  %v3323 = vadd.f32 %v3255, %v3289
  %v3324 = vadd.f32 %v3256, %v3289
  %v3325 = vadd.f32 %v3257, %v3289
  %v3326 = vadd.f32 %v3258, %v3289
  %v3327 = vadd.f32 %v3259, %v3289
  %v3328 = vadd.f32 %v3260, %v3289
  %v3329 = vadd.f32 %v3261, %v3289
  %v3330 = vadd.f32 %v3262, %v3289
  %v3331 = vadd.f32 %v3263, %v3289
  %v3332 = vadd.f32 %v3264, %v3289
  %v3333 = vadd.f32 %v3265, %v3289
  %v3334 = vadd.f32 %v3266, %v3289
  %v3335 = vadd.f32 %v3267, %v3289
  %v3336 = vadd.f32 %v3268, %v3289
  %v3337 = vadd.f32 %v3269, %v3289
  %v3338 = vadd.f32 %v3270, %v3289
  %v3339 = vadd.f32 %v3271, %v3289
  %v3340 = vadd.f32 %v3272, %v3289
  %v3341 = vadd.f32 %v3273, %v3289
  %v3342 = vadd.f32 %v3274, %v3289
  %v3343 = vadd.f32 %v3275, %v3289
  %v3344 = vadd.f32 %v3276, %v3289
  %v3345 = vadd.f32 %v3277, %v3289
  %v3346 = vadd.f32 %v3278, %v3289
  %v3347 = vadd.f32 %v3279, %v3289
  %v3348 = vadd.f32 %v3280, %v3289
  %v3349 = vadd.f32 %v3281, %v3289
  %v3350 = vadd.f32 %v3282, %v3289
  %v3351 = vadd.f32 %v3283, %v3289
  %v3352 = vadd.f32 %v3284, %v3289
  %v3353 = vadd.f32 %v3285, %v3289
  %v3354 = vadd.f32 %v3286, %v3289
  %v3355 = vmax.f32 %v3291, 0.0
  %v3356 = vmax.f32 %v3292, 0.0
  %v3357 = vmax.f32 %v3293, 0.0
  %v3358 = vmax.f32 %v3294, 0.0
  %v3359 = vmax.f32 %v3295, 0.0
  %v3360 = vmax.f32 %v3296, 0.0
  %v3361 = vmax.f32 %v3297, 0.0
  %v3362 = vmax.f32 %v3298, 0.0
  %v3363 = vmax.f32 %v3299, 0.0
  %v3364 = vmax.f32 %v3300, 0.0
  %v3365 = vmax.f32 %v3301, 0.0
  %v3366 = vmax.f32 %v3302, 0.0
  %v3367 = vmax.f32 %v3303, 0.0
  %v3368 = vmax.f32 %v3304, 0.0
  %v3369 = vmax.f32 %v3305, 0.0
  %v3370 = vmax.f32 %v3306, 0.0
  %v3371 = vmax.f32 %v3307, 0.0
  %v3372 = vmax.f32 %v3308, 0.0
  %v3373 = vmax.f32 %v3309, 0.0
  %v3374 = vmax.f32 %v3310, 0.0
  %v3375 = vmax.f32 %v3311, 0.0
  %v3376 = vmax.f32 %v3312, 0.0
  %v3377 = vmax.f32 %v3313, 0.0
  %v3378 = vmax.f32 %v3314, 0.0
  %v3379 = vmax.f32 %v3315, 0.0
  %v3380 = vmax.f32 %v3316, 0.0
  %v3381 = vmax.f32 %v3317, 0.0
  %v3382 = vmax.f32 %v3318, 0.0
  %v3383 = vmax.f32 %v3319, 0.0
  %v3384 = vmax.f32 %v3320, 0.0
  %v3385 = vmax.f32 %v3321, 0.0
  %v3386 = vmax.f32 %v3322, 0.0
  %v3387 = vmax.f32 %v3323, 0.0
  %v3388 = vmax.f32 %v3324, 0.0
  %v3389 = vmax.f32 %v3325, 0.0
  %v3390 = vmax.f32 %v3326, 0.0
  %v3391 = vmax.f32 %v3327, 0.0
  %v3392 = vmax.f32 %v3328, 0.0
  %v3393 = vmax.f32 %v3329, 0.0
  %v3394 = vmax.f32 %v3330, 0.0
  %v3395 = vmax.f32 %v3331, 0.0
  %v3396 = vmax.f32 %v3332, 0.0
  %v3397 = vmax.f32 %v3333, 0.0
  %v3398 = vmax.f32 %v3334, 0.0
  %v3399 = vmax.f32 %v3335, 0.0
  %v3400 = vmax.f32 %v3336, 0.0
  %v3401 = vmax.f32 %v3337, 0.0
  %v3402 = vmax.f32 %v3338, 0.0
  %v3403 = vmax.f32 %v3339, 0.0
  %v3404 = vmax.f32 %v3340, 0.0
  %v3405 = vmax.f32 %v3341, 0.0
  %v3406 = vmax.f32 %v3342, 0.0
  %v3407 = vmax.f32 %v3343, 0.0
  %v3408 = vmax.f32 %v3344, 0.0
  %v3409 = vmax.f32 %v3345, 0.0
  %v3410 = vmax.f32 %v3346, 0.0
  %v3411 = vmax.f32 %v3347, 0.0
  %v3412 = vmax.f32 %v3348, 0.0
  %v3413 = vmax.f32 %v3349, 0.0
  %v3414 = vmax.f32 %v3350, 0.0
  %v3415 = vmax.f32 %v3351, 0.0
  %v3416 = vmax.f32 %v3352, 0.0
  %v3417 = vmax.f32 %v3353, 0.0
  %v3418 = vmax.f32 %v3354, 0.0
  %3419 = vst [vmem:[%s207 + $0x1] sm:$0xff] %v3355
  %3420 = vst [vmem:[%s207 + $0x9] sm:$0xff] %v3356
  %3421 = vst [vmem:[%s207 + $0x19] sm:$0xff] %v3357
  %3422 = vst [vmem:[%s207 + $0x21] sm:$0xff] %v3358
  %3423 = vst [vmem:[%s207 + $0x31] sm:$0xff] %v3359
  %3424 = vst [vmem:[%s207 + $0x39] sm:$0xff] %v3360
  %3425 = vst [vmem:[%s207 + $0x49] sm:$0xff] %v3361
  %3426 = vst [vmem:[%s207 + $0x51] sm:$0xff] %v3362
  %3427 = vst [vmem:[%s207 + $0x61] sm:$0xff] %v3363
  %3428 = vst [vmem:[%s207 + $0x69] sm:$0xff] %v3364
  %3429 = vst [vmem:[%s207 + $0x79] sm:$0xff] %v3365
  %3430 = vst [vmem:[%s207 + $0x81] sm:$0xff] %v3366
  %3431 = vst [vmem:[%s207 + $0x91] sm:$0xff] %v3367
  %3432 = vst [vmem:[%s207 + $0x99] sm:$0xff] %v3368
  %3433 = vst [vmem:[%s207 + $0xa9] sm:$0xff] %v3369
  %3434 = vst [vmem:[%s207 + $0xb1] sm:$0xff] %v3370
  %3435 = vst [vmem:[%s207 + $0xc1] sm:$0xff] %v3371
  %3436 = vst [vmem:[%s207 + $0xc9] sm:$0xff] %v3372
  %3437 = vst [vmem:[%s207 + $0xd9] sm:$0xff] %v3373
  %3438 = vst [vmem:[%s207 + $0xe1] sm:$0xff] %v3374
  %3439 = vst [vmem:[%s207 + $0xf1] sm:$0xff] %v3375
  %3440 = vst [vmem:[%s207 + $0xf9] sm:$0xff] %v3376
  %3441 = vst [vmem:[%s207 + $0x109] sm:$0xff] %v3377
  %3442 = vst [vmem:[%s207 + $0x111] sm:$0xff] %v3378
  %3443 = vst [vmem:[%s207 + $0x121] sm:$0xff] %v3379
  %3444 = vst [vmem:[%s207 + $0x129] sm:$0xff] %v3380
  %3445 = vst [vmem:[%s207 + $0x139] sm:$0xff] %v3381
  %3446 = vst [vmem:[%s207 + $0x141] sm:$0xff] %v3382
  %3447 = vst [vmem:[%s207 + $0x151] sm:$0xff] %v3383
  %3448 = vst [vmem:[%s207 + $0x159] sm:$0xff] %v3384
  %3449 = vst [vmem:[%s207 + $0x169] sm:$0xff] %v3385
  %3450 = vst [vmem:[%s207 + $0x171] sm:$0xff] %v3386
  %3451 = vst [vmem:[%s207 + $0x1b1] sm:$0xff] %v3387
  %3452 = vst [vmem:[%s207 + $0x1b9] sm:$0xff] %v3388
  %3453 = vst [vmem:[%s207 + $0x1c9] sm:$0xff] %v3389
  %3454 = vst [vmem:[%s207 + $0x1d1] sm:$0xff] %v3390
  %3455 = vst [vmem:[%s207 + $0x1e1] sm:$0xff] %v3391
  %3456 = vst [vmem:[%s207 + $0x1e9] sm:$0xff] %v3392
  %3457 = vst [vmem:[%s207 + $0x1f9] sm:$0xff] %v3393
  %3458 = vst [vmem:[%s207 + $0x201] sm:$0xff] %v3394
  %3459 = vst [vmem:[%s207 + $0x211] sm:$0xff] %v3395
  %3460 = vst [vmem:[%s207 + $0x219] sm:$0xff] %v3396
  %3461 = vst [vmem:[%s207 + $0x229] sm:$0xff] %v3397
  %3462 = vst [vmem:[%s207 + $0x231] sm:$0xff] %v3398
  %3463 = vst [vmem:[%s207 + $0x241] sm:$0xff] %v3399
  %3464 = vst [vmem:[%s207 + $0x249] sm:$0xff] %v3400
  %3465 = vst [vmem:[%s207 + $0x259] sm:$0xff] %v3401
  %3466 = vst [vmem:[%s207 + $0x261] sm:$0xff] %v3402
  %3467 = vst [vmem:[%s207 + $0x271] sm:$0xff] %v3403
  %3468 = vst [vmem:[%s207 + $0x279] sm:$0xff] %v3404
  %3469 = vst [vmem:[%s207 + $0x289] sm:$0xff] %v3405
  %3470 = vst [vmem:[%s207 + $0x291] sm:$0xff] %v3406
  %3471 = vst [vmem:[%s207 + $0x2a1] sm:$0xff] %v3407
  %3472 = vst [vmem:[%s207 + $0x2a9] sm:$0xff] %v3408
  %3473 = vst [vmem:[%s207 + $0x2b9] sm:$0xff] %v3409
  %3474 = vst [vmem:[%s207 + $0x2c1] sm:$0xff] %v3410
  %3475 = vst [vmem:[%s207 + $0x2d1] sm:$0xff] %v3411
  %3476 = vst [vmem:[%s207 + $0x2d9] sm:$0xff] %v3412
  %3477 = vst [vmem:[%s207 + $0x2e9] sm:$0xff] %v3413
  %3478 = vst [vmem:[%s207 + $0x2f1] sm:$0xff] %v3414
  %3479 = vst [vmem:[%s207 + $0x301] sm:$0xff] %v3415
  %3480 = vst [vmem:[%s207 + $0x309] sm:$0xff] %v3416
  %3481 = vst [vmem:[%s207 + $0x319] sm:$0xff] %v3417
  %3482 = vst [vmem:[%s207 + $0x321] sm:$0xff] %v3418
  %v3483 = vld [vmem:[#allocation2] sm:$0xff]
  %v3484 = vld [vmem:[#allocation2 + $0x8] sm:$0xff]
  %v3485 = vld [vmem:[#allocation2 + $0x18] sm:$0xff]
  %v3486 = vld [vmem:[#allocation2 + $0x20] sm:$0xff]
  %v3487 = vld [vmem:[#allocation2 + $0x30] sm:$0xff]
  %v3488 = vld [vmem:[#allocation2 + $0x38] sm:$0xff]
  %v3489 = vld [vmem:[#allocation2 + $0x48] sm:$0xff]
  %v3490 = vld [vmem:[#allocation2 + $0x50] sm:$0xff]
  %v3491 = vld [vmem:[#allocation2 + $0x60] sm:$0xff]
  %v3492 = vld [vmem:[#allocation2 + $0x68] sm:$0xff]
  %v3493 = vld [vmem:[#allocation2 + $0x78] sm:$0xff]
  %v3494 = vld [vmem:[#allocation2 + $0x80] sm:$0xff]
  %v3495 = vld [vmem:[#allocation2 + $0x90] sm:$0xff]
  %v3496 = vld [vmem:[#allocation2 + $0x98] sm:$0xff]
  %v3497 = vld [vmem:[#allocation2 + $0xa8] sm:$0xff]
  %v3498 = vld [vmem:[#allocation2 + $0xb0] sm:$0xff]
  %v3499 = vld [vmem:[#allocation2 + $0xc0] sm:$0xff]
  %v3500 = vld [vmem:[#allocation2 + $0xc8] sm:$0xff]
  %v3501 = vld [vmem:[#allocation2 + $0xd8] sm:$0xff]
  %v3502 = vld [vmem:[#allocation2 + $0xe0] sm:$0xff]
  %v3503 = vld [vmem:[#allocation2 + $0xf0] sm:$0xff]
  %v3504 = vld [vmem:[#allocation2 + $0xf8] sm:$0xff]
  %v3505 = vld [vmem:[#allocation2 + $0x108] sm:$0xff]
  %v3506 = vld [vmem:[#allocation2 + $0x110] sm:$0xff]
  %v3507 = vld [vmem:[#allocation2 + $0x120] sm:$0xff]
  %v3508 = vld [vmem:[#allocation2 + $0x128] sm:$0xff]
  %v3509 = vld [vmem:[#allocation2 + $0x138] sm:$0xff]
  %v3510 = vld [vmem:[#allocation2 + $0x140] sm:$0xff]
  %v3511 = vld [vmem:[#allocation2 + $0x150] sm:$0xff]
  %v3512 = vld [vmem:[#allocation2 + $0x158] sm:$0xff]
  %v3513 = vld [vmem:[#allocation2 + $0x168] sm:$0xff]
  %v3514 = vld [vmem:[#allocation2 + $0x170] sm:$0xff]
  %v3515 = vld [vmem:[#allocation2 + $0x1b0] sm:$0xff]
  %v3516 = vld [vmem:[#allocation2 + $0x1b8] sm:$0xff]
  %v3517 = vld [vmem:[#allocation2 + $0x1c8] sm:$0xff]
  %v3518 = vld [vmem:[#allocation2 + $0x1d0] sm:$0xff]
  %v3519 = vld [vmem:[#allocation2 + $0x1e0] sm:$0xff]
  %v3520 = vld [vmem:[#allocation2 + $0x1e8] sm:$0xff]
  %v3521 = vld [vmem:[#allocation2 + $0x1f8] sm:$0xff]
  %v3522 = vld [vmem:[#allocation2 + $0x200] sm:$0xff]
  %v3523 = vld [vmem:[#allocation2 + $0x210] sm:$0xff]
  %v3524 = vld [vmem:[#allocation2 + $0x218] sm:$0xff]
  %v3525 = vld [vmem:[#allocation2 + $0x228] sm:$0xff]
  %v3526 = vld [vmem:[#allocation2 + $0x230] sm:$0xff]
  %v3527 = vld [vmem:[#allocation2 + $0x240] sm:$0xff]
  %v3528 = vld [vmem:[#allocation2 + $0x248] sm:$0xff]
  %v3529 = vld [vmem:[#allocation2 + $0x258] sm:$0xff]
  %v3530 = vld [vmem:[#allocation2 + $0x260] sm:$0xff]
  %v3531 = vld [vmem:[#allocation2 + $0x270] sm:$0xff]
  %v3532 = vld [vmem:[#allocation2 + $0x278] sm:$0xff]
  %v3533 = vld [vmem:[#allocation2 + $0x288] sm:$0xff]
  %v3534 = vld [vmem:[#allocation2 + $0x290] sm:$0xff]
  %v3535 = vld [vmem:[#allocation2 + $0x2a0] sm:$0xff]
  %v3536 = vld [vmem:[#allocation2 + $0x2a8] sm:$0xff]
  %v3537 = vld [vmem:[#allocation2 + $0x2b8] sm:$0xff]
  %v3538 = vld [vmem:[#allocation2 + $0x2c0] sm:$0xff]
  %v3539 = vld [vmem:[#allocation2 + $0x2d0] sm:$0xff]
  %v3540 = vld [vmem:[#allocation2 + $0x2d8] sm:$0xff]
  %v3541 = vld [vmem:[#allocation2 + $0x2e8] sm:$0xff]
  %v3542 = vld [vmem:[#allocation2 + $0x2f0] sm:$0xff]
  %v3543 = vld [vmem:[#allocation2 + $0x300] sm:$0xff]
  %v3544 = vld [vmem:[#allocation2 + $0x308] sm:$0xff]
  %v3545 = vld [vmem:[#allocation2 + $0x318] sm:$0xff]
  %v3546 = vld [vmem:[#allocation2 + $0x320] sm:$0xff]
  %v3547 = vld [vmem:[#allocation2 + $0x1] sm:$0xff]
  %v3548 = vld [vmem:[#allocation2 + $0x9] sm:$0xff]
  %v3549 = vld [vmem:[#allocation2 + $0x19] sm:$0xff]
  %v3550 = vld [vmem:[#allocation2 + $0x21] sm:$0xff]
  %v3551 = vld [vmem:[#allocation2 + $0x31] sm:$0xff]
  %v3552 = vld [vmem:[#allocation2 + $0x39] sm:$0xff]
  %v3553 = vld [vmem:[#allocation2 + $0x49] sm:$0xff]
  %v3554 = vld [vmem:[#allocation2 + $0x51] sm:$0xff]
  %v3555 = vld [vmem:[#allocation2 + $0x61] sm:$0xff]
  %v3556 = vld [vmem:[#allocation2 + $0x69] sm:$0xff]
  %v3557 = vld [vmem:[#allocation2 + $0x79] sm:$0xff]
  %v3558 = vld [vmem:[#allocation2 + $0x81] sm:$0xff]
  %v3559 = vld [vmem:[#allocation2 + $0x91] sm:$0xff]
  %v3560 = vld [vmem:[#allocation2 + $0x99] sm:$0xff]
  %v3561 = vld [vmem:[#allocation2 + $0xa9] sm:$0xff]
  %v3562 = vld [vmem:[#allocation2 + $0xb1] sm:$0xff]
  %v3563 = vld [vmem:[#allocation2 + $0xc1] sm:$0xff]
  %v3564 = vld [vmem:[#allocation2 + $0xc9] sm:$0xff]
  %v3565 = vld [vmem:[#allocation2 + $0xd9] sm:$0xff]
  %v3566 = vld [vmem:[#allocation2 + $0xe1] sm:$0xff]
  %v3567 = vld [vmem:[#allocation2 + $0xf1] sm:$0xff]
  %v3568 = vld [vmem:[#allocation2 + $0xf9] sm:$0xff]
  %v3569 = vld [vmem:[#allocation2 + $0x109] sm:$0xff]
  %v3570 = vld [vmem:[#allocation2 + $0x111] sm:$0xff]
  %v3571 = vld [vmem:[#allocation2 + $0x121] sm:$0xff]
  %v3572 = vld [vmem:[#allocation2 + $0x129] sm:$0xff]
  %v3573 = vld [vmem:[#allocation2 + $0x139] sm:$0xff]
  %v3574 = vld [vmem:[#allocation2 + $0x141] sm:$0xff]
  %v3575 = vld [vmem:[#allocation2 + $0x151] sm:$0xff]
  %v3576 = vld [vmem:[#allocation2 + $0x159] sm:$0xff]
  %v3577 = vld [vmem:[#allocation2 + $0x169] sm:$0xff]
  %v3578 = vld [vmem:[#allocation2 + $0x171] sm:$0xff]
  %v3579 = vld [vmem:[#allocation2 + $0x1b1] sm:$0xff]
  %v3580 = vld [vmem:[#allocation2 + $0x1b9] sm:$0xff]
  %v3581 = vld [vmem:[#allocation2 + $0x1c9] sm:$0xff]
  %v3582 = vld [vmem:[#allocation2 + $0x1d1] sm:$0xff]
  %v3583 = vld [vmem:[#allocation2 + $0x1e1] sm:$0xff]
  %v3584 = vld [vmem:[#allocation2 + $0x1e9] sm:$0xff]
  %v3585 = vld [vmem:[#allocation2 + $0x1f9] sm:$0xff]
  %v3586 = vld [vmem:[#allocation2 + $0x201] sm:$0xff]
  %v3587 = vld [vmem:[#allocation2 + $0x211] sm:$0xff]
  %v3588 = vld [vmem:[#allocation2 + $0x219] sm:$0xff]
  %v3589 = vld [vmem:[#allocation2 + $0x229] sm:$0xff]
  %v3590 = vld [vmem:[#allocation2 + $0x231] sm:$0xff]
  %v3591 = vld [vmem:[#allocation2 + $0x241] sm:$0xff]
  %v3592 = vld [vmem:[#allocation2 + $0x249] sm:$0xff]
  %v3593 = vld [vmem:[#allocation2 + $0x259] sm:$0xff]
  %v3594 = vld [vmem:[#allocation2 + $0x261] sm:$0xff]
  %v3595 = vld [vmem:[#allocation2 + $0x271] sm:$0xff]
  %v3596 = vld [vmem:[#allocation2 + $0x279] sm:$0xff]
  %v3597 = vld [vmem:[#allocation2 + $0x289] sm:$0xff]
  %v3598 = vld [vmem:[#allocation2 + $0x291] sm:$0xff]
  %v3599 = vld [vmem:[#allocation2 + $0x2a1] sm:$0xff]
  %v3600 = vld [vmem:[#allocation2 + $0x2a9] sm:$0xff]
  %v3601 = vld [vmem:[#allocation2 + $0x2b9] sm:$0xff]
  %v3602 = vld [vmem:[#allocation2 + $0x2c1] sm:$0xff]
  %v3603 = vld [vmem:[#allocation2 + $0x2d1] sm:$0xff]
  %v3604 = vld [vmem:[#allocation2 + $0x2d9] sm:$0xff]
  %v3605 = vld [vmem:[#allocation2 + $0x2e9] sm:$0xff]
  %v3606 = vld [vmem:[#allocation2 + $0x2f1] sm:$0xff]
  %v3607 = vld [vmem:[#allocation2 + $0x301] sm:$0xff]
  %v3608 = vld [vmem:[#allocation2 + $0x309] sm:$0xff]
  %v3609 = vld [vmem:[#allocation2 + $0x319] sm:$0xff]
  %v3610 = vld [vmem:[#allocation2 + $0x321] sm:$0xff]
  %v3611 = vld [vmem:[#allocation2 + $0x2] sm:$0xff]
  %v3612 = vld [vmem:[#allocation2 + $0xa] sm:$0xff]
  %v3613 = vld [vmem:[#allocation2 + $0x1a] sm:$0xff]
  %v3614 = vld [vmem:[#allocation2 + $0x22] sm:$0xff]
  %v3615 = vld [vmem:[#allocation2 + $0x32] sm:$0xff]
  %v3616 = vld [vmem:[#allocation2 + $0x3a] sm:$0xff]
  %v3617 = vld [vmem:[#allocation2 + $0x4a] sm:$0xff]
  %v3618 = vld [vmem:[#allocation2 + $0x52] sm:$0xff]
  %v3619 = vld [vmem:[#allocation2 + $0x62] sm:$0xff]
  %v3620 = vld [vmem:[#allocation2 + $0x6a] sm:$0xff]
  %v3621 = vld [vmem:[#allocation2 + $0x7a] sm:$0xff]
  %v3622 = vld [vmem:[#allocation2 + $0x82] sm:$0xff]
  %v3623 = vld [vmem:[#allocation2 + $0x92] sm:$0xff]
  %v3624 = vld [vmem:[#allocation2 + $0x9a] sm:$0xff]
  %v3625 = vld [vmem:[#allocation2 + $0xaa] sm:$0xff]
  %v3626 = vld [vmem:[#allocation2 + $0xb2] sm:$0xff]
  %v3627 = vld [vmem:[#allocation2 + $0xc2] sm:$0xff]
  %v3628 = vld [vmem:[#allocation2 + $0xca] sm:$0xff]
  %v3629 = vld [vmem:[#allocation2 + $0xda] sm:$0xff]
  %v3630 = vld [vmem:[#allocation2 + $0xe2] sm:$0xff]
  %v3631 = vld [vmem:[#allocation2 + $0xf2] sm:$0xff]
  %v3632 = vld [vmem:[#allocation2 + $0xfa] sm:$0xff]
  %v3633 = vld [vmem:[#allocation2 + $0x10a] sm:$0xff]
  %v3634 = vld [vmem:[#allocation2 + $0x112] sm:$0xff]
  %v3635 = vld [vmem:[#allocation2 + $0x122] sm:$0xff]
  %v3636 = vld [vmem:[#allocation2 + $0x12a] sm:$0xff]
  %v3637 = vld [vmem:[#allocation2 + $0x13a] sm:$0xff]
  %v3638 = vld [vmem:[#allocation2 + $0x142] sm:$0xff]
  %v3639 = vld [vmem:[#allocation2 + $0x152] sm:$0xff]
  %v3640 = vld [vmem:[#allocation2 + $0x15a] sm:$0xff]
  %v3641 = vld [vmem:[#allocation2 + $0x16a] sm:$0xff]
  %v3642 = vld [vmem:[#allocation2 + $0x172] sm:$0xff]
  %v3643 = vld [vmem:[#allocation2 + $0x1b2] sm:$0xff]
  %v3644 = vld [vmem:[#allocation2 + $0x1ba] sm:$0xff]
  %v3645 = vld [vmem:[#allocation2 + $0x1ca] sm:$0xff]
  %v3646 = vld [vmem:[#allocation2 + $0x1d2] sm:$0xff]
  %v3647 = vld [vmem:[#allocation2 + $0x1e2] sm:$0xff]
  %v3648 = vld [vmem:[#allocation2 + $0x1ea] sm:$0xff]
  %v3649 = vld [vmem:[#allocation2 + $0x1fa] sm:$0xff]
  %v3650 = vld [vmem:[#allocation2 + $0x202] sm:$0xff]
  %v3651 = vld [vmem:[#allocation2 + $0x212] sm:$0xff]
  %v3652 = vld [vmem:[#allocation2 + $0x21a] sm:$0xff]
  %v3653 = vld [vmem:[#allocation2 + $0x22a] sm:$0xff]
  %v3654 = vld [vmem:[#allocation2 + $0x232] sm:$0xff]
  %v3655 = vld [vmem:[#allocation2 + $0x242] sm:$0xff]
  %v3656 = vld [vmem:[#allocation2 + $0x24a] sm:$0xff]
  %v3657 = vld [vmem:[#allocation2 + $0x25a] sm:$0xff]
  %v3658 = vld [vmem:[#allocation2 + $0x262] sm:$0xff]
  %v3659 = vld [vmem:[#allocation2 + $0x272] sm:$0xff]
  %v3660 = vld [vmem:[#allocation2 + $0x27a] sm:$0xff]
  %v3661 = vld [vmem:[#allocation2 + $0x28a] sm:$0xff]
  %v3662 = vld [vmem:[#allocation2 + $0x292] sm:$0xff]
  %v3663 = vld [vmem:[#allocation2 + $0x2a2] sm:$0xff]
  %v3664 = vld [vmem:[#allocation2 + $0x2aa] sm:$0xff]
  %v3665 = vld [vmem:[#allocation2 + $0x2ba] sm:$0xff]
  %v3666 = vld [vmem:[#allocation2 + $0x2c2] sm:$0xff]
  %v3667 = vld [vmem:[#allocation2 + $0x2d2] sm:$0xff]
  %v3668 = vld [vmem:[#allocation2 + $0x2da] sm:$0xff]
  %v3669 = vld [vmem:[#allocation2 + $0x2ea] sm:$0xff]
  %v3670 = vld [vmem:[#allocation2 + $0x2f2] sm:$0xff]
  %v3671 = vld [vmem:[#allocation2 + $0x302] sm:$0xff]
  %v3672 = vld [vmem:[#allocation2 + $0x30a] sm:$0xff]
  %v3673 = vld [vmem:[#allocation2 + $0x31a] sm:$0xff]
  %v3674 = vld [vmem:[#allocation2 + $0x322] sm:$0xff]
  %v3675 = vld [vmem:[%s207] sm:$0xff]
  %v3676 = vld [vmem:[%s207 + $0x8] sm:$0xff]
  %v3677 = vld [vmem:[%s207 + $0x18] sm:$0xff]
  %v3678 = vld [vmem:[%s207 + $0x20] sm:$0xff]
  %v3679 = vld [vmem:[%s207 + $0x30] sm:$0xff]
  %v3680 = vld [vmem:[%s207 + $0x38] sm:$0xff]
  %v3681 = vld [vmem:[%s207 + $0x48] sm:$0xff]
  %v3682 = vld [vmem:[%s207 + $0x50] sm:$0xff]
  %v3683 = vld [vmem:[%s207 + $0x60] sm:$0xff]
  %v3684 = vld [vmem:[%s207 + $0x68] sm:$0xff]
  %v3685 = vld [vmem:[%s207 + $0x78] sm:$0xff]
  %v3686 = vld [vmem:[%s207 + $0x80] sm:$0xff]
  %v3687 = vld [vmem:[%s207 + $0x90] sm:$0xff]
  %v3688 = vld [vmem:[%s207 + $0x98] sm:$0xff]
  %v3689 = vld [vmem:[%s207 + $0xa8] sm:$0xff]
  %v3690 = vld [vmem:[%s207 + $0xb0] sm:$0xff]
  %v3691 = vld [vmem:[%s207 + $0xc0] sm:$0xff]
  %v3692 = vld [vmem:[%s207 + $0xc8] sm:$0xff]
  %v3693 = vld [vmem:[%s207 + $0xd8] sm:$0xff]
  %v3694 = vld [vmem:[%s207 + $0xe0] sm:$0xff]
  %v3695 = vld [vmem:[%s207 + $0xf0] sm:$0xff]
  %v3696 = vld [vmem:[%s207 + $0xf8] sm:$0xff]
  %v3697 = vld [vmem:[%s207 + $0x108] sm:$0xff]
  %v3698 = vld [vmem:[%s207 + $0x110] sm:$0xff]
  %v3699 = vld [vmem:[%s207 + $0x120] sm:$0xff]
  %v3700 = vld [vmem:[%s207 + $0x128] sm:$0xff]
  %v3701 = vld [vmem:[%s207 + $0x138] sm:$0xff]
  %v3702 = vld [vmem:[%s207 + $0x140] sm:$0xff]
  %v3703 = vld [vmem:[%s207 + $0x150] sm:$0xff]
  %v3704 = vld [vmem:[%s207 + $0x158] sm:$0xff]
  %v3705 = vld [vmem:[%s207 + $0x168] sm:$0xff]
  %v3706 = vld [vmem:[%s207 + $0x170] sm:$0xff]
  %v3707 = vld [vmem:[%s207 + $0x1b0] sm:$0xff]
  %v3708 = vld [vmem:[%s207 + $0x1b8] sm:$0xff]
  %v3709 = vld [vmem:[%s207 + $0x1c8] sm:$0xff]
  %v3710 = vld [vmem:[%s207 + $0x1d0] sm:$0xff]
  %v3711 = vld [vmem:[%s207 + $0x1e0] sm:$0xff]
  %v3712 = vld [vmem:[%s207 + $0x1e8] sm:$0xff]
  %v3713 = vld [vmem:[%s207 + $0x1f8] sm:$0xff]
  %v3714 = vld [vmem:[%s207 + $0x200] sm:$0xff]
  %v3715 = vld [vmem:[%s207 + $0x210] sm:$0xff]
  %v3716 = vld [vmem:[%s207 + $0x218] sm:$0xff]
  %v3717 = vld [vmem:[%s207 + $0x228] sm:$0xff]
  %v3718 = vld [vmem:[%s207 + $0x230] sm:$0xff]
  %v3719 = vld [vmem:[%s207 + $0x240] sm:$0xff]
  %v3720 = vld [vmem:[%s207 + $0x248] sm:$0xff]
  %v3721 = vld [vmem:[%s207 + $0x258] sm:$0xff]
  %v3722 = vld [vmem:[%s207 + $0x260] sm:$0xff]
  %v3723 = vld [vmem:[%s207 + $0x270] sm:$0xff]
  %v3724 = vld [vmem:[%s207 + $0x278] sm:$0xff]
  %v3725 = vld [vmem:[%s207 + $0x288] sm:$0xff]
  %v3726 = vld [vmem:[%s207 + $0x290] sm:$0xff]
  %v3727 = vld [vmem:[%s207 + $0x2a0] sm:$0xff]
  %v3728 = vld [vmem:[%s207 + $0x2a8] sm:$0xff]
  %v3729 = vld [vmem:[%s207 + $0x2b8] sm:$0xff]
  %v3730 = vld [vmem:[%s207 + $0x2c0] sm:$0xff]
  %v3731 = vld [vmem:[%s207 + $0x2d0] sm:$0xff]
  %v3732 = vld [vmem:[%s207 + $0x2d8] sm:$0xff]
  %v3733 = vld [vmem:[%s207 + $0x2e8] sm:$0xff]
  %v3734 = vld [vmem:[%s207 + $0x2f0] sm:$0xff]
  %v3735 = vld [vmem:[%s207 + $0x300] sm:$0xff]
  %v3736 = vld [vmem:[%s207 + $0x308] sm:$0xff]
  %v3737 = vld [vmem:[%s207 + $0x318] sm:$0xff]
  %v3738 = vld [vmem:[%s207 + $0x320] sm:$0xff]
  %v3739 = vld [vmem:[%s207 + $0x1] sm:$0xff]
  %v3740 = vld [vmem:[%s207 + $0x9] sm:$0xff]
  %v3741 = vld [vmem:[%s207 + $0x19] sm:$0xff]
  %v3742 = vld [vmem:[%s207 + $0x21] sm:$0xff]
  %v3743 = vld [vmem:[%s207 + $0x31] sm:$0xff]
  %v3744 = vld [vmem:[%s207 + $0x39] sm:$0xff]
  %v3745 = vld [vmem:[%s207 + $0x49] sm:$0xff]
  %v3746 = vld [vmem:[%s207 + $0x51] sm:$0xff]
  %v3747 = vld [vmem:[%s207 + $0x61] sm:$0xff]
  %v3748 = vld [vmem:[%s207 + $0x69] sm:$0xff]
  %v3749 = vld [vmem:[%s207 + $0x79] sm:$0xff]
  %v3750 = vld [vmem:[%s207 + $0x81] sm:$0xff]
  %v3751 = vld [vmem:[%s207 + $0x91] sm:$0xff]
  %v3752 = vld [vmem:[%s207 + $0x99] sm:$0xff]
  %v3753 = vld [vmem:[%s207 + $0xa9] sm:$0xff]
  %v3754 = vld [vmem:[%s207 + $0xb1] sm:$0xff]
  %v3755 = vld [vmem:[%s207 + $0xc1] sm:$0xff]
  %v3756 = vld [vmem:[%s207 + $0xc9] sm:$0xff]
  %v3757 = vld [vmem:[%s207 + $0xd9] sm:$0xff]
  %v3758 = vld [vmem:[%s207 + $0xe1] sm:$0xff]
  %v3759 = vld [vmem:[%s207 + $0xf1] sm:$0xff]
  %v3760 = vld [vmem:[%s207 + $0xf9] sm:$0xff]
  %v3761 = vld [vmem:[%s207 + $0x109] sm:$0xff]
  %v3762 = vld [vmem:[%s207 + $0x111] sm:$0xff]
  %v3763 = vld [vmem:[%s207 + $0x121] sm:$0xff]
  %v3764 = vld [vmem:[%s207 + $0x129] sm:$0xff]
  %v3765 = vld [vmem:[%s207 + $0x139] sm:$0xff]
  %v3766 = vld [vmem:[%s207 + $0x141] sm:$0xff]
  %v3767 = vld [vmem:[%s207 + $0x151] sm:$0xff]
  %v3768 = vld [vmem:[%s207 + $0x159] sm:$0xff]
  %v3769 = vld [vmem:[%s207 + $0x169] sm:$0xff]
  %v3770 = vld [vmem:[%s207 + $0x171] sm:$0xff]
  %v3771 = vld [vmem:[%s207 + $0x1b1] sm:$0xff]
  %v3772 = vld [vmem:[%s207 + $0x1b9] sm:$0xff]
  %v3773 = vld [vmem:[%s207 + $0x1c9] sm:$0xff]
  %v3774 = vld [vmem:[%s207 + $0x1d1] sm:$0xff]
  %v3775 = vld [vmem:[%s207 + $0x1e1] sm:$0xff]
  %v3776 = vld [vmem:[%s207 + $0x1e9] sm:$0xff]
  %v3777 = vld [vmem:[%s207 + $0x1f9] sm:$0xff]
  %v3778 = vld [vmem:[%s207 + $0x201] sm:$0xff]
  %v3779 = vld [vmem:[%s207 + $0x211] sm:$0xff]
  %v3780 = vld [vmem:[%s207 + $0x219] sm:$0xff]
  %v3781 = vld [vmem:[%s207 + $0x229] sm:$0xff]
  %v3782 = vld [vmem:[%s207 + $0x231] sm:$0xff]
  %v3783 = vld [vmem:[%s207 + $0x241] sm:$0xff]
  %v3784 = vld [vmem:[%s207 + $0x249] sm:$0xff]
  %v3785 = vld [vmem:[%s207 + $0x259] sm:$0xff]
  %v3786 = vld [vmem:[%s207 + $0x261] sm:$0xff]
  %v3787 = vld [vmem:[%s207 + $0x271] sm:$0xff]
  %v3788 = vld [vmem:[%s207 + $0x279] sm:$0xff]
  %v3789 = vld [vmem:[%s207 + $0x289] sm:$0xff]
  %v3790 = vld [vmem:[%s207 + $0x291] sm:$0xff]
  %v3791 = vld [vmem:[%s207 + $0x2a1] sm:$0xff]
  %v3792 = vld [vmem:[%s207 + $0x2a9] sm:$0xff]
  %v3793 = vld [vmem:[%s207 + $0x2b9] sm:$0xff]
  %v3794 = vld [vmem:[%s207 + $0x2c1] sm:$0xff]
  %v3795 = vld [vmem:[%s207 + $0x2d1] sm:$0xff]
  %v3796 = vld [vmem:[%s207 + $0x2d9] sm:$0xff]
  %v3797 = vld [vmem:[%s207 + $0x2e9] sm:$0xff]
  %v3798 = vld [vmem:[%s207 + $0x2f1] sm:$0xff]
  %v3799 = vld [vmem:[%s207 + $0x301] sm:$0xff]
  %v3800 = vld [vmem:[%s207 + $0x309] sm:$0xff]
  %v3801 = vld [vmem:[%s207 + $0x319] sm:$0xff]
  %v3802 = vld [vmem:[%s207 + $0x321] sm:$0xff]
  %v3803 = vld [vmem:[%s207 + $0x2] sm:$0xff]
  %v3804 = vld [vmem:[%s207 + $0xa] sm:$0xff]
  %v3805 = vld [vmem:[%s207 + $0x1a] sm:$0xff]
  %v3806 = vld [vmem:[%s207 + $0x22] sm:$0xff]
  %v3807 = vld [vmem:[%s207 + $0x32] sm:$0xff]
  %v3808 = vld [vmem:[%s207 + $0x3a] sm:$0xff]
  %v3809 = vld [vmem:[%s207 + $0x4a] sm:$0xff]
  %v3810 = vld [vmem:[%s207 + $0x52] sm:$0xff]
  %v3811 = vld [vmem:[%s207 + $0x62] sm:$0xff]
  %v3812 = vld [vmem:[%s207 + $0x6a] sm:$0xff]
  %v3813 = vld [vmem:[%s207 + $0x7a] sm:$0xff]
  %v3814 = vld [vmem:[%s207 + $0x82] sm:$0xff]
  %v3815 = vld [vmem:[%s207 + $0x92] sm:$0xff]
  %v3816 = vld [vmem:[%s207 + $0x9a] sm:$0xff]
  %v3817 = vld [vmem:[%s207 + $0xaa] sm:$0xff]
  %v3818 = vld [vmem:[%s207 + $0xb2] sm:$0xff]
  %v3819 = vld [vmem:[%s207 + $0xc2] sm:$0xff]
  %v3820 = vld [vmem:[%s207 + $0xca] sm:$0xff]
  %v3821 = vld [vmem:[%s207 + $0xda] sm:$0xff]
  %v3822 = vld [vmem:[%s207 + $0xe2] sm:$0xff]
  %v3823 = vld [vmem:[%s207 + $0xf2] sm:$0xff]
  %v3824 = vld [vmem:[%s207 + $0xfa] sm:$0xff]
  %v3825 = vld [vmem:[%s207 + $0x10a] sm:$0xff]
  %v3826 = vld [vmem:[%s207 + $0x112] sm:$0xff]
  %v3827 = vld [vmem:[%s207 + $0x122] sm:$0xff]
  %v3828 = vld [vmem:[%s207 + $0x12a] sm:$0xff]
  %v3829 = vld [vmem:[%s207 + $0x13a] sm:$0xff]
  %v3830 = vld [vmem:[%s207 + $0x142] sm:$0xff]
  %v3831 = vld [vmem:[%s207 + $0x152] sm:$0xff]
  %v3832 = vld [vmem:[%s207 + $0x15a] sm:$0xff]
  %v3833 = vld [vmem:[%s207 + $0x16a] sm:$0xff]
  %v3834 = vld [vmem:[%s207 + $0x172] sm:$0xff]
  %v3835 = vld [vmem:[%s207 + $0x1b2] sm:$0xff]
  %v3836 = vld [vmem:[%s207 + $0x1ba] sm:$0xff]
  %v3837 = vld [vmem:[%s207 + $0x1ca] sm:$0xff]
  %v3838 = vld [vmem:[%s207 + $0x1d2] sm:$0xff]
  %v3839 = vld [vmem:[%s207 + $0x1e2] sm:$0xff]
  %v3840 = vld [vmem:[%s207 + $0x1ea] sm:$0xff]
  %v3841 = vld [vmem:[%s207 + $0x1fa] sm:$0xff]
  %v3842 = vld [vmem:[%s207 + $0x202] sm:$0xff]
  %v3843 = vld [vmem:[%s207 + $0x212] sm:$0xff]
  %v3844 = vld [vmem:[%s207 + $0x21a] sm:$0xff]
  %v3845 = vld [vmem:[%s207 + $0x22a] sm:$0xff]
  %v3846 = vld [vmem:[%s207 + $0x232] sm:$0xff]
  %v3847 = vld [vmem:[%s207 + $0x242] sm:$0xff]
  %v3848 = vld [vmem:[%s207 + $0x24a] sm:$0xff]
  %v3849 = vld [vmem:[%s207 + $0x25a] sm:$0xff]
  %v3850 = vld [vmem:[%s207 + $0x262] sm:$0xff]
  %v3851 = vld [vmem:[%s207 + $0x272] sm:$0xff]
  %v3852 = vld [vmem:[%s207 + $0x27a] sm:$0xff]
  %v3853 = vld [vmem:[%s207 + $0x28a] sm:$0xff]
  %v3854 = vld [vmem:[%s207 + $0x292] sm:$0xff]
  %v3855 = vld [vmem:[%s207 + $0x2a2] sm:$0xff]
  %v3856 = vld [vmem:[%s207 + $0x2aa] sm:$0xff]
  %v3857 = vld [vmem:[%s207 + $0x2ba] sm:$0xff]
  %v3858 = vld [vmem:[%s207 + $0x2c2] sm:$0xff]
  %v3859 = vld [vmem:[%s207 + $0x2d2] sm:$0xff]
  %v3860 = vld [vmem:[%s207 + $0x2da] sm:$0xff]
  %v3861 = vld [vmem:[%s207 + $0x2ea] sm:$0xff]
  %v3862 = vld [vmem:[%s207 + $0x2f2] sm:$0xff]
  %v3863 = vld [vmem:[%s207 + $0x302] sm:$0xff]
  %v3864 = vld [vmem:[%s207 + $0x30a] sm:$0xff]
  %v3865 = vld [vmem:[%s207 + $0x31a] sm:$0xff]
  %v3866 = vld [vmem:[%s207 + $0x322] sm:$0xff]
  %v3867 = vld [vmem:[%s656] sm:$0xff]
  %v3868 = vld [vmem:[%s656 + $0x8] sm:$0xff]
  %v3869 = vld [vmem:[%s656 + $0x18] sm:$0xff]
  %v3870 = vld [vmem:[%s656 + $0x20] sm:$0xff]
  %v3871 = vld [vmem:[%s656 + $0x30] sm:$0xff]
  %v3872 = vld [vmem:[%s656 + $0x38] sm:$0xff]
  %v3873 = vld [vmem:[%s656 + $0x48] sm:$0xff]
  %v3874 = vld [vmem:[%s656 + $0x50] sm:$0xff]
  %v3875 = vld [vmem:[%s656 + $0x60] sm:$0xff]
  %v3876 = vld [vmem:[%s656 + $0x68] sm:$0xff]
  %v3877 = vld [vmem:[%s656 + $0x78] sm:$0xff]
  %v3878 = vld [vmem:[%s656 + $0x80] sm:$0xff]
  %v3879 = vld [vmem:[%s656 + $0x90] sm:$0xff]
  %v3880 = vld [vmem:[%s656 + $0x98] sm:$0xff]
  %v3881 = vld [vmem:[%s656 + $0xa8] sm:$0xff]
  %v3882 = vld [vmem:[%s656 + $0xb0] sm:$0xff]
  %v3883 = vld [vmem:[%s656 + $0xc0] sm:$0xff]
  %v3884 = vld [vmem:[%s656 + $0xc8] sm:$0xff]
  %v3885 = vld [vmem:[%s656 + $0xd8] sm:$0xff]
  %v3886 = vld [vmem:[%s656 + $0xe0] sm:$0xff]
  %v3887 = vld [vmem:[%s656 + $0xf0] sm:$0xff]
  %v3888 = vld [vmem:[%s656 + $0xf8] sm:$0xff]
  %v3889 = vld [vmem:[%s656 + $0x108] sm:$0xff]
  %v3890 = vld [vmem:[%s656 + $0x110] sm:$0xff]
  %v3891 = vld [vmem:[%s656 + $0x120] sm:$0xff]
  %v3892 = vld [vmem:[%s656 + $0x128] sm:$0xff]
  %v3893 = vld [vmem:[%s656 + $0x138] sm:$0xff]
  %v3894 = vld [vmem:[%s656 + $0x140] sm:$0xff]
  %v3895 = vld [vmem:[%s656 + $0x150] sm:$0xff]
  %v3896 = vld [vmem:[%s656 + $0x158] sm:$0xff]
  %v3897 = vld [vmem:[%s656 + $0x168] sm:$0xff]
  %v3898 = vld [vmem:[%s656 + $0x170] sm:$0xff]
  %v3899 = vld [vmem:[%s656 + $0x1b0] sm:$0xff]
  %v3900 = vld [vmem:[%s656 + $0x1b8] sm:$0xff]
  %v3901 = vld [vmem:[%s656 + $0x1c8] sm:$0xff]
  %v3902 = vld [vmem:[%s656 + $0x1d0] sm:$0xff]
  %v3903 = vld [vmem:[%s656 + $0x1e0] sm:$0xff]
  %v3904 = vld [vmem:[%s656 + $0x1e8] sm:$0xff]
  %v3905 = vld [vmem:[%s656 + $0x1f8] sm:$0xff]
  %v3906 = vld [vmem:[%s656 + $0x200] sm:$0xff]
  %v3907 = vld [vmem:[%s656 + $0x210] sm:$0xff]
  %v3908 = vld [vmem:[%s656 + $0x218] sm:$0xff]
  %v3909 = vld [vmem:[%s656 + $0x228] sm:$0xff]
  %v3910 = vld [vmem:[%s656 + $0x230] sm:$0xff]
  %v3911 = vld [vmem:[%s656 + $0x240] sm:$0xff]
  %v3912 = vld [vmem:[%s656 + $0x248] sm:$0xff]
  %v3913 = vld [vmem:[%s656 + $0x258] sm:$0xff]
  %v3914 = vld [vmem:[%s656 + $0x260] sm:$0xff]
  %v3915 = vld [vmem:[%s656 + $0x270] sm:$0xff]
  %v3916 = vld [vmem:[%s656 + $0x278] sm:$0xff]
  %v3917 = vld [vmem:[%s656 + $0x288] sm:$0xff]
  %v3918 = vld [vmem:[%s656 + $0x290] sm:$0xff]
  %v3919 = vld [vmem:[%s656 + $0x2a0] sm:$0xff]
  %v3920 = vld [vmem:[%s656 + $0x2a8] sm:$0xff]
  %v3921 = vld [vmem:[%s656 + $0x2b8] sm:$0xff]
  %v3922 = vld [vmem:[%s656 + $0x2c0] sm:$0xff]
  %v3923 = vld [vmem:[%s656 + $0x2d0] sm:$0xff]
  %v3924 = vld [vmem:[%s656 + $0x2d8] sm:$0xff]
  %v3925 = vld [vmem:[%s656 + $0x2e8] sm:$0xff]
  %v3926 = vld [vmem:[%s656 + $0x2f0] sm:$0xff]
  %v3927 = vld [vmem:[%s656 + $0x300] sm:$0xff]
  %v3928 = vld [vmem:[%s656 + $0x308] sm:$0xff]
  %v3929 = vld [vmem:[%s656 + $0x318] sm:$0xff]
  %v3930 = vld [vmem:[%s656 + $0x320] sm:$0xff]
  %v3931 = vld [vmem:[%s656 + $0x1] sm:$0xff]
  %v3932 = vld [vmem:[%s656 + $0x9] sm:$0xff]
  %v3933 = vld [vmem:[%s656 + $0x19] sm:$0xff]
  %v3934 = vld [vmem:[%s656 + $0x21] sm:$0xff]
  %v3935 = vld [vmem:[%s656 + $0x31] sm:$0xff]
  %v3936 = vld [vmem:[%s656 + $0x39] sm:$0xff]
  %v3937 = vld [vmem:[%s656 + $0x49] sm:$0xff]
  %v3938 = vld [vmem:[%s656 + $0x51] sm:$0xff]
  %v3939 = vld [vmem:[%s656 + $0x61] sm:$0xff]
  %v3940 = vld [vmem:[%s656 + $0x69] sm:$0xff]
  %v3941 = vld [vmem:[%s656 + $0x79] sm:$0xff]
  %v3942 = vld [vmem:[%s656 + $0x81] sm:$0xff]
  %v3943 = vld [vmem:[%s656 + $0x91] sm:$0xff]
  %v3944 = vld [vmem:[%s656 + $0x99] sm:$0xff]
  %v3945 = vld [vmem:[%s656 + $0xa9] sm:$0xff]
  %v3946 = vld [vmem:[%s656 + $0xb1] sm:$0xff]
  %v3947 = vld [vmem:[%s656 + $0xc1] sm:$0xff]
  %v3948 = vld [vmem:[%s656 + $0xc9] sm:$0xff]
  %v3949 = vld [vmem:[%s656 + $0xd9] sm:$0xff]
  %v3950 = vld [vmem:[%s656 + $0xe1] sm:$0xff]
  %v3951 = vld [vmem:[%s656 + $0xf1] sm:$0xff]
  %v3952 = vld [vmem:[%s656 + $0xf9] sm:$0xff]
  %v3953 = vld [vmem:[%s656 + $0x109] sm:$0xff]
  %v3954 = vld [vmem:[%s656 + $0x111] sm:$0xff]
  %v3955 = vld [vmem:[%s656 + $0x121] sm:$0xff]
  %v3956 = vld [vmem:[%s656 + $0x129] sm:$0xff]
  %v3957 = vld [vmem:[%s656 + $0x139] sm:$0xff]
  %v3958 = vld [vmem:[%s656 + $0x141] sm:$0xff]
  %v3959 = vld [vmem:[%s656 + $0x151] sm:$0xff]
  %v3960 = vld [vmem:[%s656 + $0x159] sm:$0xff]
  %v3961 = vld [vmem:[%s656 + $0x169] sm:$0xff]
  %v3962 = vld [vmem:[%s656 + $0x171] sm:$0xff]
  %v3963 = vld [vmem:[%s656 + $0x1b1] sm:$0xff]
  %v3964 = vld [vmem:[%s656 + $0x1b9] sm:$0xff]
  %v3965 = vld [vmem:[%s656 + $0x1c9] sm:$0xff]
  %v3966 = vld [vmem:[%s656 + $0x1d1] sm:$0xff]
  %v3967 = vld [vmem:[%s656 + $0x1e1] sm:$0xff]
  %v3968 = vld [vmem:[%s656 + $0x1e9] sm:$0xff]
  %v3969 = vld [vmem:[%s656 + $0x1f9] sm:$0xff]
  %v3970 = vld [vmem:[%s656 + $0x201] sm:$0xff]
  %v3971 = vld [vmem:[%s656 + $0x211] sm:$0xff]
  %v3972 = vld [vmem:[%s656 + $0x219] sm:$0xff]
  %v3973 = vld [vmem:[%s656 + $0x229] sm:$0xff]
  %v3974 = vld [vmem:[%s656 + $0x231] sm:$0xff]
  %v3975 = vld [vmem:[%s656 + $0x241] sm:$0xff]
  %v3976 = vld [vmem:[%s656 + $0x249] sm:$0xff]
  %v3977 = vld [vmem:[%s656 + $0x259] sm:$0xff]
  %v3978 = vld [vmem:[%s656 + $0x261] sm:$0xff]
  %v3979 = vld [vmem:[%s656 + $0x271] sm:$0xff]
  %v3980 = vld [vmem:[%s656 + $0x279] sm:$0xff]
  %v3981 = vld [vmem:[%s656 + $0x289] sm:$0xff]
  %v3982 = vld [vmem:[%s656 + $0x291] sm:$0xff]
  %v3983 = vld [vmem:[%s656 + $0x2a1] sm:$0xff]
  %v3984 = vld [vmem:[%s656 + $0x2a9] sm:$0xff]
  %v3985 = vld [vmem:[%s656 + $0x2b9] sm:$0xff]
  %v3986 = vld [vmem:[%s656 + $0x2c1] sm:$0xff]
  %v3987 = vld [vmem:[%s656 + $0x2d1] sm:$0xff]
  %v3988 = vld [vmem:[%s656 + $0x2d9] sm:$0xff]
  %v3989 = vld [vmem:[%s656 + $0x2e9] sm:$0xff]
  %v3990 = vld [vmem:[%s656 + $0x2f1] sm:$0xff]
  %v3991 = vld [vmem:[%s656 + $0x301] sm:$0xff]
  %v3992 = vld [vmem:[%s656 + $0x309] sm:$0xff]
  %v3993 = vld [vmem:[%s656 + $0x319] sm:$0xff]
  %v3994 = vld [vmem:[%s656 + $0x321] sm:$0xff]
  %v3995 = vld [vmem:[%s656 + $0x2] sm:$0xff]
  %v3996 = vld [vmem:[%s656 + $0xa] sm:$0xff]
  %v3997 = vld [vmem:[%s656 + $0x1a] sm:$0xff]
  %v3998 = vld [vmem:[%s656 + $0x22] sm:$0xff]
  %v3999 = vld [vmem:[%s656 + $0x32] sm:$0xff]
  %v4000 = vld [vmem:[%s656 + $0x3a] sm:$0xff]
  %v4001 = vld [vmem:[%s656 + $0x4a] sm:$0xff]
  %v4002 = vld [vmem:[%s656 + $0x52] sm:$0xff]
  %v4003 = vld [vmem:[%s656 + $0x62] sm:$0xff]
  %v4004 = vld [vmem:[%s656 + $0x6a] sm:$0xff]
  %v4005 = vld [vmem:[%s656 + $0x7a] sm:$0xff]
  %v4006 = vld [vmem:[%s656 + $0x82] sm:$0xff]
  %v4007 = vld [vmem:[%s656 + $0x92] sm:$0xff]
  %v4008 = vld [vmem:[%s656 + $0x9a] sm:$0xff]
  %v4009 = vld [vmem:[%s656 + $0xaa] sm:$0xff]
  %v4010 = vld [vmem:[%s656 + $0xb2] sm:$0xff]
  %v4011 = vld [vmem:[%s656 + $0xc2] sm:$0xff]
  %v4012 = vld [vmem:[%s656 + $0xca] sm:$0xff]
  %v4013 = vld [vmem:[%s656 + $0xda] sm:$0xff]
  %v4014 = vld [vmem:[%s656 + $0xe2] sm:$0xff]
  %v4015 = vld [vmem:[%s656 + $0xf2] sm:$0xff]
  %v4016 = vld [vmem:[%s656 + $0xfa] sm:$0xff]
  %v4017 = vld [vmem:[%s656 + $0x10a] sm:$0xff]
  %v4018 = vld [vmem:[%s656 + $0x112] sm:$0xff]
  %v4019 = vld [vmem:[%s656 + $0x122] sm:$0xff]
  %v4020 = vld [vmem:[%s656 + $0x12a] sm:$0xff]
  %v4021 = vld [vmem:[%s656 + $0x13a] sm:$0xff]
  %v4022 = vld [vmem:[%s656 + $0x142] sm:$0xff]
  %v4023 = vld [vmem:[%s656 + $0x152] sm:$0xff]
  %v4024 = vld [vmem:[%s656 + $0x15a] sm:$0xff]
  %v4025 = vld [vmem:[%s656 + $0x16a] sm:$0xff]
  %v4026 = vld [vmem:[%s656 + $0x172] sm:$0xff]
  %v4027 = vld [vmem:[%s656 + $0x1b2] sm:$0xff]
  %v4028 = vld [vmem:[%s656 + $0x1ba] sm:$0xff]
  %v4029 = vld [vmem:[%s656 + $0x1ca] sm:$0xff]
  %v4030 = vld [vmem:[%s656 + $0x1d2] sm:$0xff]
  %v4031 = vld [vmem:[%s656 + $0x1e2] sm:$0xff]
  %v4032 = vld [vmem:[%s656 + $0x1ea] sm:$0xff]
  %v4033 = vld [vmem:[%s656 + $0x1fa] sm:$0xff]
  %v4034 = vld [vmem:[%s656 + $0x202] sm:$0xff]
  %v4035 = vld [vmem:[%s656 + $0x212] sm:$0xff]
  %v4036 = vld [vmem:[%s656 + $0x21a] sm:$0xff]
  %v4037 = vld [vmem:[%s656 + $0x22a] sm:$0xff]
  %v4038 = vld [vmem:[%s656 + $0x232] sm:$0xff]
  %v4039 = vld [vmem:[%s656 + $0x242] sm:$0xff]
  %v4040 = vld [vmem:[%s656 + $0x24a] sm:$0xff]
  %v4041 = vld [vmem:[%s656 + $0x25a] sm:$0xff]
  %v4042 = vld [vmem:[%s656 + $0x262] sm:$0xff]
  %v4043 = vld [vmem:[%s656 + $0x272] sm:$0xff]
  %v4044 = vld [vmem:[%s656 + $0x27a] sm:$0xff]
  %v4045 = vld [vmem:[%s656 + $0x28a] sm:$0xff]
  %v4046 = vld [vmem:[%s656 + $0x292] sm:$0xff]
  %v4047 = vld [vmem:[%s656 + $0x2a2] sm:$0xff]
  %v4048 = vld [vmem:[%s656 + $0x2aa] sm:$0xff]
  %v4049 = vld [vmem:[%s656 + $0x2ba] sm:$0xff]
  %v4050 = vld [vmem:[%s656 + $0x2c2] sm:$0xff]
  %v4051 = vld [vmem:[%s656 + $0x2d2] sm:$0xff]
  %v4052 = vld [vmem:[%s656 + $0x2da] sm:$0xff]
  %v4053 = vld [vmem:[%s656 + $0x2ea] sm:$0xff]
  %v4054 = vld [vmem:[%s656 + $0x2f2] sm:$0xff]
  %v4055 = vld [vmem:[%s656 + $0x302] sm:$0xff]
  %v4056 = vld [vmem:[%s656 + $0x30a] sm:$0xff]
  %v4057 = vld [vmem:[%s656 + $0x31a] sm:$0xff]
  %v4058 = vld [vmem:[%s656 + $0x322] sm:$0xff]
  %v4059 = vld [vmem:[%s4] sm:$0xff]
  %v4060 = vld [vmem:[%s4 + $0x8] sm:$0xff]
  %v4061 = vld [vmem:[%s4 + $0x10] sm:$0xff]
  %v4062 = vld [vmem:[%s4 + $0x18] sm:$0xff]
  %v4063 = vld [vmem:[%s4 + $0x20] sm:$0xff]
  %v4064 = vld [vmem:[%s4 + $0x28] sm:$0xff]
  %v4065 = vld [vmem:[%s4 + $0x30] sm:$0xff]
  %v4066 = vld [vmem:[%s4 + $0x38] sm:$0xff]
  %v4067 = vld [vmem:[%s4 + $0x40] sm:$0xff]
  %v4068 = vld [vmem:[%s4 + $0x48] sm:$0xff]
  %v4069 = vld [vmem:[%s4 + $0x50] sm:$0xff]
  %v4070 = vld [vmem:[%s4 + $0x58] sm:$0xff]
  %v4071 = vld [vmem:[%s4 + $0x60] sm:$0xff]
  %v4072 = vld [vmem:[%s4 + $0x68] sm:$0xff]
  %v4073 = vld [vmem:[%s4 + $0x70] sm:$0xff]
  %v4074 = vld [vmem:[%s4 + $0x78] sm:$0xff]
  %v4075 = vld [vmem:[%s4 + $0x80] sm:$0xff]
  %v4076 = vld [vmem:[%s4 + $0x88] sm:$0xff]
  %v4077 = vld [vmem:[%s4 + $0x90] sm:$0xff]
  %v4078 = vld [vmem:[%s4 + $0x98] sm:$0xff]
  %v4079 = vld [vmem:[%s4 + $0xa0] sm:$0xff]
  %v4080 = vld [vmem:[%s4 + $0xa8] sm:$0xff]
  %v4081 = vld [vmem:[%s4 + $0xb0] sm:$0xff]
  %v4082 = vld [vmem:[%s4 + $0xb8] sm:$0xff]
  %v4083 = vld [vmem:[%s4 + $0xc0] sm:$0xff]
  %v4084 = vld [vmem:[%s4 + $0xc8] sm:$0xff]
  %v4085 = vld [vmem:[%s4 + $0xd0] sm:$0xff]
  %v4086 = vld [vmem:[%s4 + $0xd8] sm:$0xff]
  %v4087 = vld [vmem:[%s4 + $0xe0] sm:$0xff]
  %v4088 = vld [vmem:[%s4 + $0xe8] sm:$0xff]
  %v4089 = vld [vmem:[%s4 + $0xf0] sm:$0xff]
  %v4090 = vld [vmem:[%s4 + $0xf8] sm:$0xff]
  %v4091 = vld [vmem:[%s4 + $0x100] sm:$0xff]
  %v4092 = vld [vmem:[%s4 + $0x108] sm:$0xff]
  %v4093 = vld [vmem:[%s4 + $0x110] sm:$0xff]
  %v4094 = vld [vmem:[%s4 + $0x118] sm:$0xff]
  %v4095 = vld [vmem:[%s4 + $0x120] sm:$0xff]
  %v4096 = vld [vmem:[%s4 + $0x128] sm:$0xff]
  %v4097 = vld [vmem:[%s4 + $0x130] sm:$0xff]
  %v4098 = vld [vmem:[%s4 + $0x138] sm:$0xff]
  %v4099 = vld [vmem:[%s4 + $0x140] sm:$0xff]
  %v4100 = vld [vmem:[%s4 + $0x148] sm:$0xff]
  %v4101 = vld [vmem:[%s4 + $0x150] sm:$0xff]
  %v4102 = vld [vmem:[%s4 + $0x158] sm:$0xff]
  %v4103 = vld [vmem:[%s4 + $0x160] sm:$0xff]
  %v4104 = vld [vmem:[%s4 + $0x168] sm:$0xff]
  %v4105 = vld [vmem:[%s4 + $0x170] sm:$0xff]
  %v4106 = vld [vmem:[%s4 + $0x178] sm:$0xff]
  %v4107 = vld [vmem:[%s4 + $0x180] sm:$0xff]
  %v4108 = vld [vmem:[%s4 + $0x188] sm:$0xff]
  %v4109 = vld [vmem:[%s4 + $0x190] sm:$0xff]
  %v4110 = vld [vmem:[%s4 + $0x198] sm:$0xff]
  %v4111 = vld [vmem:[%s4 + $0x1a0] sm:$0xff]
  %v4112 = vld [vmem:[%s4 + $0x1a8] sm:$0xff]
  %v4113 = vld [vmem:[%s4 + $0x1b0] sm:$0xff]
  %v4114 = vld [vmem:[%s4 + $0x1b8] sm:$0xff]
  %v4115 = vld [vmem:[%s4 + $0x1c0] sm:$0xff]
  %v4116 = vld [vmem:[%s4 + $0x1c8] sm:$0xff]
  %v4117 = vld [vmem:[%s4 + $0x1d0] sm:$0xff]
  %v4118 = vld [vmem:[%s4 + $0x1d8] sm:$0xff]
  %v4119 = vld [vmem:[%s4 + $0x1e0] sm:$0xff]
  %v4120 = vld [vmem:[%s4 + $0x1e8] sm:$0xff]
  %v4121 = vld [vmem:[%s4 + $0x1f0] sm:$0xff]
  %v4122 = vld [vmem:[%s4 + $0x1f8] sm:$0xff]
  %v4123 = vld [vmem:[%s4 + $0x200] sm:$0xff]
  %v4124 = vld [vmem:[%s4 + $0x208] sm:$0xff]
  %v4125 = vld [vmem:[%s4 + $0x210] sm:$0xff]
  %v4126 = vld [vmem:[%s4 + $0x218] sm:$0xff]
  %v4127 = vld [vmem:[%s4 + $0x220] sm:$0xff]
  %v4128 = vld [vmem:[%s4 + $0x228] sm:$0xff]
  %v4129 = vld [vmem:[%s4 + $0x230] sm:$0xff]
  %v4130 = vld [vmem:[%s4 + $0x238] sm:$0xff]
  %v4131 = vld [vmem:[%s4 + $0x240] sm:$0xff]
  %v4132 = vld [vmem:[%s4 + $0x248] sm:$0xff]
  %v4133 = vld [vmem:[%s4 + $0x250] sm:$0xff]
  %v4134 = vld [vmem:[%s4 + $0x258] sm:$0xff]
  %v4135 = vld [vmem:[%s4 + $0x260] sm:$0xff]
  %v4136 = vld [vmem:[%s4 + $0x268] sm:$0xff]
  %v4137 = vld [vmem:[%s4 + $0x270] sm:$0xff]
  %v4138 = vld [vmem:[%s4 + $0x278] sm:$0xff]
  %v4139 = vld [vmem:[%s4 + $0x280] sm:$0xff]
  %v4140 = vld [vmem:[%s4 + $0x288] sm:$0xff]
  %v4141 = vld [vmem:[%s4 + $0x290] sm:$0xff]
  %v4142 = vld [vmem:[%s4 + $0x298] sm:$0xff]
  %v4143 = vld [vmem:[%s4 + $0x2a0] sm:$0xff]
  %v4144 = vld [vmem:[%s4 + $0x2a8] sm:$0xff]
  %v4145 = vld [vmem:[%s4 + $0x2b0] sm:$0xff]
  %v4146 = vld [vmem:[%s4 + $0x2b8] sm:$0xff]
  %v4147 = vld [vmem:[%s4 + $0x2c0] sm:$0xff]
  %v4148 = vld [vmem:[%s4 + $0x2c8] sm:$0xff]
  %v4149 = vld [vmem:[%s4 + $0x2d0] sm:$0xff]
  %v4150 = vld [vmem:[%s4 + $0x2d8] sm:$0xff]
  %v4151 = vld [vmem:[%s4 + $0x2e0] sm:$0xff]
  %v4152 = vld [vmem:[%s4 + $0x2e8] sm:$0xff]
  %v4153 = vld [vmem:[%s4 + $0x2f0] sm:$0xff]
  %v4154 = vld [vmem:[%s4 + $0x2f8] sm:$0xff]
  %v4155 = vld [vmem:[%s4 + $0x300] sm:$0xff]
  %v4156 = vld [vmem:[%s4 + $0x308] sm:$0xff]
  %v4157 = vld [vmem:[%s4 + $0x310] sm:$0xff]
  %v4158 = vld [vmem:[%s4 + $0x318] sm:$0xff]
  %v4159 = vld [vmem:[%s4 + $0x320] sm:$0xff]
  %v4160 = vld [vmem:[%s4 + $0x328] sm:$0xff]
  %v4161 = vld [vmem:[%s4 + $0x330] sm:$0xff]
  %v4162 = vld [vmem:[%s4 + $0x338] sm:$0xff]
  %v4163 = vld [vmem:[%s4 + $0x340] sm:$0xff]
  %v4164 = vld [vmem:[%s4 + $0x348] sm:$0xff]
  %v4165 = vld [vmem:[%s4 + $0x350] sm:$0xff]
  %v4166 = vld [vmem:[%s4 + $0x358] sm:$0xff]
  %v4167 = vld [vmem:[%s4 + $0x360] sm:$0xff]
  %v4168 = vld [vmem:[%s4 + $0x368] sm:$0xff]
  %v4169 = vld [vmem:[%s4 + $0x370] sm:$0xff]
  %v4170 = vld [vmem:[%s4 + $0x378] sm:$0xff]
  %v4171 = vld [vmem:[%s4 + $0x380] sm:$0xff]
  %v4172 = vld [vmem:[%s4 + $0x388] sm:$0xff]
  %v4173 = vld [vmem:[%s4 + $0x390] sm:$0xff]
  %v4174 = vld [vmem:[%s4 + $0x398] sm:$0xff]
  %v4175 = vld [vmem:[%s4 + $0x3a0] sm:$0xff]
  %v4176 = vld [vmem:[%s4 + $0x3a8] sm:$0xff]
  %v4177 = vld [vmem:[%s4 + $0x3b0] sm:$0xff]
  %v4178 = vld [vmem:[%s4 + $0x3b8] sm:$0xff]
  %v4179 = vld [vmem:[%s4 + $0x3c0] sm:$0xff]
  %v4180 = vld [vmem:[%s4 + $0x3c8] sm:$0xff]
  %v4181 = vld [vmem:[%s4 + $0x3d0] sm:$0xff]
  %v4182 = vld [vmem:[%s4 + $0x3d8] sm:$0xff]
  %v4183 = vld [vmem:[%s4 + $0x3e0] sm:$0xff]
  %v4184 = vld [vmem:[%s4 + $0x3e8] sm:$0xff]
  %v4185 = vld [vmem:[%s4 + $0x3f0] sm:$0xff]
  %v4186 = vld [vmem:[%s4 + $0x3f8] sm:$0xff]
  %v4187 = vld [vmem:[%s4 + $0x400] sm:$0xff]
  %v4188 = vld [vmem:[%s4 + $0x408] sm:$0xff]
  %v4189 = vld [vmem:[%s4 + $0x410] sm:$0xff]
  %v4190 = vld [vmem:[%s4 + $0x418] sm:$0xff]
  %v4191 = vld [vmem:[%s4 + $0x420] sm:$0xff]
  %v4192 = vld [vmem:[%s4 + $0x428] sm:$0xff]
  %v4193 = vld [vmem:[%s4 + $0x430] sm:$0xff]
  %v4194 = vld [vmem:[%s4 + $0x438] sm:$0xff]
  %v4195 = vld [vmem:[%s4 + $0x440] sm:$0xff]
  %v4196 = vld [vmem:[%s4 + $0x448] sm:$0xff]
  %v4197 = vld [vmem:[%s4 + $0x450] sm:$0xff]
  %v4198 = vld [vmem:[%s4 + $0x458] sm:$0xff]
  %v4199 = vld [vmem:[%s4 + $0x460] sm:$0xff]
  %v4200 = vld [vmem:[%s4 + $0x468] sm:$0xff]
  %v4201 = vld [vmem:[%s4 + $0x470] sm:$0xff]
  %v4202 = vld [vmem:[%s4 + $0x478] sm:$0xff]
  %4203 = vmatpush.msra.mxu0 %v4074
  %4204 = vmatpush.msra.mxu0 %v4073
  %4205 = vmatpush.msra.mxu0 %v4072
  %4206 = vmatpush.msra.mxu0 %v4071
  %4207 = vmatpush.msra.mxu0 %v4070
  %4208 = vmatpush.msra.mxu0 %v4069
  %4209 = vmatpush.msra.mxu0 %v4068
  %4210 = vmatpush.msra.mxu0 %v4067
  %4211 = vmatpush.msra.mxu0 %v4066
  %4212 = vmatpush.msra.mxu0 %v4065
  %4213 = vmatpush.msra.mxu0 %v4064
  %4214 = vmatpush.msra.mxu0 %v4063
  %4215 = vmatpush.msra.mxu0 %v4062
  %4216 = vmatpush.msra.mxu0 %v4061
  %4217 = vmatpush.msra.mxu0 %v4060
  %4218 = vmatpush.msra.mxu0 %v4059
  %4219 = vmatmul.f32.gmra.mxu0 %v3483
  %v4220 = vpop.f32.mrf.mxu0
  %v4221 = vadd.f32 0.0, %v4220
  %4222 = vmatmul.f32.gmra.mxu0 %v3484
  %v4223 = vpop.f32.mrf.mxu0
  %v4224 = vadd.f32 0.0, %v4223
  %4225 = vmatmul.f32.gmra.mxu0 %v3485
  %v4226 = vpop.f32.mrf.mxu0
  %v4227 = vadd.f32 0.0, %v4226
  %4228 = vmatmul.f32.gmra.mxu0 %v3486
  %v4229 = vpop.f32.mrf.mxu0
  %v4230 = vadd.f32 0.0, %v4229
  %4231 = vmatmul.f32.gmra.mxu0 %v3487
  %v4232 = vpop.f32.mrf.mxu0
  %v4233 = vadd.f32 0.0, %v4232
  %4234 = vmatmul.f32.gmra.mxu0 %v3488
  %v4235 = vpop.f32.mrf.mxu0
  %v4236 = vadd.f32 0.0, %v4235
  %4237 = vmatmul.f32.gmra.mxu0 %v3489
  %v4238 = vpop.f32.mrf.mxu0
  %v4239 = vadd.f32 0.0, %v4238
  %4240 = vmatmul.f32.gmra.mxu0 %v3490
  %v4241 = vpop.f32.mrf.mxu0
  %v4242 = vadd.f32 0.0, %v4241
  %4243 = vmatmul.f32.gmra.mxu0 %v3491
  %v4244 = vpop.f32.mrf.mxu0
  %v4245 = vadd.f32 0.0, %v4244
  %4246 = vmatmul.f32.gmra.mxu0 %v3492
  %v4247 = vpop.f32.mrf.mxu0
  %v4248 = vadd.f32 0.0, %v4247
  %4249 = vmatmul.f32.gmra.mxu0 %v3493
  %v4250 = vpop.f32.mrf.mxu0
  %v4251 = vadd.f32 0.0, %v4250
  %4252 = vmatmul.f32.gmra.mxu0 %v3494
  %v4253 = vpop.f32.mrf.mxu0
  %v4254 = vadd.f32 0.0, %v4253
  %4255 = vmatmul.f32.gmra.mxu0 %v3495
  %v4256 = vpop.f32.mrf.mxu0
  %v4257 = vadd.f32 0.0, %v4256
  %4258 = vmatmul.f32.gmra.mxu0 %v3496
  %v4259 = vpop.f32.mrf.mxu0
  %v4260 = vadd.f32 0.0, %v4259
  %4261 = vmatmul.f32.gmra.mxu0 %v3497
  %v4262 = vpop.f32.mrf.mxu0
  %v4263 = vadd.f32 0.0, %v4262
  %4264 = vmatmul.f32.gmra.mxu0 %v3498
  %v4265 = vpop.f32.mrf.mxu0
  %v4266 = vadd.f32 0.0, %v4265
  %4267 = vmatmul.f32.gmra.mxu0 %v3499
  %v4268 = vpop.f32.mrf.mxu0
  %v4269 = vadd.f32 0.0, %v4268
  %4270 = vmatmul.f32.gmra.mxu0 %v3500
  %v4271 = vpop.f32.mrf.mxu0
  %v4272 = vadd.f32 0.0, %v4271
  %4273 = vmatmul.f32.gmra.mxu0 %v3501
  %v4274 = vpop.f32.mrf.mxu0
  %v4275 = vadd.f32 0.0, %v4274
  %4276 = vmatmul.f32.gmra.mxu0 %v3502
  %v4277 = vpop.f32.mrf.mxu0
  %v4278 = vadd.f32 0.0, %v4277
  %4279 = vmatmul.f32.gmra.mxu0 %v3503
  %v4280 = vpop.f32.mrf.mxu0
  %v4281 = vadd.f32 0.0, %v4280
  %4282 = vmatmul.f32.gmra.mxu0 %v3504
  %v4283 = vpop.f32.mrf.mxu0
  %v4284 = vadd.f32 0.0, %v4283
  %4285 = vmatmul.f32.gmra.mxu0 %v3505
  %v4286 = vpop.f32.mrf.mxu0
  %v4287 = vadd.f32 0.0, %v4286
  %4288 = vmatmul.f32.gmra.mxu0 %v3506
  %v4289 = vpop.f32.mrf.mxu0
  %v4290 = vadd.f32 0.0, %v4289
  %4291 = vmatmul.f32.gmra.mxu0 %v3507
  %v4292 = vpop.f32.mrf.mxu0
  %v4293 = vadd.f32 0.0, %v4292
  %4294 = vmatmul.f32.gmra.mxu0 %v3508
  %v4295 = vpop.f32.mrf.mxu0
  %v4296 = vadd.f32 0.0, %v4295
  %4297 = vmatmul.f32.gmra.mxu0 %v3509
  %v4298 = vpop.f32.mrf.mxu0
  %v4299 = vadd.f32 0.0, %v4298
  %4300 = vmatmul.f32.gmra.mxu0 %v3510
  %v4301 = vpop.f32.mrf.mxu0
  %v4302 = vadd.f32 0.0, %v4301
  %4303 = vmatmul.f32.gmra.mxu0 %v3511
  %v4304 = vpop.f32.mrf.mxu0
  %v4305 = vadd.f32 0.0, %v4304
  %4306 = vmatmul.f32.gmra.mxu0 %v3512
  %v4307 = vpop.f32.mrf.mxu0
  %v4308 = vadd.f32 0.0, %v4307
  %4309 = vmatmul.f32.gmra.mxu0 %v3513
  %v4310 = vpop.f32.mrf.mxu0
  %v4311 = vadd.f32 0.0, %v4310
  %4312 = vmatmul.f32.gmra.mxu0 %v3514
  %v4313 = vpop.f32.mrf.mxu0
  %v4314 = vadd.f32 0.0, %v4313
  %4315 = vmatmul.f32.gmra.mxu0 %v3515
  %v4316 = vpop.f32.mrf.mxu0
  %v4317 = vadd.f32 0.0, %v4316
  %4318 = vmatmul.f32.gmra.mxu0 %v3516
  %v4319 = vpop.f32.mrf.mxu0
  %v4320 = vadd.f32 0.0, %v4319
  %4321 = vmatmul.f32.gmra.mxu0 %v3517
  %v4322 = vpop.f32.mrf.mxu0
  %v4323 = vadd.f32 0.0, %v4322
  %4324 = vmatmul.f32.gmra.mxu0 %v3518
  %v4325 = vpop.f32.mrf.mxu0
  %v4326 = vadd.f32 0.0, %v4325
  %4327 = vmatmul.f32.gmra.mxu0 %v3519
  %v4328 = vpop.f32.mrf.mxu0
  %v4329 = vadd.f32 0.0, %v4328
  %4330 = vmatmul.f32.gmra.mxu0 %v3520
  %v4331 = vpop.f32.mrf.mxu0
  %v4332 = vadd.f32 0.0, %v4331
  %4333 = vmatmul.f32.gmra.mxu0 %v3521
  %v4334 = vpop.f32.mrf.mxu0
  %v4335 = vadd.f32 0.0, %v4334
  %4336 = vmatmul.f32.gmra.mxu0 %v3522
  %v4337 = vpop.f32.mrf.mxu0
  %v4338 = vadd.f32 0.0, %v4337
  %4339 = vmatmul.f32.gmra.mxu0 %v3523
  %v4340 = vpop.f32.mrf.mxu0
  %v4341 = vadd.f32 0.0, %v4340
  %4342 = vmatmul.f32.gmra.mxu0 %v3524
  %v4343 = vpop.f32.mrf.mxu0
  %v4344 = vadd.f32 0.0, %v4343
  %4345 = vmatmul.f32.gmra.mxu0 %v3525
  %v4346 = vpop.f32.mrf.mxu0
  %v4347 = vadd.f32 0.0, %v4346
  %4348 = vmatmul.f32.gmra.mxu0 %v3526
  %v4349 = vpop.f32.mrf.mxu0
  %v4350 = vadd.f32 0.0, %v4349
  %4351 = vmatmul.f32.gmra.mxu0 %v3527
  %v4352 = vpop.f32.mrf.mxu0
  %v4353 = vadd.f32 0.0, %v4352
  %4354 = vmatmul.f32.gmra.mxu0 %v3528
  %v4355 = vpop.f32.mrf.mxu0
  %v4356 = vadd.f32 0.0, %v4355
  %4357 = vmatmul.f32.gmra.mxu0 %v3529
  %v4358 = vpop.f32.mrf.mxu0
  %v4359 = vadd.f32 0.0, %v4358
  %4360 = vmatmul.f32.gmra.mxu0 %v3530
  %v4361 = vpop.f32.mrf.mxu0
  %v4362 = vadd.f32 0.0, %v4361
  %4363 = vmatmul.f32.gmra.mxu0 %v3531
  %v4364 = vpop.f32.mrf.mxu0
  %v4365 = vadd.f32 0.0, %v4364
  %4366 = vmatmul.f32.gmra.mxu0 %v3532
  %v4367 = vpop.f32.mrf.mxu0
  %v4368 = vadd.f32 0.0, %v4367
  %4369 = vmatmul.f32.gmra.mxu0 %v3533
  %v4370 = vpop.f32.mrf.mxu0
  %v4371 = vadd.f32 0.0, %v4370
  %4372 = vmatmul.f32.gmra.mxu0 %v3534
  %v4373 = vpop.f32.mrf.mxu0
  %v4374 = vadd.f32 0.0, %v4373
  %4375 = vmatmul.f32.gmra.mxu0 %v3535
  %v4376 = vpop.f32.mrf.mxu0
  %v4377 = vadd.f32 0.0, %v4376
  %4378 = vmatmul.f32.gmra.mxu0 %v3536
  %v4379 = vpop.f32.mrf.mxu0
  %v4380 = vadd.f32 0.0, %v4379
  %4381 = vmatmul.f32.gmra.mxu0 %v3537
  %v4382 = vpop.f32.mrf.mxu0
  %v4383 = vadd.f32 0.0, %v4382
  %4384 = vmatmul.f32.gmra.mxu0 %v3538
  %v4385 = vpop.f32.mrf.mxu0
  %v4386 = vadd.f32 0.0, %v4385
  %4387 = vmatmul.f32.gmra.mxu0 %v3539
  %v4388 = vpop.f32.mrf.mxu0
  %v4389 = vadd.f32 0.0, %v4388
  %4390 = vmatmul.f32.gmra.mxu0 %v3540
  %v4391 = vpop.f32.mrf.mxu0
  %v4392 = vadd.f32 0.0, %v4391
  %4393 = vmatmul.f32.gmra.mxu0 %v3541
  %v4394 = vpop.f32.mrf.mxu0
  %v4395 = vadd.f32 0.0, %v4394
  %4396 = vmatmul.f32.gmra.mxu0 %v3542
  %v4397 = vpop.f32.mrf.mxu0
  %v4398 = vadd.f32 0.0, %v4397
  %4399 = vmatmul.f32.gmra.mxu0 %v3543
  %v4400 = vpop.f32.mrf.mxu0
  %v4401 = vadd.f32 0.0, %v4400
  %4402 = vmatmul.f32.gmra.mxu0 %v3544
  %v4403 = vpop.f32.mrf.mxu0
  %v4404 = vadd.f32 0.0, %v4403
  %4405 = vmatmul.f32.gmra.mxu0 %v3545
  %v4406 = vpop.f32.mrf.mxu0
  %v4407 = vadd.f32 0.0, %v4406
  %4408 = vmatmul.f32.gmra.mxu0 %v3546
  %v4409 = vpop.f32.mrf.mxu0
  %v4410 = vadd.f32 0.0, %v4409
  %4411 = vdwg.mxu0
  %4412 = vmatpush.msra.mxu0 %v4090
  %4413 = vmatpush.msra.mxu0 %v4089
  %4414 = vmatpush.msra.mxu0 %v4088
  %4415 = vmatpush.msra.mxu0 %v4087
  %4416 = vmatpush.msra.mxu0 %v4086
  %4417 = vmatpush.msra.mxu0 %v4085
  %4418 = vmatpush.msra.mxu0 %v4084
  %4419 = vmatpush.msra.mxu0 %v4083
  %4420 = vmatpush.msra.mxu0 %v4082
  %4421 = vmatpush.msra.mxu0 %v4081
  %4422 = vmatpush.msra.mxu0 %v4080
  %4423 = vmatpush.msra.mxu0 %v4079
  %4424 = vmatpush.msra.mxu0 %v4078
  %4425 = vmatpush.msra.mxu0 %v4077
  %4426 = vmatpush.msra.mxu0 %v4076
  %4427 = vmatpush.msra.mxu0 %v4075
  %4428 = vmatmul.f32.gmra.mxu0 %v3547
  %v4429 = vpop.f32.mrf.mxu0
  %v4430 = vadd.f32 %v4221, %v4429
  %4431 = vmatmul.f32.gmra.mxu0 %v3548
  %v4432 = vpop.f32.mrf.mxu0
  %v4433 = vadd.f32 %v4224, %v4432
  %4434 = vmatmul.f32.gmra.mxu0 %v3549
  %v4435 = vpop.f32.mrf.mxu0
  %v4436 = vadd.f32 %v4227, %v4435
  %4437 = vmatmul.f32.gmra.mxu0 %v3550
  %v4438 = vpop.f32.mrf.mxu0
  %v4439 = vadd.f32 %v4230, %v4438
  %4440 = vmatmul.f32.gmra.mxu0 %v3551
  %v4441 = vpop.f32.mrf.mxu0
  %v4442 = vadd.f32 %v4233, %v4441
  %4443 = vmatmul.f32.gmra.mxu0 %v3552
  %v4444 = vpop.f32.mrf.mxu0
  %v4445 = vadd.f32 %v4236, %v4444
  %4446 = vmatmul.f32.gmra.mxu0 %v3553
  %v4447 = vpop.f32.mrf.mxu0
  %v4448 = vadd.f32 %v4239, %v4447
  %4449 = vmatmul.f32.gmra.mxu0 %v3554
  %v4450 = vpop.f32.mrf.mxu0
  %v4451 = vadd.f32 %v4242, %v4450
  %4452 = vmatmul.f32.gmra.mxu0 %v3555
  %v4453 = vpop.f32.mrf.mxu0
  %v4454 = vadd.f32 %v4245, %v4453
  %4455 = vmatmul.f32.gmra.mxu0 %v3556
  %v4456 = vpop.f32.mrf.mxu0
  %v4457 = vadd.f32 %v4248, %v4456
  %4458 = vmatmul.f32.gmra.mxu0 %v3557
  %v4459 = vpop.f32.mrf.mxu0
  %v4460 = vadd.f32 %v4251, %v4459
  %4461 = vmatmul.f32.gmra.mxu0 %v3558
  %v4462 = vpop.f32.mrf.mxu0
  %v4463 = vadd.f32 %v4254, %v4462
  %4464 = vmatmul.f32.gmra.mxu0 %v3559
  %v4465 = vpop.f32.mrf.mxu0
  %v4466 = vadd.f32 %v4257, %v4465
  %4467 = vmatmul.f32.gmra.mxu0 %v3560
  %v4468 = vpop.f32.mrf.mxu0
  %v4469 = vadd.f32 %v4260, %v4468
  %4470 = vmatmul.f32.gmra.mxu0 %v3561
  %v4471 = vpop.f32.mrf.mxu0
  %v4472 = vadd.f32 %v4263, %v4471
  %4473 = vmatmul.f32.gmra.mxu0 %v3562
  %v4474 = vpop.f32.mrf.mxu0
  %v4475 = vadd.f32 %v4266, %v4474
  %4476 = vmatmul.f32.gmra.mxu0 %v3563
  %v4477 = vpop.f32.mrf.mxu0
  %v4478 = vadd.f32 %v4269, %v4477
  %4479 = vmatmul.f32.gmra.mxu0 %v3564
  %v4480 = vpop.f32.mrf.mxu0
  %v4481 = vadd.f32 %v4272, %v4480
  %4482 = vmatmul.f32.gmra.mxu0 %v3565
  %v4483 = vpop.f32.mrf.mxu0
  %v4484 = vadd.f32 %v4275, %v4483
  %4485 = vmatmul.f32.gmra.mxu0 %v3566
  %v4486 = vpop.f32.mrf.mxu0
  %v4487 = vadd.f32 %v4278, %v4486
  %4488 = vmatmul.f32.gmra.mxu0 %v3567
  %v4489 = vpop.f32.mrf.mxu0
  %v4490 = vadd.f32 %v4281, %v4489
  %4491 = vmatmul.f32.gmra.mxu0 %v3568
  %v4492 = vpop.f32.mrf.mxu0
  %v4493 = vadd.f32 %v4284, %v4492
  %4494 = vmatmul.f32.gmra.mxu0 %v3569
  %v4495 = vpop.f32.mrf.mxu0
  %v4496 = vadd.f32 %v4287, %v4495
  %4497 = vmatmul.f32.gmra.mxu0 %v3570
  %v4498 = vpop.f32.mrf.mxu0
  %v4499 = vadd.f32 %v4290, %v4498
  %4500 = vmatmul.f32.gmra.mxu0 %v3571
  %v4501 = vpop.f32.mrf.mxu0
  %v4502 = vadd.f32 %v4293, %v4501
  %4503 = vmatmul.f32.gmra.mxu0 %v3572
  %v4504 = vpop.f32.mrf.mxu0
  %v4505 = vadd.f32 %v4296, %v4504
  %4506 = vmatmul.f32.gmra.mxu0 %v3573
  %v4507 = vpop.f32.mrf.mxu0
  %v4508 = vadd.f32 %v4299, %v4507
  %4509 = vmatmul.f32.gmra.mxu0 %v3574
  %v4510 = vpop.f32.mrf.mxu0
  %v4511 = vadd.f32 %v4302, %v4510
  %4512 = vmatmul.f32.gmra.mxu0 %v3575
  %v4513 = vpop.f32.mrf.mxu0
  %v4514 = vadd.f32 %v4305, %v4513
  %4515 = vmatmul.f32.gmra.mxu0 %v3576
  %v4516 = vpop.f32.mrf.mxu0
  %v4517 = vadd.f32 %v4308, %v4516
  %4518 = vmatmul.f32.gmra.mxu0 %v3577
  %v4519 = vpop.f32.mrf.mxu0
  %v4520 = vadd.f32 %v4311, %v4519
  %4521 = vmatmul.f32.gmra.mxu0 %v3578
  %v4522 = vpop.f32.mrf.mxu0
  %v4523 = vadd.f32 %v4314, %v4522
  %4524 = vmatmul.f32.gmra.mxu0 %v3579
  %v4525 = vpop.f32.mrf.mxu0
  %v4526 = vadd.f32 %v4317, %v4525
  %4527 = vmatmul.f32.gmra.mxu0 %v3580
  %v4528 = vpop.f32.mrf.mxu0
  %v4529 = vadd.f32 %v4320, %v4528
  %4530 = vmatmul.f32.gmra.mxu0 %v3581
  %v4531 = vpop.f32.mrf.mxu0
  %v4532 = vadd.f32 %v4323, %v4531
  %4533 = vmatmul.f32.gmra.mxu0 %v3582
  %v4534 = vpop.f32.mrf.mxu0
  %v4535 = vadd.f32 %v4326, %v4534
  %4536 = vmatmul.f32.gmra.mxu0 %v3583
  %v4537 = vpop.f32.mrf.mxu0
  %v4538 = vadd.f32 %v4329, %v4537
  %4539 = vmatmul.f32.gmra.mxu0 %v3584
  %v4540 = vpop.f32.mrf.mxu0
  %v4541 = vadd.f32 %v4332, %v4540
  %4542 = vmatmul.f32.gmra.mxu0 %v3585
  %v4543 = vpop.f32.mrf.mxu0
  %v4544 = vadd.f32 %v4335, %v4543
  %4545 = vmatmul.f32.gmra.mxu0 %v3586
  %v4546 = vpop.f32.mrf.mxu0
  %v4547 = vadd.f32 %v4338, %v4546
  %4548 = vmatmul.f32.gmra.mxu0 %v3587
  %v4549 = vpop.f32.mrf.mxu0
  %v4550 = vadd.f32 %v4341, %v4549
  %4551 = vmatmul.f32.gmra.mxu0 %v3588
  %v4552 = vpop.f32.mrf.mxu0
  %v4553 = vadd.f32 %v4344, %v4552
  %4554 = vmatmul.f32.gmra.mxu0 %v3589
  %v4555 = vpop.f32.mrf.mxu0
  %v4556 = vadd.f32 %v4347, %v4555
  %4557 = vmatmul.f32.gmra.mxu0 %v3590
  %v4558 = vpop.f32.mrf.mxu0
  %v4559 = vadd.f32 %v4350, %v4558
  %4560 = vmatmul.f32.gmra.mxu0 %v3591
  %v4561 = vpop.f32.mrf.mxu0
  %v4562 = vadd.f32 %v4353, %v4561
  %4563 = vmatmul.f32.gmra.mxu0 %v3592
  %v4564 = vpop.f32.mrf.mxu0
  %v4565 = vadd.f32 %v4356, %v4564
  %4566 = vmatmul.f32.gmra.mxu0 %v3593
  %v4567 = vpop.f32.mrf.mxu0
  %v4568 = vadd.f32 %v4359, %v4567
  %4569 = vmatmul.f32.gmra.mxu0 %v3594
  %v4570 = vpop.f32.mrf.mxu0
  %v4571 = vadd.f32 %v4362, %v4570
  %4572 = vmatmul.f32.gmra.mxu0 %v3595
  %v4573 = vpop.f32.mrf.mxu0
  %v4574 = vadd.f32 %v4365, %v4573
  %4575 = vmatmul.f32.gmra.mxu0 %v3596
  %v4576 = vpop.f32.mrf.mxu0
  %v4577 = vadd.f32 %v4368, %v4576
  %4578 = vmatmul.f32.gmra.mxu0 %v3597
  %v4579 = vpop.f32.mrf.mxu0
  %v4580 = vadd.f32 %v4371, %v4579
  %4581 = vmatmul.f32.gmra.mxu0 %v3598
  %v4582 = vpop.f32.mrf.mxu0
  %v4583 = vadd.f32 %v4374, %v4582
  %4584 = vmatmul.f32.gmra.mxu0 %v3599
  %v4585 = vpop.f32.mrf.mxu0
  %v4586 = vadd.f32 %v4377, %v4585
  %4587 = vmatmul.f32.gmra.mxu0 %v3600
  %v4588 = vpop.f32.mrf.mxu0
  %v4589 = vadd.f32 %v4380, %v4588
  %4590 = vmatmul.f32.gmra.mxu0 %v3601
  %v4591 = vpop.f32.mrf.mxu0
  %v4592 = vadd.f32 %v4383, %v4591
  %4593 = vmatmul.f32.gmra.mxu0 %v3602
  %v4594 = vpop.f32.mrf.mxu0
  %v4595 = vadd.f32 %v4386, %v4594
  %4596 = vmatmul.f32.gmra.mxu0 %v3603
  %v4597 = vpop.f32.mrf.mxu0
  %v4598 = vadd.f32 %v4389, %v4597
  %4599 = vmatmul.f32.gmra.mxu0 %v3604
  %v4600 = vpop.f32.mrf.mxu0
  %v4601 = vadd.f32 %v4392, %v4600
  %4602 = vmatmul.f32.gmra.mxu0 %v3605
  %v4603 = vpop.f32.mrf.mxu0
  %v4604 = vadd.f32 %v4395, %v4603
  %4605 = vmatmul.f32.gmra.mxu0 %v3606
  %v4606 = vpop.f32.mrf.mxu0
  %v4607 = vadd.f32 %v4398, %v4606
  %4608 = vmatmul.f32.gmra.mxu0 %v3607
  %v4609 = vpop.f32.mrf.mxu0
  %v4610 = vadd.f32 %v4401, %v4609
  %4611 = vmatmul.f32.gmra.mxu0 %v3608
  %v4612 = vpop.f32.mrf.mxu0
  %v4613 = vadd.f32 %v4404, %v4612
  %4614 = vmatmul.f32.gmra.mxu0 %v3609
  %v4615 = vpop.f32.mrf.mxu0
  %v4616 = vadd.f32 %v4407, %v4615
  %4617 = vmatmul.f32.gmra.mxu0 %v3610
  %v4618 = vpop.f32.mrf.mxu0
  %v4619 = vadd.f32 %v4410, %v4618
  %4620 = vdwg.mxu0
  %4621 = vmatpush.msra.mxu0 %v4106
  %4622 = vmatpush.msra.mxu0 %v4105
  %4623 = vmatpush.msra.mxu0 %v4104
  %4624 = vmatpush.msra.mxu0 %v4103
  %4625 = vmatpush.msra.mxu0 %v4102
  %4626 = vmatpush.msra.mxu0 %v4101
  %4627 = vmatpush.msra.mxu0 %v4100
  %4628 = vmatpush.msra.mxu0 %v4099
  %4629 = vmatpush.msra.mxu0 %v4098
  %4630 = vmatpush.msra.mxu0 %v4097
  %4631 = vmatpush.msra.mxu0 %v4096
  %4632 = vmatpush.msra.mxu0 %v4095
  %4633 = vmatpush.msra.mxu0 %v4094
  %4634 = vmatpush.msra.mxu0 %v4093
  %4635 = vmatpush.msra.mxu0 %v4092
  %4636 = vmatpush.msra.mxu0 %v4091
  %4637 = vmatmul.f32.gmra.mxu0 %v3611
  %v4638 = vpop.f32.mrf.mxu0
  %v4639 = vadd.f32 %v4430, %v4638
  %4640 = vmatmul.f32.gmra.mxu0 %v3612
  %v4641 = vpop.f32.mrf.mxu0
  %v4642 = vadd.f32 %v4433, %v4641
  %4643 = vmatmul.f32.gmra.mxu0 %v3613
  %v4644 = vpop.f32.mrf.mxu0
  %v4645 = vadd.f32 %v4436, %v4644
  %4646 = vmatmul.f32.gmra.mxu0 %v3614
  %v4647 = vpop.f32.mrf.mxu0
  %v4648 = vadd.f32 %v4439, %v4647
  %4649 = vmatmul.f32.gmra.mxu0 %v3615
  %v4650 = vpop.f32.mrf.mxu0
  %v4651 = vadd.f32 %v4442, %v4650
  %4652 = vmatmul.f32.gmra.mxu0 %v3616
  %v4653 = vpop.f32.mrf.mxu0
  %v4654 = vadd.f32 %v4445, %v4653
  %4655 = vmatmul.f32.gmra.mxu0 %v3617
  %v4656 = vpop.f32.mrf.mxu0
  %v4657 = vadd.f32 %v4448, %v4656
  %4658 = vmatmul.f32.gmra.mxu0 %v3618
  %v4659 = vpop.f32.mrf.mxu0
  %v4660 = vadd.f32 %v4451, %v4659
  %4661 = vmatmul.f32.gmra.mxu0 %v3619
  %v4662 = vpop.f32.mrf.mxu0
  %v4663 = vadd.f32 %v4454, %v4662
  %4664 = vmatmul.f32.gmra.mxu0 %v3620
  %v4665 = vpop.f32.mrf.mxu0
  %v4666 = vadd.f32 %v4457, %v4665
  %4667 = vmatmul.f32.gmra.mxu0 %v3621
  %v4668 = vpop.f32.mrf.mxu0
  %v4669 = vadd.f32 %v4460, %v4668
  %4670 = vmatmul.f32.gmra.mxu0 %v3622
  %v4671 = vpop.f32.mrf.mxu0
  %v4672 = vadd.f32 %v4463, %v4671
  %4673 = vmatmul.f32.gmra.mxu0 %v3623
  %v4674 = vpop.f32.mrf.mxu0
  %v4675 = vadd.f32 %v4466, %v4674
  %4676 = vmatmul.f32.gmra.mxu0 %v3624
  %v4677 = vpop.f32.mrf.mxu0
  %v4678 = vadd.f32 %v4469, %v4677
  %4679 = vmatmul.f32.gmra.mxu0 %v3625
  %v4680 = vpop.f32.mrf.mxu0
  %v4681 = vadd.f32 %v4472, %v4680
  %4682 = vmatmul.f32.gmra.mxu0 %v3626
  %v4683 = vpop.f32.mrf.mxu0
  %v4684 = vadd.f32 %v4475, %v4683
  %4685 = vmatmul.f32.gmra.mxu0 %v3627
  %v4686 = vpop.f32.mrf.mxu0
  %v4687 = vadd.f32 %v4478, %v4686
  %4688 = vmatmul.f32.gmra.mxu0 %v3628
  %v4689 = vpop.f32.mrf.mxu0
  %v4690 = vadd.f32 %v4481, %v4689
  %4691 = vmatmul.f32.gmra.mxu0 %v3629
  %v4692 = vpop.f32.mrf.mxu0
  %v4693 = vadd.f32 %v4484, %v4692
  %4694 = vmatmul.f32.gmra.mxu0 %v3630
  %v4695 = vpop.f32.mrf.mxu0
  %v4696 = vadd.f32 %v4487, %v4695
  %4697 = vmatmul.f32.gmra.mxu0 %v3631
  %v4698 = vpop.f32.mrf.mxu0
  %v4699 = vadd.f32 %v4490, %v4698
  %4700 = vmatmul.f32.gmra.mxu0 %v3632
  %v4701 = vpop.f32.mrf.mxu0
  %v4702 = vadd.f32 %v4493, %v4701
  %4703 = vmatmul.f32.gmra.mxu0 %v3633
  %v4704 = vpop.f32.mrf.mxu0
  %v4705 = vadd.f32 %v4496, %v4704
  %4706 = vmatmul.f32.gmra.mxu0 %v3634
  %v4707 = vpop.f32.mrf.mxu0
  %v4708 = vadd.f32 %v4499, %v4707
  %4709 = vmatmul.f32.gmra.mxu0 %v3635
  %v4710 = vpop.f32.mrf.mxu0
  %v4711 = vadd.f32 %v4502, %v4710
  %4712 = vmatmul.f32.gmra.mxu0 %v3636
  %v4713 = vpop.f32.mrf.mxu0
  %v4714 = vadd.f32 %v4505, %v4713
  %4715 = vmatmul.f32.gmra.mxu0 %v3637
  %v4716 = vpop.f32.mrf.mxu0
  %v4717 = vadd.f32 %v4508, %v4716
  %4718 = vmatmul.f32.gmra.mxu0 %v3638
  %v4719 = vpop.f32.mrf.mxu0
  %v4720 = vadd.f32 %v4511, %v4719
  %4721 = vmatmul.f32.gmra.mxu0 %v3639
  %v4722 = vpop.f32.mrf.mxu0
  %v4723 = vadd.f32 %v4514, %v4722
  %4724 = vmatmul.f32.gmra.mxu0 %v3640
  %v4725 = vpop.f32.mrf.mxu0
  %v4726 = vadd.f32 %v4517, %v4725
  %4727 = vmatmul.f32.gmra.mxu0 %v3641
  %v4728 = vpop.f32.mrf.mxu0
  %v4729 = vadd.f32 %v4520, %v4728
  %4730 = vmatmul.f32.gmra.mxu0 %v3642
  %v4731 = vpop.f32.mrf.mxu0
  %v4732 = vadd.f32 %v4523, %v4731
  %4733 = vmatmul.f32.gmra.mxu0 %v3643
  %v4734 = vpop.f32.mrf.mxu0
  %v4735 = vadd.f32 %v4526, %v4734
  %4736 = vmatmul.f32.gmra.mxu0 %v3644
  %v4737 = vpop.f32.mrf.mxu0
  %v4738 = vadd.f32 %v4529, %v4737
  %4739 = vmatmul.f32.gmra.mxu0 %v3645
  %v4740 = vpop.f32.mrf.mxu0
  %v4741 = vadd.f32 %v4532, %v4740
  %4742 = vmatmul.f32.gmra.mxu0 %v3646
  %v4743 = vpop.f32.mrf.mxu0
  %v4744 = vadd.f32 %v4535, %v4743
  %4745 = vmatmul.f32.gmra.mxu0 %v3647
  %v4746 = vpop.f32.mrf.mxu0
  %v4747 = vadd.f32 %v4538, %v4746
  %4748 = vmatmul.f32.gmra.mxu0 %v3648
  %v4749 = vpop.f32.mrf.mxu0
  %v4750 = vadd.f32 %v4541, %v4749
  %4751 = vmatmul.f32.gmra.mxu0 %v3649
  %v4752 = vpop.f32.mrf.mxu0
  %v4753 = vadd.f32 %v4544, %v4752
  %4754 = vmatmul.f32.gmra.mxu0 %v3650
  %v4755 = vpop.f32.mrf.mxu0
  %v4756 = vadd.f32 %v4547, %v4755
  %4757 = vmatmul.f32.gmra.mxu0 %v3651
  %v4758 = vpop.f32.mrf.mxu0
  %v4759 = vadd.f32 %v4550, %v4758
  %4760 = vmatmul.f32.gmra.mxu0 %v3652
  %v4761 = vpop.f32.mrf.mxu0
  %v4762 = vadd.f32 %v4553, %v4761
  %4763 = vmatmul.f32.gmra.mxu0 %v3653
  %v4764 = vpop.f32.mrf.mxu0
  %v4765 = vadd.f32 %v4556, %v4764
  %4766 = vmatmul.f32.gmra.mxu0 %v3654
  %v4767 = vpop.f32.mrf.mxu0
  %v4768 = vadd.f32 %v4559, %v4767
  %4769 = vmatmul.f32.gmra.mxu0 %v3655
  %v4770 = vpop.f32.mrf.mxu0
  %v4771 = vadd.f32 %v4562, %v4770
  %4772 = vmatmul.f32.gmra.mxu0 %v3656
  %v4773 = vpop.f32.mrf.mxu0
  %v4774 = vadd.f32 %v4565, %v4773
  %4775 = vmatmul.f32.gmra.mxu0 %v3657
  %v4776 = vpop.f32.mrf.mxu0
  %v4777 = vadd.f32 %v4568, %v4776
  %4778 = vmatmul.f32.gmra.mxu0 %v3658
  %v4779 = vpop.f32.mrf.mxu0
  %v4780 = vadd.f32 %v4571, %v4779
  %4781 = vmatmul.f32.gmra.mxu0 %v3659
  %v4782 = vpop.f32.mrf.mxu0
  %v4783 = vadd.f32 %v4574, %v4782
  %4784 = vmatmul.f32.gmra.mxu0 %v3660
  %v4785 = vpop.f32.mrf.mxu0
  %v4786 = vadd.f32 %v4577, %v4785
  %4787 = vmatmul.f32.gmra.mxu0 %v3661
  %v4788 = vpop.f32.mrf.mxu0
  %v4789 = vadd.f32 %v4580, %v4788
  %4790 = vmatmul.f32.gmra.mxu0 %v3662
  %v4791 = vpop.f32.mrf.mxu0
  %v4792 = vadd.f32 %v4583, %v4791
  %4793 = vmatmul.f32.gmra.mxu0 %v3663
  %v4794 = vpop.f32.mrf.mxu0
  %v4795 = vadd.f32 %v4586, %v4794
  %4796 = vmatmul.f32.gmra.mxu0 %v3664
  %v4797 = vpop.f32.mrf.mxu0
  %v4798 = vadd.f32 %v4589, %v4797
  %4799 = vmatmul.f32.gmra.mxu0 %v3665
  %v4800 = vpop.f32.mrf.mxu0
  %v4801 = vadd.f32 %v4592, %v4800
  %4802 = vmatmul.f32.gmra.mxu0 %v3666
  %v4803 = vpop.f32.mrf.mxu0
  %v4804 = vadd.f32 %v4595, %v4803
  %4805 = vmatmul.f32.gmra.mxu0 %v3667
  %v4806 = vpop.f32.mrf.mxu0
  %v4807 = vadd.f32 %v4598, %v4806
  %4808 = vmatmul.f32.gmra.mxu0 %v3668
  %v4809 = vpop.f32.mrf.mxu0
  %v4810 = vadd.f32 %v4601, %v4809
  %4811 = vmatmul.f32.gmra.mxu0 %v3669
  %v4812 = vpop.f32.mrf.mxu0
  %v4813 = vadd.f32 %v4604, %v4812
  %4814 = vmatmul.f32.gmra.mxu0 %v3670
  %v4815 = vpop.f32.mrf.mxu0
  %v4816 = vadd.f32 %v4607, %v4815
  %4817 = vmatmul.f32.gmra.mxu0 %v3671
  %v4818 = vpop.f32.mrf.mxu0
  %v4819 = vadd.f32 %v4610, %v4818
  %4820 = vmatmul.f32.gmra.mxu0 %v3672
  %v4821 = vpop.f32.mrf.mxu0
  %v4822 = vadd.f32 %v4613, %v4821
  %4823 = vmatmul.f32.gmra.mxu0 %v3673
  %v4824 = vpop.f32.mrf.mxu0
  %v4825 = vadd.f32 %v4616, %v4824
  %4826 = vmatmul.f32.gmra.mxu0 %v3674
  %v4827 = vpop.f32.mrf.mxu0
  %v4828 = vadd.f32 %v4619, %v4827
  %4829 = vdwg.mxu0
  %4830 = vmatpush.msra.mxu0 %v4122
  %4831 = vmatpush.msra.mxu0 %v4121
  %4832 = vmatpush.msra.mxu0 %v4120
  %4833 = vmatpush.msra.mxu0 %v4119
  %4834 = vmatpush.msra.mxu0 %v4118
  %4835 = vmatpush.msra.mxu0 %v4117
  %4836 = vmatpush.msra.mxu0 %v4116
  %4837 = vmatpush.msra.mxu0 %v4115
  %4838 = vmatpush.msra.mxu0 %v4114
  %4839 = vmatpush.msra.mxu0 %v4113
  %4840 = vmatpush.msra.mxu0 %v4112
  %4841 = vmatpush.msra.mxu0 %v4111
  %4842 = vmatpush.msra.mxu0 %v4110
  %4843 = vmatpush.msra.mxu0 %v4109
  %4844 = vmatpush.msra.mxu0 %v4108
  %4845 = vmatpush.msra.mxu0 %v4107
  %4846 = vmatmul.f32.gmra.mxu0 %v3675
  %v4847 = vpop.f32.mrf.mxu0
  %v4848 = vadd.f32 %v4639, %v4847
  %4849 = vmatmul.f32.gmra.mxu0 %v3676
  %v4850 = vpop.f32.mrf.mxu0
  %v4851 = vadd.f32 %v4642, %v4850
  %4852 = vmatmul.f32.gmra.mxu0 %v3677
  %v4853 = vpop.f32.mrf.mxu0
  %v4854 = vadd.f32 %v4645, %v4853
  %4855 = vmatmul.f32.gmra.mxu0 %v3678
  %v4856 = vpop.f32.mrf.mxu0
  %v4857 = vadd.f32 %v4648, %v4856
  %4858 = vmatmul.f32.gmra.mxu0 %v3679
  %v4859 = vpop.f32.mrf.mxu0
  %v4860 = vadd.f32 %v4651, %v4859
  %4861 = vmatmul.f32.gmra.mxu0 %v3680
  %v4862 = vpop.f32.mrf.mxu0
  %v4863 = vadd.f32 %v4654, %v4862
  %4864 = vmatmul.f32.gmra.mxu0 %v3681
  %v4865 = vpop.f32.mrf.mxu0
  %v4866 = vadd.f32 %v4657, %v4865
  %4867 = vmatmul.f32.gmra.mxu0 %v3682
  %v4868 = vpop.f32.mrf.mxu0
  %v4869 = vadd.f32 %v4660, %v4868
  %4870 = vmatmul.f32.gmra.mxu0 %v3683
  %v4871 = vpop.f32.mrf.mxu0
  %v4872 = vadd.f32 %v4663, %v4871
  %4873 = vmatmul.f32.gmra.mxu0 %v3684
  %v4874 = vpop.f32.mrf.mxu0
  %v4875 = vadd.f32 %v4666, %v4874
  %4876 = vmatmul.f32.gmra.mxu0 %v3685
  %v4877 = vpop.f32.mrf.mxu0
  %v4878 = vadd.f32 %v4669, %v4877
  %4879 = vmatmul.f32.gmra.mxu0 %v3686
  %v4880 = vpop.f32.mrf.mxu0
  %v4881 = vadd.f32 %v4672, %v4880
  %4882 = vmatmul.f32.gmra.mxu0 %v3687
  %v4883 = vpop.f32.mrf.mxu0
  %v4884 = vadd.f32 %v4675, %v4883
  %4885 = vmatmul.f32.gmra.mxu0 %v3688
  %v4886 = vpop.f32.mrf.mxu0
  %v4887 = vadd.f32 %v4678, %v4886
  %4888 = vmatmul.f32.gmra.mxu0 %v3689
  %v4889 = vpop.f32.mrf.mxu0
  %v4890 = vadd.f32 %v4681, %v4889
  %4891 = vmatmul.f32.gmra.mxu0 %v3690
  %v4892 = vpop.f32.mrf.mxu0
  %v4893 = vadd.f32 %v4684, %v4892
  %4894 = vmatmul.f32.gmra.mxu0 %v3691
  %v4895 = vpop.f32.mrf.mxu0
  %v4896 = vadd.f32 %v4687, %v4895
  %4897 = vmatmul.f32.gmra.mxu0 %v3692
  %v4898 = vpop.f32.mrf.mxu0
  %v4899 = vadd.f32 %v4690, %v4898
  %4900 = vmatmul.f32.gmra.mxu0 %v3693
  %v4901 = vpop.f32.mrf.mxu0
  %v4902 = vadd.f32 %v4693, %v4901
  %4903 = vmatmul.f32.gmra.mxu0 %v3694
  %v4904 = vpop.f32.mrf.mxu0
  %v4905 = vadd.f32 %v4696, %v4904
  %4906 = vmatmul.f32.gmra.mxu0 %v3695
  %v4907 = vpop.f32.mrf.mxu0
  %v4908 = vadd.f32 %v4699, %v4907
  %4909 = vmatmul.f32.gmra.mxu0 %v3696
  %v4910 = vpop.f32.mrf.mxu0
  %v4911 = vadd.f32 %v4702, %v4910
  %4912 = vmatmul.f32.gmra.mxu0 %v3697
  %v4913 = vpop.f32.mrf.mxu0
  %v4914 = vadd.f32 %v4705, %v4913
  %4915 = vmatmul.f32.gmra.mxu0 %v3698
  %v4916 = vpop.f32.mrf.mxu0
  %v4917 = vadd.f32 %v4708, %v4916
  %4918 = vmatmul.f32.gmra.mxu0 %v3699
  %v4919 = vpop.f32.mrf.mxu0
  %v4920 = vadd.f32 %v4711, %v4919
  %4921 = vmatmul.f32.gmra.mxu0 %v3700
  %v4922 = vpop.f32.mrf.mxu0
  %v4923 = vadd.f32 %v4714, %v4922
  %4924 = vmatmul.f32.gmra.mxu0 %v3701
  %v4925 = vpop.f32.mrf.mxu0
  %v4926 = vadd.f32 %v4717, %v4925
  %4927 = vmatmul.f32.gmra.mxu0 %v3702
  %v4928 = vpop.f32.mrf.mxu0
  %v4929 = vadd.f32 %v4720, %v4928
  %4930 = vmatmul.f32.gmra.mxu0 %v3703
  %v4931 = vpop.f32.mrf.mxu0
  %v4932 = vadd.f32 %v4723, %v4931
  %4933 = vmatmul.f32.gmra.mxu0 %v3704
  %v4934 = vpop.f32.mrf.mxu0
  %v4935 = vadd.f32 %v4726, %v4934
  %4936 = vmatmul.f32.gmra.mxu0 %v3705
  %v4937 = vpop.f32.mrf.mxu0
  %v4938 = vadd.f32 %v4729, %v4937
  %4939 = vmatmul.f32.gmra.mxu0 %v3706
  %v4940 = vpop.f32.mrf.mxu0
  %v4941 = vadd.f32 %v4732, %v4940
  %4942 = vmatmul.f32.gmra.mxu0 %v3707
  %v4943 = vpop.f32.mrf.mxu0
  %v4944 = vadd.f32 %v4735, %v4943
  %4945 = vmatmul.f32.gmra.mxu0 %v3708
  %v4946 = vpop.f32.mrf.mxu0
  %v4947 = vadd.f32 %v4738, %v4946
  %4948 = vmatmul.f32.gmra.mxu0 %v3709
  %v4949 = vpop.f32.mrf.mxu0
  %v4950 = vadd.f32 %v4741, %v4949
  %4951 = vmatmul.f32.gmra.mxu0 %v3710
  %v4952 = vpop.f32.mrf.mxu0
  %v4953 = vadd.f32 %v4744, %v4952
  %4954 = vmatmul.f32.gmra.mxu0 %v3711
  %v4955 = vpop.f32.mrf.mxu0
  %v4956 = vadd.f32 %v4747, %v4955
  %4957 = vmatmul.f32.gmra.mxu0 %v3712
  %v4958 = vpop.f32.mrf.mxu0
  %v4959 = vadd.f32 %v4750, %v4958
  %4960 = vmatmul.f32.gmra.mxu0 %v3713
  %v4961 = vpop.f32.mrf.mxu0
  %v4962 = vadd.f32 %v4753, %v4961
  %4963 = vmatmul.f32.gmra.mxu0 %v3714
  %v4964 = vpop.f32.mrf.mxu0
  %v4965 = vadd.f32 %v4756, %v4964
  %4966 = vmatmul.f32.gmra.mxu0 %v3715
  %v4967 = vpop.f32.mrf.mxu0
  %v4968 = vadd.f32 %v4759, %v4967
  %4969 = vmatmul.f32.gmra.mxu0 %v3716
  %v4970 = vpop.f32.mrf.mxu0
  %v4971 = vadd.f32 %v4762, %v4970
  %4972 = vmatmul.f32.gmra.mxu0 %v3717
  %v4973 = vpop.f32.mrf.mxu0
  %v4974 = vadd.f32 %v4765, %v4973
  %4975 = vmatmul.f32.gmra.mxu0 %v3718
  %v4976 = vpop.f32.mrf.mxu0
  %v4977 = vadd.f32 %v4768, %v4976
  %4978 = vmatmul.f32.gmra.mxu0 %v3719
  %v4979 = vpop.f32.mrf.mxu0
  %v4980 = vadd.f32 %v4771, %v4979
  %4981 = vmatmul.f32.gmra.mxu0 %v3720
  %v4982 = vpop.f32.mrf.mxu0
  %v4983 = vadd.f32 %v4774, %v4982
  %4984 = vmatmul.f32.gmra.mxu0 %v3721
  %v4985 = vpop.f32.mrf.mxu0
  %v4986 = vadd.f32 %v4777, %v4985
  %4987 = vmatmul.f32.gmra.mxu0 %v3722
  %v4988 = vpop.f32.mrf.mxu0
  %v4989 = vadd.f32 %v4780, %v4988
  %4990 = vmatmul.f32.gmra.mxu0 %v3723
  %v4991 = vpop.f32.mrf.mxu0
  %v4992 = vadd.f32 %v4783, %v4991
  %4993 = vmatmul.f32.gmra.mxu0 %v3724
  %v4994 = vpop.f32.mrf.mxu0
  %v4995 = vadd.f32 %v4786, %v4994
  %4996 = vmatmul.f32.gmra.mxu0 %v3725
  %v4997 = vpop.f32.mrf.mxu0
  %v4998 = vadd.f32 %v4789, %v4997
  %4999 = vmatmul.f32.gmra.mxu0 %v3726
  %v5000 = vpop.f32.mrf.mxu0
  %v5001 = vadd.f32 %v4792, %v5000
  %5002 = vmatmul.f32.gmra.mxu0 %v3727
  %v5003 = vpop.f32.mrf.mxu0
  %v5004 = vadd.f32 %v4795, %v5003
  %5005 = vmatmul.f32.gmra.mxu0 %v3728
  %v5006 = vpop.f32.mrf.mxu0
  %v5007 = vadd.f32 %v4798, %v5006
  %5008 = vmatmul.f32.gmra.mxu0 %v3729
  %v5009 = vpop.f32.mrf.mxu0
  %v5010 = vadd.f32 %v4801, %v5009
  %5011 = vmatmul.f32.gmra.mxu0 %v3730
  %v5012 = vpop.f32.mrf.mxu0
  %v5013 = vadd.f32 %v4804, %v5012
  %5014 = vmatmul.f32.gmra.mxu0 %v3731
  %v5015 = vpop.f32.mrf.mxu0
  %v5016 = vadd.f32 %v4807, %v5015
  %5017 = vmatmul.f32.gmra.mxu0 %v3732
  %v5018 = vpop.f32.mrf.mxu0
  %v5019 = vadd.f32 %v4810, %v5018
  %5020 = vmatmul.f32.gmra.mxu0 %v3733
  %v5021 = vpop.f32.mrf.mxu0
  %v5022 = vadd.f32 %v4813, %v5021
  %5023 = vmatmul.f32.gmra.mxu0 %v3734
  %v5024 = vpop.f32.mrf.mxu0
  %v5025 = vadd.f32 %v4816, %v5024
  %5026 = vmatmul.f32.gmra.mxu0 %v3735
  %v5027 = vpop.f32.mrf.mxu0
  %v5028 = vadd.f32 %v4819, %v5027
  %5029 = vmatmul.f32.gmra.mxu0 %v3736
  %v5030 = vpop.f32.mrf.mxu0
  %v5031 = vadd.f32 %v4822, %v5030
  %5032 = vmatmul.f32.gmra.mxu0 %v3737
  %v5033 = vpop.f32.mrf.mxu0
  %v5034 = vadd.f32 %v4825, %v5033
  %5035 = vmatmul.f32.gmra.mxu0 %v3738
  %v5036 = vpop.f32.mrf.mxu0
  %v5037 = vadd.f32 %v4828, %v5036
  %5038 = vdwg.mxu0
  %5039 = vmatpush.msra.mxu0 %v4138
  %5040 = vmatpush.msra.mxu0 %v4137
  %5041 = vmatpush.msra.mxu0 %v4136
  %5042 = vmatpush.msra.mxu0 %v4135
  %5043 = vmatpush.msra.mxu0 %v4134
  %5044 = vmatpush.msra.mxu0 %v4133
  %5045 = vmatpush.msra.mxu0 %v4132
  %5046 = vmatpush.msra.mxu0 %v4131
  %5047 = vmatpush.msra.mxu0 %v4130
  %5048 = vmatpush.msra.mxu0 %v4129
  %5049 = vmatpush.msra.mxu0 %v4128
  %5050 = vmatpush.msra.mxu0 %v4127
  %5051 = vmatpush.msra.mxu0 %v4126
  %5052 = vmatpush.msra.mxu0 %v4125
  %5053 = vmatpush.msra.mxu0 %v4124
  %5054 = vmatpush.msra.mxu0 %v4123
  %5055 = vmatmul.f32.gmra.mxu0 %v3739
  %v5056 = vpop.f32.mrf.mxu0
  %v5057 = vadd.f32 %v4848, %v5056
  %5058 = vmatmul.f32.gmra.mxu0 %v3740
  %v5059 = vpop.f32.mrf.mxu0
  %v5060 = vadd.f32 %v4851, %v5059
  %5061 = vmatmul.f32.gmra.mxu0 %v3741
  %v5062 = vpop.f32.mrf.mxu0
  %v5063 = vadd.f32 %v4854, %v5062
  %5064 = vmatmul.f32.gmra.mxu0 %v3742
  %v5065 = vpop.f32.mrf.mxu0
  %v5066 = vadd.f32 %v4857, %v5065
  %5067 = vmatmul.f32.gmra.mxu0 %v3743
  %v5068 = vpop.f32.mrf.mxu0
  %v5069 = vadd.f32 %v4860, %v5068
  %5070 = vmatmul.f32.gmra.mxu0 %v3744
  %v5071 = vpop.f32.mrf.mxu0
  %v5072 = vadd.f32 %v4863, %v5071
  %5073 = vmatmul.f32.gmra.mxu0 %v3745
  %v5074 = vpop.f32.mrf.mxu0
  %v5075 = vadd.f32 %v4866, %v5074
  %5076 = vmatmul.f32.gmra.mxu0 %v3746
  %v5077 = vpop.f32.mrf.mxu0
  %v5078 = vadd.f32 %v4869, %v5077
  %5079 = vmatmul.f32.gmra.mxu0 %v3747
  %v5080 = vpop.f32.mrf.mxu0
  %v5081 = vadd.f32 %v4872, %v5080
  %5082 = vmatmul.f32.gmra.mxu0 %v3748
  %v5083 = vpop.f32.mrf.mxu0
  %v5084 = vadd.f32 %v4875, %v5083
  %5085 = vmatmul.f32.gmra.mxu0 %v3749
  %v5086 = vpop.f32.mrf.mxu0
  %v5087 = vadd.f32 %v4878, %v5086
  %5088 = vmatmul.f32.gmra.mxu0 %v3750
  %v5089 = vpop.f32.mrf.mxu0
  %v5090 = vadd.f32 %v4881, %v5089
  %5091 = vmatmul.f32.gmra.mxu0 %v3751
  %v5092 = vpop.f32.mrf.mxu0
  %v5093 = vadd.f32 %v4884, %v5092
  %5094 = vmatmul.f32.gmra.mxu0 %v3752
  %v5095 = vpop.f32.mrf.mxu0
  %v5096 = vadd.f32 %v4887, %v5095
  %5097 = vmatmul.f32.gmra.mxu0 %v3753
  %v5098 = vpop.f32.mrf.mxu0
  %v5099 = vadd.f32 %v4890, %v5098
  %5100 = vmatmul.f32.gmra.mxu0 %v3754
  %v5101 = vpop.f32.mrf.mxu0
  %v5102 = vadd.f32 %v4893, %v5101
  %5103 = vmatmul.f32.gmra.mxu0 %v3755
  %v5104 = vpop.f32.mrf.mxu0
  %v5105 = vadd.f32 %v4896, %v5104
  %5106 = vmatmul.f32.gmra.mxu0 %v3756
  %v5107 = vpop.f32.mrf.mxu0
  %v5108 = vadd.f32 %v4899, %v5107
  %5109 = vmatmul.f32.gmra.mxu0 %v3757
  %v5110 = vpop.f32.mrf.mxu0
  %v5111 = vadd.f32 %v4902, %v5110
  %5112 = vmatmul.f32.gmra.mxu0 %v3758
  %v5113 = vpop.f32.mrf.mxu0
  %v5114 = vadd.f32 %v4905, %v5113
  %5115 = vmatmul.f32.gmra.mxu0 %v3759
  %v5116 = vpop.f32.mrf.mxu0
  %v5117 = vadd.f32 %v4908, %v5116
  %5118 = vmatmul.f32.gmra.mxu0 %v3760
  %v5119 = vpop.f32.mrf.mxu0
  %v5120 = vadd.f32 %v4911, %v5119
  %5121 = vmatmul.f32.gmra.mxu0 %v3761
  %v5122 = vpop.f32.mrf.mxu0
  %v5123 = vadd.f32 %v4914, %v5122
  %5124 = vmatmul.f32.gmra.mxu0 %v3762
  %v5125 = vpop.f32.mrf.mxu0
  %v5126 = vadd.f32 %v4917, %v5125
  %5127 = vmatmul.f32.gmra.mxu0 %v3763
  %v5128 = vpop.f32.mrf.mxu0
  %v5129 = vadd.f32 %v4920, %v5128
  %5130 = vmatmul.f32.gmra.mxu0 %v3764
  %v5131 = vpop.f32.mrf.mxu0
  %v5132 = vadd.f32 %v4923, %v5131
  %5133 = vmatmul.f32.gmra.mxu0 %v3765
  %v5134 = vpop.f32.mrf.mxu0
  %v5135 = vadd.f32 %v4926, %v5134
  %5136 = vmatmul.f32.gmra.mxu0 %v3766
  %v5137 = vpop.f32.mrf.mxu0
  %v5138 = vadd.f32 %v4929, %v5137
  %5139 = vmatmul.f32.gmra.mxu0 %v3767
  %v5140 = vpop.f32.mrf.mxu0
  %v5141 = vadd.f32 %v4932, %v5140
  %5142 = vmatmul.f32.gmra.mxu0 %v3768
  %v5143 = vpop.f32.mrf.mxu0
  %v5144 = vadd.f32 %v4935, %v5143
  %5145 = vmatmul.f32.gmra.mxu0 %v3769
  %v5146 = vpop.f32.mrf.mxu0
  %v5147 = vadd.f32 %v4938, %v5146
  %5148 = vmatmul.f32.gmra.mxu0 %v3770
  %v5149 = vpop.f32.mrf.mxu0
  %v5150 = vadd.f32 %v4941, %v5149
  %5151 = vmatmul.f32.gmra.mxu0 %v3771
  %v5152 = vpop.f32.mrf.mxu0
  %v5153 = vadd.f32 %v4944, %v5152
  %5154 = vmatmul.f32.gmra.mxu0 %v3772
  %v5155 = vpop.f32.mrf.mxu0
  %v5156 = vadd.f32 %v4947, %v5155
  %5157 = vmatmul.f32.gmra.mxu0 %v3773
  %v5158 = vpop.f32.mrf.mxu0
  %v5159 = vadd.f32 %v4950, %v5158
  %5160 = vmatmul.f32.gmra.mxu0 %v3774
  %v5161 = vpop.f32.mrf.mxu0
  %v5162 = vadd.f32 %v4953, %v5161
  %5163 = vmatmul.f32.gmra.mxu0 %v3775
  %v5164 = vpop.f32.mrf.mxu0
  %v5165 = vadd.f32 %v4956, %v5164
  %5166 = vmatmul.f32.gmra.mxu0 %v3776
  %v5167 = vpop.f32.mrf.mxu0
  %v5168 = vadd.f32 %v4959, %v5167
  %5169 = vmatmul.f32.gmra.mxu0 %v3777
  %v5170 = vpop.f32.mrf.mxu0
  %v5171 = vadd.f32 %v4962, %v5170
  %5172 = vmatmul.f32.gmra.mxu0 %v3778
  %v5173 = vpop.f32.mrf.mxu0
  %v5174 = vadd.f32 %v4965, %v5173
  %5175 = vmatmul.f32.gmra.mxu0 %v3779
  %v5176 = vpop.f32.mrf.mxu0
  %v5177 = vadd.f32 %v4968, %v5176
  %5178 = vmatmul.f32.gmra.mxu0 %v3780
  %v5179 = vpop.f32.mrf.mxu0
  %v5180 = vadd.f32 %v4971, %v5179
  %5181 = vmatmul.f32.gmra.mxu0 %v3781
  %v5182 = vpop.f32.mrf.mxu0
  %v5183 = vadd.f32 %v4974, %v5182
  %5184 = vmatmul.f32.gmra.mxu0 %v3782
  %v5185 = vpop.f32.mrf.mxu0
  %v5186 = vadd.f32 %v4977, %v5185
  %5187 = vmatmul.f32.gmra.mxu0 %v3783
  %v5188 = vpop.f32.mrf.mxu0
  %v5189 = vadd.f32 %v4980, %v5188
  %5190 = vmatmul.f32.gmra.mxu0 %v3784
  %v5191 = vpop.f32.mrf.mxu0
  %v5192 = vadd.f32 %v4983, %v5191
  %5193 = vmatmul.f32.gmra.mxu0 %v3785
  %v5194 = vpop.f32.mrf.mxu0
  %v5195 = vadd.f32 %v4986, %v5194
  %5196 = vmatmul.f32.gmra.mxu0 %v3786
  %v5197 = vpop.f32.mrf.mxu0
  %v5198 = vadd.f32 %v4989, %v5197
  %5199 = vmatmul.f32.gmra.mxu0 %v3787
  %v5200 = vpop.f32.mrf.mxu0
  %v5201 = vadd.f32 %v4992, %v5200
  %5202 = vmatmul.f32.gmra.mxu0 %v3788
  %v5203 = vpop.f32.mrf.mxu0
  %v5204 = vadd.f32 %v4995, %v5203
  %5205 = vmatmul.f32.gmra.mxu0 %v3789
  %v5206 = vpop.f32.mrf.mxu0
  %v5207 = vadd.f32 %v4998, %v5206
  %5208 = vmatmul.f32.gmra.mxu0 %v3790
  %v5209 = vpop.f32.mrf.mxu0
  %v5210 = vadd.f32 %v5001, %v5209
  %5211 = vmatmul.f32.gmra.mxu0 %v3791
  %v5212 = vpop.f32.mrf.mxu0
  %v5213 = vadd.f32 %v5004, %v5212
  %5214 = vmatmul.f32.gmra.mxu0 %v3792
  %v5215 = vpop.f32.mrf.mxu0
  %v5216 = vadd.f32 %v5007, %v5215
  %5217 = vmatmul.f32.gmra.mxu0 %v3793
  %v5218 = vpop.f32.mrf.mxu0
  %v5219 = vadd.f32 %v5010, %v5218
  %5220 = vmatmul.f32.gmra.mxu0 %v3794
  %v5221 = vpop.f32.mrf.mxu0
  %v5222 = vadd.f32 %v5013, %v5221
  %5223 = vmatmul.f32.gmra.mxu0 %v3795
  %v5224 = vpop.f32.mrf.mxu0
  %v5225 = vadd.f32 %v5016, %v5224
  %5226 = vmatmul.f32.gmra.mxu0 %v3796
  %v5227 = vpop.f32.mrf.mxu0
  %v5228 = vadd.f32 %v5019, %v5227
  %5229 = vmatmul.f32.gmra.mxu0 %v3797
  %v5230 = vpop.f32.mrf.mxu0
  %v5231 = vadd.f32 %v5022, %v5230
  %5232 = vmatmul.f32.gmra.mxu0 %v3798
  %v5233 = vpop.f32.mrf.mxu0
  %v5234 = vadd.f32 %v5025, %v5233
  %5235 = vmatmul.f32.gmra.mxu0 %v3799
  %v5236 = vpop.f32.mrf.mxu0
  %v5237 = vadd.f32 %v5028, %v5236
  %5238 = vmatmul.f32.gmra.mxu0 %v3800
  %v5239 = vpop.f32.mrf.mxu0
  %v5240 = vadd.f32 %v5031, %v5239
  %5241 = vmatmul.f32.gmra.mxu0 %v3801
  %v5242 = vpop.f32.mrf.mxu0
  %v5243 = vadd.f32 %v5034, %v5242
  %5244 = vmatmul.f32.gmra.mxu0 %v3802
  %v5245 = vpop.f32.mrf.mxu0
  %v5246 = vadd.f32 %v5037, %v5245
  %5247 = vdwg.mxu0
  %5248 = vmatpush.msra.mxu0 %v4154
  %5249 = vmatpush.msra.mxu0 %v4153
  %5250 = vmatpush.msra.mxu0 %v4152
  %5251 = vmatpush.msra.mxu0 %v4151
  %5252 = vmatpush.msra.mxu0 %v4150
  %5253 = vmatpush.msra.mxu0 %v4149
  %5254 = vmatpush.msra.mxu0 %v4148
  %5255 = vmatpush.msra.mxu0 %v4147
  %5256 = vmatpush.msra.mxu0 %v4146
  %5257 = vmatpush.msra.mxu0 %v4145
  %5258 = vmatpush.msra.mxu0 %v4144
  %5259 = vmatpush.msra.mxu0 %v4143
  %5260 = vmatpush.msra.mxu0 %v4142
  %5261 = vmatpush.msra.mxu0 %v4141
  %5262 = vmatpush.msra.mxu0 %v4140
  %5263 = vmatpush.msra.mxu0 %v4139
  %5264 = vmatmul.f32.gmra.mxu0 %v3803
  %v5265 = vpop.f32.mrf.mxu0
  %v5266 = vadd.f32 %v5057, %v5265
  %5267 = vmatmul.f32.gmra.mxu0 %v3804
  %v5268 = vpop.f32.mrf.mxu0
  %v5269 = vadd.f32 %v5060, %v5268
  %5270 = vmatmul.f32.gmra.mxu0 %v3805
  %v5271 = vpop.f32.mrf.mxu0
  %v5272 = vadd.f32 %v5063, %v5271
  %5273 = vmatmul.f32.gmra.mxu0 %v3806
  %v5274 = vpop.f32.mrf.mxu0
  %v5275 = vadd.f32 %v5066, %v5274
  %5276 = vmatmul.f32.gmra.mxu0 %v3807
  %v5277 = vpop.f32.mrf.mxu0
  %v5278 = vadd.f32 %v5069, %v5277
  %5279 = vmatmul.f32.gmra.mxu0 %v3808
  %v5280 = vpop.f32.mrf.mxu0
  %v5281 = vadd.f32 %v5072, %v5280
  %5282 = vmatmul.f32.gmra.mxu0 %v3809
  %v5283 = vpop.f32.mrf.mxu0
  %v5284 = vadd.f32 %v5075, %v5283
  %5285 = vmatmul.f32.gmra.mxu0 %v3810
  %v5286 = vpop.f32.mrf.mxu0
  %v5287 = vadd.f32 %v5078, %v5286
  %5288 = vmatmul.f32.gmra.mxu0 %v3811
  %v5289 = vpop.f32.mrf.mxu0
  %v5290 = vadd.f32 %v5081, %v5289
  %5291 = vmatmul.f32.gmra.mxu0 %v3812
  %v5292 = vpop.f32.mrf.mxu0
  %v5293 = vadd.f32 %v5084, %v5292
  %5294 = vmatmul.f32.gmra.mxu0 %v3813
  %v5295 = vpop.f32.mrf.mxu0
  %v5296 = vadd.f32 %v5087, %v5295
  %5297 = vmatmul.f32.gmra.mxu0 %v3814
  %v5298 = vpop.f32.mrf.mxu0
  %v5299 = vadd.f32 %v5090, %v5298
  %5300 = vmatmul.f32.gmra.mxu0 %v3815
  %v5301 = vpop.f32.mrf.mxu0
  %v5302 = vadd.f32 %v5093, %v5301
  %5303 = vmatmul.f32.gmra.mxu0 %v3816
  %v5304 = vpop.f32.mrf.mxu0
  %v5305 = vadd.f32 %v5096, %v5304
  %5306 = vmatmul.f32.gmra.mxu0 %v3817
  %v5307 = vpop.f32.mrf.mxu0
  %v5308 = vadd.f32 %v5099, %v5307
  %5309 = vmatmul.f32.gmra.mxu0 %v3818
  %v5310 = vpop.f32.mrf.mxu0
  %v5311 = vadd.f32 %v5102, %v5310
  %5312 = vmatmul.f32.gmra.mxu0 %v3819
  %v5313 = vpop.f32.mrf.mxu0
  %v5314 = vadd.f32 %v5105, %v5313
  %5315 = vmatmul.f32.gmra.mxu0 %v3820
  %v5316 = vpop.f32.mrf.mxu0
  %v5317 = vadd.f32 %v5108, %v5316
  %5318 = vmatmul.f32.gmra.mxu0 %v3821
  %v5319 = vpop.f32.mrf.mxu0
  %v5320 = vadd.f32 %v5111, %v5319
  %5321 = vmatmul.f32.gmra.mxu0 %v3822
  %v5322 = vpop.f32.mrf.mxu0
  %v5323 = vadd.f32 %v5114, %v5322
  %5324 = vmatmul.f32.gmra.mxu0 %v3823
  %v5325 = vpop.f32.mrf.mxu0
  %v5326 = vadd.f32 %v5117, %v5325
  %5327 = vmatmul.f32.gmra.mxu0 %v3824
  %v5328 = vpop.f32.mrf.mxu0
  %v5329 = vadd.f32 %v5120, %v5328
  %5330 = vmatmul.f32.gmra.mxu0 %v3825
  %v5331 = vpop.f32.mrf.mxu0
  %v5332 = vadd.f32 %v5123, %v5331
  %5333 = vmatmul.f32.gmra.mxu0 %v3826
  %v5334 = vpop.f32.mrf.mxu0
  %v5335 = vadd.f32 %v5126, %v5334
  %5336 = vmatmul.f32.gmra.mxu0 %v3827
  %v5337 = vpop.f32.mrf.mxu0
  %v5338 = vadd.f32 %v5129, %v5337
  %5339 = vmatmul.f32.gmra.mxu0 %v3828
  %v5340 = vpop.f32.mrf.mxu0
  %v5341 = vadd.f32 %v5132, %v5340
  %5342 = vmatmul.f32.gmra.mxu0 %v3829
  %v5343 = vpop.f32.mrf.mxu0
  %v5344 = vadd.f32 %v5135, %v5343
  %5345 = vmatmul.f32.gmra.mxu0 %v3830
  %v5346 = vpop.f32.mrf.mxu0
  %v5347 = vadd.f32 %v5138, %v5346
  %5348 = vmatmul.f32.gmra.mxu0 %v3831
  %v5349 = vpop.f32.mrf.mxu0
  %v5350 = vadd.f32 %v5141, %v5349
  %5351 = vmatmul.f32.gmra.mxu0 %v3832
  %v5352 = vpop.f32.mrf.mxu0
  %v5353 = vadd.f32 %v5144, %v5352
  %5354 = vmatmul.f32.gmra.mxu0 %v3833
  %v5355 = vpop.f32.mrf.mxu0
  %v5356 = vadd.f32 %v5147, %v5355
  %5357 = vmatmul.f32.gmra.mxu0 %v3834
  %v5358 = vpop.f32.mrf.mxu0
  %v5359 = vadd.f32 %v5150, %v5358
  %5360 = vmatmul.f32.gmra.mxu0 %v3835
  %v5361 = vpop.f32.mrf.mxu0
  %v5362 = vadd.f32 %v5153, %v5361
  %5363 = vmatmul.f32.gmra.mxu0 %v3836
  %v5364 = vpop.f32.mrf.mxu0
  %v5365 = vadd.f32 %v5156, %v5364
  %5366 = vmatmul.f32.gmra.mxu0 %v3837
  %v5367 = vpop.f32.mrf.mxu0
  %v5368 = vadd.f32 %v5159, %v5367
  %5369 = vmatmul.f32.gmra.mxu0 %v3838
  %v5370 = vpop.f32.mrf.mxu0
  %v5371 = vadd.f32 %v5162, %v5370
  %5372 = vmatmul.f32.gmra.mxu0 %v3839
  %v5373 = vpop.f32.mrf.mxu0
  %v5374 = vadd.f32 %v5165, %v5373
  %5375 = vmatmul.f32.gmra.mxu0 %v3840
  %v5376 = vpop.f32.mrf.mxu0
  %v5377 = vadd.f32 %v5168, %v5376
  %5378 = vmatmul.f32.gmra.mxu0 %v3841
  %v5379 = vpop.f32.mrf.mxu0
  %v5380 = vadd.f32 %v5171, %v5379
  %5381 = vmatmul.f32.gmra.mxu0 %v3842
  %v5382 = vpop.f32.mrf.mxu0
  %v5383 = vadd.f32 %v5174, %v5382
  %5384 = vmatmul.f32.gmra.mxu0 %v3843
  %v5385 = vpop.f32.mrf.mxu0
  %v5386 = vadd.f32 %v5177, %v5385
  %5387 = vmatmul.f32.gmra.mxu0 %v3844
  %v5388 = vpop.f32.mrf.mxu0
  %v5389 = vadd.f32 %v5180, %v5388
  %5390 = vmatmul.f32.gmra.mxu0 %v3845
  %v5391 = vpop.f32.mrf.mxu0
  %v5392 = vadd.f32 %v5183, %v5391
  %5393 = vmatmul.f32.gmra.mxu0 %v3846
  %v5394 = vpop.f32.mrf.mxu0
  %v5395 = vadd.f32 %v5186, %v5394
  %5396 = vmatmul.f32.gmra.mxu0 %v3847
  %v5397 = vpop.f32.mrf.mxu0
  %v5398 = vadd.f32 %v5189, %v5397
  %5399 = vmatmul.f32.gmra.mxu0 %v3848
  %v5400 = vpop.f32.mrf.mxu0
  %v5401 = vadd.f32 %v5192, %v5400
  %5402 = vmatmul.f32.gmra.mxu0 %v3849
  %v5403 = vpop.f32.mrf.mxu0
  %v5404 = vadd.f32 %v5195, %v5403
  %5405 = vmatmul.f32.gmra.mxu0 %v3850
  %v5406 = vpop.f32.mrf.mxu0
  %v5407 = vadd.f32 %v5198, %v5406
  %5408 = vmatmul.f32.gmra.mxu0 %v3851
  %v5409 = vpop.f32.mrf.mxu0
  %v5410 = vadd.f32 %v5201, %v5409
  %5411 = vmatmul.f32.gmra.mxu0 %v3852
  %v5412 = vpop.f32.mrf.mxu0
  %v5413 = vadd.f32 %v5204, %v5412
  %5414 = vmatmul.f32.gmra.mxu0 %v3853
  %v5415 = vpop.f32.mrf.mxu0
  %v5416 = vadd.f32 %v5207, %v5415
  %5417 = vmatmul.f32.gmra.mxu0 %v3854
  %v5418 = vpop.f32.mrf.mxu0
  %v5419 = vadd.f32 %v5210, %v5418
  %5420 = vmatmul.f32.gmra.mxu0 %v3855
  %v5421 = vpop.f32.mrf.mxu0
  %v5422 = vadd.f32 %v5213, %v5421
  %5423 = vmatmul.f32.gmra.mxu0 %v3856
  %v5424 = vpop.f32.mrf.mxu0
  %v5425 = vadd.f32 %v5216, %v5424
  %5426 = vmatmul.f32.gmra.mxu0 %v3857
  %v5427 = vpop.f32.mrf.mxu0
  %v5428 = vadd.f32 %v5219, %v5427
  %5429 = vmatmul.f32.gmra.mxu0 %v3858
  %v5430 = vpop.f32.mrf.mxu0
  %v5431 = vadd.f32 %v5222, %v5430
  %5432 = vmatmul.f32.gmra.mxu0 %v3859
  %v5433 = vpop.f32.mrf.mxu0
  %v5434 = vadd.f32 %v5225, %v5433
  %5435 = vmatmul.f32.gmra.mxu0 %v3860
  %v5436 = vpop.f32.mrf.mxu0
  %v5437 = vadd.f32 %v5228, %v5436
  %5438 = vmatmul.f32.gmra.mxu0 %v3861
  %v5439 = vpop.f32.mrf.mxu0
  %v5440 = vadd.f32 %v5231, %v5439
  %5441 = vmatmul.f32.gmra.mxu0 %v3862
  %v5442 = vpop.f32.mrf.mxu0
  %v5443 = vadd.f32 %v5234, %v5442
  %5444 = vmatmul.f32.gmra.mxu0 %v3863
  %v5445 = vpop.f32.mrf.mxu0
  %v5446 = vadd.f32 %v5237, %v5445
  %5447 = vmatmul.f32.gmra.mxu0 %v3864
  %v5448 = vpop.f32.mrf.mxu0
  %v5449 = vadd.f32 %v5240, %v5448
  %5450 = vmatmul.f32.gmra.mxu0 %v3865
  %v5451 = vpop.f32.mrf.mxu0
  %v5452 = vadd.f32 %v5243, %v5451
  %5453 = vmatmul.f32.gmra.mxu0 %v3866
  %v5454 = vpop.f32.mrf.mxu0
  %v5455 = vadd.f32 %v5246, %v5454
  %5456 = vdwg.mxu0
  %5457 = vmatpush.msra.mxu0 %v4170
  %5458 = vmatpush.msra.mxu0 %v4169
  %5459 = vmatpush.msra.mxu0 %v4168
  %5460 = vmatpush.msra.mxu0 %v4167
  %5461 = vmatpush.msra.mxu0 %v4166
  %5462 = vmatpush.msra.mxu0 %v4165
  %5463 = vmatpush.msra.mxu0 %v4164
  %5464 = vmatpush.msra.mxu0 %v4163
  %5465 = vmatpush.msra.mxu0 %v4162
  %5466 = vmatpush.msra.mxu0 %v4161
  %5467 = vmatpush.msra.mxu0 %v4160
  %5468 = vmatpush.msra.mxu0 %v4159
  %5469 = vmatpush.msra.mxu0 %v4158
  %5470 = vmatpush.msra.mxu0 %v4157
  %5471 = vmatpush.msra.mxu0 %v4156
  %5472 = vmatpush.msra.mxu0 %v4155
  %5473 = vmatmul.f32.gmra.mxu0 %v3867
  %v5474 = vpop.f32.mrf.mxu0
  %v5475 = vadd.f32 %v5266, %v5474
  %5476 = vmatmul.f32.gmra.mxu0 %v3868
  %v5477 = vpop.f32.mrf.mxu0
  %v5478 = vadd.f32 %v5269, %v5477
  %5479 = vmatmul.f32.gmra.mxu0 %v3869
  %v5480 = vpop.f32.mrf.mxu0
  %v5481 = vadd.f32 %v5272, %v5480
  %5482 = vmatmul.f32.gmra.mxu0 %v3870
  %v5483 = vpop.f32.mrf.mxu0
  %v5484 = vadd.f32 %v5275, %v5483
  %5485 = vmatmul.f32.gmra.mxu0 %v3871
  %v5486 = vpop.f32.mrf.mxu0
  %v5487 = vadd.f32 %v5278, %v5486
  %5488 = vmatmul.f32.gmra.mxu0 %v3872
  %v5489 = vpop.f32.mrf.mxu0
  %v5490 = vadd.f32 %v5281, %v5489
  %5491 = vmatmul.f32.gmra.mxu0 %v3873
  %v5492 = vpop.f32.mrf.mxu0
  %v5493 = vadd.f32 %v5284, %v5492
  %5494 = vmatmul.f32.gmra.mxu0 %v3874
  %v5495 = vpop.f32.mrf.mxu0
  %v5496 = vadd.f32 %v5287, %v5495
  %5497 = vmatmul.f32.gmra.mxu0 %v3875
  %v5498 = vpop.f32.mrf.mxu0
  %v5499 = vadd.f32 %v5290, %v5498
  %5500 = vmatmul.f32.gmra.mxu0 %v3876
  %v5501 = vpop.f32.mrf.mxu0
  %v5502 = vadd.f32 %v5293, %v5501
  %5503 = vmatmul.f32.gmra.mxu0 %v3877
  %v5504 = vpop.f32.mrf.mxu0
  %v5505 = vadd.f32 %v5296, %v5504
  %5506 = vmatmul.f32.gmra.mxu0 %v3878
  %v5507 = vpop.f32.mrf.mxu0
  %v5508 = vadd.f32 %v5299, %v5507
  %5509 = vmatmul.f32.gmra.mxu0 %v3879
  %v5510 = vpop.f32.mrf.mxu0
  %v5511 = vadd.f32 %v5302, %v5510
  %5512 = vmatmul.f32.gmra.mxu0 %v3880
  %v5513 = vpop.f32.mrf.mxu0
  %v5514 = vadd.f32 %v5305, %v5513
  %5515 = vmatmul.f32.gmra.mxu0 %v3881
  %v5516 = vpop.f32.mrf.mxu0
  %v5517 = vadd.f32 %v5308, %v5516
  %5518 = vmatmul.f32.gmra.mxu0 %v3882
  %v5519 = vpop.f32.mrf.mxu0
  %v5520 = vadd.f32 %v5311, %v5519
  %5521 = vmatmul.f32.gmra.mxu0 %v3883
  %v5522 = vpop.f32.mrf.mxu0
  %v5523 = vadd.f32 %v5314, %v5522
  %5524 = vmatmul.f32.gmra.mxu0 %v3884
  %v5525 = vpop.f32.mrf.mxu0
  %v5526 = vadd.f32 %v5317, %v5525
  %5527 = vmatmul.f32.gmra.mxu0 %v3885
  %v5528 = vpop.f32.mrf.mxu0
  %v5529 = vadd.f32 %v5320, %v5528
  %5530 = vmatmul.f32.gmra.mxu0 %v3886
  %v5531 = vpop.f32.mrf.mxu0
  %v5532 = vadd.f32 %v5323, %v5531
  %5533 = vmatmul.f32.gmra.mxu0 %v3887
  %v5534 = vpop.f32.mrf.mxu0
  %v5535 = vadd.f32 %v5326, %v5534
  %5536 = vmatmul.f32.gmra.mxu0 %v3888
  %v5537 = vpop.f32.mrf.mxu0
  %v5538 = vadd.f32 %v5329, %v5537
  %5539 = vmatmul.f32.gmra.mxu0 %v3889
  %v5540 = vpop.f32.mrf.mxu0
  %v5541 = vadd.f32 %v5332, %v5540
  %5542 = vmatmul.f32.gmra.mxu0 %v3890
  %v5543 = vpop.f32.mrf.mxu0
  %v5544 = vadd.f32 %v5335, %v5543
  %5545 = vmatmul.f32.gmra.mxu0 %v3891
  %v5546 = vpop.f32.mrf.mxu0
  %v5547 = vadd.f32 %v5338, %v5546
  %5548 = vmatmul.f32.gmra.mxu0 %v3892
  %v5549 = vpop.f32.mrf.mxu0
  %v5550 = vadd.f32 %v5341, %v5549
  %5551 = vmatmul.f32.gmra.mxu0 %v3893
  %v5552 = vpop.f32.mrf.mxu0
  %v5553 = vadd.f32 %v5344, %v5552
  %5554 = vmatmul.f32.gmra.mxu0 %v3894
  %v5555 = vpop.f32.mrf.mxu0
  %v5556 = vadd.f32 %v5347, %v5555
  %5557 = vmatmul.f32.gmra.mxu0 %v3895
  %v5558 = vpop.f32.mrf.mxu0
  %v5559 = vadd.f32 %v5350, %v5558
  %5560 = vmatmul.f32.gmra.mxu0 %v3896
  %v5561 = vpop.f32.mrf.mxu0
  %v5562 = vadd.f32 %v5353, %v5561
  %5563 = vmatmul.f32.gmra.mxu0 %v3897
  %v5564 = vpop.f32.mrf.mxu0
  %v5565 = vadd.f32 %v5356, %v5564
  %5566 = vmatmul.f32.gmra.mxu0 %v3898
  %v5567 = vpop.f32.mrf.mxu0
  %v5568 = vadd.f32 %v5359, %v5567
  %5569 = vmatmul.f32.gmra.mxu0 %v3899
  %v5570 = vpop.f32.mrf.mxu0
  %v5571 = vadd.f32 %v5362, %v5570
  %5572 = vmatmul.f32.gmra.mxu0 %v3900
  %v5573 = vpop.f32.mrf.mxu0
  %v5574 = vadd.f32 %v5365, %v5573
  %5575 = vmatmul.f32.gmra.mxu0 %v3901
  %v5576 = vpop.f32.mrf.mxu0
  %v5577 = vadd.f32 %v5368, %v5576
  %5578 = vmatmul.f32.gmra.mxu0 %v3902
  %v5579 = vpop.f32.mrf.mxu0
  %v5580 = vadd.f32 %v5371, %v5579
  %5581 = vmatmul.f32.gmra.mxu0 %v3903
  %v5582 = vpop.f32.mrf.mxu0
  %v5583 = vadd.f32 %v5374, %v5582
  %5584 = vmatmul.f32.gmra.mxu0 %v3904
  %v5585 = vpop.f32.mrf.mxu0
  %v5586 = vadd.f32 %v5377, %v5585
  %5587 = vmatmul.f32.gmra.mxu0 %v3905
  %v5588 = vpop.f32.mrf.mxu0
  %v5589 = vadd.f32 %v5380, %v5588
  %5590 = vmatmul.f32.gmra.mxu0 %v3906
  %v5591 = vpop.f32.mrf.mxu0
  %v5592 = vadd.f32 %v5383, %v5591
  %5593 = vmatmul.f32.gmra.mxu0 %v3907
  %v5594 = vpop.f32.mrf.mxu0
  %v5595 = vadd.f32 %v5386, %v5594
  %5596 = vmatmul.f32.gmra.mxu0 %v3908
  %v5597 = vpop.f32.mrf.mxu0
  %v5598 = vadd.f32 %v5389, %v5597
  %5599 = vmatmul.f32.gmra.mxu0 %v3909
  %v5600 = vpop.f32.mrf.mxu0
  %v5601 = vadd.f32 %v5392, %v5600
  %5602 = vmatmul.f32.gmra.mxu0 %v3910
  %v5603 = vpop.f32.mrf.mxu0
  %v5604 = vadd.f32 %v5395, %v5603
  %5605 = vmatmul.f32.gmra.mxu0 %v3911
  %v5606 = vpop.f32.mrf.mxu0
  %v5607 = vadd.f32 %v5398, %v5606
  %5608 = vmatmul.f32.gmra.mxu0 %v3912
  %v5609 = vpop.f32.mrf.mxu0
  %v5610 = vadd.f32 %v5401, %v5609
  %5611 = vmatmul.f32.gmra.mxu0 %v3913
  %v5612 = vpop.f32.mrf.mxu0
  %v5613 = vadd.f32 %v5404, %v5612
  %5614 = vmatmul.f32.gmra.mxu0 %v3914
  %v5615 = vpop.f32.mrf.mxu0
  %v5616 = vadd.f32 %v5407, %v5615
  %5617 = vmatmul.f32.gmra.mxu0 %v3915
  %v5618 = vpop.f32.mrf.mxu0
  %v5619 = vadd.f32 %v5410, %v5618
  %5620 = vmatmul.f32.gmra.mxu0 %v3916
  %v5621 = vpop.f32.mrf.mxu0
  %v5622 = vadd.f32 %v5413, %v5621
  %5623 = vmatmul.f32.gmra.mxu0 %v3917
  %v5624 = vpop.f32.mrf.mxu0
  %v5625 = vadd.f32 %v5416, %v5624
  %5626 = vmatmul.f32.gmra.mxu0 %v3918
  %v5627 = vpop.f32.mrf.mxu0
  %v5628 = vadd.f32 %v5419, %v5627
  %5629 = vmatmul.f32.gmra.mxu0 %v3919
  %v5630 = vpop.f32.mrf.mxu0
  %v5631 = vadd.f32 %v5422, %v5630
  %5632 = vmatmul.f32.gmra.mxu0 %v3920
  %v5633 = vpop.f32.mrf.mxu0
  %v5634 = vadd.f32 %v5425, %v5633
  %5635 = vmatmul.f32.gmra.mxu0 %v3921
  %v5636 = vpop.f32.mrf.mxu0
  %v5637 = vadd.f32 %v5428, %v5636
  %5638 = vmatmul.f32.gmra.mxu0 %v3922
  %v5639 = vpop.f32.mrf.mxu0
  %v5640 = vadd.f32 %v5431, %v5639
  %5641 = vmatmul.f32.gmra.mxu0 %v3923
  %v5642 = vpop.f32.mrf.mxu0
  %v5643 = vadd.f32 %v5434, %v5642
  %5644 = vmatmul.f32.gmra.mxu0 %v3924
  %v5645 = vpop.f32.mrf.mxu0
  %v5646 = vadd.f32 %v5437, %v5645
  %5647 = vmatmul.f32.gmra.mxu0 %v3925
  %v5648 = vpop.f32.mrf.mxu0
  %v5649 = vadd.f32 %v5440, %v5648
  %5650 = vmatmul.f32.gmra.mxu0 %v3926
  %v5651 = vpop.f32.mrf.mxu0
  %v5652 = vadd.f32 %v5443, %v5651
  %5653 = vmatmul.f32.gmra.mxu0 %v3927
  %v5654 = vpop.f32.mrf.mxu0
  %v5655 = vadd.f32 %v5446, %v5654
  %5656 = vmatmul.f32.gmra.mxu0 %v3928
  %v5657 = vpop.f32.mrf.mxu0
  %v5658 = vadd.f32 %v5449, %v5657
  %5659 = vmatmul.f32.gmra.mxu0 %v3929
  %v5660 = vpop.f32.mrf.mxu0
  %v5661 = vadd.f32 %v5452, %v5660
  %5662 = vmatmul.f32.gmra.mxu0 %v3930
  %v5663 = vpop.f32.mrf.mxu0
  %v5664 = vadd.f32 %v5455, %v5663
  %5665 = vdwg.mxu0
  %5666 = vmatpush.msra.mxu0 %v4186
  %5667 = vmatpush.msra.mxu0 %v4185
  %5668 = vmatpush.msra.mxu0 %v4184
  %5669 = vmatpush.msra.mxu0 %v4183
  %5670 = vmatpush.msra.mxu0 %v4182
  %5671 = vmatpush.msra.mxu0 %v4181
  %5672 = vmatpush.msra.mxu0 %v4180
  %5673 = vmatpush.msra.mxu0 %v4179
  %5674 = vmatpush.msra.mxu0 %v4178
  %5675 = vmatpush.msra.mxu0 %v4177
  %5676 = vmatpush.msra.mxu0 %v4176
  %5677 = vmatpush.msra.mxu0 %v4175
  %5678 = vmatpush.msra.mxu0 %v4174
  %5679 = vmatpush.msra.mxu0 %v4173
  %5680 = vmatpush.msra.mxu0 %v4172
  %5681 = vmatpush.msra.mxu0 %v4171
  %5682 = vmatmul.f32.gmra.mxu0 %v3931
  %v5683 = vpop.f32.mrf.mxu0
  %v5684 = vadd.f32 %v5475, %v5683
  %5685 = vmatmul.f32.gmra.mxu0 %v3932
  %v5686 = vpop.f32.mrf.mxu0
  %v5687 = vadd.f32 %v5478, %v5686
  %5688 = vmatmul.f32.gmra.mxu0 %v3933
  %v5689 = vpop.f32.mrf.mxu0
  %v5690 = vadd.f32 %v5481, %v5689
  %5691 = vmatmul.f32.gmra.mxu0 %v3934
  %v5692 = vpop.f32.mrf.mxu0
  %v5693 = vadd.f32 %v5484, %v5692
  %5694 = vmatmul.f32.gmra.mxu0 %v3935
  %v5695 = vpop.f32.mrf.mxu0
  %v5696 = vadd.f32 %v5487, %v5695
  %5697 = vmatmul.f32.gmra.mxu0 %v3936
  %v5698 = vpop.f32.mrf.mxu0
  %v5699 = vadd.f32 %v5490, %v5698
  %5700 = vmatmul.f32.gmra.mxu0 %v3937
  %v5701 = vpop.f32.mrf.mxu0
  %v5702 = vadd.f32 %v5493, %v5701
  %5703 = vmatmul.f32.gmra.mxu0 %v3938
  %v5704 = vpop.f32.mrf.mxu0
  %v5705 = vadd.f32 %v5496, %v5704
  %5706 = vmatmul.f32.gmra.mxu0 %v3939
  %v5707 = vpop.f32.mrf.mxu0
  %v5708 = vadd.f32 %v5499, %v5707
  %5709 = vmatmul.f32.gmra.mxu0 %v3940
  %v5710 = vpop.f32.mrf.mxu0
  %v5711 = vadd.f32 %v5502, %v5710
  %5712 = vmatmul.f32.gmra.mxu0 %v3941
  %v5713 = vpop.f32.mrf.mxu0
  %v5714 = vadd.f32 %v5505, %v5713
  %5715 = vmatmul.f32.gmra.mxu0 %v3942
  %v5716 = vpop.f32.mrf.mxu0
  %v5717 = vadd.f32 %v5508, %v5716
  %5718 = vmatmul.f32.gmra.mxu0 %v3943
  %v5719 = vpop.f32.mrf.mxu0
  %v5720 = vadd.f32 %v5511, %v5719
  %5721 = vmatmul.f32.gmra.mxu0 %v3944
  %v5722 = vpop.f32.mrf.mxu0
  %v5723 = vadd.f32 %v5514, %v5722
  %5724 = vmatmul.f32.gmra.mxu0 %v3945
  %v5725 = vpop.f32.mrf.mxu0
  %v5726 = vadd.f32 %v5517, %v5725
  %5727 = vmatmul.f32.gmra.mxu0 %v3946
  %v5728 = vpop.f32.mrf.mxu0
  %v5729 = vadd.f32 %v5520, %v5728
  %5730 = vmatmul.f32.gmra.mxu0 %v3947
  %v5731 = vpop.f32.mrf.mxu0
  %v5732 = vadd.f32 %v5523, %v5731
  %5733 = vmatmul.f32.gmra.mxu0 %v3948
  %v5734 = vpop.f32.mrf.mxu0
  %v5735 = vadd.f32 %v5526, %v5734
  %5736 = vmatmul.f32.gmra.mxu0 %v3949
  %v5737 = vpop.f32.mrf.mxu0
  %v5738 = vadd.f32 %v5529, %v5737
  %5739 = vmatmul.f32.gmra.mxu0 %v3950
  %v5740 = vpop.f32.mrf.mxu0
  %v5741 = vadd.f32 %v5532, %v5740
  %5742 = vmatmul.f32.gmra.mxu0 %v3951
  %v5743 = vpop.f32.mrf.mxu0
  %v5744 = vadd.f32 %v5535, %v5743
  %5745 = vmatmul.f32.gmra.mxu0 %v3952
  %v5746 = vpop.f32.mrf.mxu0
  %v5747 = vadd.f32 %v5538, %v5746
  %5748 = vmatmul.f32.gmra.mxu0 %v3953
  %v5749 = vpop.f32.mrf.mxu0
  %v5750 = vadd.f32 %v5541, %v5749
  %5751 = vmatmul.f32.gmra.mxu0 %v3954
  %v5752 = vpop.f32.mrf.mxu0
  %v5753 = vadd.f32 %v5544, %v5752
  %5754 = vmatmul.f32.gmra.mxu0 %v3955
  %v5755 = vpop.f32.mrf.mxu0
  %v5756 = vadd.f32 %v5547, %v5755
  %5757 = vmatmul.f32.gmra.mxu0 %v3956
  %v5758 = vpop.f32.mrf.mxu0
  %v5759 = vadd.f32 %v5550, %v5758
  %5760 = vmatmul.f32.gmra.mxu0 %v3957
  %v5761 = vpop.f32.mrf.mxu0
  %v5762 = vadd.f32 %v5553, %v5761
  %5763 = vmatmul.f32.gmra.mxu0 %v3958
  %v5764 = vpop.f32.mrf.mxu0
  %v5765 = vadd.f32 %v5556, %v5764
  %5766 = vmatmul.f32.gmra.mxu0 %v3959
  %v5767 = vpop.f32.mrf.mxu0
  %v5768 = vadd.f32 %v5559, %v5767
  %5769 = vmatmul.f32.gmra.mxu0 %v3960
  %v5770 = vpop.f32.mrf.mxu0
  %v5771 = vadd.f32 %v5562, %v5770
  %5772 = vmatmul.f32.gmra.mxu0 %v3961
  %v5773 = vpop.f32.mrf.mxu0
  %v5774 = vadd.f32 %v5565, %v5773
  %5775 = vmatmul.f32.gmra.mxu0 %v3962
  %v5776 = vpop.f32.mrf.mxu0
  %v5777 = vadd.f32 %v5568, %v5776
  %5778 = vmatmul.f32.gmra.mxu0 %v3963
  %v5779 = vpop.f32.mrf.mxu0
  %v5780 = vadd.f32 %v5571, %v5779
  %5781 = vmatmul.f32.gmra.mxu0 %v3964
  %v5782 = vpop.f32.mrf.mxu0
  %v5783 = vadd.f32 %v5574, %v5782
  %5784 = vmatmul.f32.gmra.mxu0 %v3965
  %v5785 = vpop.f32.mrf.mxu0
  %v5786 = vadd.f32 %v5577, %v5785
  %5787 = vmatmul.f32.gmra.mxu0 %v3966
  %v5788 = vpop.f32.mrf.mxu0
  %v5789 = vadd.f32 %v5580, %v5788
  %5790 = vmatmul.f32.gmra.mxu0 %v3967
  %v5791 = vpop.f32.mrf.mxu0
  %v5792 = vadd.f32 %v5583, %v5791
  %5793 = vmatmul.f32.gmra.mxu0 %v3968
  %v5794 = vpop.f32.mrf.mxu0
  %v5795 = vadd.f32 %v5586, %v5794
  %5796 = vmatmul.f32.gmra.mxu0 %v3969
  %v5797 = vpop.f32.mrf.mxu0
  %v5798 = vadd.f32 %v5589, %v5797
  %5799 = vmatmul.f32.gmra.mxu0 %v3970
  %v5800 = vpop.f32.mrf.mxu0
  %v5801 = vadd.f32 %v5592, %v5800
  %5802 = vmatmul.f32.gmra.mxu0 %v3971
  %v5803 = vpop.f32.mrf.mxu0
  %v5804 = vadd.f32 %v5595, %v5803
  %5805 = vmatmul.f32.gmra.mxu0 %v3972
  %v5806 = vpop.f32.mrf.mxu0
  %v5807 = vadd.f32 %v5598, %v5806
  %5808 = vmatmul.f32.gmra.mxu0 %v3973
  %v5809 = vpop.f32.mrf.mxu0
  %v5810 = vadd.f32 %v5601, %v5809
  %5811 = vmatmul.f32.gmra.mxu0 %v3974
  %v5812 = vpop.f32.mrf.mxu0
  %v5813 = vadd.f32 %v5604, %v5812
  %5814 = vmatmul.f32.gmra.mxu0 %v3975
  %v5815 = vpop.f32.mrf.mxu0
  %v5816 = vadd.f32 %v5607, %v5815
  %5817 = vmatmul.f32.gmra.mxu0 %v3976
  %v5818 = vpop.f32.mrf.mxu0
  %v5819 = vadd.f32 %v5610, %v5818
  %5820 = vmatmul.f32.gmra.mxu0 %v3977
  %v5821 = vpop.f32.mrf.mxu0
  %v5822 = vadd.f32 %v5613, %v5821
  %5823 = vmatmul.f32.gmra.mxu0 %v3978
  %v5824 = vpop.f32.mrf.mxu0
  %v5825 = vadd.f32 %v5616, %v5824
  %5826 = vmatmul.f32.gmra.mxu0 %v3979
  %v5827 = vpop.f32.mrf.mxu0
  %v5828 = vadd.f32 %v5619, %v5827
  %5829 = vmatmul.f32.gmra.mxu0 %v3980
  %v5830 = vpop.f32.mrf.mxu0
  %v5831 = vadd.f32 %v5622, %v5830
  %5832 = vmatmul.f32.gmra.mxu0 %v3981
  %v5833 = vpop.f32.mrf.mxu0
  %v5834 = vadd.f32 %v5625, %v5833
  %5835 = vmatmul.f32.gmra.mxu0 %v3982
  %v5836 = vpop.f32.mrf.mxu0
  %v5837 = vadd.f32 %v5628, %v5836
  %5838 = vmatmul.f32.gmra.mxu0 %v3983
  %v5839 = vpop.f32.mrf.mxu0
  %v5840 = vadd.f32 %v5631, %v5839
  %5841 = vmatmul.f32.gmra.mxu0 %v3984
  %v5842 = vpop.f32.mrf.mxu0
  %v5843 = vadd.f32 %v5634, %v5842
  %5844 = vmatmul.f32.gmra.mxu0 %v3985
  %v5845 = vpop.f32.mrf.mxu0
  %v5846 = vadd.f32 %v5637, %v5845
  %5847 = vmatmul.f32.gmra.mxu0 %v3986
  %v5848 = vpop.f32.mrf.mxu0
  %v5849 = vadd.f32 %v5640, %v5848
  %5850 = vmatmul.f32.gmra.mxu0 %v3987
  %v5851 = vpop.f32.mrf.mxu0
  %v5852 = vadd.f32 %v5643, %v5851
  %5853 = vmatmul.f32.gmra.mxu0 %v3988
  %v5854 = vpop.f32.mrf.mxu0
  %v5855 = vadd.f32 %v5646, %v5854
  %5856 = vmatmul.f32.gmra.mxu0 %v3989
  %v5857 = vpop.f32.mrf.mxu0
  %v5858 = vadd.f32 %v5649, %v5857
  %5859 = vmatmul.f32.gmra.mxu0 %v3990
  %v5860 = vpop.f32.mrf.mxu0
  %v5861 = vadd.f32 %v5652, %v5860
  %5862 = vmatmul.f32.gmra.mxu0 %v3991
  %v5863 = vpop.f32.mrf.mxu0
  %v5864 = vadd.f32 %v5655, %v5863
  %5865 = vmatmul.f32.gmra.mxu0 %v3992
  %v5866 = vpop.f32.mrf.mxu0
  %v5867 = vadd.f32 %v5658, %v5866
  %5868 = vmatmul.f32.gmra.mxu0 %v3993
  %v5869 = vpop.f32.mrf.mxu0
  %v5870 = vadd.f32 %v5661, %v5869
  %5871 = vmatmul.f32.gmra.mxu0 %v3994
  %v5872 = vpop.f32.mrf.mxu0
  %v5873 = vadd.f32 %v5664, %v5872
  %5874 = vdwg.mxu0
  %5875 = vmatpush.msra.mxu0 %v4202
  %5876 = vmatpush.msra.mxu0 %v4201
  %5877 = vmatpush.msra.mxu0 %v4200
  %5878 = vmatpush.msra.mxu0 %v4199
  %5879 = vmatpush.msra.mxu0 %v4198
  %5880 = vmatpush.msra.mxu0 %v4197
  %5881 = vmatpush.msra.mxu0 %v4196
  %5882 = vmatpush.msra.mxu0 %v4195
  %5883 = vmatpush.msra.mxu0 %v4194
  %5884 = vmatpush.msra.mxu0 %v4193
  %5885 = vmatpush.msra.mxu0 %v4192
  %5886 = vmatpush.msra.mxu0 %v4191
  %5887 = vmatpush.msra.mxu0 %v4190
  %5888 = vmatpush.msra.mxu0 %v4189
  %5889 = vmatpush.msra.mxu0 %v4188
  %5890 = vmatpush.msra.mxu0 %v4187
  %5891 = vmatmul.f32.gmra.mxu0 %v3995
  %v5892 = vpop.f32.mrf.mxu0
  %v5893 = vadd.f32 %v5684, %v5892
  %5894 = vmatmul.f32.gmra.mxu0 %v3996
  %v5895 = vpop.f32.mrf.mxu0
  %v5896 = vadd.f32 %v5687, %v5895
  %5897 = vmatmul.f32.gmra.mxu0 %v3997
  %v5898 = vpop.f32.mrf.mxu0
  %v5899 = vadd.f32 %v5690, %v5898
  %5900 = vmatmul.f32.gmra.mxu0 %v3998
  %v5901 = vpop.f32.mrf.mxu0
  %v5902 = vadd.f32 %v5693, %v5901
  %5903 = vmatmul.f32.gmra.mxu0 %v3999
  %v5904 = vpop.f32.mrf.mxu0
  %v5905 = vadd.f32 %v5696, %v5904
  %5906 = vmatmul.f32.gmra.mxu0 %v4000
  %v5907 = vpop.f32.mrf.mxu0
  %v5908 = vadd.f32 %v5699, %v5907
  %5909 = vmatmul.f32.gmra.mxu0 %v4001
  %v5910 = vpop.f32.mrf.mxu0
  %v5911 = vadd.f32 %v5702, %v5910
  %5912 = vmatmul.f32.gmra.mxu0 %v4002
  %v5913 = vpop.f32.mrf.mxu0
  %v5914 = vadd.f32 %v5705, %v5913
  %5915 = vmatmul.f32.gmra.mxu0 %v4003
  %v5916 = vpop.f32.mrf.mxu0
  %v5917 = vadd.f32 %v5708, %v5916
  %5918 = vmatmul.f32.gmra.mxu0 %v4004
  %v5919 = vpop.f32.mrf.mxu0
  %v5920 = vadd.f32 %v5711, %v5919
  %5921 = vmatmul.f32.gmra.mxu0 %v4005
  %v5922 = vpop.f32.mrf.mxu0
  %v5923 = vadd.f32 %v5714, %v5922
  %5924 = vmatmul.f32.gmra.mxu0 %v4006
  %v5925 = vpop.f32.mrf.mxu0
  %v5926 = vadd.f32 %v5717, %v5925
  %5927 = vmatmul.f32.gmra.mxu0 %v4007
  %v5928 = vpop.f32.mrf.mxu0
  %v5929 = vadd.f32 %v5720, %v5928
  %5930 = vmatmul.f32.gmra.mxu0 %v4008
  %v5931 = vpop.f32.mrf.mxu0
  %v5932 = vadd.f32 %v5723, %v5931
  %5933 = vmatmul.f32.gmra.mxu0 %v4009
  %v5934 = vpop.f32.mrf.mxu0
  %v5935 = vadd.f32 %v5726, %v5934
  %5936 = vmatmul.f32.gmra.mxu0 %v4010
  %v5937 = vpop.f32.mrf.mxu0
  %v5938 = vadd.f32 %v5729, %v5937
  %5939 = vmatmul.f32.gmra.mxu0 %v4011
  %v5940 = vpop.f32.mrf.mxu0
  %v5941 = vadd.f32 %v5732, %v5940
  %5942 = vmatmul.f32.gmra.mxu0 %v4012
  %v5943 = vpop.f32.mrf.mxu0
  %v5944 = vadd.f32 %v5735, %v5943
  %5945 = vmatmul.f32.gmra.mxu0 %v4013
  %v5946 = vpop.f32.mrf.mxu0
  %v5947 = vadd.f32 %v5738, %v5946
  %5948 = vmatmul.f32.gmra.mxu0 %v4014
  %v5949 = vpop.f32.mrf.mxu0
  %v5950 = vadd.f32 %v5741, %v5949
  %5951 = vmatmul.f32.gmra.mxu0 %v4015
  %v5952 = vpop.f32.mrf.mxu0
  %v5953 = vadd.f32 %v5744, %v5952
  %5954 = vmatmul.f32.gmra.mxu0 %v4016
  %v5955 = vpop.f32.mrf.mxu0
  %v5956 = vadd.f32 %v5747, %v5955
  %5957 = vmatmul.f32.gmra.mxu0 %v4017
  %v5958 = vpop.f32.mrf.mxu0
  %v5959 = vadd.f32 %v5750, %v5958
  %5960 = vmatmul.f32.gmra.mxu0 %v4018
  %v5961 = vpop.f32.mrf.mxu0
  %v5962 = vadd.f32 %v5753, %v5961
  %5963 = vmatmul.f32.gmra.mxu0 %v4019
  %v5964 = vpop.f32.mrf.mxu0
  %v5965 = vadd.f32 %v5756, %v5964
  %5966 = vmatmul.f32.gmra.mxu0 %v4020
  %v5967 = vpop.f32.mrf.mxu0
  %v5968 = vadd.f32 %v5759, %v5967
  %5969 = vmatmul.f32.gmra.mxu0 %v4021
  %v5970 = vpop.f32.mrf.mxu0
  %v5971 = vadd.f32 %v5762, %v5970
  %5972 = vmatmul.f32.gmra.mxu0 %v4022
  %v5973 = vpop.f32.mrf.mxu0
  %v5974 = vadd.f32 %v5765, %v5973
  %5975 = vmatmul.f32.gmra.mxu0 %v4023
  %v5976 = vpop.f32.mrf.mxu0
  %v5977 = vadd.f32 %v5768, %v5976
  %5978 = vmatmul.f32.gmra.mxu0 %v4024
  %v5979 = vpop.f32.mrf.mxu0
  %v5980 = vadd.f32 %v5771, %v5979
  %5981 = vmatmul.f32.gmra.mxu0 %v4025
  %v5982 = vpop.f32.mrf.mxu0
  %v5983 = vadd.f32 %v5774, %v5982
  %5984 = vmatmul.f32.gmra.mxu0 %v4026
  %v5985 = vpop.f32.mrf.mxu0
  %v5986 = vadd.f32 %v5777, %v5985
  %5987 = vmatmul.f32.gmra.mxu0 %v4027
  %v5988 = vpop.f32.mrf.mxu0
  %v5989 = vadd.f32 %v5780, %v5988
  %5990 = vmatmul.f32.gmra.mxu0 %v4028
  %v5991 = vpop.f32.mrf.mxu0
  %v5992 = vadd.f32 %v5783, %v5991
  %5993 = vmatmul.f32.gmra.mxu0 %v4029
  %v5994 = vpop.f32.mrf.mxu0
  %v5995 = vadd.f32 %v5786, %v5994
  %5996 = vmatmul.f32.gmra.mxu0 %v4030
  %v5997 = vpop.f32.mrf.mxu0
  %v5998 = vadd.f32 %v5789, %v5997
  %5999 = vmatmul.f32.gmra.mxu0 %v4031
  %v6000 = vpop.f32.mrf.mxu0
  %v6001 = vadd.f32 %v5792, %v6000
  %6002 = vmatmul.f32.gmra.mxu0 %v4032
  %v6003 = vpop.f32.mrf.mxu0
  %v6004 = vadd.f32 %v5795, %v6003
  %6005 = vmatmul.f32.gmra.mxu0 %v4033
  %v6006 = vpop.f32.mrf.mxu0
  %v6007 = vadd.f32 %v5798, %v6006
  %6008 = vmatmul.f32.gmra.mxu0 %v4034
  %v6009 = vpop.f32.mrf.mxu0
  %v6010 = vadd.f32 %v5801, %v6009
  %6011 = vmatmul.f32.gmra.mxu0 %v4035
  %v6012 = vpop.f32.mrf.mxu0
  %v6013 = vadd.f32 %v5804, %v6012
  %6014 = vmatmul.f32.gmra.mxu0 %v4036
  %v6015 = vpop.f32.mrf.mxu0
  %v6016 = vadd.f32 %v5807, %v6015
  %6017 = vmatmul.f32.gmra.mxu0 %v4037
  %v6018 = vpop.f32.mrf.mxu0
  %v6019 = vadd.f32 %v5810, %v6018
  %6020 = vmatmul.f32.gmra.mxu0 %v4038
  %v6021 = vpop.f32.mrf.mxu0
  %v6022 = vadd.f32 %v5813, %v6021
  %6023 = vmatmul.f32.gmra.mxu0 %v4039
  %v6024 = vpop.f32.mrf.mxu0
  %v6025 = vadd.f32 %v5816, %v6024
  %6026 = vmatmul.f32.gmra.mxu0 %v4040
  %v6027 = vpop.f32.mrf.mxu0
  %v6028 = vadd.f32 %v5819, %v6027
  %6029 = vmatmul.f32.gmra.mxu0 %v4041
  %v6030 = vpop.f32.mrf.mxu0
  %v6031 = vadd.f32 %v5822, %v6030
  %6032 = vmatmul.f32.gmra.mxu0 %v4042
  %v6033 = vpop.f32.mrf.mxu0
  %v6034 = vadd.f32 %v5825, %v6033
  %6035 = vmatmul.f32.gmra.mxu0 %v4043
  %v6036 = vpop.f32.mrf.mxu0
  %v6037 = vadd.f32 %v5828, %v6036
  %6038 = vmatmul.f32.gmra.mxu0 %v4044
  %v6039 = vpop.f32.mrf.mxu0
  %v6040 = vadd.f32 %v5831, %v6039
  %6041 = vmatmul.f32.gmra.mxu0 %v4045
  %v6042 = vpop.f32.mrf.mxu0
  %v6043 = vadd.f32 %v5834, %v6042
  %6044 = vmatmul.f32.gmra.mxu0 %v4046
  %v6045 = vpop.f32.mrf.mxu0
  %v6046 = vadd.f32 %v5837, %v6045
  %6047 = vmatmul.f32.gmra.mxu0 %v4047
  %v6048 = vpop.f32.mrf.mxu0
  %v6049 = vadd.f32 %v5840, %v6048
  %6050 = vmatmul.f32.gmra.mxu0 %v4048
  %v6051 = vpop.f32.mrf.mxu0
  %v6052 = vadd.f32 %v5843, %v6051
  %6053 = vmatmul.f32.gmra.mxu0 %v4049
  %v6054 = vpop.f32.mrf.mxu0
  %v6055 = vadd.f32 %v5846, %v6054
  %6056 = vmatmul.f32.gmra.mxu0 %v4050
  %v6057 = vpop.f32.mrf.mxu0
  %v6058 = vadd.f32 %v5849, %v6057
  %6059 = vmatmul.f32.gmra.mxu0 %v4051
  %v6060 = vpop.f32.mrf.mxu0
  %v6061 = vadd.f32 %v5852, %v6060
  %6062 = vmatmul.f32.gmra.mxu0 %v4052
  %v6063 = vpop.f32.mrf.mxu0
  %v6064 = vadd.f32 %v5855, %v6063
  %6065 = vmatmul.f32.gmra.mxu0 %v4053
  %v6066 = vpop.f32.mrf.mxu0
  %v6067 = vadd.f32 %v5858, %v6066
  %6068 = vmatmul.f32.gmra.mxu0 %v4054
  %v6069 = vpop.f32.mrf.mxu0
  %v6070 = vadd.f32 %v5861, %v6069
  %6071 = vmatmul.f32.gmra.mxu0 %v4055
  %v6072 = vpop.f32.mrf.mxu0
  %v6073 = vadd.f32 %v5864, %v6072
  %6074 = vmatmul.f32.gmra.mxu0 %v4056
  %v6075 = vpop.f32.mrf.mxu0
  %v6076 = vadd.f32 %v5867, %v6075
  %6077 = vmatmul.f32.gmra.mxu0 %v4057
  %v6078 = vpop.f32.mrf.mxu0
  %v6079 = vadd.f32 %v5870, %v6078
  %6080 = vmatmul.f32.gmra.mxu0 %v4058
  %v6081 = vpop.f32.mrf.mxu0
  %v6082 = vadd.f32 %v5873, %v6081
  %6083 = vdwg.mxu0
  %v6084 = vadd.f32 %v5893, %v5896
  %v6085 = vadd.f32 %v6084, %v5899
  %v6086 = vadd.f32 %v6085, %v5902
  %v6087 = vadd.f32 %v6086, %v5905
  %v6088 = vadd.f32 %v6087, %v5908
  %v6089 = vadd.f32 %v6088, %v5911
  %v6090 = vadd.f32 %v6089, %v5914
  %v6091 = vadd.f32 %v6090, %v5917
  %v6092 = vadd.f32 %v6091, %v5920
  %v6093 = vadd.f32 %v6092, %v5923
  %v6094 = vadd.f32 %v6093, %v5926
  %v6095 = vadd.f32 %v6094, %v5929
  %v6096 = vadd.f32 %v6095, %v5932
  %v6097 = vadd.f32 %v6096, %v5935
  %v6098 = vadd.f32 %v6097, %v5938
  %v6099 = vadd.f32 %v6098, %v5941
  %v6100 = vadd.f32 %v6099, %v5944
  %v6101 = vadd.f32 %v6100, %v5947
  %v6102 = vadd.f32 %v6101, %v5950
  %v6103 = vadd.f32 %v6102, %v5953
  %v6104 = vadd.f32 %v6103, %v5956
  %v6105 = vadd.f32 %v6104, %v5959
  %v6106 = vadd.f32 %v6105, %v5962
  %v6107 = vadd.f32 %v6106, %v5965
  %v6108 = vadd.f32 %v6107, %v5968
  %v6109 = vadd.f32 %v6108, %v5971
  %v6110 = vadd.f32 %v6109, %v5974
  %v6111 = vadd.f32 %v6110, %v5977
  %v6112 = vadd.f32 %v6111, %v5980
  %v6113 = vadd.f32 %v6112, %v5983
  %v6114 = vadd.f32 %v6113, %v5986
  %v6115 = vadd.f32 %v6114, %v5989
  %v6116 = vadd.f32 %v6115, %v5992
  %v6117 = vadd.f32 %v6116, %v5995
  %v6118 = vadd.f32 %v6117, %v5998
  %v6119 = vadd.f32 %v6118, %v6001
  %v6120 = vadd.f32 %v6119, %v6004
  %v6121 = vadd.f32 %v6120, %v6007
  %v6122 = vadd.f32 %v6121, %v6010
  %v6123 = vadd.f32 %v6122, %v6013
  %v6124 = vadd.f32 %v6123, %v6016
  %v6125 = vadd.f32 %v6124, %v6019
  %v6126 = vadd.f32 %v6125, %v6022
  %v6127 = vadd.f32 %v6126, %v6025
  %v6128 = vadd.f32 %v6127, %v6028
  %v6129 = vadd.f32 %v6128, %v6031
  %v6130 = vadd.f32 %v6129, %v6034
  %v6131 = vadd.f32 %v6130, %v6037
  %v6132 = vadd.f32 %v6131, %v6040
  %v6133 = vadd.f32 %v6132, %v6043
  %v6134 = vadd.f32 %v6133, %v6046
  %v6135 = vadd.f32 %v6134, %v6049
  %v6136 = vadd.f32 %v6135, %v6052
  %v6137 = vadd.f32 %v6136, %v6055
  %v6138 = vadd.f32 %v6137, %v6058
  %v6139 = vadd.f32 %v6138, %v6061
  %v6140 = vadd.f32 %v6139, %v6064
  %v6141 = vadd.f32 %v6140, %v6067
  %v6142 = vadd.f32 %v6141, %v6070
  %v6143 = vadd.f32 %v6142, %v6073
  %v6144 = vadd.f32 %v6143, %v6076
  %v6145 = vadd.f32 %v6144, %v6079
  %v6146 = vadd.f32 %v6145, %v6082
  %v6147 = vrot.slane %v6146, 4
  %v6148 = vadd.f32 %v6146, %v6147
  %v6149 = vrot.slane %v6148, 2
  %v6150 = vadd.f32 %v6148, %v6149
  %v6151 = vrot.slane %v6150, 1
  %v6152 = vadd.f32 %v6150, %v6151
  %v6153 = vmul.f32 %v5893, %v5893
  %v6154 = vmul.f32 %v5896, %v5896
  %v6155 = vmul.f32 %v5899, %v5899
  %v6156 = vmul.f32 %v5902, %v5902
  %v6157 = vmul.f32 %v5905, %v5905
  %v6158 = vmul.f32 %v5908, %v5908
  %v6159 = vmul.f32 %v5911, %v5911
  %v6160 = vmul.f32 %v5914, %v5914
  %v6161 = vmul.f32 %v5917, %v5917
  %v6162 = vmul.f32 %v5920, %v5920
  %v6163 = vmul.f32 %v5923, %v5923
  %v6164 = vmul.f32 %v5926, %v5926
  %v6165 = vmul.f32 %v5929, %v5929
  %v6166 = vmul.f32 %v5932, %v5932
  %v6167 = vmul.f32 %v5935, %v5935
  %v6168 = vmul.f32 %v5938, %v5938
  %v6169 = vmul.f32 %v5941, %v5941
  %v6170 = vmul.f32 %v5944, %v5944
  %v6171 = vmul.f32 %v5947, %v5947
  %v6172 = vmul.f32 %v5950, %v5950
  %v6173 = vmul.f32 %v5953, %v5953
  %v6174 = vmul.f32 %v5956, %v5956
  %v6175 = vmul.f32 %v5959, %v5959
  %v6176 = vmul.f32 %v5962, %v5962
  %v6177 = vmul.f32 %v5965, %v5965
  %v6178 = vmul.f32 %v5968, %v5968
  %v6179 = vmul.f32 %v5971, %v5971
  %v6180 = vmul.f32 %v5974, %v5974
  %v6181 = vmul.f32 %v5977, %v5977
  %v6182 = vmul.f32 %v5980, %v5980
  %v6183 = vmul.f32 %v5983, %v5983
  %v6184 = vmul.f32 %v5986, %v5986
  %v6185 = vmul.f32 %v5989, %v5989
  %v6186 = vmul.f32 %v5992, %v5992
  %v6187 = vmul.f32 %v5995, %v5995
  %v6188 = vmul.f32 %v5998, %v5998
  %v6189 = vmul.f32 %v6001, %v6001
  %v6190 = vmul.f32 %v6004, %v6004
  %v6191 = vmul.f32 %v6007, %v6007
  %v6192 = vmul.f32 %v6010, %v6010
  %v6193 = vmul.f32 %v6013, %v6013
  %v6194 = vmul.f32 %v6016, %v6016
  %v6195 = vmul.f32 %v6019, %v6019
  %v6196 = vmul.f32 %v6022, %v6022
  %v6197 = vmul.f32 %v6025, %v6025
  %v6198 = vmul.f32 %v6028, %v6028
  %v6199 = vmul.f32 %v6031, %v6031
  %v6200 = vmul.f32 %v6034, %v6034
  %v6201 = vmul.f32 %v6037, %v6037
  %v6202 = vmul.f32 %v6040, %v6040
  %v6203 = vmul.f32 %v6043, %v6043
  %v6204 = vmul.f32 %v6046, %v6046
  %v6205 = vmul.f32 %v6049, %v6049
  %v6206 = vmul.f32 %v6052, %v6052
  %v6207 = vmul.f32 %v6055, %v6055
  %v6208 = vmul.f32 %v6058, %v6058
  %v6209 = vmul.f32 %v6061, %v6061
  %v6210 = vmul.f32 %v6064, %v6064
  %v6211 = vmul.f32 %v6067, %v6067
  %v6212 = vmul.f32 %v6070, %v6070
  %v6213 = vmul.f32 %v6073, %v6073
  %v6214 = vmul.f32 %v6076, %v6076
  %v6215 = vmul.f32 %v6079, %v6079
  %v6216 = vmul.f32 %v6082, %v6082
  %v6217 = vadd.f32 %v6153, %v6154
  %v6218 = vadd.f32 %v6217, %v6155
  %v6219 = vadd.f32 %v6218, %v6156
  %v6220 = vadd.f32 %v6219, %v6157
  %v6221 = vadd.f32 %v6220, %v6158
  %v6222 = vadd.f32 %v6221, %v6159
  %v6223 = vadd.f32 %v6222, %v6160
  %v6224 = vadd.f32 %v6223, %v6161
  %v6225 = vadd.f32 %v6224, %v6162
  %v6226 = vadd.f32 %v6225, %v6163
  %v6227 = vadd.f32 %v6226, %v6164
  %v6228 = vadd.f32 %v6227, %v6165
  %v6229 = vadd.f32 %v6228, %v6166
  %v6230 = vadd.f32 %v6229, %v6167
  %v6231 = vadd.f32 %v6230, %v6168
  %v6232 = vadd.f32 %v6231, %v6169
  %v6233 = vadd.f32 %v6232, %v6170
  %v6234 = vadd.f32 %v6233, %v6171
  %v6235 = vadd.f32 %v6234, %v6172
  %v6236 = vadd.f32 %v6235, %v6173
  %v6237 = vadd.f32 %v6236, %v6174
  %v6238 = vadd.f32 %v6237, %v6175
  %v6239 = vadd.f32 %v6238, %v6176
  %v6240 = vadd.f32 %v6239, %v6177
  %v6241 = vadd.f32 %v6240, %v6178
  %v6242 = vadd.f32 %v6241, %v6179
  %v6243 = vadd.f32 %v6242, %v6180
  %v6244 = vadd.f32 %v6243, %v6181
  %v6245 = vadd.f32 %v6244, %v6182
  %v6246 = vadd.f32 %v6245, %v6183
  %v6247 = vadd.f32 %v6246, %v6184
  %v6248 = vadd.f32 %v6247, %v6185
  %v6249 = vadd.f32 %v6248, %v6186
  %v6250 = vadd.f32 %v6249, %v6187
  %v6251 = vadd.f32 %v6250, %v6188
  %v6252 = vadd.f32 %v6251, %v6189
  %v6253 = vadd.f32 %v6252, %v6190
  %v6254 = vadd.f32 %v6253, %v6191
  %v6255 = vadd.f32 %v6254, %v6192
  %v6256 = vadd.f32 %v6255, %v6193
  %v6257 = vadd.f32 %v6256, %v6194
  %v6258 = vadd.f32 %v6257, %v6195
  %v6259 = vadd.f32 %v6258, %v6196
  %v6260 = vadd.f32 %v6259, %v6197
  %v6261 = vadd.f32 %v6260, %v6198
  %v6262 = vadd.f32 %v6261, %v6199
  %v6263 = vadd.f32 %v6262, %v6200
  %v6264 = vadd.f32 %v6263, %v6201
  %v6265 = vadd.f32 %v6264, %v6202
  %v6266 = vadd.f32 %v6265, %v6203
  %v6267 = vadd.f32 %v6266, %v6204
  %v6268 = vadd.f32 %v6267, %v6205
  %v6269 = vadd.f32 %v6268, %v6206
  %v6270 = vadd.f32 %v6269, %v6207
  %v6271 = vadd.f32 %v6270, %v6208
  %v6272 = vadd.f32 %v6271, %v6209
  %v6273 = vadd.f32 %v6272, %v6210
  %v6274 = vadd.f32 %v6273, %v6211
  %v6275 = vadd.f32 %v6274, %v6212
  %v6276 = vadd.f32 %v6275, %v6213
  %v6277 = vadd.f32 %v6276, %v6214
  %v6278 = vadd.f32 %v6277, %v6215
  %v6279 = vadd.f32 %v6278, %v6216
  %v6280 = vrot.slane %v6279, 4
  %v6281 = vadd.f32 %v6279, %v6280
  %v6282 = vrot.slane %v6281, 2
  %v6283 = vadd.f32 %v6281, %v6282
  %v6284 = vrot.slane %v6283, 1
  %v6285 = vadd.f32 %v6283, %v6284
  %v6286 = vmul.f32 %v6152, 0.001953125
  %v6287 = vmul.f32 %v6285, 0.001953125
  %v6288 = vmul.f32 %v6286, %v6286
  %v6289 = vsub.f32 %v6287, %v6288
  %v6290 = vsub.f32 %v5893, %v6286
  %v6291 = vsub.f32 %v5896, %v6286
  %v6292 = vsub.f32 %v5899, %v6286
  %v6293 = vsub.f32 %v5902, %v6286
  %v6294 = vsub.f32 %v5905, %v6286
  %v6295 = vsub.f32 %v5908, %v6286
  %v6296 = vsub.f32 %v5911, %v6286
  %v6297 = vsub.f32 %v5914, %v6286
  %v6298 = vsub.f32 %v5917, %v6286
  %v6299 = vsub.f32 %v5920, %v6286
  %v6300 = vsub.f32 %v5923, %v6286
  %v6301 = vsub.f32 %v5926, %v6286
  %v6302 = vsub.f32 %v5929, %v6286
  %v6303 = vsub.f32 %v5932, %v6286
  %v6304 = vsub.f32 %v5935, %v6286
  %v6305 = vsub.f32 %v5938, %v6286
  %v6306 = vsub.f32 %v5941, %v6286
  %v6307 = vsub.f32 %v5944, %v6286
  %v6308 = vsub.f32 %v5947, %v6286
  %v6309 = vsub.f32 %v5950, %v6286
  %v6310 = vsub.f32 %v5953, %v6286
  %v6311 = vsub.f32 %v5956, %v6286
  %v6312 = vsub.f32 %v5959, %v6286
  %v6313 = vsub.f32 %v5962, %v6286
  %v6314 = vsub.f32 %v5965, %v6286
  %v6315 = vsub.f32 %v5968, %v6286
  %v6316 = vsub.f32 %v5971, %v6286
  %v6317 = vsub.f32 %v5974, %v6286
  %v6318 = vsub.f32 %v5977, %v6286
  %v6319 = vsub.f32 %v5980, %v6286
  %v6320 = vsub.f32 %v5983, %v6286
  %v6321 = vsub.f32 %v5986, %v6286
  %v6322 = vsub.f32 %v5989, %v6286
  %v6323 = vsub.f32 %v5992, %v6286
  %v6324 = vsub.f32 %v5995, %v6286
  %v6325 = vsub.f32 %v5998, %v6286
  %v6326 = vsub.f32 %v6001, %v6286
  %v6327 = vsub.f32 %v6004, %v6286
  %v6328 = vsub.f32 %v6007, %v6286
  %v6329 = vsub.f32 %v6010, %v6286
  %v6330 = vsub.f32 %v6013, %v6286
  %v6331 = vsub.f32 %v6016, %v6286
  %v6332 = vsub.f32 %v6019, %v6286
  %v6333 = vsub.f32 %v6022, %v6286
  %v6334 = vsub.f32 %v6025, %v6286
  %v6335 = vsub.f32 %v6028, %v6286
  %v6336 = vsub.f32 %v6031, %v6286
  %v6337 = vsub.f32 %v6034, %v6286
  %v6338 = vsub.f32 %v6037, %v6286
  %v6339 = vsub.f32 %v6040, %v6286
  %v6340 = vsub.f32 %v6043, %v6286
  %v6341 = vsub.f32 %v6046, %v6286
  %v6342 = vsub.f32 %v6049, %v6286
  %v6343 = vsub.f32 %v6052, %v6286
  %v6344 = vsub.f32 %v6055, %v6286
  %v6345 = vsub.f32 %v6058, %v6286
  %v6346 = vsub.f32 %v6061, %v6286
  %v6347 = vsub.f32 %v6064, %v6286
  %v6348 = vsub.f32 %v6067, %v6286
  %v6349 = vsub.f32 %v6070, %v6286
  %v6350 = vsub.f32 %v6073, %v6286
  %v6351 = vsub.f32 %v6076, %v6286
  %v6352 = vsub.f32 %v6079, %v6286
  %v6353 = vsub.f32 %v6082, %v6286
  %v6354 = vadd.f32 %v6289, 1e-05
  %v6355 = vrsqrt.pop %v6354
  %v6356 = vmul.f32 %v6355, %v6354
  %v6357 = vmul.f32 %v6356, %v6355
  %v6358 = vmul.f32 0.5, %v6357
  %v6359 = vsub.f32 1.5, %v6358
  %v6360 = vmul.f32 %v6355, %v6359
  %vm6361 = vweird.f32 %v6354
  %vm6362 = vweird.f32 %v6355
  %vm6363 = vmor %vm6361, %vm6362
  %v6364 = vsel %vm6363, %v6355, %v6360
  %v6365 = vmul.f32 %v6290, %v6364
  %v6366 = vmul.f32 %v6291, %v6364
  %v6367 = vmul.f32 %v6292, %v6364
  %v6368 = vmul.f32 %v6293, %v6364
  %v6369 = vmul.f32 %v6294, %v6364
  %v6370 = vmul.f32 %v6295, %v6364
  %v6371 = vmul.f32 %v6296, %v6364
  %v6372 = vmul.f32 %v6297, %v6364
  %v6373 = vmul.f32 %v6298, %v6364
  %v6374 = vmul.f32 %v6299, %v6364
  %v6375 = vmul.f32 %v6300, %v6364
  %v6376 = vmul.f32 %v6301, %v6364
  %v6377 = vmul.f32 %v6302, %v6364
  %v6378 = vmul.f32 %v6303, %v6364
  %v6379 = vmul.f32 %v6304, %v6364
  %v6380 = vmul.f32 %v6305, %v6364
  %v6381 = vmul.f32 %v6306, %v6364
  %v6382 = vmul.f32 %v6307, %v6364
  %v6383 = vmul.f32 %v6308, %v6364
  %v6384 = vmul.f32 %v6309, %v6364
  %v6385 = vmul.f32 %v6310, %v6364
  %v6386 = vmul.f32 %v6311, %v6364
  %v6387 = vmul.f32 %v6312, %v6364
  %v6388 = vmul.f32 %v6313, %v6364
  %v6389 = vmul.f32 %v6314, %v6364
  %v6390 = vmul.f32 %v6315, %v6364
  %v6391 = vmul.f32 %v6316, %v6364
  %v6392 = vmul.f32 %v6317, %v6364
  %v6393 = vmul.f32 %v6318, %v6364
  %v6394 = vmul.f32 %v6319, %v6364
  %v6395 = vmul.f32 %v6320, %v6364
  %v6396 = vmul.f32 %v6321, %v6364
  %v6397 = vmul.f32 %v6322, %v6364
  %v6398 = vmul.f32 %v6323, %v6364
  %v6399 = vmul.f32 %v6324, %v6364
  %v6400 = vmul.f32 %v6325, %v6364
  %v6401 = vmul.f32 %v6326, %v6364
  %v6402 = vmul.f32 %v6327, %v6364
  %v6403 = vmul.f32 %v6328, %v6364
  %v6404 = vmul.f32 %v6329, %v6364
  %v6405 = vmul.f32 %v6330, %v6364
  %v6406 = vmul.f32 %v6331, %v6364
  %v6407 = vmul.f32 %v6332, %v6364
  %v6408 = vmul.f32 %v6333, %v6364
  %v6409 = vmul.f32 %v6334, %v6364
  %v6410 = vmul.f32 %v6335, %v6364
  %v6411 = vmul.f32 %v6336, %v6364
  %v6412 = vmul.f32 %v6337, %v6364
  %v6413 = vmul.f32 %v6338, %v6364
  %v6414 = vmul.f32 %v6339, %v6364
  %v6415 = vmul.f32 %v6340, %v6364
  %v6416 = vmul.f32 %v6341, %v6364
  %v6417 = vmul.f32 %v6342, %v6364
  %v6418 = vmul.f32 %v6343, %v6364
  %v6419 = vmul.f32 %v6344, %v6364
  %v6420 = vmul.f32 %v6345, %v6364
  %v6421 = vmul.f32 %v6346, %v6364
  %v6422 = vmul.f32 %v6347, %v6364
  %v6423 = vmul.f32 %v6348, %v6364
  %v6424 = vmul.f32 %v6349, %v6364
  %v6425 = vmul.f32 %v6350, %v6364
  %v6426 = vmul.f32 %v6351, %v6364
  %v6427 = vmul.f32 %v6352, %v6364
  %v6428 = vmul.f32 %v6353, %v6364
  %v6429 = vld [vmem:[%s5] sm:$0x1]
  %v6431 = vperm.slane %v6429, 0
  %v6433 = vmul.f32 %v6365, %v6431
  %v6434 = vmul.f32 %v6366, %v6431
  %v6435 = vmul.f32 %v6367, %v6431
  %v6436 = vmul.f32 %v6368, %v6431
  %v6437 = vmul.f32 %v6369, %v6431
  %v6438 = vmul.f32 %v6370, %v6431
  %v6439 = vmul.f32 %v6371, %v6431
  %v6440 = vmul.f32 %v6372, %v6431
  %v6441 = vmul.f32 %v6373, %v6431
  %v6442 = vmul.f32 %v6374, %v6431
  %v6443 = vmul.f32 %v6375, %v6431
  %v6444 = vmul.f32 %v6376, %v6431
  %v6445 = vmul.f32 %v6377, %v6431
  %v6446 = vmul.f32 %v6378, %v6431
  %v6447 = vmul.f32 %v6379, %v6431
  %v6448 = vmul.f32 %v6380, %v6431
  %v6449 = vmul.f32 %v6381, %v6431
  %v6450 = vmul.f32 %v6382, %v6431
  %v6451 = vmul.f32 %v6383, %v6431
  %v6452 = vmul.f32 %v6384, %v6431
  %v6453 = vmul.f32 %v6385, %v6431
  %v6454 = vmul.f32 %v6386, %v6431
  %v6455 = vmul.f32 %v6387, %v6431
  %v6456 = vmul.f32 %v6388, %v6431
  %v6457 = vmul.f32 %v6389, %v6431
  %v6458 = vmul.f32 %v6390, %v6431
  %v6459 = vmul.f32 %v6391, %v6431
  %v6460 = vmul.f32 %v6392, %v6431
  %v6461 = vmul.f32 %v6393, %v6431
  %v6462 = vmul.f32 %v6394, %v6431
  %v6463 = vmul.f32 %v6395, %v6431
  %v6464 = vmul.f32 %v6396, %v6431
  %v6465 = vmul.f32 %v6397, %v6431
  %v6466 = vmul.f32 %v6398, %v6431
  %v6467 = vmul.f32 %v6399, %v6431
  %v6468 = vmul.f32 %v6400, %v6431
  %v6469 = vmul.f32 %v6401, %v6431
  %v6470 = vmul.f32 %v6402, %v6431
  %v6471 = vmul.f32 %v6403, %v6431
  %v6472 = vmul.f32 %v6404, %v6431
  %v6473 = vmul.f32 %v6405, %v6431
  %v6474 = vmul.f32 %v6406, %v6431
  %v6475 = vmul.f32 %v6407, %v6431
  %v6476 = vmul.f32 %v6408, %v6431
  %v6477 = vmul.f32 %v6409, %v6431
  %v6478 = vmul.f32 %v6410, %v6431
  %v6479 = vmul.f32 %v6411, %v6431
  %v6480 = vmul.f32 %v6412, %v6431
  %v6481 = vmul.f32 %v6413, %v6431
  %v6482 = vmul.f32 %v6414, %v6431
  %v6483 = vmul.f32 %v6415, %v6431
  %v6484 = vmul.f32 %v6416, %v6431
  %v6485 = vmul.f32 %v6417, %v6431
  %v6486 = vmul.f32 %v6418, %v6431
  %v6487 = vmul.f32 %v6419, %v6431
  %v6488 = vmul.f32 %v6420, %v6431
  %v6489 = vmul.f32 %v6421, %v6431
  %v6490 = vmul.f32 %v6422, %v6431
  %v6491 = vmul.f32 %v6423, %v6431
  %v6492 = vmul.f32 %v6424, %v6431
  %v6493 = vmul.f32 %v6425, %v6431
  %v6494 = vmul.f32 %v6426, %v6431
  %v6495 = vmul.f32 %v6427, %v6431
  %v6496 = vmul.f32 %v6428, %v6431
  %v6497 = vld [vmem:[%s6] sm:$0x1]
  %v6499 = vperm.slane %v6497, 0
  %v6501 = vadd.f32 %v6433, %v6499
  %v6502 = vadd.f32 %v6434, %v6499
  %v6503 = vadd.f32 %v6435, %v6499
  %v6504 = vadd.f32 %v6436, %v6499
  %v6505 = vadd.f32 %v6437, %v6499
  %v6506 = vadd.f32 %v6438, %v6499
  %v6507 = vadd.f32 %v6439, %v6499
  %v6508 = vadd.f32 %v6440, %v6499
  %v6509 = vadd.f32 %v6441, %v6499
  %v6510 = vadd.f32 %v6442, %v6499
  %v6511 = vadd.f32 %v6443, %v6499
  %v6512 = vadd.f32 %v6444, %v6499
  %v6513 = vadd.f32 %v6445, %v6499
  %v6514 = vadd.f32 %v6446, %v6499
  %v6515 = vadd.f32 %v6447, %v6499
  %v6516 = vadd.f32 %v6448, %v6499
  %v6517 = vadd.f32 %v6449, %v6499
  %v6518 = vadd.f32 %v6450, %v6499
  %v6519 = vadd.f32 %v6451, %v6499
  %v6520 = vadd.f32 %v6452, %v6499
  %v6521 = vadd.f32 %v6453, %v6499
  %v6522 = vadd.f32 %v6454, %v6499
  %v6523 = vadd.f32 %v6455, %v6499
  %v6524 = vadd.f32 %v6456, %v6499
  %v6525 = vadd.f32 %v6457, %v6499
  %v6526 = vadd.f32 %v6458, %v6499
  %v6527 = vadd.f32 %v6459, %v6499
  %v6528 = vadd.f32 %v6460, %v6499
  %v6529 = vadd.f32 %v6461, %v6499
  %v6530 = vadd.f32 %v6462, %v6499
  %v6531 = vadd.f32 %v6463, %v6499
  %v6532 = vadd.f32 %v6464, %v6499
  %v6533 = vadd.f32 %v6465, %v6499
  %v6534 = vadd.f32 %v6466, %v6499
  %v6535 = vadd.f32 %v6467, %v6499
  %v6536 = vadd.f32 %v6468, %v6499
  %v6537 = vadd.f32 %v6469, %v6499
  %v6538 = vadd.f32 %v6470, %v6499
  %v6539 = vadd.f32 %v6471, %v6499
  %v6540 = vadd.f32 %v6472, %v6499
  %v6541 = vadd.f32 %v6473, %v6499
  %v6542 = vadd.f32 %v6474, %v6499
  %v6543 = vadd.f32 %v6475, %v6499
  %v6544 = vadd.f32 %v6476, %v6499
  %v6545 = vadd.f32 %v6477, %v6499
  %v6546 = vadd.f32 %v6478, %v6499
  %v6547 = vadd.f32 %v6479, %v6499
  %v6548 = vadd.f32 %v6480, %v6499
  %v6549 = vadd.f32 %v6481, %v6499
  %v6550 = vadd.f32 %v6482, %v6499
  %v6551 = vadd.f32 %v6483, %v6499
  %v6552 = vadd.f32 %v6484, %v6499
  %v6553 = vadd.f32 %v6485, %v6499
  %v6554 = vadd.f32 %v6486, %v6499
  %v6555 = vadd.f32 %v6487, %v6499
  %v6556 = vadd.f32 %v6488, %v6499
  %v6557 = vadd.f32 %v6489, %v6499
  %v6558 = vadd.f32 %v6490, %v6499
  %v6559 = vadd.f32 %v6491, %v6499
  %v6560 = vadd.f32 %v6492, %v6499
  %v6561 = vadd.f32 %v6493, %v6499
  %v6562 = vadd.f32 %v6494, %v6499
  %v6563 = vadd.f32 %v6495, %v6499
  %v6564 = vadd.f32 %v6496, %v6499
  %v6565 = vmax.f32 %v6501, 0.0
  %v6566 = vmax.f32 %v6502, 0.0
  %v6567 = vmax.f32 %v6503, 0.0
  %v6568 = vmax.f32 %v6504, 0.0
  %v6569 = vmax.f32 %v6505, 0.0
  %v6570 = vmax.f32 %v6506, 0.0
  %v6571 = vmax.f32 %v6507, 0.0
  %v6572 = vmax.f32 %v6508, 0.0
  %v6573 = vmax.f32 %v6509, 0.0
  %v6574 = vmax.f32 %v6510, 0.0
  %v6575 = vmax.f32 %v6511, 0.0
  %v6576 = vmax.f32 %v6512, 0.0
  %v6577 = vmax.f32 %v6513, 0.0
  %v6578 = vmax.f32 %v6514, 0.0
  %v6579 = vmax.f32 %v6515, 0.0
  %v6580 = vmax.f32 %v6516, 0.0
  %v6581 = vmax.f32 %v6517, 0.0
  %v6582 = vmax.f32 %v6518, 0.0
  %v6583 = vmax.f32 %v6519, 0.0
  %v6584 = vmax.f32 %v6520, 0.0
  %v6585 = vmax.f32 %v6521, 0.0
  %v6586 = vmax.f32 %v6522, 0.0
  %v6587 = vmax.f32 %v6523, 0.0
  %v6588 = vmax.f32 %v6524, 0.0
  %v6589 = vmax.f32 %v6525, 0.0
  %v6590 = vmax.f32 %v6526, 0.0
  %v6591 = vmax.f32 %v6527, 0.0
  %v6592 = vmax.f32 %v6528, 0.0
  %v6593 = vmax.f32 %v6529, 0.0
  %v6594 = vmax.f32 %v6530, 0.0
  %v6595 = vmax.f32 %v6531, 0.0
  %v6596 = vmax.f32 %v6532, 0.0
  %v6597 = vmax.f32 %v6533, 0.0
  %v6598 = vmax.f32 %v6534, 0.0
  %v6599 = vmax.f32 %v6535, 0.0
  %v6600 = vmax.f32 %v6536, 0.0
  %v6601 = vmax.f32 %v6537, 0.0
  %v6602 = vmax.f32 %v6538, 0.0
  %v6603 = vmax.f32 %v6539, 0.0
  %v6604 = vmax.f32 %v6540, 0.0
  %v6605 = vmax.f32 %v6541, 0.0
  %v6606 = vmax.f32 %v6542, 0.0
  %v6607 = vmax.f32 %v6543, 0.0
  %v6608 = vmax.f32 %v6544, 0.0
  %v6609 = vmax.f32 %v6545, 0.0
  %v6610 = vmax.f32 %v6546, 0.0
  %v6611 = vmax.f32 %v6547, 0.0
  %v6612 = vmax.f32 %v6548, 0.0
  %v6613 = vmax.f32 %v6549, 0.0
  %v6614 = vmax.f32 %v6550, 0.0
  %v6615 = vmax.f32 %v6551, 0.0
  %v6616 = vmax.f32 %v6552, 0.0
  %v6617 = vmax.f32 %v6553, 0.0
  %v6618 = vmax.f32 %v6554, 0.0
  %v6619 = vmax.f32 %v6555, 0.0
  %v6620 = vmax.f32 %v6556, 0.0
  %v6621 = vmax.f32 %v6557, 0.0
  %v6622 = vmax.f32 %v6558, 0.0
  %v6623 = vmax.f32 %v6559, 0.0
  %v6624 = vmax.f32 %v6560, 0.0
  %v6625 = vmax.f32 %v6561, 0.0
  %v6626 = vmax.f32 %v6562, 0.0
  %v6627 = vmax.f32 %v6563, 0.0
  %v6628 = vmax.f32 %v6564, 0.0
  %6629 = vst [vmem:[%s207 + $0x1] sm:$0xff] %v6565
  %6630 = vst [vmem:[%s207 + $0x9] sm:$0xff] %v6566
  %6631 = vst [vmem:[%s207 + $0x19] sm:$0xff] %v6567
  %6632 = vst [vmem:[%s207 + $0x21] sm:$0xff] %v6568
  %6633 = vst [vmem:[%s207 + $0x31] sm:$0xff] %v6569
  %6634 = vst [vmem:[%s207 + $0x39] sm:$0xff] %v6570
  %6635 = vst [vmem:[%s207 + $0x49] sm:$0xff] %v6571
  %6636 = vst [vmem:[%s207 + $0x51] sm:$0xff] %v6572
  %6637 = vst [vmem:[%s207 + $0x61] sm:$0xff] %v6573
  %6638 = vst [vmem:[%s207 + $0x69] sm:$0xff] %v6574
  %6639 = vst [vmem:[%s207 + $0x79] sm:$0xff] %v6575
  %6640 = vst [vmem:[%s207 + $0x81] sm:$0xff] %v6576
  %6641 = vst [vmem:[%s207 + $0x91] sm:$0xff] %v6577
  %6642 = vst [vmem:[%s207 + $0x99] sm:$0xff] %v6578
  %6643 = vst [vmem:[%s207 + $0xa9] sm:$0xff] %v6579
  %6644 = vst [vmem:[%s207 + $0xb1] sm:$0xff] %v6580
  %6645 = vst [vmem:[%s207 + $0xc1] sm:$0xff] %v6581
  %6646 = vst [vmem:[%s207 + $0xc9] sm:$0xff] %v6582
  %6647 = vst [vmem:[%s207 + $0xd9] sm:$0xff] %v6583
  %6648 = vst [vmem:[%s207 + $0xe1] sm:$0xff] %v6584
  %6649 = vst [vmem:[%s207 + $0xf1] sm:$0xff] %v6585
  %6650 = vst [vmem:[%s207 + $0xf9] sm:$0xff] %v6586
  %6651 = vst [vmem:[%s207 + $0x109] sm:$0xff] %v6587
  %6652 = vst [vmem:[%s207 + $0x111] sm:$0xff] %v6588
  %6653 = vst [vmem:[%s207 + $0x121] sm:$0xff] %v6589
  %6654 = vst [vmem:[%s207 + $0x129] sm:$0xff] %v6590
  %6655 = vst [vmem:[%s207 + $0x139] sm:$0xff] %v6591
  %6656 = vst [vmem:[%s207 + $0x141] sm:$0xff] %v6592
  %6657 = vst [vmem:[%s207 + $0x151] sm:$0xff] %v6593
  %6658 = vst [vmem:[%s207 + $0x159] sm:$0xff] %v6594
  %6659 = vst [vmem:[%s207 + $0x169] sm:$0xff] %v6595
  %6660 = vst [vmem:[%s207 + $0x171] sm:$0xff] %v6596
  %6661 = vst [vmem:[%s207 + $0x1b1] sm:$0xff] %v6597
  %6662 = vst [vmem:[%s207 + $0x1b9] sm:$0xff] %v6598
  %6663 = vst [vmem:[%s207 + $0x1c9] sm:$0xff] %v6599
  %6664 = vst [vmem:[%s207 + $0x1d1] sm:$0xff] %v6600
  %6665 = vst [vmem:[%s207 + $0x1e1] sm:$0xff] %v6601
  %6666 = vst [vmem:[%s207 + $0x1e9] sm:$0xff] %v6602
  %6667 = vst [vmem:[%s207 + $0x1f9] sm:$0xff] %v6603
  %6668 = vst [vmem:[%s207 + $0x201] sm:$0xff] %v6604
  %6669 = vst [vmem:[%s207 + $0x211] sm:$0xff] %v6605
  %6670 = vst [vmem:[%s207 + $0x219] sm:$0xff] %v6606
  %6671 = vst [vmem:[%s207 + $0x229] sm:$0xff] %v6607
  %6672 = vst [vmem:[%s207 + $0x231] sm:$0xff] %v6608
  %6673 = vst [vmem:[%s207 + $0x241] sm:$0xff] %v6609
  %6674 = vst [vmem:[%s207 + $0x249] sm:$0xff] %v6610
  %6675 = vst [vmem:[%s207 + $0x259] sm:$0xff] %v6611
  %6676 = vst [vmem:[%s207 + $0x261] sm:$0xff] %v6612
  %6677 = vst [vmem:[%s207 + $0x271] sm:$0xff] %v6613
  %6678 = vst [vmem:[%s207 + $0x279] sm:$0xff] %v6614
  %6679 = vst [vmem:[%s207 + $0x289] sm:$0xff] %v6615
  %6680 = vst [vmem:[%s207 + $0x291] sm:$0xff] %v6616
  %6681 = vst [vmem:[%s207 + $0x2a1] sm:$0xff] %v6617
  %6682 = vst [vmem:[%s207 + $0x2a9] sm:$0xff] %v6618
  %6683 = vst [vmem:[%s207 + $0x2b9] sm:$0xff] %v6619
  %6684 = vst [vmem:[%s207 + $0x2c1] sm:$0xff] %v6620
  %6685 = vst [vmem:[%s207 + $0x2d1] sm:$0xff] %v6621
  %6686 = vst [vmem:[%s207 + $0x2d9] sm:$0xff] %v6622
  %6687 = vst [vmem:[%s207 + $0x2e9] sm:$0xff] %v6623
  %6688 = vst [vmem:[%s207 + $0x2f1] sm:$0xff] %v6624
  %6689 = vst [vmem:[%s207 + $0x301] sm:$0xff] %v6625
  %6690 = vst [vmem:[%s207 + $0x309] sm:$0xff] %v6626
  %6691 = vst [vmem:[%s207 + $0x319] sm:$0xff] %v6627
  %6692 = vst [vmem:[%s207 + $0x321] sm:$0xff] %v6628
  %v6693 = vld [vmem:[#allocation2] sm:$0xff]
  %v6694 = vld [vmem:[#allocation2 + $0x8] sm:$0xff]
  %v6695 = vld [vmem:[#allocation2 + $0x18] sm:$0xff]
  %v6696 = vld [vmem:[#allocation2 + $0x20] sm:$0xff]
  %v6697 = vld [vmem:[#allocation2 + $0x30] sm:$0xff]
  %v6698 = vld [vmem:[#allocation2 + $0x38] sm:$0xff]
  %v6699 = vld [vmem:[#allocation2 + $0x48] sm:$0xff]
  %v6700 = vld [vmem:[#allocation2 + $0x50] sm:$0xff]
  %v6701 = vld [vmem:[#allocation2 + $0x60] sm:$0xff]
  %v6702 = vld [vmem:[#allocation2 + $0x68] sm:$0xff]
  %v6703 = vld [vmem:[#allocation2 + $0x78] sm:$0xff]
  %v6704 = vld [vmem:[#allocation2 + $0x80] sm:$0xff]
  %v6705 = vld [vmem:[#allocation2 + $0x90] sm:$0xff]
  %v6706 = vld [vmem:[#allocation2 + $0x98] sm:$0xff]
  %v6707 = vld [vmem:[#allocation2 + $0xa8] sm:$0xff]
  %v6708 = vld [vmem:[#allocation2 + $0xb0] sm:$0xff]
  %v6709 = vld [vmem:[#allocation2 + $0xc0] sm:$0xff]
  %v6710 = vld [vmem:[#allocation2 + $0xc8] sm:$0xff]
  %v6711 = vld [vmem:[#allocation2 + $0xd8] sm:$0xff]
  %v6712 = vld [vmem:[#allocation2 + $0xe0] sm:$0xff]
  %v6713 = vld [vmem:[#allocation2 + $0xf0] sm:$0xff]
  %v6714 = vld [vmem:[#allocation2 + $0xf8] sm:$0xff]
  %v6715 = vld [vmem:[#allocation2 + $0x108] sm:$0xff]
  %v6716 = vld [vmem:[#allocation2 + $0x110] sm:$0xff]
  %v6717 = vld [vmem:[#allocation2 + $0x120] sm:$0xff]
  %v6718 = vld [vmem:[#allocation2 + $0x128] sm:$0xff]
  %v6719 = vld [vmem:[#allocation2 + $0x138] sm:$0xff]
  %v6720 = vld [vmem:[#allocation2 + $0x140] sm:$0xff]
  %v6721 = vld [vmem:[#allocation2 + $0x150] sm:$0xff]
  %v6722 = vld [vmem:[#allocation2 + $0x158] sm:$0xff]
  %v6723 = vld [vmem:[#allocation2 + $0x168] sm:$0xff]
  %v6724 = vld [vmem:[#allocation2 + $0x170] sm:$0xff]
  %v6725 = vld [vmem:[#allocation2 + $0x1b0] sm:$0xff]
  %v6726 = vld [vmem:[#allocation2 + $0x1b8] sm:$0xff]
  %v6727 = vld [vmem:[#allocation2 + $0x1c8] sm:$0xff]
  %v6728 = vld [vmem:[#allocation2 + $0x1d0] sm:$0xff]
  %v6729 = vld [vmem:[#allocation2 + $0x1e0] sm:$0xff]
  %v6730 = vld [vmem:[#allocation2 + $0x1e8] sm:$0xff]
  %v6731 = vld [vmem:[#allocation2 + $0x1f8] sm:$0xff]
  %v6732 = vld [vmem:[#allocation2 + $0x200] sm:$0xff]
  %v6733 = vld [vmem:[#allocation2 + $0x210] sm:$0xff]
  %v6734 = vld [vmem:[#allocation2 + $0x218] sm:$0xff]
  %v6735 = vld [vmem:[#allocation2 + $0x228] sm:$0xff]
  %v6736 = vld [vmem:[#allocation2 + $0x230] sm:$0xff]
  %v6737 = vld [vmem:[#allocation2 + $0x240] sm:$0xff]
  %v6738 = vld [vmem:[#allocation2 + $0x248] sm:$0xff]
  %v6739 = vld [vmem:[#allocation2 + $0x258] sm:$0xff]
  %v6740 = vld [vmem:[#allocation2 + $0x260] sm:$0xff]
  %v6741 = vld [vmem:[#allocation2 + $0x270] sm:$0xff]
  %v6742 = vld [vmem:[#allocation2 + $0x278] sm:$0xff]
  %v6743 = vld [vmem:[#allocation2 + $0x288] sm:$0xff]
  %v6744 = vld [vmem:[#allocation2 + $0x290] sm:$0xff]
  %v6745 = vld [vmem:[#allocation2 + $0x2a0] sm:$0xff]
  %v6746 = vld [vmem:[#allocation2 + $0x2a8] sm:$0xff]
  %v6747 = vld [vmem:[#allocation2 + $0x2b8] sm:$0xff]
  %v6748 = vld [vmem:[#allocation2 + $0x2c0] sm:$0xff]
  %v6749 = vld [vmem:[#allocation2 + $0x2d0] sm:$0xff]
  %v6750 = vld [vmem:[#allocation2 + $0x2d8] sm:$0xff]
  %v6751 = vld [vmem:[#allocation2 + $0x2e8] sm:$0xff]
  %v6752 = vld [vmem:[#allocation2 + $0x2f0] sm:$0xff]
  %v6753 = vld [vmem:[#allocation2 + $0x300] sm:$0xff]
  %v6754 = vld [vmem:[#allocation2 + $0x308] sm:$0xff]
  %v6755 = vld [vmem:[#allocation2 + $0x318] sm:$0xff]
  %v6756 = vld [vmem:[#allocation2 + $0x320] sm:$0xff]
  %v6757 = vld [vmem:[#allocation2 + $0x1] sm:$0xff]
  %v6758 = vld [vmem:[#allocation2 + $0x9] sm:$0xff]
  %v6759 = vld [vmem:[#allocation2 + $0x19] sm:$0xff]
  %v6760 = vld [vmem:[#allocation2 + $0x21] sm:$0xff]
  %v6761 = vld [vmem:[#allocation2 + $0x31] sm:$0xff]
  %v6762 = vld [vmem:[#allocation2 + $0x39] sm:$0xff]
  %v6763 = vld [vmem:[#allocation2 + $0x49] sm:$0xff]
  %v6764 = vld [vmem:[#allocation2 + $0x51] sm:$0xff]
  %v6765 = vld [vmem:[#allocation2 + $0x61] sm:$0xff]
  %v6766 = vld [vmem:[#allocation2 + $0x69] sm:$0xff]
  %v6767 = vld [vmem:[#allocation2 + $0x79] sm:$0xff]
  %v6768 = vld [vmem:[#allocation2 + $0x81] sm:$0xff]
  %v6769 = vld [vmem:[#allocation2 + $0x91] sm:$0xff]
  %v6770 = vld [vmem:[#allocation2 + $0x99] sm:$0xff]
  %v6771 = vld [vmem:[#allocation2 + $0xa9] sm:$0xff]
  %v6772 = vld [vmem:[#allocation2 + $0xb1] sm:$0xff]
  %v6773 = vld [vmem:[#allocation2 + $0xc1] sm:$0xff]
  %v6774 = vld [vmem:[#allocation2 + $0xc9] sm:$0xff]
  %v6775 = vld [vmem:[#allocation2 + $0xd9] sm:$0xff]
  %v6776 = vld [vmem:[#allocation2 + $0xe1] sm:$0xff]
  %v6777 = vld [vmem:[#allocation2 + $0xf1] sm:$0xff]
  %v6778 = vld [vmem:[#allocation2 + $0xf9] sm:$0xff]
  %v6779 = vld [vmem:[#allocation2 + $0x109] sm:$0xff]
  %v6780 = vld [vmem:[#allocation2 + $0x111] sm:$0xff]
  %v6781 = vld [vmem:[#allocation2 + $0x121] sm:$0xff]
  %v6782 = vld [vmem:[#allocation2 + $0x129] sm:$0xff]
  %v6783 = vld [vmem:[#allocation2 + $0x139] sm:$0xff]
  %v6784 = vld [vmem:[#allocation2 + $0x141] sm:$0xff]
  %v6785 = vld [vmem:[#allocation2 + $0x151] sm:$0xff]
  %v6786 = vld [vmem:[#allocation2 + $0x159] sm:$0xff]
  %v6787 = vld [vmem:[#allocation2 + $0x169] sm:$0xff]
  %v6788 = vld [vmem:[#allocation2 + $0x171] sm:$0xff]
  %v6789 = vld [vmem:[#allocation2 + $0x1b1] sm:$0xff]
  %v6790 = vld [vmem:[#allocation2 + $0x1b9] sm:$0xff]
  %v6791 = vld [vmem:[#allocation2 + $0x1c9] sm:$0xff]
  %v6792 = vld [vmem:[#allocation2 + $0x1d1] sm:$0xff]
  %v6793 = vld [vmem:[#allocation2 + $0x1e1] sm:$0xff]
  %v6794 = vld [vmem:[#allocation2 + $0x1e9] sm:$0xff]
  %v6795 = vld [vmem:[#allocation2 + $0x1f9] sm:$0xff]
  %v6796 = vld [vmem:[#allocation2 + $0x201] sm:$0xff]
  %v6797 = vld [vmem:[#allocation2 + $0x211] sm:$0xff]
  %v6798 = vld [vmem:[#allocation2 + $0x219] sm:$0xff]
  %v6799 = vld [vmem:[#allocation2 + $0x229] sm:$0xff]
  %v6800 = vld [vmem:[#allocation2 + $0x231] sm:$0xff]
  %v6801 = vld [vmem:[#allocation2 + $0x241] sm:$0xff]
  %v6802 = vld [vmem:[#allocation2 + $0x249] sm:$0xff]
  %v6803 = vld [vmem:[#allocation2 + $0x259] sm:$0xff]
  %v6804 = vld [vmem:[#allocation2 + $0x261] sm:$0xff]
  %v6805 = vld [vmem:[#allocation2 + $0x271] sm:$0xff]
  %v6806 = vld [vmem:[#allocation2 + $0x279] sm:$0xff]
  %v6807 = vld [vmem:[#allocation2 + $0x289] sm:$0xff]
  %v6808 = vld [vmem:[#allocation2 + $0x291] sm:$0xff]
  %v6809 = vld [vmem:[#allocation2 + $0x2a1] sm:$0xff]
  %v6810 = vld [vmem:[#allocation2 + $0x2a9] sm:$0xff]
  %v6811 = vld [vmem:[#allocation2 + $0x2b9] sm:$0xff]
  %v6812 = vld [vmem:[#allocation2 + $0x2c1] sm:$0xff]
  %v6813 = vld [vmem:[#allocation2 + $0x2d1] sm:$0xff]
  %v6814 = vld [vmem:[#allocation2 + $0x2d9] sm:$0xff]
  %v6815 = vld [vmem:[#allocation2 + $0x2e9] sm:$0xff]
  %v6816 = vld [vmem:[#allocation2 + $0x2f1] sm:$0xff]
  %v6817 = vld [vmem:[#allocation2 + $0x301] sm:$0xff]
  %v6818 = vld [vmem:[#allocation2 + $0x309] sm:$0xff]
  %v6819 = vld [vmem:[#allocation2 + $0x319] sm:$0xff]
  %v6820 = vld [vmem:[#allocation2 + $0x321] sm:$0xff]
  %v6821 = vld [vmem:[#allocation2 + $0x2] sm:$0xff]
  %v6822 = vld [vmem:[#allocation2 + $0xa] sm:$0xff]
  %v6823 = vld [vmem:[#allocation2 + $0x1a] sm:$0xff]
  %v6824 = vld [vmem:[#allocation2 + $0x22] sm:$0xff]
  %v6825 = vld [vmem:[#allocation2 + $0x32] sm:$0xff]
  %v6826 = vld [vmem:[#allocation2 + $0x3a] sm:$0xff]
  %v6827 = vld [vmem:[#allocation2 + $0x4a] sm:$0xff]
  %v6828 = vld [vmem:[#allocation2 + $0x52] sm:$0xff]
  %v6829 = vld [vmem:[#allocation2 + $0x62] sm:$0xff]
  %v6830 = vld [vmem:[#allocation2 + $0x6a] sm:$0xff]
  %v6831 = vld [vmem:[#allocation2 + $0x7a] sm:$0xff]
  %v6832 = vld [vmem:[#allocation2 + $0x82] sm:$0xff]
  %v6833 = vld [vmem:[#allocation2 + $0x92] sm:$0xff]
  %v6834 = vld [vmem:[#allocation2 + $0x9a] sm:$0xff]
  %v6835 = vld [vmem:[#allocation2 + $0xaa] sm:$0xff]
  %v6836 = vld [vmem:[#allocation2 + $0xb2] sm:$0xff]
  %v6837 = vld [vmem:[#allocation2 + $0xc2] sm:$0xff]
  %v6838 = vld [vmem:[#allocation2 + $0xca] sm:$0xff]
  %v6839 = vld [vmem:[#allocation2 + $0xda] sm:$0xff]
  %v6840 = vld [vmem:[#allocation2 + $0xe2] sm:$0xff]
  %v6841 = vld [vmem:[#allocation2 + $0xf2] sm:$0xff]
  %v6842 = vld [vmem:[#allocation2 + $0xfa] sm:$0xff]
  %v6843 = vld [vmem:[#allocation2 + $0x10a] sm:$0xff]
  %v6844 = vld [vmem:[#allocation2 + $0x112] sm:$0xff]
  %v6845 = vld [vmem:[#allocation2 + $0x122] sm:$0xff]
  %v6846 = vld [vmem:[#allocation2 + $0x12a] sm:$0xff]
  %v6847 = vld [vmem:[#allocation2 + $0x13a] sm:$0xff]
  %v6848 = vld [vmem:[#allocation2 + $0x142] sm:$0xff]
  %v6849 = vld [vmem:[#allocation2 + $0x152] sm:$0xff]
  %v6850 = vld [vmem:[#allocation2 + $0x15a] sm:$0xff]
  %v6851 = vld [vmem:[#allocation2 + $0x16a] sm:$0xff]
  %v6852 = vld [vmem:[#allocation2 + $0x172] sm:$0xff]
  %v6853 = vld [vmem:[#allocation2 + $0x1b2] sm:$0xff]
  %v6854 = vld [vmem:[#allocation2 + $0x1ba] sm:$0xff]
  %v6855 = vld [vmem:[#allocation2 + $0x1ca] sm:$0xff]
  %v6856 = vld [vmem:[#allocation2 + $0x1d2] sm:$0xff]
  %v6857 = vld [vmem:[#allocation2 + $0x1e2] sm:$0xff]
  %v6858 = vld [vmem:[#allocation2 + $0x1ea] sm:$0xff]
  %v6859 = vld [vmem:[#allocation2 + $0x1fa] sm:$0xff]
  %v6860 = vld [vmem:[#allocation2 + $0x202] sm:$0xff]
  %v6861 = vld [vmem:[#allocation2 + $0x212] sm:$0xff]
  %v6862 = vld [vmem:[#allocation2 + $0x21a] sm:$0xff]
  %v6863 = vld [vmem:[#allocation2 + $0x22a] sm:$0xff]
  %v6864 = vld [vmem:[#allocation2 + $0x232] sm:$0xff]
  %v6865 = vld [vmem:[#allocation2 + $0x242] sm:$0xff]
  %v6866 = vld [vmem:[#allocation2 + $0x24a] sm:$0xff]
  %v6867 = vld [vmem:[#allocation2 + $0x25a] sm:$0xff]
  %v6868 = vld [vmem:[#allocation2 + $0x262] sm:$0xff]
  %v6869 = vld [vmem:[#allocation2 + $0x272] sm:$0xff]
  %v6870 = vld [vmem:[#allocation2 + $0x27a] sm:$0xff]
  %v6871 = vld [vmem:[#allocation2 + $0x28a] sm:$0xff]
  %v6872 = vld [vmem:[#allocation2 + $0x292] sm:$0xff]
  %v6873 = vld [vmem:[#allocation2 + $0x2a2] sm:$0xff]
  %v6874 = vld [vmem:[#allocation2 + $0x2aa] sm:$0xff]
  %v6875 = vld [vmem:[#allocation2 + $0x2ba] sm:$0xff]
  %v6876 = vld [vmem:[#allocation2 + $0x2c2] sm:$0xff]
  %v6877 = vld [vmem:[#allocation2 + $0x2d2] sm:$0xff]
  %v6878 = vld [vmem:[#allocation2 + $0x2da] sm:$0xff]
  %v6879 = vld [vmem:[#allocation2 + $0x2ea] sm:$0xff]
  %v6880 = vld [vmem:[#allocation2 + $0x2f2] sm:$0xff]
  %v6881 = vld [vmem:[#allocation2 + $0x302] sm:$0xff]
  %v6882 = vld [vmem:[#allocation2 + $0x30a] sm:$0xff]
  %v6883 = vld [vmem:[#allocation2 + $0x31a] sm:$0xff]
  %v6884 = vld [vmem:[#allocation2 + $0x322] sm:$0xff]
  %v6885 = vld [vmem:[%s207] sm:$0xff]
  %v6886 = vld [vmem:[%s207 + $0x8] sm:$0xff]
  %v6887 = vld [vmem:[%s207 + $0x18] sm:$0xff]
  %v6888 = vld [vmem:[%s207 + $0x20] sm:$0xff]
  %v6889 = vld [vmem:[%s207 + $0x30] sm:$0xff]
  %v6890 = vld [vmem:[%s207 + $0x38] sm:$0xff]
  %v6891 = vld [vmem:[%s207 + $0x48] sm:$0xff]
  %v6892 = vld [vmem:[%s207 + $0x50] sm:$0xff]
  %v6893 = vld [vmem:[%s207 + $0x60] sm:$0xff]
  %v6894 = vld [vmem:[%s207 + $0x68] sm:$0xff]
  %v6895 = vld [vmem:[%s207 + $0x78] sm:$0xff]
  %v6896 = vld [vmem:[%s207 + $0x80] sm:$0xff]
  %v6897 = vld [vmem:[%s207 + $0x90] sm:$0xff]
  %v6898 = vld [vmem:[%s207 + $0x98] sm:$0xff]
  %v6899 = vld [vmem:[%s207 + $0xa8] sm:$0xff]
  %v6900 = vld [vmem:[%s207 + $0xb0] sm:$0xff]
  %v6901 = vld [vmem:[%s207 + $0xc0] sm:$0xff]
  %v6902 = vld [vmem:[%s207 + $0xc8] sm:$0xff]
  %v6903 = vld [vmem:[%s207 + $0xd8] sm:$0xff]
  %v6904 = vld [vmem:[%s207 + $0xe0] sm:$0xff]
  %v6905 = vld [vmem:[%s207 + $0xf0] sm:$0xff]
  %v6906 = vld [vmem:[%s207 + $0xf8] sm:$0xff]
  %v6907 = vld [vmem:[%s207 + $0x108] sm:$0xff]
  %v6908 = vld [vmem:[%s207 + $0x110] sm:$0xff]
  %v6909 = vld [vmem:[%s207 + $0x120] sm:$0xff]
  %v6910 = vld [vmem:[%s207 + $0x128] sm:$0xff]
  %v6911 = vld [vmem:[%s207 + $0x138] sm:$0xff]
  %v6912 = vld [vmem:[%s207 + $0x140] sm:$0xff]
  %v6913 = vld [vmem:[%s207 + $0x150] sm:$0xff]
  %v6914 = vld [vmem:[%s207 + $0x158] sm:$0xff]
  %v6915 = vld [vmem:[%s207 + $0x168] sm:$0xff]
  %v6916 = vld [vmem:[%s207 + $0x170] sm:$0xff]
  %v6917 = vld [vmem:[%s207 + $0x1b0] sm:$0xff]
  %v6918 = vld [vmem:[%s207 + $0x1b8] sm:$0xff]
  %v6919 = vld [vmem:[%s207 + $0x1c8] sm:$0xff]
  %v6920 = vld [vmem:[%s207 + $0x1d0] sm:$0xff]
  %v6921 = vld [vmem:[%s207 + $0x1e0] sm:$0xff]
  %v6922 = vld [vmem:[%s207 + $0x1e8] sm:$0xff]
  %v6923 = vld [vmem:[%s207 + $0x1f8] sm:$0xff]
  %v6924 = vld [vmem:[%s207 + $0x200] sm:$0xff]
  %v6925 = vld [vmem:[%s207 + $0x210] sm:$0xff]
  %v6926 = vld [vmem:[%s207 + $0x218] sm:$0xff]
  %v6927 = vld [vmem:[%s207 + $0x228] sm:$0xff]
  %v6928 = vld [vmem:[%s207 + $0x230] sm:$0xff]
  %v6929 = vld [vmem:[%s207 + $0x240] sm:$0xff]
  %v6930 = vld [vmem:[%s207 + $0x248] sm:$0xff]
  %v6931 = vld [vmem:[%s207 + $0x258] sm:$0xff]
  %v6932 = vld [vmem:[%s207 + $0x260] sm:$0xff]
  %v6933 = vld [vmem:[%s207 + $0x270] sm:$0xff]
  %v6934 = vld [vmem:[%s207 + $0x278] sm:$0xff]
  %v6935 = vld [vmem:[%s207 + $0x288] sm:$0xff]
  %v6936 = vld [vmem:[%s207 + $0x290] sm:$0xff]
  %v6937 = vld [vmem:[%s207 + $0x2a0] sm:$0xff]
  %v6938 = vld [vmem:[%s207 + $0x2a8] sm:$0xff]
  %v6939 = vld [vmem:[%s207 + $0x2b8] sm:$0xff]
  %v6940 = vld [vmem:[%s207 + $0x2c0] sm:$0xff]
  %v6941 = vld [vmem:[%s207 + $0x2d0] sm:$0xff]
  %v6942 = vld [vmem:[%s207 + $0x2d8] sm:$0xff]
  %v6943 = vld [vmem:[%s207 + $0x2e8] sm:$0xff]
  %v6944 = vld [vmem:[%s207 + $0x2f0] sm:$0xff]
  %v6945 = vld [vmem:[%s207 + $0x300] sm:$0xff]
  %v6946 = vld [vmem:[%s207 + $0x308] sm:$0xff]
  %v6947 = vld [vmem:[%s207 + $0x318] sm:$0xff]
  %v6948 = vld [vmem:[%s207 + $0x320] sm:$0xff]
  %v6949 = vld [vmem:[%s207 + $0x1] sm:$0xff]
  %v6950 = vld [vmem:[%s207 + $0x9] sm:$0xff]
  %v6951 = vld [vmem:[%s207 + $0x19] sm:$0xff]
  %v6952 = vld [vmem:[%s207 + $0x21] sm:$0xff]
  %v6953 = vld [vmem:[%s207 + $0x31] sm:$0xff]
  %v6954 = vld [vmem:[%s207 + $0x39] sm:$0xff]
  %v6955 = vld [vmem:[%s207 + $0x49] sm:$0xff]
  %v6956 = vld [vmem:[%s207 + $0x51] sm:$0xff]
  %v6957 = vld [vmem:[%s207 + $0x61] sm:$0xff]
  %v6958 = vld [vmem:[%s207 + $0x69] sm:$0xff]
  %v6959 = vld [vmem:[%s207 + $0x79] sm:$0xff]
  %v6960 = vld [vmem:[%s207 + $0x81] sm:$0xff]
  %v6961 = vld [vmem:[%s207 + $0x91] sm:$0xff]
  %v6962 = vld [vmem:[%s207 + $0x99] sm:$0xff]
  %v6963 = vld [vmem:[%s207 + $0xa9] sm:$0xff]
  %v6964 = vld [vmem:[%s207 + $0xb1] sm:$0xff]
  %v6965 = vld [vmem:[%s207 + $0xc1] sm:$0xff]
  %v6966 = vld [vmem:[%s207 + $0xc9] sm:$0xff]
  %v6967 = vld [vmem:[%s207 + $0xd9] sm:$0xff]
  %v6968 = vld [vmem:[%s207 + $0xe1] sm:$0xff]
  %v6969 = vld [vmem:[%s207 + $0xf1] sm:$0xff]
  %v6970 = vld [vmem:[%s207 + $0xf9] sm:$0xff]
  %v6971 = vld [vmem:[%s207 + $0x109] sm:$0xff]
  %v6972 = vld [vmem:[%s207 + $0x111] sm:$0xff]
  %v6973 = vld [vmem:[%s207 + $0x121] sm:$0xff]
  %v6974 = vld [vmem:[%s207 + $0x129] sm:$0xff]
  %v6975 = vld [vmem:[%s207 + $0x139] sm:$0xff]
  %v6976 = vld [vmem:[%s207 + $0x141] sm:$0xff]
  %v6977 = vld [vmem:[%s207 + $0x151] sm:$0xff]
  %v6978 = vld [vmem:[%s207 + $0x159] sm:$0xff]
  %v6979 = vld [vmem:[%s207 + $0x169] sm:$0xff]
  %v6980 = vld [vmem:[%s207 + $0x171] sm:$0xff]
  %v6981 = vld [vmem:[%s207 + $0x1b1] sm:$0xff]
  %v6982 = vld [vmem:[%s207 + $0x1b9] sm:$0xff]
  %v6983 = vld [vmem:[%s207 + $0x1c9] sm:$0xff]
  %v6984 = vld [vmem:[%s207 + $0x1d1] sm:$0xff]
  %v6985 = vld [vmem:[%s207 + $0x1e1] sm:$0xff]
  %v6986 = vld [vmem:[%s207 + $0x1e9] sm:$0xff]
  %v6987 = vld [vmem:[%s207 + $0x1f9] sm:$0xff]
  %v6988 = vld [vmem:[%s207 + $0x201] sm:$0xff]
  %v6989 = vld [vmem:[%s207 + $0x211] sm:$0xff]
  %v6990 = vld [vmem:[%s207 + $0x219] sm:$0xff]
  %v6991 = vld [vmem:[%s207 + $0x229] sm:$0xff]
  %v6992 = vld [vmem:[%s207 + $0x231] sm:$0xff]
  %v6993 = vld [vmem:[%s207 + $0x241] sm:$0xff]
  %v6994 = vld [vmem:[%s207 + $0x249] sm:$0xff]
  %v6995 = vld [vmem:[%s207 + $0x259] sm:$0xff]
  %v6996 = vld [vmem:[%s207 + $0x261] sm:$0xff]
  %v6997 = vld [vmem:[%s207 + $0x271] sm:$0xff]
  %v6998 = vld [vmem:[%s207 + $0x279] sm:$0xff]
  %v6999 = vld [vmem:[%s207 + $0x289] sm:$0xff]
  %v7000 = vld [vmem:[%s207 + $0x291] sm:$0xff]
  %v7001 = vld [vmem:[%s207 + $0x2a1] sm:$0xff]
  %v7002 = vld [vmem:[%s207 + $0x2a9] sm:$0xff]
  %v7003 = vld [vmem:[%s207 + $0x2b9] sm:$0xff]
  %v7004 = vld [vmem:[%s207 + $0x2c1] sm:$0xff]
  %v7005 = vld [vmem:[%s207 + $0x2d1] sm:$0xff]
  %v7006 = vld [vmem:[%s207 + $0x2d9] sm:$0xff]
  %v7007 = vld [vmem:[%s207 + $0x2e9] sm:$0xff]
  %v7008 = vld [vmem:[%s207 + $0x2f1] sm:$0xff]
  %v7009 = vld [vmem:[%s207 + $0x301] sm:$0xff]
  %v7010 = vld [vmem:[%s207 + $0x309] sm:$0xff]
  %v7011 = vld [vmem:[%s207 + $0x319] sm:$0xff]
  %v7012 = vld [vmem:[%s207 + $0x321] sm:$0xff]
  %v7013 = vld [vmem:[%s207 + $0x2] sm:$0xff]
  %v7014 = vld [vmem:[%s207 + $0xa] sm:$0xff]
  %v7015 = vld [vmem:[%s207 + $0x1a] sm:$0xff]
  %v7016 = vld [vmem:[%s207 + $0x22] sm:$0xff]
  %v7017 = vld [vmem:[%s207 + $0x32] sm:$0xff]
  %v7018 = vld [vmem:[%s207 + $0x3a] sm:$0xff]
  %v7019 = vld [vmem:[%s207 + $0x4a] sm:$0xff]
  %v7020 = vld [vmem:[%s207 + $0x52] sm:$0xff]
  %v7021 = vld [vmem:[%s207 + $0x62] sm:$0xff]
  %v7022 = vld [vmem:[%s207 + $0x6a] sm:$0xff]
  %v7023 = vld [vmem:[%s207 + $0x7a] sm:$0xff]
  %v7024 = vld [vmem:[%s207 + $0x82] sm:$0xff]
  %v7025 = vld [vmem:[%s207 + $0x92] sm:$0xff]
  %v7026 = vld [vmem:[%s207 + $0x9a] sm:$0xff]
  %v7027 = vld [vmem:[%s207 + $0xaa] sm:$0xff]
  %v7028 = vld [vmem:[%s207 + $0xb2] sm:$0xff]
  %v7029 = vld [vmem:[%s207 + $0xc2] sm:$0xff]
  %v7030 = vld [vmem:[%s207 + $0xca] sm:$0xff]
  %v7031 = vld [vmem:[%s207 + $0xda] sm:$0xff]
  %v7032 = vld [vmem:[%s207 + $0xe2] sm:$0xff]
  %v7033 = vld [vmem:[%s207 + $0xf2] sm:$0xff]
  %v7034 = vld [vmem:[%s207 + $0xfa] sm:$0xff]
  %v7035 = vld [vmem:[%s207 + $0x10a] sm:$0xff]
  %v7036 = vld [vmem:[%s207 + $0x112] sm:$0xff]
  %v7037 = vld [vmem:[%s207 + $0x122] sm:$0xff]
  %v7038 = vld [vmem:[%s207 + $0x12a] sm:$0xff]
  %v7039 = vld [vmem:[%s207 + $0x13a] sm:$0xff]
  %v7040 = vld [vmem:[%s207 + $0x142] sm:$0xff]
  %v7041 = vld [vmem:[%s207 + $0x152] sm:$0xff]
  %v7042 = vld [vmem:[%s207 + $0x15a] sm:$0xff]
  %v7043 = vld [vmem:[%s207 + $0x16a] sm:$0xff]
  %v7044 = vld [vmem:[%s207 + $0x172] sm:$0xff]
  %v7045 = vld [vmem:[%s207 + $0x1b2] sm:$0xff]
  %v7046 = vld [vmem:[%s207 + $0x1ba] sm:$0xff]
  %v7047 = vld [vmem:[%s207 + $0x1ca] sm:$0xff]
  %v7048 = vld [vmem:[%s207 + $0x1d2] sm:$0xff]
  %v7049 = vld [vmem:[%s207 + $0x1e2] sm:$0xff]
  %v7050 = vld [vmem:[%s207 + $0x1ea] sm:$0xff]
  %v7051 = vld [vmem:[%s207 + $0x1fa] sm:$0xff]
  %v7052 = vld [vmem:[%s207 + $0x202] sm:$0xff]
  %v7053 = vld [vmem:[%s207 + $0x212] sm:$0xff]
  %v7054 = vld [vmem:[%s207 + $0x21a] sm:$0xff]
  %v7055 = vld [vmem:[%s207 + $0x22a] sm:$0xff]
  %v7056 = vld [vmem:[%s207 + $0x232] sm:$0xff]
  %v7057 = vld [vmem:[%s207 + $0x242] sm:$0xff]
  %v7058 = vld [vmem:[%s207 + $0x24a] sm:$0xff]
  %v7059 = vld [vmem:[%s207 + $0x25a] sm:$0xff]
  %v7060 = vld [vmem:[%s207 + $0x262] sm:$0xff]
  %v7061 = vld [vmem:[%s207 + $0x272] sm:$0xff]
  %v7062 = vld [vmem:[%s207 + $0x27a] sm:$0xff]
  %v7063 = vld [vmem:[%s207 + $0x28a] sm:$0xff]
  %v7064 = vld [vmem:[%s207 + $0x292] sm:$0xff]
  %v7065 = vld [vmem:[%s207 + $0x2a2] sm:$0xff]
  %v7066 = vld [vmem:[%s207 + $0x2aa] sm:$0xff]
  %v7067 = vld [vmem:[%s207 + $0x2ba] sm:$0xff]
  %v7068 = vld [vmem:[%s207 + $0x2c2] sm:$0xff]
  %v7069 = vld [vmem:[%s207 + $0x2d2] sm:$0xff]
  %v7070 = vld [vmem:[%s207 + $0x2da] sm:$0xff]
  %v7071 = vld [vmem:[%s207 + $0x2ea] sm:$0xff]
  %v7072 = vld [vmem:[%s207 + $0x2f2] sm:$0xff]
  %v7073 = vld [vmem:[%s207 + $0x302] sm:$0xff]
  %v7074 = vld [vmem:[%s207 + $0x30a] sm:$0xff]
  %v7075 = vld [vmem:[%s207 + $0x31a] sm:$0xff]
  %v7076 = vld [vmem:[%s207 + $0x322] sm:$0xff]
  %v7077 = vld [vmem:[%s656] sm:$0xff]
  %v7078 = vld [vmem:[%s656 + $0x8] sm:$0xff]
  %v7079 = vld [vmem:[%s656 + $0x18] sm:$0xff]
  %v7080 = vld [vmem:[%s656 + $0x20] sm:$0xff]
  %v7081 = vld [vmem:[%s656 + $0x30] sm:$0xff]
  %v7082 = vld [vmem:[%s656 + $0x38] sm:$0xff]
  %v7083 = vld [vmem:[%s656 + $0x48] sm:$0xff]
  %v7084 = vld [vmem:[%s656 + $0x50] sm:$0xff]
  %v7085 = vld [vmem:[%s656 + $0x60] sm:$0xff]
  %v7086 = vld [vmem:[%s656 + $0x68] sm:$0xff]
  %v7087 = vld [vmem:[%s656 + $0x78] sm:$0xff]
  %v7088 = vld [vmem:[%s656 + $0x80] sm:$0xff]
  %v7089 = vld [vmem:[%s656 + $0x90] sm:$0xff]
  %v7090 = vld [vmem:[%s656 + $0x98] sm:$0xff]
  %v7091 = vld [vmem:[%s656 + $0xa8] sm:$0xff]
  %v7092 = vld [vmem:[%s656 + $0xb0] sm:$0xff]
  %v7093 = vld [vmem:[%s656 + $0xc0] sm:$0xff]
  %v7094 = vld [vmem:[%s656 + $0xc8] sm:$0xff]
  %v7095 = vld [vmem:[%s656 + $0xd8] sm:$0xff]
  %v7096 = vld [vmem:[%s656 + $0xe0] sm:$0xff]
  %v7097 = vld [vmem:[%s656 + $0xf0] sm:$0xff]
  %v7098 = vld [vmem:[%s656 + $0xf8] sm:$0xff]
  %v7099 = vld [vmem:[%s656 + $0x108] sm:$0xff]
  %v7100 = vld [vmem:[%s656 + $0x110] sm:$0xff]
  %v7101 = vld [vmem:[%s656 + $0x120] sm:$0xff]
  %v7102 = vld [vmem:[%s656 + $0x128] sm:$0xff]
  %v7103 = vld [vmem:[%s656 + $0x138] sm:$0xff]
  %v7104 = vld [vmem:[%s656 + $0x140] sm:$0xff]
  %v7105 = vld [vmem:[%s656 + $0x150] sm:$0xff]
  %v7106 = vld [vmem:[%s656 + $0x158] sm:$0xff]
  %v7107 = vld [vmem:[%s656 + $0x168] sm:$0xff]
  %v7108 = vld [vmem:[%s656 + $0x170] sm:$0xff]
  %v7109 = vld [vmem:[%s656 + $0x1b0] sm:$0xff]
  %v7110 = vld [vmem:[%s656 + $0x1b8] sm:$0xff]
  %v7111 = vld [vmem:[%s656 + $0x1c8] sm:$0xff]
  %v7112 = vld [vmem:[%s656 + $0x1d0] sm:$0xff]
  %v7113 = vld [vmem:[%s656 + $0x1e0] sm:$0xff]
  %v7114 = vld [vmem:[%s656 + $0x1e8] sm:$0xff]
  %v7115 = vld [vmem:[%s656 + $0x1f8] sm:$0xff]
  %v7116 = vld [vmem:[%s656 + $0x200] sm:$0xff]
  %v7117 = vld [vmem:[%s656 + $0x210] sm:$0xff]
  %v7118 = vld [vmem:[%s656 + $0x218] sm:$0xff]
  %v7119 = vld [vmem:[%s656 + $0x228] sm:$0xff]
  %v7120 = vld [vmem:[%s656 + $0x230] sm:$0xff]
  %v7121 = vld [vmem:[%s656 + $0x240] sm:$0xff]
  %v7122 = vld [vmem:[%s656 + $0x248] sm:$0xff]
  %v7123 = vld [vmem:[%s656 + $0x258] sm:$0xff]
  %v7124 = vld [vmem:[%s656 + $0x260] sm:$0xff]
  %v7125 = vld [vmem:[%s656 + $0x270] sm:$0xff]
  %v7126 = vld [vmem:[%s656 + $0x278] sm:$0xff]
  %v7127 = vld [vmem:[%s656 + $0x288] sm:$0xff]
  %v7128 = vld [vmem:[%s656 + $0x290] sm:$0xff]
  %v7129 = vld [vmem:[%s656 + $0x2a0] sm:$0xff]
  %v7130 = vld [vmem:[%s656 + $0x2a8] sm:$0xff]
  %v7131 = vld [vmem:[%s656 + $0x2b8] sm:$0xff]
  %v7132 = vld [vmem:[%s656 + $0x2c0] sm:$0xff]
  %v7133 = vld [vmem:[%s656 + $0x2d0] sm:$0xff]
  %v7134 = vld [vmem:[%s656 + $0x2d8] sm:$0xff]
  %v7135 = vld [vmem:[%s656 + $0x2e8] sm:$0xff]
  %v7136 = vld [vmem:[%s656 + $0x2f0] sm:$0xff]
  %v7137 = vld [vmem:[%s656 + $0x300] sm:$0xff]
  %v7138 = vld [vmem:[%s656 + $0x308] sm:$0xff]
  %v7139 = vld [vmem:[%s656 + $0x318] sm:$0xff]
  %v7140 = vld [vmem:[%s656 + $0x320] sm:$0xff]
  %v7141 = vld [vmem:[%s656 + $0x1] sm:$0xff]
  %v7142 = vld [vmem:[%s656 + $0x9] sm:$0xff]
  %v7143 = vld [vmem:[%s656 + $0x19] sm:$0xff]
  %v7144 = vld [vmem:[%s656 + $0x21] sm:$0xff]
  %v7145 = vld [vmem:[%s656 + $0x31] sm:$0xff]
  %v7146 = vld [vmem:[%s656 + $0x39] sm:$0xff]
  %v7147 = vld [vmem:[%s656 + $0x49] sm:$0xff]
  %v7148 = vld [vmem:[%s656 + $0x51] sm:$0xff]
  %v7149 = vld [vmem:[%s656 + $0x61] sm:$0xff]
  %v7150 = vld [vmem:[%s656 + $0x69] sm:$0xff]
  %v7151 = vld [vmem:[%s656 + $0x79] sm:$0xff]
  %v7152 = vld [vmem:[%s656 + $0x81] sm:$0xff]
  %v7153 = vld [vmem:[%s656 + $0x91] sm:$0xff]
  %v7154 = vld [vmem:[%s656 + $0x99] sm:$0xff]
  %v7155 = vld [vmem:[%s656 + $0xa9] sm:$0xff]
  %v7156 = vld [vmem:[%s656 + $0xb1] sm:$0xff]
  %v7157 = vld [vmem:[%s656 + $0xc1] sm:$0xff]
  %v7158 = vld [vmem:[%s656 + $0xc9] sm:$0xff]
  %v7159 = vld [vmem:[%s656 + $0xd9] sm:$0xff]
  %v7160 = vld [vmem:[%s656 + $0xe1] sm:$0xff]
  %v7161 = vld [vmem:[%s656 + $0xf1] sm:$0xff]
  %v7162 = vld [vmem:[%s656 + $0xf9] sm:$0xff]
  %v7163 = vld [vmem:[%s656 + $0x109] sm:$0xff]
  %v7164 = vld [vmem:[%s656 + $0x111] sm:$0xff]
  %v7165 = vld [vmem:[%s656 + $0x121] sm:$0xff]
  %v7166 = vld [vmem:[%s656 + $0x129] sm:$0xff]
  %v7167 = vld [vmem:[%s656 + $0x139] sm:$0xff]
  %v7168 = vld [vmem:[%s656 + $0x141] sm:$0xff]
  %v7169 = vld [vmem:[%s656 + $0x151] sm:$0xff]
  %v7170 = vld [vmem:[%s656 + $0x159] sm:$0xff]
  %v7171 = vld [vmem:[%s656 + $0x169] sm:$0xff]
  %v7172 = vld [vmem:[%s656 + $0x171] sm:$0xff]
  %v7173 = vld [vmem:[%s656 + $0x1b1] sm:$0xff]
  %v7174 = vld [vmem:[%s656 + $0x1b9] sm:$0xff]
  %v7175 = vld [vmem:[%s656 + $0x1c9] sm:$0xff]
  %v7176 = vld [vmem:[%s656 + $0x1d1] sm:$0xff]
  %v7177 = vld [vmem:[%s656 + $0x1e1] sm:$0xff]
  %v7178 = vld [vmem:[%s656 + $0x1e9] sm:$0xff]
  %v7179 = vld [vmem:[%s656 + $0x1f9] sm:$0xff]
  %v7180 = vld [vmem:[%s656 + $0x201] sm:$0xff]
  %v7181 = vld [vmem:[%s656 + $0x211] sm:$0xff]
  %v7182 = vld [vmem:[%s656 + $0x219] sm:$0xff]
  %v7183 = vld [vmem:[%s656 + $0x229] sm:$0xff]
  %v7184 = vld [vmem:[%s656 + $0x231] sm:$0xff]
  %v7185 = vld [vmem:[%s656 + $0x241] sm:$0xff]
  %v7186 = vld [vmem:[%s656 + $0x249] sm:$0xff]
  %v7187 = vld [vmem:[%s656 + $0x259] sm:$0xff]
  %v7188 = vld [vmem:[%s656 + $0x261] sm:$0xff]
  %v7189 = vld [vmem:[%s656 + $0x271] sm:$0xff]
  %v7190 = vld [vmem:[%s656 + $0x279] sm:$0xff]
  %v7191 = vld [vmem:[%s656 + $0x289] sm:$0xff]
  %v7192 = vld [vmem:[%s656 + $0x291] sm:$0xff]
  %v7193 = vld [vmem:[%s656 + $0x2a1] sm:$0xff]
  %v7194 = vld [vmem:[%s656 + $0x2a9] sm:$0xff]
  %v7195 = vld [vmem:[%s656 + $0x2b9] sm:$0xff]
  %v7196 = vld [vmem:[%s656 + $0x2c1] sm:$0xff]
  %v7197 = vld [vmem:[%s656 + $0x2d1] sm:$0xff]
  %v7198 = vld [vmem:[%s656 + $0x2d9] sm:$0xff]
  %v7199 = vld [vmem:[%s656 + $0x2e9] sm:$0xff]
  %v7200 = vld [vmem:[%s656 + $0x2f1] sm:$0xff]
  %v7201 = vld [vmem:[%s656 + $0x301] sm:$0xff]
  %v7202 = vld [vmem:[%s656 + $0x309] sm:$0xff]
  %v7203 = vld [vmem:[%s656 + $0x319] sm:$0xff]
  %v7204 = vld [vmem:[%s656 + $0x321] sm:$0xff]
  %v7205 = vld [vmem:[%s656 + $0x2] sm:$0xff]
  %v7206 = vld [vmem:[%s656 + $0xa] sm:$0xff]
  %v7207 = vld [vmem:[%s656 + $0x1a] sm:$0xff]
  %v7208 = vld [vmem:[%s656 + $0x22] sm:$0xff]
  %v7209 = vld [vmem:[%s656 + $0x32] sm:$0xff]
  %v7210 = vld [vmem:[%s656 + $0x3a] sm:$0xff]
  %v7211 = vld [vmem:[%s656 + $0x4a] sm:$0xff]
  %v7212 = vld [vmem:[%s656 + $0x52] sm:$0xff]
  %v7213 = vld [vmem:[%s656 + $0x62] sm:$0xff]
  %v7214 = vld [vmem:[%s656 + $0x6a] sm:$0xff]
  %v7215 = vld [vmem:[%s656 + $0x7a] sm:$0xff]
  %v7216 = vld [vmem:[%s656 + $0x82] sm:$0xff]
  %v7217 = vld [vmem:[%s656 + $0x92] sm:$0xff]
  %v7218 = vld [vmem:[%s656 + $0x9a] sm:$0xff]
  %v7219 = vld [vmem:[%s656 + $0xaa] sm:$0xff]
  %v7220 = vld [vmem:[%s656 + $0xb2] sm:$0xff]
  %v7221 = vld [vmem:[%s656 + $0xc2] sm:$0xff]
  %v7222 = vld [vmem:[%s656 + $0xca] sm:$0xff]
  %v7223 = vld [vmem:[%s656 + $0xda] sm:$0xff]
  %v7224 = vld [vmem:[%s656 + $0xe2] sm:$0xff]
  %v7225 = vld [vmem:[%s656 + $0xf2] sm:$0xff]
  %v7226 = vld [vmem:[%s656 + $0xfa] sm:$0xff]
  %v7227 = vld [vmem:[%s656 + $0x10a] sm:$0xff]
  %v7228 = vld [vmem:[%s656 + $0x112] sm:$0xff]
  %v7229 = vld [vmem:[%s656 + $0x122] sm:$0xff]
  %v7230 = vld [vmem:[%s656 + $0x12a] sm:$0xff]
  %v7231 = vld [vmem:[%s656 + $0x13a] sm:$0xff]
  %v7232 = vld [vmem:[%s656 + $0x142] sm:$0xff]
  %v7233 = vld [vmem:[%s656 + $0x152] sm:$0xff]
  %v7234 = vld [vmem:[%s656 + $0x15a] sm:$0xff]
  %v7235 = vld [vmem:[%s656 + $0x16a] sm:$0xff]
  %v7236 = vld [vmem:[%s656 + $0x172] sm:$0xff]
  %v7237 = vld [vmem:[%s656 + $0x1b2] sm:$0xff]
  %v7238 = vld [vmem:[%s656 + $0x1ba] sm:$0xff]
  %v7239 = vld [vmem:[%s656 + $0x1ca] sm:$0xff]
  %v7240 = vld [vmem:[%s656 + $0x1d2] sm:$0xff]
  %v7241 = vld [vmem:[%s656 + $0x1e2] sm:$0xff]
  %v7242 = vld [vmem:[%s656 + $0x1ea] sm:$0xff]
  %v7243 = vld [vmem:[%s656 + $0x1fa] sm:$0xff]
  %v7244 = vld [vmem:[%s656 + $0x202] sm:$0xff]
  %v7245 = vld [vmem:[%s656 + $0x212] sm:$0xff]
  %v7246 = vld [vmem:[%s656 + $0x21a] sm:$0xff]
  %v7247 = vld [vmem:[%s656 + $0x22a] sm:$0xff]
  %v7248 = vld [vmem:[%s656 + $0x232] sm:$0xff]
  %v7249 = vld [vmem:[%s656 + $0x242] sm:$0xff]
  %v7250 = vld [vmem:[%s656 + $0x24a] sm:$0xff]
  %v7251 = vld [vmem:[%s656 + $0x25a] sm:$0xff]
  %v7252 = vld [vmem:[%s656 + $0x262] sm:$0xff]
  %v7253 = vld [vmem:[%s656 + $0x272] sm:$0xff]
  %v7254 = vld [vmem:[%s656 + $0x27a] sm:$0xff]
  %v7255 = vld [vmem:[%s656 + $0x28a] sm:$0xff]
  %v7256 = vld [vmem:[%s656 + $0x292] sm:$0xff]
  %v7257 = vld [vmem:[%s656 + $0x2a2] sm:$0xff]
  %v7258 = vld [vmem:[%s656 + $0x2aa] sm:$0xff]
  %v7259 = vld [vmem:[%s656 + $0x2ba] sm:$0xff]
  %v7260 = vld [vmem:[%s656 + $0x2c2] sm:$0xff]
  %v7261 = vld [vmem:[%s656 + $0x2d2] sm:$0xff]
  %v7262 = vld [vmem:[%s656 + $0x2da] sm:$0xff]
  %v7263 = vld [vmem:[%s656 + $0x2ea] sm:$0xff]
  %v7264 = vld [vmem:[%s656 + $0x2f2] sm:$0xff]
  %v7265 = vld [vmem:[%s656 + $0x302] sm:$0xff]
  %v7266 = vld [vmem:[%s656 + $0x30a] sm:$0xff]
  %v7267 = vld [vmem:[%s656 + $0x31a] sm:$0xff]
  %v7268 = vld [vmem:[%s656 + $0x322] sm:$0xff]
  %v7269 = vld [vmem:[%s7] sm:$0xff]
  %v7270 = vld [vmem:[%s7 + $0x8] sm:$0xff]
  %v7271 = vld [vmem:[%s7 + $0x10] sm:$0xff]
  %v7272 = vld [vmem:[%s7 + $0x18] sm:$0xff]
  %v7273 = vld [vmem:[%s7 + $0x20] sm:$0xff]
  %v7274 = vld [vmem:[%s7 + $0x28] sm:$0xff]
  %v7275 = vld [vmem:[%s7 + $0x30] sm:$0xff]
  %v7276 = vld [vmem:[%s7 + $0x38] sm:$0xff]
  %v7277 = vld [vmem:[%s7 + $0x40] sm:$0xff]
  %v7278 = vld [vmem:[%s7 + $0x48] sm:$0xff]
  %v7279 = vld [vmem:[%s7 + $0x50] sm:$0xff]
  %v7280 = vld [vmem:[%s7 + $0x58] sm:$0xff]
  %v7281 = vld [vmem:[%s7 + $0x60] sm:$0xff]
  %v7282 = vld [vmem:[%s7 + $0x68] sm:$0xff]
  %v7283 = vld [vmem:[%s7 + $0x70] sm:$0xff]
  %v7284 = vld [vmem:[%s7 + $0x78] sm:$0xff]
  %v7285 = vld [vmem:[%s7 + $0x80] sm:$0xff]
  %v7286 = vld [vmem:[%s7 + $0x88] sm:$0xff]
  %v7287 = vld [vmem:[%s7 + $0x90] sm:$0xff]
  %v7288 = vld [vmem:[%s7 + $0x98] sm:$0xff]
  %v7289 = vld [vmem:[%s7 + $0xa0] sm:$0xff]
  %v7290 = vld [vmem:[%s7 + $0xa8] sm:$0xff]
  %v7291 = vld [vmem:[%s7 + $0xb0] sm:$0xff]
  %v7292 = vld [vmem:[%s7 + $0xb8] sm:$0xff]
  %v7293 = vld [vmem:[%s7 + $0xc0] sm:$0xff]
  %v7294 = vld [vmem:[%s7 + $0xc8] sm:$0xff]
  %v7295 = vld [vmem:[%s7 + $0xd0] sm:$0xff]
  %v7296 = vld [vmem:[%s7 + $0xd8] sm:$0xff]
  %v7297 = vld [vmem:[%s7 + $0xe0] sm:$0xff]
  %v7298 = vld [vmem:[%s7 + $0xe8] sm:$0xff]
  %v7299 = vld [vmem:[%s7 + $0xf0] sm:$0xff]
  %v7300 = vld [vmem:[%s7 + $0xf8] sm:$0xff]
  %v7301 = vld [vmem:[%s7 + $0x100] sm:$0xff]
  %v7302 = vld [vmem:[%s7 + $0x108] sm:$0xff]
  %v7303 = vld [vmem:[%s7 + $0x110] sm:$0xff]
  %v7304 = vld [vmem:[%s7 + $0x118] sm:$0xff]
  %v7305 = vld [vmem:[%s7 + $0x120] sm:$0xff]
  %v7306 = vld [vmem:[%s7 + $0x128] sm:$0xff]
  %v7307 = vld [vmem:[%s7 + $0x130] sm:$0xff]
  %v7308 = vld [vmem:[%s7 + $0x138] sm:$0xff]
  %v7309 = vld [vmem:[%s7 + $0x140] sm:$0xff]
  %v7310 = vld [vmem:[%s7 + $0x148] sm:$0xff]
  %v7311 = vld [vmem:[%s7 + $0x150] sm:$0xff]
  %v7312 = vld [vmem:[%s7 + $0x158] sm:$0xff]
  %v7313 = vld [vmem:[%s7 + $0x160] sm:$0xff]
  %v7314 = vld [vmem:[%s7 + $0x168] sm:$0xff]
  %v7315 = vld [vmem:[%s7 + $0x170] sm:$0xff]
  %v7316 = vld [vmem:[%s7 + $0x178] sm:$0xff]
  %v7317 = vld [vmem:[%s7 + $0x180] sm:$0xff]
  %v7318 = vld [vmem:[%s7 + $0x188] sm:$0xff]
  %v7319 = vld [vmem:[%s7 + $0x190] sm:$0xff]
  %v7320 = vld [vmem:[%s7 + $0x198] sm:$0xff]
  %v7321 = vld [vmem:[%s7 + $0x1a0] sm:$0xff]
  %v7322 = vld [vmem:[%s7 + $0x1a8] sm:$0xff]
  %v7323 = vld [vmem:[%s7 + $0x1b0] sm:$0xff]
  %v7324 = vld [vmem:[%s7 + $0x1b8] sm:$0xff]
  %v7325 = vld [vmem:[%s7 + $0x1c0] sm:$0xff]
  %v7326 = vld [vmem:[%s7 + $0x1c8] sm:$0xff]
  %v7327 = vld [vmem:[%s7 + $0x1d0] sm:$0xff]
  %v7328 = vld [vmem:[%s7 + $0x1d8] sm:$0xff]
  %v7329 = vld [vmem:[%s7 + $0x1e0] sm:$0xff]
  %v7330 = vld [vmem:[%s7 + $0x1e8] sm:$0xff]
  %v7331 = vld [vmem:[%s7 + $0x1f0] sm:$0xff]
  %v7332 = vld [vmem:[%s7 + $0x1f8] sm:$0xff]
  %v7333 = vld [vmem:[%s7 + $0x200] sm:$0xff]
  %v7334 = vld [vmem:[%s7 + $0x208] sm:$0xff]
  %v7335 = vld [vmem:[%s7 + $0x210] sm:$0xff]
  %v7336 = vld [vmem:[%s7 + $0x218] sm:$0xff]
  %v7337 = vld [vmem:[%s7 + $0x220] sm:$0xff]
  %v7338 = vld [vmem:[%s7 + $0x228] sm:$0xff]
  %v7339 = vld [vmem:[%s7 + $0x230] sm:$0xff]
  %v7340 = vld [vmem:[%s7 + $0x238] sm:$0xff]
  %v7341 = vld [vmem:[%s7 + $0x240] sm:$0xff]
  %v7342 = vld [vmem:[%s7 + $0x248] sm:$0xff]
  %v7343 = vld [vmem:[%s7 + $0x250] sm:$0xff]
  %v7344 = vld [vmem:[%s7 + $0x258] sm:$0xff]
  %v7345 = vld [vmem:[%s7 + $0x260] sm:$0xff]
  %v7346 = vld [vmem:[%s7 + $0x268] sm:$0xff]
  %v7347 = vld [vmem:[%s7 + $0x270] sm:$0xff]
  %v7348 = vld [vmem:[%s7 + $0x278] sm:$0xff]
  %v7349 = vld [vmem:[%s7 + $0x280] sm:$0xff]
  %v7350 = vld [vmem:[%s7 + $0x288] sm:$0xff]
  %v7351 = vld [vmem:[%s7 + $0x290] sm:$0xff]
  %v7352 = vld [vmem:[%s7 + $0x298] sm:$0xff]
  %v7353 = vld [vmem:[%s7 + $0x2a0] sm:$0xff]
  %v7354 = vld [vmem:[%s7 + $0x2a8] sm:$0xff]
  %v7355 = vld [vmem:[%s7 + $0x2b0] sm:$0xff]
  %v7356 = vld [vmem:[%s7 + $0x2b8] sm:$0xff]
  %v7357 = vld [vmem:[%s7 + $0x2c0] sm:$0xff]
  %v7358 = vld [vmem:[%s7 + $0x2c8] sm:$0xff]
  %v7359 = vld [vmem:[%s7 + $0x2d0] sm:$0xff]
  %v7360 = vld [vmem:[%s7 + $0x2d8] sm:$0xff]
  %v7361 = vld [vmem:[%s7 + $0x2e0] sm:$0xff]
  %v7362 = vld [vmem:[%s7 + $0x2e8] sm:$0xff]
  %v7363 = vld [vmem:[%s7 + $0x2f0] sm:$0xff]
  %v7364 = vld [vmem:[%s7 + $0x2f8] sm:$0xff]
  %v7365 = vld [vmem:[%s7 + $0x300] sm:$0xff]
  %v7366 = vld [vmem:[%s7 + $0x308] sm:$0xff]
  %v7367 = vld [vmem:[%s7 + $0x310] sm:$0xff]
  %v7368 = vld [vmem:[%s7 + $0x318] sm:$0xff]
  %v7369 = vld [vmem:[%s7 + $0x320] sm:$0xff]
  %v7370 = vld [vmem:[%s7 + $0x328] sm:$0xff]
  %v7371 = vld [vmem:[%s7 + $0x330] sm:$0xff]
  %v7372 = vld [vmem:[%s7 + $0x338] sm:$0xff]
  %v7373 = vld [vmem:[%s7 + $0x340] sm:$0xff]
  %v7374 = vld [vmem:[%s7 + $0x348] sm:$0xff]
  %v7375 = vld [vmem:[%s7 + $0x350] sm:$0xff]
  %v7376 = vld [vmem:[%s7 + $0x358] sm:$0xff]
  %v7377 = vld [vmem:[%s7 + $0x360] sm:$0xff]
  %v7378 = vld [vmem:[%s7 + $0x368] sm:$0xff]
  %v7379 = vld [vmem:[%s7 + $0x370] sm:$0xff]
  %v7380 = vld [vmem:[%s7 + $0x378] sm:$0xff]
  %v7381 = vld [vmem:[%s7 + $0x380] sm:$0xff]
  %v7382 = vld [vmem:[%s7 + $0x388] sm:$0xff]
  %v7383 = vld [vmem:[%s7 + $0x390] sm:$0xff]
  %v7384 = vld [vmem:[%s7 + $0x398] sm:$0xff]
  %v7385 = vld [vmem:[%s7 + $0x3a0] sm:$0xff]
  %v7386 = vld [vmem:[%s7 + $0x3a8] sm:$0xff]
  %v7387 = vld [vmem:[%s7 + $0x3b0] sm:$0xff]
  %v7388 = vld [vmem:[%s7 + $0x3b8] sm:$0xff]
  %v7389 = vld [vmem:[%s7 + $0x3c0] sm:$0xff]
  %v7390 = vld [vmem:[%s7 + $0x3c8] sm:$0xff]
  %v7391 = vld [vmem:[%s7 + $0x3d0] sm:$0xff]
  %v7392 = vld [vmem:[%s7 + $0x3d8] sm:$0xff]
  %v7393 = vld [vmem:[%s7 + $0x3e0] sm:$0xff]
  %v7394 = vld [vmem:[%s7 + $0x3e8] sm:$0xff]
  %v7395 = vld [vmem:[%s7 + $0x3f0] sm:$0xff]
  %v7396 = vld [vmem:[%s7 + $0x3f8] sm:$0xff]
  %v7397 = vld [vmem:[%s7 + $0x400] sm:$0xff]
  %v7398 = vld [vmem:[%s7 + $0x408] sm:$0xff]
  %v7399 = vld [vmem:[%s7 + $0x410] sm:$0xff]
  %v7400 = vld [vmem:[%s7 + $0x418] sm:$0xff]
  %v7401 = vld [vmem:[%s7 + $0x420] sm:$0xff]
  %v7402 = vld [vmem:[%s7 + $0x428] sm:$0xff]
  %v7403 = vld [vmem:[%s7 + $0x430] sm:$0xff]
  %v7404 = vld [vmem:[%s7 + $0x438] sm:$0xff]
  %v7405 = vld [vmem:[%s7 + $0x440] sm:$0xff]
  %v7406 = vld [vmem:[%s7 + $0x448] sm:$0xff]
  %v7407 = vld [vmem:[%s7 + $0x450] sm:$0xff]
  %v7408 = vld [vmem:[%s7 + $0x458] sm:$0xff]
  %v7409 = vld [vmem:[%s7 + $0x460] sm:$0xff]
  %v7410 = vld [vmem:[%s7 + $0x468] sm:$0xff]
  %v7411 = vld [vmem:[%s7 + $0x470] sm:$0xff]
  %v7412 = vld [vmem:[%s7 + $0x478] sm:$0xff]
  %7413 = vmatpush.msra.mxu0 %v7284
  %7414 = vmatpush.msra.mxu0 %v7283
  %7415 = vmatpush.msra.mxu0 %v7282
  %7416 = vmatpush.msra.mxu0 %v7281
  %7417 = vmatpush.msra.mxu0 %v7280
  %7418 = vmatpush.msra.mxu0 %v7279
  %7419 = vmatpush.msra.mxu0 %v7278
  %7420 = vmatpush.msra.mxu0 %v7277
  %7421 = vmatpush.msra.mxu0 %v7276
  %7422 = vmatpush.msra.mxu0 %v7275
  %7423 = vmatpush.msra.mxu0 %v7274
  %7424 = vmatpush.msra.mxu0 %v7273
  %7425 = vmatpush.msra.mxu0 %v7272
  %7426 = vmatpush.msra.mxu0 %v7271
  %7427 = vmatpush.msra.mxu0 %v7270
  %7428 = vmatpush.msra.mxu0 %v7269
  %7429 = vmatmul.f32.gmra.mxu0 %v6693
  %v7430 = vpop.f32.mrf.mxu0
  %v7431 = vadd.f32 0.0, %v7430
  %7432 = vmatmul.f32.gmra.mxu0 %v6694
  %v7433 = vpop.f32.mrf.mxu0
  %v7434 = vadd.f32 0.0, %v7433
  %7435 = vmatmul.f32.gmra.mxu0 %v6695
  %v7436 = vpop.f32.mrf.mxu0
  %v7437 = vadd.f32 0.0, %v7436
  %7438 = vmatmul.f32.gmra.mxu0 %v6696
  %v7439 = vpop.f32.mrf.mxu0
  %v7440 = vadd.f32 0.0, %v7439
  %7441 = vmatmul.f32.gmra.mxu0 %v6697
  %v7442 = vpop.f32.mrf.mxu0
  %v7443 = vadd.f32 0.0, %v7442
  %7444 = vmatmul.f32.gmra.mxu0 %v6698
  %v7445 = vpop.f32.mrf.mxu0
  %v7446 = vadd.f32 0.0, %v7445
  %7447 = vmatmul.f32.gmra.mxu0 %v6699
  %v7448 = vpop.f32.mrf.mxu0
  %v7449 = vadd.f32 0.0, %v7448
  %7450 = vmatmul.f32.gmra.mxu0 %v6700
  %v7451 = vpop.f32.mrf.mxu0
  %v7452 = vadd.f32 0.0, %v7451
  %7453 = vmatmul.f32.gmra.mxu0 %v6701
  %v7454 = vpop.f32.mrf.mxu0
  %v7455 = vadd.f32 0.0, %v7454
  %7456 = vmatmul.f32.gmra.mxu0 %v6702
  %v7457 = vpop.f32.mrf.mxu0
  %v7458 = vadd.f32 0.0, %v7457
  %7459 = vmatmul.f32.gmra.mxu0 %v6703
  %v7460 = vpop.f32.mrf.mxu0
  %v7461 = vadd.f32 0.0, %v7460
  %7462 = vmatmul.f32.gmra.mxu0 %v6704
  %v7463 = vpop.f32.mrf.mxu0
  %v7464 = vadd.f32 0.0, %v7463
  %7465 = vmatmul.f32.gmra.mxu0 %v6705
  %v7466 = vpop.f32.mrf.mxu0
  %v7467 = vadd.f32 0.0, %v7466
  %7468 = vmatmul.f32.gmra.mxu0 %v6706
  %v7469 = vpop.f32.mrf.mxu0
  %v7470 = vadd.f32 0.0, %v7469
  %7471 = vmatmul.f32.gmra.mxu0 %v6707
  %v7472 = vpop.f32.mrf.mxu0
  %v7473 = vadd.f32 0.0, %v7472
  %7474 = vmatmul.f32.gmra.mxu0 %v6708
  %v7475 = vpop.f32.mrf.mxu0
  %v7476 = vadd.f32 0.0, %v7475
  %7477 = vmatmul.f32.gmra.mxu0 %v6709
  %v7478 = vpop.f32.mrf.mxu0
  %v7479 = vadd.f32 0.0, %v7478
  %7480 = vmatmul.f32.gmra.mxu0 %v6710
  %v7481 = vpop.f32.mrf.mxu0
  %v7482 = vadd.f32 0.0, %v7481
  %7483 = vmatmul.f32.gmra.mxu0 %v6711
  %v7484 = vpop.f32.mrf.mxu0
  %v7485 = vadd.f32 0.0, %v7484
  %7486 = vmatmul.f32.gmra.mxu0 %v6712
  %v7487 = vpop.f32.mrf.mxu0
  %v7488 = vadd.f32 0.0, %v7487
  %7489 = vmatmul.f32.gmra.mxu0 %v6713
  %v7490 = vpop.f32.mrf.mxu0
  %v7491 = vadd.f32 0.0, %v7490
  %7492 = vmatmul.f32.gmra.mxu0 %v6714
  %v7493 = vpop.f32.mrf.mxu0
  %v7494 = vadd.f32 0.0, %v7493
  %7495 = vmatmul.f32.gmra.mxu0 %v6715
  %v7496 = vpop.f32.mrf.mxu0
  %v7497 = vadd.f32 0.0, %v7496
  %7498 = vmatmul.f32.gmra.mxu0 %v6716
  %v7499 = vpop.f32.mrf.mxu0
  %v7500 = vadd.f32 0.0, %v7499
  %7501 = vmatmul.f32.gmra.mxu0 %v6717
  %v7502 = vpop.f32.mrf.mxu0
  %v7503 = vadd.f32 0.0, %v7502
  %7504 = vmatmul.f32.gmra.mxu0 %v6718
  %v7505 = vpop.f32.mrf.mxu0
  %v7506 = vadd.f32 0.0, %v7505
  %7507 = vmatmul.f32.gmra.mxu0 %v6719
  %v7508 = vpop.f32.mrf.mxu0
  %v7509 = vadd.f32 0.0, %v7508
  %7510 = vmatmul.f32.gmra.mxu0 %v6720
  %v7511 = vpop.f32.mrf.mxu0
  %v7512 = vadd.f32 0.0, %v7511
  %7513 = vmatmul.f32.gmra.mxu0 %v6721
  %v7514 = vpop.f32.mrf.mxu0
  %v7515 = vadd.f32 0.0, %v7514
  %7516 = vmatmul.f32.gmra.mxu0 %v6722
  %v7517 = vpop.f32.mrf.mxu0
  %v7518 = vadd.f32 0.0, %v7517
  %7519 = vmatmul.f32.gmra.mxu0 %v6723
  %v7520 = vpop.f32.mrf.mxu0
  %v7521 = vadd.f32 0.0, %v7520
  %7522 = vmatmul.f32.gmra.mxu0 %v6724
  %v7523 = vpop.f32.mrf.mxu0
  %v7524 = vadd.f32 0.0, %v7523
  %7525 = vmatmul.f32.gmra.mxu0 %v6725
  %v7526 = vpop.f32.mrf.mxu0
  %v7527 = vadd.f32 0.0, %v7526
  %7528 = vmatmul.f32.gmra.mxu0 %v6726
  %v7529 = vpop.f32.mrf.mxu0
  %v7530 = vadd.f32 0.0, %v7529
  %7531 = vmatmul.f32.gmra.mxu0 %v6727
  %v7532 = vpop.f32.mrf.mxu0
  %v7533 = vadd.f32 0.0, %v7532
  %7534 = vmatmul.f32.gmra.mxu0 %v6728
  %v7535 = vpop.f32.mrf.mxu0
  %v7536 = vadd.f32 0.0, %v7535
  %7537 = vmatmul.f32.gmra.mxu0 %v6729
  %v7538 = vpop.f32.mrf.mxu0
  %v7539 = vadd.f32 0.0, %v7538
  %7540 = vmatmul.f32.gmra.mxu0 %v6730
  %v7541 = vpop.f32.mrf.mxu0
  %v7542 = vadd.f32 0.0, %v7541
  %7543 = vmatmul.f32.gmra.mxu0 %v6731
  %v7544 = vpop.f32.mrf.mxu0
  %v7545 = vadd.f32 0.0, %v7544
  %7546 = vmatmul.f32.gmra.mxu0 %v6732
  %v7547 = vpop.f32.mrf.mxu0
  %v7548 = vadd.f32 0.0, %v7547
  %7549 = vmatmul.f32.gmra.mxu0 %v6733
  %v7550 = vpop.f32.mrf.mxu0
  %v7551 = vadd.f32 0.0, %v7550
  %7552 = vmatmul.f32.gmra.mxu0 %v6734
  %v7553 = vpop.f32.mrf.mxu0
  %v7554 = vadd.f32 0.0, %v7553
  %7555 = vmatmul.f32.gmra.mxu0 %v6735
  %v7556 = vpop.f32.mrf.mxu0
  %v7557 = vadd.f32 0.0, %v7556
  %7558 = vmatmul.f32.gmra.mxu0 %v6736
  %v7559 = vpop.f32.mrf.mxu0
  %v7560 = vadd.f32 0.0, %v7559
  %7561 = vmatmul.f32.gmra.mxu0 %v6737
  %v7562 = vpop.f32.mrf.mxu0
  %v7563 = vadd.f32 0.0, %v7562
  %7564 = vmatmul.f32.gmra.mxu0 %v6738
  %v7565 = vpop.f32.mrf.mxu0
  %v7566 = vadd.f32 0.0, %v7565
  %7567 = vmatmul.f32.gmra.mxu0 %v6739
  %v7568 = vpop.f32.mrf.mxu0
  %v7569 = vadd.f32 0.0, %v7568
  %7570 = vmatmul.f32.gmra.mxu0 %v6740
  %v7571 = vpop.f32.mrf.mxu0
  %v7572 = vadd.f32 0.0, %v7571
  %7573 = vmatmul.f32.gmra.mxu0 %v6741
  %v7574 = vpop.f32.mrf.mxu0
  %v7575 = vadd.f32 0.0, %v7574
  %7576 = vmatmul.f32.gmra.mxu0 %v6742
  %v7577 = vpop.f32.mrf.mxu0
  %v7578 = vadd.f32 0.0, %v7577
  %7579 = vmatmul.f32.gmra.mxu0 %v6743
  %v7580 = vpop.f32.mrf.mxu0
  %v7581 = vadd.f32 0.0, %v7580
  %7582 = vmatmul.f32.gmra.mxu0 %v6744
  %v7583 = vpop.f32.mrf.mxu0
  %v7584 = vadd.f32 0.0, %v7583
  %7585 = vmatmul.f32.gmra.mxu0 %v6745
  %v7586 = vpop.f32.mrf.mxu0
  %v7587 = vadd.f32 0.0, %v7586
  %7588 = vmatmul.f32.gmra.mxu0 %v6746
  %v7589 = vpop.f32.mrf.mxu0
  %v7590 = vadd.f32 0.0, %v7589
  %7591 = vmatmul.f32.gmra.mxu0 %v6747
  %v7592 = vpop.f32.mrf.mxu0
  %v7593 = vadd.f32 0.0, %v7592
  %7594 = vmatmul.f32.gmra.mxu0 %v6748
  %v7595 = vpop.f32.mrf.mxu0
  %v7596 = vadd.f32 0.0, %v7595
  %7597 = vmatmul.f32.gmra.mxu0 %v6749
  %v7598 = vpop.f32.mrf.mxu0
  %v7599 = vadd.f32 0.0, %v7598
  %7600 = vmatmul.f32.gmra.mxu0 %v6750
  %v7601 = vpop.f32.mrf.mxu0
  %v7602 = vadd.f32 0.0, %v7601
  %7603 = vmatmul.f32.gmra.mxu0 %v6751
  %v7604 = vpop.f32.mrf.mxu0
  %v7605 = vadd.f32 0.0, %v7604
  %7606 = vmatmul.f32.gmra.mxu0 %v6752
  %v7607 = vpop.f32.mrf.mxu0
  %v7608 = vadd.f32 0.0, %v7607
  %7609 = vmatmul.f32.gmra.mxu0 %v6753
  %v7610 = vpop.f32.mrf.mxu0
  %v7611 = vadd.f32 0.0, %v7610
  %7612 = vmatmul.f32.gmra.mxu0 %v6754
  %v7613 = vpop.f32.mrf.mxu0
  %v7614 = vadd.f32 0.0, %v7613
  %7615 = vmatmul.f32.gmra.mxu0 %v6755
  %v7616 = vpop.f32.mrf.mxu0
  %v7617 = vadd.f32 0.0, %v7616
  %7618 = vmatmul.f32.gmra.mxu0 %v6756
  %v7619 = vpop.f32.mrf.mxu0
  %v7620 = vadd.f32 0.0, %v7619
  %7621 = vdwg.mxu0
  %7622 = vmatpush.msra.mxu0 %v7300
  %7623 = vmatpush.msra.mxu0 %v7299
  %7624 = vmatpush.msra.mxu0 %v7298
  %7625 = vmatpush.msra.mxu0 %v7297
  %7626 = vmatpush.msra.mxu0 %v7296
  %7627 = vmatpush.msra.mxu0 %v7295
  %7628 = vmatpush.msra.mxu0 %v7294
  %7629 = vmatpush.msra.mxu0 %v7293
  %7630 = vmatpush.msra.mxu0 %v7292
  %7631 = vmatpush.msra.mxu0 %v7291
  %7632 = vmatpush.msra.mxu0 %v7290
  %7633 = vmatpush.msra.mxu0 %v7289
  %7634 = vmatpush.msra.mxu0 %v7288
  %7635 = vmatpush.msra.mxu0 %v7287
  %7636 = vmatpush.msra.mxu0 %v7286
  %7637 = vmatpush.msra.mxu0 %v7285
  %7638 = vmatmul.f32.gmra.mxu0 %v6757
  %v7639 = vpop.f32.mrf.mxu0
  %v7640 = vadd.f32 %v7431, %v7639
  %7641 = vmatmul.f32.gmra.mxu0 %v6758
  %v7642 = vpop.f32.mrf.mxu0
  %v7643 = vadd.f32 %v7434, %v7642
  %7644 = vmatmul.f32.gmra.mxu0 %v6759
  %v7645 = vpop.f32.mrf.mxu0
  %v7646 = vadd.f32 %v7437, %v7645
  %7647 = vmatmul.f32.gmra.mxu0 %v6760
  %v7648 = vpop.f32.mrf.mxu0
  %v7649 = vadd.f32 %v7440, %v7648
  %7650 = vmatmul.f32.gmra.mxu0 %v6761
  %v7651 = vpop.f32.mrf.mxu0
  %v7652 = vadd.f32 %v7443, %v7651
  %7653 = vmatmul.f32.gmra.mxu0 %v6762
  %v7654 = vpop.f32.mrf.mxu0
  %v7655 = vadd.f32 %v7446, %v7654
  %7656 = vmatmul.f32.gmra.mxu0 %v6763
  %v7657 = vpop.f32.mrf.mxu0
  %v7658 = vadd.f32 %v7449, %v7657
  %7659 = vmatmul.f32.gmra.mxu0 %v6764
  %v7660 = vpop.f32.mrf.mxu0
  %v7661 = vadd.f32 %v7452, %v7660
  %7662 = vmatmul.f32.gmra.mxu0 %v6765
  %v7663 = vpop.f32.mrf.mxu0
  %v7664 = vadd.f32 %v7455, %v7663
  %7665 = vmatmul.f32.gmra.mxu0 %v6766
  %v7666 = vpop.f32.mrf.mxu0
  %v7667 = vadd.f32 %v7458, %v7666
  %7668 = vmatmul.f32.gmra.mxu0 %v6767
  %v7669 = vpop.f32.mrf.mxu0
  %v7670 = vadd.f32 %v7461, %v7669
  %7671 = vmatmul.f32.gmra.mxu0 %v6768
  %v7672 = vpop.f32.mrf.mxu0
  %v7673 = vadd.f32 %v7464, %v7672
  %7674 = vmatmul.f32.gmra.mxu0 %v6769
  %v7675 = vpop.f32.mrf.mxu0
  %v7676 = vadd.f32 %v7467, %v7675
  %7677 = vmatmul.f32.gmra.mxu0 %v6770
  %v7678 = vpop.f32.mrf.mxu0
  %v7679 = vadd.f32 %v7470, %v7678
  %7680 = vmatmul.f32.gmra.mxu0 %v6771
  %v7681 = vpop.f32.mrf.mxu0
  %v7682 = vadd.f32 %v7473, %v7681
  %7683 = vmatmul.f32.gmra.mxu0 %v6772
  %v7684 = vpop.f32.mrf.mxu0
  %v7685 = vadd.f32 %v7476, %v7684
  %7686 = vmatmul.f32.gmra.mxu0 %v6773
  %v7687 = vpop.f32.mrf.mxu0
  %v7688 = vadd.f32 %v7479, %v7687
  %7689 = vmatmul.f32.gmra.mxu0 %v6774
  %v7690 = vpop.f32.mrf.mxu0
  %v7691 = vadd.f32 %v7482, %v7690
  %7692 = vmatmul.f32.gmra.mxu0 %v6775
  %v7693 = vpop.f32.mrf.mxu0
  %v7694 = vadd.f32 %v7485, %v7693
  %7695 = vmatmul.f32.gmra.mxu0 %v6776
  %v7696 = vpop.f32.mrf.mxu0
  %v7697 = vadd.f32 %v7488, %v7696
  %7698 = vmatmul.f32.gmra.mxu0 %v6777
  %v7699 = vpop.f32.mrf.mxu0
  %v7700 = vadd.f32 %v7491, %v7699
  %7701 = vmatmul.f32.gmra.mxu0 %v6778
  %v7702 = vpop.f32.mrf.mxu0
  %v7703 = vadd.f32 %v7494, %v7702
  %7704 = vmatmul.f32.gmra.mxu0 %v6779
  %v7705 = vpop.f32.mrf.mxu0
  %v7706 = vadd.f32 %v7497, %v7705
  %7707 = vmatmul.f32.gmra.mxu0 %v6780
  %v7708 = vpop.f32.mrf.mxu0
  %v7709 = vadd.f32 %v7500, %v7708
  %7710 = vmatmul.f32.gmra.mxu0 %v6781
  %v7711 = vpop.f32.mrf.mxu0
  %v7712 = vadd.f32 %v7503, %v7711
  %7713 = vmatmul.f32.gmra.mxu0 %v6782
  %v7714 = vpop.f32.mrf.mxu0
  %v7715 = vadd.f32 %v7506, %v7714
  %7716 = vmatmul.f32.gmra.mxu0 %v6783
  %v7717 = vpop.f32.mrf.mxu0
  %v7718 = vadd.f32 %v7509, %v7717
  %7719 = vmatmul.f32.gmra.mxu0 %v6784
  %v7720 = vpop.f32.mrf.mxu0
  %v7721 = vadd.f32 %v7512, %v7720
  %7722 = vmatmul.f32.gmra.mxu0 %v6785
  %v7723 = vpop.f32.mrf.mxu0
  %v7724 = vadd.f32 %v7515, %v7723
  %7725 = vmatmul.f32.gmra.mxu0 %v6786
  %v7726 = vpop.f32.mrf.mxu0
  %v7727 = vadd.f32 %v7518, %v7726
  %7728 = vmatmul.f32.gmra.mxu0 %v6787
  %v7729 = vpop.f32.mrf.mxu0
  %v7730 = vadd.f32 %v7521, %v7729
  %7731 = vmatmul.f32.gmra.mxu0 %v6788
  %v7732 = vpop.f32.mrf.mxu0
  %v7733 = vadd.f32 %v7524, %v7732
  %7734 = vmatmul.f32.gmra.mxu0 %v6789
  %v7735 = vpop.f32.mrf.mxu0
  %v7736 = vadd.f32 %v7527, %v7735
  %7737 = vmatmul.f32.gmra.mxu0 %v6790
  %v7738 = vpop.f32.mrf.mxu0
  %v7739 = vadd.f32 %v7530, %v7738
  %7740 = vmatmul.f32.gmra.mxu0 %v6791
  %v7741 = vpop.f32.mrf.mxu0
  %v7742 = vadd.f32 %v7533, %v7741
  %7743 = vmatmul.f32.gmra.mxu0 %v6792
  %v7744 = vpop.f32.mrf.mxu0
  %v7745 = vadd.f32 %v7536, %v7744
  %7746 = vmatmul.f32.gmra.mxu0 %v6793
  %v7747 = vpop.f32.mrf.mxu0
  %v7748 = vadd.f32 %v7539, %v7747
  %7749 = vmatmul.f32.gmra.mxu0 %v6794
  %v7750 = vpop.f32.mrf.mxu0
  %v7751 = vadd.f32 %v7542, %v7750
  %7752 = vmatmul.f32.gmra.mxu0 %v6795
  %v7753 = vpop.f32.mrf.mxu0
  %v7754 = vadd.f32 %v7545, %v7753
  %7755 = vmatmul.f32.gmra.mxu0 %v6796
  %v7756 = vpop.f32.mrf.mxu0
  %v7757 = vadd.f32 %v7548, %v7756
  %7758 = vmatmul.f32.gmra.mxu0 %v6797
  %v7759 = vpop.f32.mrf.mxu0
  %v7760 = vadd.f32 %v7551, %v7759
  %7761 = vmatmul.f32.gmra.mxu0 %v6798
  %v7762 = vpop.f32.mrf.mxu0
  %v7763 = vadd.f32 %v7554, %v7762
  %7764 = vmatmul.f32.gmra.mxu0 %v6799
  %v7765 = vpop.f32.mrf.mxu0
  %v7766 = vadd.f32 %v7557, %v7765
  %7767 = vmatmul.f32.gmra.mxu0 %v6800
  %v7768 = vpop.f32.mrf.mxu0
  %v7769 = vadd.f32 %v7560, %v7768
  %7770 = vmatmul.f32.gmra.mxu0 %v6801
  %v7771 = vpop.f32.mrf.mxu0
  %v7772 = vadd.f32 %v7563, %v7771
  %7773 = vmatmul.f32.gmra.mxu0 %v6802
  %v7774 = vpop.f32.mrf.mxu0
  %v7775 = vadd.f32 %v7566, %v7774
  %7776 = vmatmul.f32.gmra.mxu0 %v6803
  %v7777 = vpop.f32.mrf.mxu0
  %v7778 = vadd.f32 %v7569, %v7777
  %7779 = vmatmul.f32.gmra.mxu0 %v6804
  %v7780 = vpop.f32.mrf.mxu0
  %v7781 = vadd.f32 %v7572, %v7780
  %7782 = vmatmul.f32.gmra.mxu0 %v6805
  %v7783 = vpop.f32.mrf.mxu0
  %v7784 = vadd.f32 %v7575, %v7783
  %7785 = vmatmul.f32.gmra.mxu0 %v6806
  %v7786 = vpop.f32.mrf.mxu0
  %v7787 = vadd.f32 %v7578, %v7786
  %7788 = vmatmul.f32.gmra.mxu0 %v6807
  %v7789 = vpop.f32.mrf.mxu0
  %v7790 = vadd.f32 %v7581, %v7789
  %7791 = vmatmul.f32.gmra.mxu0 %v6808
  %v7792 = vpop.f32.mrf.mxu0
  %v7793 = vadd.f32 %v7584, %v7792
  %7794 = vmatmul.f32.gmra.mxu0 %v6809
  %v7795 = vpop.f32.mrf.mxu0
  %v7796 = vadd.f32 %v7587, %v7795
  %7797 = vmatmul.f32.gmra.mxu0 %v6810
  %v7798 = vpop.f32.mrf.mxu0
  %v7799 = vadd.f32 %v7590, %v7798
  %7800 = vmatmul.f32.gmra.mxu0 %v6811
  %v7801 = vpop.f32.mrf.mxu0
  %v7802 = vadd.f32 %v7593, %v7801
  %7803 = vmatmul.f32.gmra.mxu0 %v6812
  %v7804 = vpop.f32.mrf.mxu0
  %v7805 = vadd.f32 %v7596, %v7804
  %7806 = vmatmul.f32.gmra.mxu0 %v6813
  %v7807 = vpop.f32.mrf.mxu0
  %v7808 = vadd.f32 %v7599, %v7807
  %7809 = vmatmul.f32.gmra.mxu0 %v6814
  %v7810 = vpop.f32.mrf.mxu0
  %v7811 = vadd.f32 %v7602, %v7810
  %7812 = vmatmul.f32.gmra.mxu0 %v6815
  %v7813 = vpop.f32.mrf.mxu0
  %v7814 = vadd.f32 %v7605, %v7813
  %7815 = vmatmul.f32.gmra.mxu0 %v6816
  %v7816 = vpop.f32.mrf.mxu0
  %v7817 = vadd.f32 %v7608, %v7816
  %7818 = vmatmul.f32.gmra.mxu0 %v6817
  %v7819 = vpop.f32.mrf.mxu0
  %v7820 = vadd.f32 %v7611, %v7819
  %7821 = vmatmul.f32.gmra.mxu0 %v6818
  %v7822 = vpop.f32.mrf.mxu0
  %v7823 = vadd.f32 %v7614, %v7822
  %7824 = vmatmul.f32.gmra.mxu0 %v6819
  %v7825 = vpop.f32.mrf.mxu0
  %v7826 = vadd.f32 %v7617, %v7825
  %7827 = vmatmul.f32.gmra.mxu0 %v6820
  %v7828 = vpop.f32.mrf.mxu0
  %v7829 = vadd.f32 %v7620, %v7828
  %7830 = vdwg.mxu0
  %7831 = vmatpush.msra.mxu0 %v7316
  %7832 = vmatpush.msra.mxu0 %v7315
  %7833 = vmatpush.msra.mxu0 %v7314
  %7834 = vmatpush.msra.mxu0 %v7313
  %7835 = vmatpush.msra.mxu0 %v7312
  %7836 = vmatpush.msra.mxu0 %v7311
  %7837 = vmatpush.msra.mxu0 %v7310
  %7838 = vmatpush.msra.mxu0 %v7309
  %7839 = vmatpush.msra.mxu0 %v7308
  %7840 = vmatpush.msra.mxu0 %v7307
  %7841 = vmatpush.msra.mxu0 %v7306
  %7842 = vmatpush.msra.mxu0 %v7305
  %7843 = vmatpush.msra.mxu0 %v7304
  %7844 = vmatpush.msra.mxu0 %v7303
  %7845 = vmatpush.msra.mxu0 %v7302
  %7846 = vmatpush.msra.mxu0 %v7301
  %7847 = vmatmul.f32.gmra.mxu0 %v6821
  %v7848 = vpop.f32.mrf.mxu0
  %v7849 = vadd.f32 %v7640, %v7848
  %7850 = vmatmul.f32.gmra.mxu0 %v6822
  %v7851 = vpop.f32.mrf.mxu0
  %v7852 = vadd.f32 %v7643, %v7851
  %7853 = vmatmul.f32.gmra.mxu0 %v6823
  %v7854 = vpop.f32.mrf.mxu0
  %v7855 = vadd.f32 %v7646, %v7854
  %7856 = vmatmul.f32.gmra.mxu0 %v6824
  %v7857 = vpop.f32.mrf.mxu0
  %v7858 = vadd.f32 %v7649, %v7857
  %7859 = vmatmul.f32.gmra.mxu0 %v6825
  %v7860 = vpop.f32.mrf.mxu0
  %v7861 = vadd.f32 %v7652, %v7860
  %7862 = vmatmul.f32.gmra.mxu0 %v6826
  %v7863 = vpop.f32.mrf.mxu0
  %v7864 = vadd.f32 %v7655, %v7863
  %7865 = vmatmul.f32.gmra.mxu0 %v6827
  %v7866 = vpop.f32.mrf.mxu0
  %v7867 = vadd.f32 %v7658, %v7866
  %7868 = vmatmul.f32.gmra.mxu0 %v6828
  %v7869 = vpop.f32.mrf.mxu0
  %v7870 = vadd.f32 %v7661, %v7869
  %7871 = vmatmul.f32.gmra.mxu0 %v6829
  %v7872 = vpop.f32.mrf.mxu0
  %v7873 = vadd.f32 %v7664, %v7872
  %7874 = vmatmul.f32.gmra.mxu0 %v6830
  %v7875 = vpop.f32.mrf.mxu0
  %v7876 = vadd.f32 %v7667, %v7875
  %7877 = vmatmul.f32.gmra.mxu0 %v6831
  %v7878 = vpop.f32.mrf.mxu0
  %v7879 = vadd.f32 %v7670, %v7878
  %7880 = vmatmul.f32.gmra.mxu0 %v6832
  %v7881 = vpop.f32.mrf.mxu0
  %v7882 = vadd.f32 %v7673, %v7881
  %7883 = vmatmul.f32.gmra.mxu0 %v6833
  %v7884 = vpop.f32.mrf.mxu0
  %v7885 = vadd.f32 %v7676, %v7884
  %7886 = vmatmul.f32.gmra.mxu0 %v6834
  %v7887 = vpop.f32.mrf.mxu0
  %v7888 = vadd.f32 %v7679, %v7887
  %7889 = vmatmul.f32.gmra.mxu0 %v6835
  %v7890 = vpop.f32.mrf.mxu0
  %v7891 = vadd.f32 %v7682, %v7890
  %7892 = vmatmul.f32.gmra.mxu0 %v6836
  %v7893 = vpop.f32.mrf.mxu0
  %v7894 = vadd.f32 %v7685, %v7893
  %7895 = vmatmul.f32.gmra.mxu0 %v6837
  %v7896 = vpop.f32.mrf.mxu0
  %v7897 = vadd.f32 %v7688, %v7896
  %7898 = vmatmul.f32.gmra.mxu0 %v6838
  %v7899 = vpop.f32.mrf.mxu0
  %v7900 = vadd.f32 %v7691, %v7899
  %7901 = vmatmul.f32.gmra.mxu0 %v6839
  %v7902 = vpop.f32.mrf.mxu0
  %v7903 = vadd.f32 %v7694, %v7902
  %7904 = vmatmul.f32.gmra.mxu0 %v6840
  %v7905 = vpop.f32.mrf.mxu0
  %v7906 = vadd.f32 %v7697, %v7905
  %7907 = vmatmul.f32.gmra.mxu0 %v6841
  %v7908 = vpop.f32.mrf.mxu0
  %v7909 = vadd.f32 %v7700, %v7908
  %7910 = vmatmul.f32.gmra.mxu0 %v6842
  %v7911 = vpop.f32.mrf.mxu0
  %v7912 = vadd.f32 %v7703, %v7911
  %7913 = vmatmul.f32.gmra.mxu0 %v6843
  %v7914 = vpop.f32.mrf.mxu0
  %v7915 = vadd.f32 %v7706, %v7914
  %7916 = vmatmul.f32.gmra.mxu0 %v6844
  %v7917 = vpop.f32.mrf.mxu0
  %v7918 = vadd.f32 %v7709, %v7917
  %7919 = vmatmul.f32.gmra.mxu0 %v6845
  %v7920 = vpop.f32.mrf.mxu0
  %v7921 = vadd.f32 %v7712, %v7920
  %7922 = vmatmul.f32.gmra.mxu0 %v6846
  %v7923 = vpop.f32.mrf.mxu0
  %v7924 = vadd.f32 %v7715, %v7923
  %7925 = vmatmul.f32.gmra.mxu0 %v6847
  %v7926 = vpop.f32.mrf.mxu0
  %v7927 = vadd.f32 %v7718, %v7926
  %7928 = vmatmul.f32.gmra.mxu0 %v6848
  %v7929 = vpop.f32.mrf.mxu0
  %v7930 = vadd.f32 %v7721, %v7929
  %7931 = vmatmul.f32.gmra.mxu0 %v6849
  %v7932 = vpop.f32.mrf.mxu0
  %v7933 = vadd.f32 %v7724, %v7932
  %7934 = vmatmul.f32.gmra.mxu0 %v6850
  %v7935 = vpop.f32.mrf.mxu0
  %v7936 = vadd.f32 %v7727, %v7935
  %7937 = vmatmul.f32.gmra.mxu0 %v6851
  %v7938 = vpop.f32.mrf.mxu0
  %v7939 = vadd.f32 %v7730, %v7938
  %7940 = vmatmul.f32.gmra.mxu0 %v6852
  %v7941 = vpop.f32.mrf.mxu0
  %v7942 = vadd.f32 %v7733, %v7941
  %7943 = vmatmul.f32.gmra.mxu0 %v6853
  %v7944 = vpop.f32.mrf.mxu0
  %v7945 = vadd.f32 %v7736, %v7944
  %7946 = vmatmul.f32.gmra.mxu0 %v6854
  %v7947 = vpop.f32.mrf.mxu0
  %v7948 = vadd.f32 %v7739, %v7947
  %7949 = vmatmul.f32.gmra.mxu0 %v6855
  %v7950 = vpop.f32.mrf.mxu0
  %v7951 = vadd.f32 %v7742, %v7950
  %7952 = vmatmul.f32.gmra.mxu0 %v6856
  %v7953 = vpop.f32.mrf.mxu0
  %v7954 = vadd.f32 %v7745, %v7953
  %7955 = vmatmul.f32.gmra.mxu0 %v6857
  %v7956 = vpop.f32.mrf.mxu0
  %v7957 = vadd.f32 %v7748, %v7956
  %7958 = vmatmul.f32.gmra.mxu0 %v6858
  %v7959 = vpop.f32.mrf.mxu0
  %v7960 = vadd.f32 %v7751, %v7959
  %7961 = vmatmul.f32.gmra.mxu0 %v6859
  %v7962 = vpop.f32.mrf.mxu0
  %v7963 = vadd.f32 %v7754, %v7962
  %7964 = vmatmul.f32.gmra.mxu0 %v6860
  %v7965 = vpop.f32.mrf.mxu0
  %v7966 = vadd.f32 %v7757, %v7965
  %7967 = vmatmul.f32.gmra.mxu0 %v6861
  %v7968 = vpop.f32.mrf.mxu0
  %v7969 = vadd.f32 %v7760, %v7968
  %7970 = vmatmul.f32.gmra.mxu0 %v6862
  %v7971 = vpop.f32.mrf.mxu0
  %v7972 = vadd.f32 %v7763, %v7971
  %7973 = vmatmul.f32.gmra.mxu0 %v6863
  %v7974 = vpop.f32.mrf.mxu0
  %v7975 = vadd.f32 %v7766, %v7974
  %7976 = vmatmul.f32.gmra.mxu0 %v6864
  %v7977 = vpop.f32.mrf.mxu0
  %v7978 = vadd.f32 %v7769, %v7977
  %7979 = vmatmul.f32.gmra.mxu0 %v6865
  %v7980 = vpop.f32.mrf.mxu0
  %v7981 = vadd.f32 %v7772, %v7980
  %7982 = vmatmul.f32.gmra.mxu0 %v6866
  %v7983 = vpop.f32.mrf.mxu0
  %v7984 = vadd.f32 %v7775, %v7983
  %7985 = vmatmul.f32.gmra.mxu0 %v6867
  %v7986 = vpop.f32.mrf.mxu0
  %v7987 = vadd.f32 %v7778, %v7986
  %7988 = vmatmul.f32.gmra.mxu0 %v6868
  %v7989 = vpop.f32.mrf.mxu0
  %v7990 = vadd.f32 %v7781, %v7989
  %7991 = vmatmul.f32.gmra.mxu0 %v6869
  %v7992 = vpop.f32.mrf.mxu0
  %v7993 = vadd.f32 %v7784, %v7992
  %7994 = vmatmul.f32.gmra.mxu0 %v6870
  %v7995 = vpop.f32.mrf.mxu0
  %v7996 = vadd.f32 %v7787, %v7995
  %7997 = vmatmul.f32.gmra.mxu0 %v6871
  %v7998 = vpop.f32.mrf.mxu0
  %v7999 = vadd.f32 %v7790, %v7998
  %8000 = vmatmul.f32.gmra.mxu0 %v6872
  %v8001 = vpop.f32.mrf.mxu0
  %v8002 = vadd.f32 %v7793, %v8001
  %8003 = vmatmul.f32.gmra.mxu0 %v6873
  %v8004 = vpop.f32.mrf.mxu0
  %v8005 = vadd.f32 %v7796, %v8004
  %8006 = vmatmul.f32.gmra.mxu0 %v6874
  %v8007 = vpop.f32.mrf.mxu0
  %v8008 = vadd.f32 %v7799, %v8007
  %8009 = vmatmul.f32.gmra.mxu0 %v6875
  %v8010 = vpop.f32.mrf.mxu0
  %v8011 = vadd.f32 %v7802, %v8010
  %8012 = vmatmul.f32.gmra.mxu0 %v6876
  %v8013 = vpop.f32.mrf.mxu0
  %v8014 = vadd.f32 %v7805, %v8013
  %8015 = vmatmul.f32.gmra.mxu0 %v6877
  %v8016 = vpop.f32.mrf.mxu0
  %v8017 = vadd.f32 %v7808, %v8016
  %8018 = vmatmul.f32.gmra.mxu0 %v6878
  %v8019 = vpop.f32.mrf.mxu0
  %v8020 = vadd.f32 %v7811, %v8019
  %8021 = vmatmul.f32.gmra.mxu0 %v6879
  %v8022 = vpop.f32.mrf.mxu0
  %v8023 = vadd.f32 %v7814, %v8022
  %8024 = vmatmul.f32.gmra.mxu0 %v6880
  %v8025 = vpop.f32.mrf.mxu0
  %v8026 = vadd.f32 %v7817, %v8025
  %8027 = vmatmul.f32.gmra.mxu0 %v6881
  %v8028 = vpop.f32.mrf.mxu0
  %v8029 = vadd.f32 %v7820, %v8028
  %8030 = vmatmul.f32.gmra.mxu0 %v6882
  %v8031 = vpop.f32.mrf.mxu0
  %v8032 = vadd.f32 %v7823, %v8031
  %8033 = vmatmul.f32.gmra.mxu0 %v6883
  %v8034 = vpop.f32.mrf.mxu0
  %v8035 = vadd.f32 %v7826, %v8034
  %8036 = vmatmul.f32.gmra.mxu0 %v6884
  %v8037 = vpop.f32.mrf.mxu0
  %v8038 = vadd.f32 %v7829, %v8037
  %8039 = vdwg.mxu0
  %8040 = vmatpush.msra.mxu0 %v7332
  %8041 = vmatpush.msra.mxu0 %v7331
  %8042 = vmatpush.msra.mxu0 %v7330
  %8043 = vmatpush.msra.mxu0 %v7329
  %8044 = vmatpush.msra.mxu0 %v7328
  %8045 = vmatpush.msra.mxu0 %v7327
  %8046 = vmatpush.msra.mxu0 %v7326
  %8047 = vmatpush.msra.mxu0 %v7325
  %8048 = vmatpush.msra.mxu0 %v7324
  %8049 = vmatpush.msra.mxu0 %v7323
  %8050 = vmatpush.msra.mxu0 %v7322
  %8051 = vmatpush.msra.mxu0 %v7321
  %8052 = vmatpush.msra.mxu0 %v7320
  %8053 = vmatpush.msra.mxu0 %v7319
  %8054 = vmatpush.msra.mxu0 %v7318
  %8055 = vmatpush.msra.mxu0 %v7317
  %8056 = vmatmul.f32.gmra.mxu0 %v6885
  %v8057 = vpop.f32.mrf.mxu0
  %v8058 = vadd.f32 %v7849, %v8057
  %8059 = vmatmul.f32.gmra.mxu0 %v6886
  %v8060 = vpop.f32.mrf.mxu0
  %v8061 = vadd.f32 %v7852, %v8060
  %8062 = vmatmul.f32.gmra.mxu0 %v6887
  %v8063 = vpop.f32.mrf.mxu0
  %v8064 = vadd.f32 %v7855, %v8063
  %8065 = vmatmul.f32.gmra.mxu0 %v6888
  %v8066 = vpop.f32.mrf.mxu0
  %v8067 = vadd.f32 %v7858, %v8066
  %8068 = vmatmul.f32.gmra.mxu0 %v6889
  %v8069 = vpop.f32.mrf.mxu0
  %v8070 = vadd.f32 %v7861, %v8069
  %8071 = vmatmul.f32.gmra.mxu0 %v6890
  %v8072 = vpop.f32.mrf.mxu0
  %v8073 = vadd.f32 %v7864, %v8072
  %8074 = vmatmul.f32.gmra.mxu0 %v6891
  %v8075 = vpop.f32.mrf.mxu0
  %v8076 = vadd.f32 %v7867, %v8075
  %8077 = vmatmul.f32.gmra.mxu0 %v6892
  %v8078 = vpop.f32.mrf.mxu0
  %v8079 = vadd.f32 %v7870, %v8078
  %8080 = vmatmul.f32.gmra.mxu0 %v6893
  %v8081 = vpop.f32.mrf.mxu0
  %v8082 = vadd.f32 %v7873, %v8081
  %8083 = vmatmul.f32.gmra.mxu0 %v6894
  %v8084 = vpop.f32.mrf.mxu0
  %v8085 = vadd.f32 %v7876, %v8084
  %8086 = vmatmul.f32.gmra.mxu0 %v6895
  %v8087 = vpop.f32.mrf.mxu0
  %v8088 = vadd.f32 %v7879, %v8087
  %8089 = vmatmul.f32.gmra.mxu0 %v6896
  %v8090 = vpop.f32.mrf.mxu0
  %v8091 = vadd.f32 %v7882, %v8090
  %8092 = vmatmul.f32.gmra.mxu0 %v6897
  %v8093 = vpop.f32.mrf.mxu0
  %v8094 = vadd.f32 %v7885, %v8093
  %8095 = vmatmul.f32.gmra.mxu0 %v6898
  %v8096 = vpop.f32.mrf.mxu0
  %v8097 = vadd.f32 %v7888, %v8096
  %8098 = vmatmul.f32.gmra.mxu0 %v6899
  %v8099 = vpop.f32.mrf.mxu0
  %v8100 = vadd.f32 %v7891, %v8099
  %8101 = vmatmul.f32.gmra.mxu0 %v6900
  %v8102 = vpop.f32.mrf.mxu0
  %v8103 = vadd.f32 %v7894, %v8102
  %8104 = vmatmul.f32.gmra.mxu0 %v6901
  %v8105 = vpop.f32.mrf.mxu0
  %v8106 = vadd.f32 %v7897, %v8105
  %8107 = vmatmul.f32.gmra.mxu0 %v6902
  %v8108 = vpop.f32.mrf.mxu0
  %v8109 = vadd.f32 %v7900, %v8108
  %8110 = vmatmul.f32.gmra.mxu0 %v6903
  %v8111 = vpop.f32.mrf.mxu0
  %v8112 = vadd.f32 %v7903, %v8111
  %8113 = vmatmul.f32.gmra.mxu0 %v6904
  %v8114 = vpop.f32.mrf.mxu0
  %v8115 = vadd.f32 %v7906, %v8114
  %8116 = vmatmul.f32.gmra.mxu0 %v6905
  %v8117 = vpop.f32.mrf.mxu0
  %v8118 = vadd.f32 %v7909, %v8117
  %8119 = vmatmul.f32.gmra.mxu0 %v6906
  %v8120 = vpop.f32.mrf.mxu0
  %v8121 = vadd.f32 %v7912, %v8120
  %8122 = vmatmul.f32.gmra.mxu0 %v6907
  %v8123 = vpop.f32.mrf.mxu0
  %v8124 = vadd.f32 %v7915, %v8123
  %8125 = vmatmul.f32.gmra.mxu0 %v6908
  %v8126 = vpop.f32.mrf.mxu0
  %v8127 = vadd.f32 %v7918, %v8126
  %8128 = vmatmul.f32.gmra.mxu0 %v6909
  %v8129 = vpop.f32.mrf.mxu0
  %v8130 = vadd.f32 %v7921, %v8129
  %8131 = vmatmul.f32.gmra.mxu0 %v6910
  %v8132 = vpop.f32.mrf.mxu0
  %v8133 = vadd.f32 %v7924, %v8132
  %8134 = vmatmul.f32.gmra.mxu0 %v6911
  %v8135 = vpop.f32.mrf.mxu0
  %v8136 = vadd.f32 %v7927, %v8135
  %8137 = vmatmul.f32.gmra.mxu0 %v6912
  %v8138 = vpop.f32.mrf.mxu0
  %v8139 = vadd.f32 %v7930, %v8138
  %8140 = vmatmul.f32.gmra.mxu0 %v6913
  %v8141 = vpop.f32.mrf.mxu0
  %v8142 = vadd.f32 %v7933, %v8141
  %8143 = vmatmul.f32.gmra.mxu0 %v6914
  %v8144 = vpop.f32.mrf.mxu0
  %v8145 = vadd.f32 %v7936, %v8144
  %8146 = vmatmul.f32.gmra.mxu0 %v6915
  %v8147 = vpop.f32.mrf.mxu0
  %v8148 = vadd.f32 %v7939, %v8147
  %8149 = vmatmul.f32.gmra.mxu0 %v6916
  %v8150 = vpop.f32.mrf.mxu0
  %v8151 = vadd.f32 %v7942, %v8150
  %8152 = vmatmul.f32.gmra.mxu0 %v6917
  %v8153 = vpop.f32.mrf.mxu0
  %v8154 = vadd.f32 %v7945, %v8153
  %8155 = vmatmul.f32.gmra.mxu0 %v6918
  %v8156 = vpop.f32.mrf.mxu0
  %v8157 = vadd.f32 %v7948, %v8156
  %8158 = vmatmul.f32.gmra.mxu0 %v6919
  %v8159 = vpop.f32.mrf.mxu0
  %v8160 = vadd.f32 %v7951, %v8159
  %8161 = vmatmul.f32.gmra.mxu0 %v6920
  %v8162 = vpop.f32.mrf.mxu0
  %v8163 = vadd.f32 %v7954, %v8162
  %8164 = vmatmul.f32.gmra.mxu0 %v6921
  %v8165 = vpop.f32.mrf.mxu0
  %v8166 = vadd.f32 %v7957, %v8165
  %8167 = vmatmul.f32.gmra.mxu0 %v6922
  %v8168 = vpop.f32.mrf.mxu0
  %v8169 = vadd.f32 %v7960, %v8168
  %8170 = vmatmul.f32.gmra.mxu0 %v6923
  %v8171 = vpop.f32.mrf.mxu0
  %v8172 = vadd.f32 %v7963, %v8171
  %8173 = vmatmul.f32.gmra.mxu0 %v6924
  %v8174 = vpop.f32.mrf.mxu0
  %v8175 = vadd.f32 %v7966, %v8174
  %8176 = vmatmul.f32.gmra.mxu0 %v6925
  %v8177 = vpop.f32.mrf.mxu0
  %v8178 = vadd.f32 %v7969, %v8177
  %8179 = vmatmul.f32.gmra.mxu0 %v6926
  %v8180 = vpop.f32.mrf.mxu0
  %v8181 = vadd.f32 %v7972, %v8180
  %8182 = vmatmul.f32.gmra.mxu0 %v6927
  %v8183 = vpop.f32.mrf.mxu0
  %v8184 = vadd.f32 %v7975, %v8183
  %8185 = vmatmul.f32.gmra.mxu0 %v6928
  %v8186 = vpop.f32.mrf.mxu0
  %v8187 = vadd.f32 %v7978, %v8186
  %8188 = vmatmul.f32.gmra.mxu0 %v6929
  %v8189 = vpop.f32.mrf.mxu0
  %v8190 = vadd.f32 %v7981, %v8189
  %8191 = vmatmul.f32.gmra.mxu0 %v6930
  %v8192 = vpop.f32.mrf.mxu0
  %v8193 = vadd.f32 %v7984, %v8192
  %8194 = vmatmul.f32.gmra.mxu0 %v6931
  %v8195 = vpop.f32.mrf.mxu0
  %v8196 = vadd.f32 %v7987, %v8195
  %8197 = vmatmul.f32.gmra.mxu0 %v6932
  %v8198 = vpop.f32.mrf.mxu0
  %v8199 = vadd.f32 %v7990, %v8198
  %8200 = vmatmul.f32.gmra.mxu0 %v6933
  %v8201 = vpop.f32.mrf.mxu0
  %v8202 = vadd.f32 %v7993, %v8201
  %8203 = vmatmul.f32.gmra.mxu0 %v6934
  %v8204 = vpop.f32.mrf.mxu0
  %v8205 = vadd.f32 %v7996, %v8204
  %8206 = vmatmul.f32.gmra.mxu0 %v6935
  %v8207 = vpop.f32.mrf.mxu0
  %v8208 = vadd.f32 %v7999, %v8207
  %8209 = vmatmul.f32.gmra.mxu0 %v6936
  %v8210 = vpop.f32.mrf.mxu0
  %v8211 = vadd.f32 %v8002, %v8210
  %8212 = vmatmul.f32.gmra.mxu0 %v6937
  %v8213 = vpop.f32.mrf.mxu0
  %v8214 = vadd.f32 %v8005, %v8213
  %8215 = vmatmul.f32.gmra.mxu0 %v6938
  %v8216 = vpop.f32.mrf.mxu0
  %v8217 = vadd.f32 %v8008, %v8216
  %8218 = vmatmul.f32.gmra.mxu0 %v6939
  %v8219 = vpop.f32.mrf.mxu0
  %v8220 = vadd.f32 %v8011, %v8219
  %8221 = vmatmul.f32.gmra.mxu0 %v6940
  %v8222 = vpop.f32.mrf.mxu0
  %v8223 = vadd.f32 %v8014, %v8222
  %8224 = vmatmul.f32.gmra.mxu0 %v6941
  %v8225 = vpop.f32.mrf.mxu0
  %v8226 = vadd.f32 %v8017, %v8225
  %8227 = vmatmul.f32.gmra.mxu0 %v6942
  %v8228 = vpop.f32.mrf.mxu0
  %v8229 = vadd.f32 %v8020, %v8228
  %8230 = vmatmul.f32.gmra.mxu0 %v6943
  %v8231 = vpop.f32.mrf.mxu0
  %v8232 = vadd.f32 %v8023, %v8231
  %8233 = vmatmul.f32.gmra.mxu0 %v6944
  %v8234 = vpop.f32.mrf.mxu0
  %v8235 = vadd.f32 %v8026, %v8234
  %8236 = vmatmul.f32.gmra.mxu0 %v6945
  %v8237 = vpop.f32.mrf.mxu0
  %v8238 = vadd.f32 %v8029, %v8237
  %8239 = vmatmul.f32.gmra.mxu0 %v6946
  %v8240 = vpop.f32.mrf.mxu0
  %v8241 = vadd.f32 %v8032, %v8240
  %8242 = vmatmul.f32.gmra.mxu0 %v6947
  %v8243 = vpop.f32.mrf.mxu0
  %v8244 = vadd.f32 %v8035, %v8243
  %8245 = vmatmul.f32.gmra.mxu0 %v6948
  %v8246 = vpop.f32.mrf.mxu0
  %v8247 = vadd.f32 %v8038, %v8246
  %8248 = vdwg.mxu0
  %8249 = vmatpush.msra.mxu0 %v7348
  %8250 = vmatpush.msra.mxu0 %v7347
  %8251 = vmatpush.msra.mxu0 %v7346
  %8252 = vmatpush.msra.mxu0 %v7345
  %8253 = vmatpush.msra.mxu0 %v7344
  %8254 = vmatpush.msra.mxu0 %v7343
  %8255 = vmatpush.msra.mxu0 %v7342
  %8256 = vmatpush.msra.mxu0 %v7341
  %8257 = vmatpush.msra.mxu0 %v7340
  %8258 = vmatpush.msra.mxu0 %v7339
  %8259 = vmatpush.msra.mxu0 %v7338
  %8260 = vmatpush.msra.mxu0 %v7337
  %8261 = vmatpush.msra.mxu0 %v7336
  %8262 = vmatpush.msra.mxu0 %v7335
  %8263 = vmatpush.msra.mxu0 %v7334
  %8264 = vmatpush.msra.mxu0 %v7333
  %8265 = vmatmul.f32.gmra.mxu0 %v6949
  %v8266 = vpop.f32.mrf.mxu0
  %v8267 = vadd.f32 %v8058, %v8266
  %8268 = vmatmul.f32.gmra.mxu0 %v6950
  %v8269 = vpop.f32.mrf.mxu0
  %v8270 = vadd.f32 %v8061, %v8269
  %8271 = vmatmul.f32.gmra.mxu0 %v6951
  %v8272 = vpop.f32.mrf.mxu0
  %v8273 = vadd.f32 %v8064, %v8272
  %8274 = vmatmul.f32.gmra.mxu0 %v6952
  %v8275 = vpop.f32.mrf.mxu0
  %v8276 = vadd.f32 %v8067, %v8275
  %8277 = vmatmul.f32.gmra.mxu0 %v6953
  %v8278 = vpop.f32.mrf.mxu0
  %v8279 = vadd.f32 %v8070, %v8278
  %8280 = vmatmul.f32.gmra.mxu0 %v6954
  %v8281 = vpop.f32.mrf.mxu0
  %v8282 = vadd.f32 %v8073, %v8281
  %8283 = vmatmul.f32.gmra.mxu0 %v6955
  %v8284 = vpop.f32.mrf.mxu0
  %v8285 = vadd.f32 %v8076, %v8284
  %8286 = vmatmul.f32.gmra.mxu0 %v6956
  %v8287 = vpop.f32.mrf.mxu0
  %v8288 = vadd.f32 %v8079, %v8287
  %8289 = vmatmul.f32.gmra.mxu0 %v6957
  %v8290 = vpop.f32.mrf.mxu0
  %v8291 = vadd.f32 %v8082, %v8290
  %8292 = vmatmul.f32.gmra.mxu0 %v6958
  %v8293 = vpop.f32.mrf.mxu0
  %v8294 = vadd.f32 %v8085, %v8293
  %8295 = vmatmul.f32.gmra.mxu0 %v6959
  %v8296 = vpop.f32.mrf.mxu0
  %v8297 = vadd.f32 %v8088, %v8296
  %8298 = vmatmul.f32.gmra.mxu0 %v6960
  %v8299 = vpop.f32.mrf.mxu0
  %v8300 = vadd.f32 %v8091, %v8299
  %8301 = vmatmul.f32.gmra.mxu0 %v6961
  %v8302 = vpop.f32.mrf.mxu0
  %v8303 = vadd.f32 %v8094, %v8302
  %8304 = vmatmul.f32.gmra.mxu0 %v6962
  %v8305 = vpop.f32.mrf.mxu0
  %v8306 = vadd.f32 %v8097, %v8305
  %8307 = vmatmul.f32.gmra.mxu0 %v6963
  %v8308 = vpop.f32.mrf.mxu0
  %v8309 = vadd.f32 %v8100, %v8308
  %8310 = vmatmul.f32.gmra.mxu0 %v6964
  %v8311 = vpop.f32.mrf.mxu0
  %v8312 = vadd.f32 %v8103, %v8311
  %8313 = vmatmul.f32.gmra.mxu0 %v6965
  %v8314 = vpop.f32.mrf.mxu0
  %v8315 = vadd.f32 %v8106, %v8314
  %8316 = vmatmul.f32.gmra.mxu0 %v6966
  %v8317 = vpop.f32.mrf.mxu0
  %v8318 = vadd.f32 %v8109, %v8317
  %8319 = vmatmul.f32.gmra.mxu0 %v6967
  %v8320 = vpop.f32.mrf.mxu0
  %v8321 = vadd.f32 %v8112, %v8320
  %8322 = vmatmul.f32.gmra.mxu0 %v6968
  %v8323 = vpop.f32.mrf.mxu0
  %v8324 = vadd.f32 %v8115, %v8323
  %8325 = vmatmul.f32.gmra.mxu0 %v6969
  %v8326 = vpop.f32.mrf.mxu0
  %v8327 = vadd.f32 %v8118, %v8326
  %8328 = vmatmul.f32.gmra.mxu0 %v6970
  %v8329 = vpop.f32.mrf.mxu0
  %v8330 = vadd.f32 %v8121, %v8329
  %8331 = vmatmul.f32.gmra.mxu0 %v6971
  %v8332 = vpop.f32.mrf.mxu0
  %v8333 = vadd.f32 %v8124, %v8332
  %8334 = vmatmul.f32.gmra.mxu0 %v6972
  %v8335 = vpop.f32.mrf.mxu0
  %v8336 = vadd.f32 %v8127, %v8335
  %8337 = vmatmul.f32.gmra.mxu0 %v6973
  %v8338 = vpop.f32.mrf.mxu0
  %v8339 = vadd.f32 %v8130, %v8338
  %8340 = vmatmul.f32.gmra.mxu0 %v6974
  %v8341 = vpop.f32.mrf.mxu0
  %v8342 = vadd.f32 %v8133, %v8341
  %8343 = vmatmul.f32.gmra.mxu0 %v6975
  %v8344 = vpop.f32.mrf.mxu0
  %v8345 = vadd.f32 %v8136, %v8344
  %8346 = vmatmul.f32.gmra.mxu0 %v6976
  %v8347 = vpop.f32.mrf.mxu0
  %v8348 = vadd.f32 %v8139, %v8347
  %8349 = vmatmul.f32.gmra.mxu0 %v6977
  %v8350 = vpop.f32.mrf.mxu0
  %v8351 = vadd.f32 %v8142, %v8350
  %8352 = vmatmul.f32.gmra.mxu0 %v6978
  %v8353 = vpop.f32.mrf.mxu0
  %v8354 = vadd.f32 %v8145, %v8353
  %8355 = vmatmul.f32.gmra.mxu0 %v6979
  %v8356 = vpop.f32.mrf.mxu0
  %v8357 = vadd.f32 %v8148, %v8356
  %8358 = vmatmul.f32.gmra.mxu0 %v6980
  %v8359 = vpop.f32.mrf.mxu0
  %v8360 = vadd.f32 %v8151, %v8359
  %8361 = vmatmul.f32.gmra.mxu0 %v6981
  %v8362 = vpop.f32.mrf.mxu0
  %v8363 = vadd.f32 %v8154, %v8362
  %8364 = vmatmul.f32.gmra.mxu0 %v6982
  %v8365 = vpop.f32.mrf.mxu0
  %v8366 = vadd.f32 %v8157, %v8365
  %8367 = vmatmul.f32.gmra.mxu0 %v6983
  %v8368 = vpop.f32.mrf.mxu0
  %v8369 = vadd.f32 %v8160, %v8368
  %8370 = vmatmul.f32.gmra.mxu0 %v6984
  %v8371 = vpop.f32.mrf.mxu0
  %v8372 = vadd.f32 %v8163, %v8371
  %8373 = vmatmul.f32.gmra.mxu0 %v6985
  %v8374 = vpop.f32.mrf.mxu0
  %v8375 = vadd.f32 %v8166, %v8374
  %8376 = vmatmul.f32.gmra.mxu0 %v6986
  %v8377 = vpop.f32.mrf.mxu0
  %v8378 = vadd.f32 %v8169, %v8377
  %8379 = vmatmul.f32.gmra.mxu0 %v6987
  %v8380 = vpop.f32.mrf.mxu0
  %v8381 = vadd.f32 %v8172, %v8380
  %8382 = vmatmul.f32.gmra.mxu0 %v6988
  %v8383 = vpop.f32.mrf.mxu0
  %v8384 = vadd.f32 %v8175, %v8383
  %8385 = vmatmul.f32.gmra.mxu0 %v6989
  %v8386 = vpop.f32.mrf.mxu0
  %v8387 = vadd.f32 %v8178, %v8386
  %8388 = vmatmul.f32.gmra.mxu0 %v6990
  %v8389 = vpop.f32.mrf.mxu0
  %v8390 = vadd.f32 %v8181, %v8389
  %8391 = vmatmul.f32.gmra.mxu0 %v6991
  %v8392 = vpop.f32.mrf.mxu0
  %v8393 = vadd.f32 %v8184, %v8392
  %8394 = vmatmul.f32.gmra.mxu0 %v6992
  %v8395 = vpop.f32.mrf.mxu0
  %v8396 = vadd.f32 %v8187, %v8395
  %8397 = vmatmul.f32.gmra.mxu0 %v6993
  %v8398 = vpop.f32.mrf.mxu0
  %v8399 = vadd.f32 %v8190, %v8398
  %8400 = vmatmul.f32.gmra.mxu0 %v6994
  %v8401 = vpop.f32.mrf.mxu0
  %v8402 = vadd.f32 %v8193, %v8401
  %8403 = vmatmul.f32.gmra.mxu0 %v6995
  %v8404 = vpop.f32.mrf.mxu0
  %v8405 = vadd.f32 %v8196, %v8404
  %8406 = vmatmul.f32.gmra.mxu0 %v6996
  %v8407 = vpop.f32.mrf.mxu0
  %v8408 = vadd.f32 %v8199, %v8407
  %8409 = vmatmul.f32.gmra.mxu0 %v6997
  %v8410 = vpop.f32.mrf.mxu0
  %v8411 = vadd.f32 %v8202, %v8410
  %8412 = vmatmul.f32.gmra.mxu0 %v6998
  %v8413 = vpop.f32.mrf.mxu0
  %v8414 = vadd.f32 %v8205, %v8413
  %8415 = vmatmul.f32.gmra.mxu0 %v6999
  %v8416 = vpop.f32.mrf.mxu0
  %v8417 = vadd.f32 %v8208, %v8416
  %8418 = vmatmul.f32.gmra.mxu0 %v7000
  %v8419 = vpop.f32.mrf.mxu0
  %v8420 = vadd.f32 %v8211, %v8419
  %8421 = vmatmul.f32.gmra.mxu0 %v7001
  %v8422 = vpop.f32.mrf.mxu0
  %v8423 = vadd.f32 %v8214, %v8422
  %8424 = vmatmul.f32.gmra.mxu0 %v7002
  %v8425 = vpop.f32.mrf.mxu0
  %v8426 = vadd.f32 %v8217, %v8425
  %8427 = vmatmul.f32.gmra.mxu0 %v7003
  %v8428 = vpop.f32.mrf.mxu0
  %v8429 = vadd.f32 %v8220, %v8428
  %8430 = vmatmul.f32.gmra.mxu0 %v7004
  %v8431 = vpop.f32.mrf.mxu0
  %v8432 = vadd.f32 %v8223, %v8431
  %8433 = vmatmul.f32.gmra.mxu0 %v7005
  %v8434 = vpop.f32.mrf.mxu0
  %v8435 = vadd.f32 %v8226, %v8434
  %8436 = vmatmul.f32.gmra.mxu0 %v7006
  %v8437 = vpop.f32.mrf.mxu0
  %v8438 = vadd.f32 %v8229, %v8437
  %8439 = vmatmul.f32.gmra.mxu0 %v7007
  %v8440 = vpop.f32.mrf.mxu0
  %v8441 = vadd.f32 %v8232, %v8440
  %8442 = vmatmul.f32.gmra.mxu0 %v7008
  %v8443 = vpop.f32.mrf.mxu0
  %v8444 = vadd.f32 %v8235, %v8443
  %8445 = vmatmul.f32.gmra.mxu0 %v7009
  %v8446 = vpop.f32.mrf.mxu0
  %v8447 = vadd.f32 %v8238, %v8446
  %8448 = vmatmul.f32.gmra.mxu0 %v7010
  %v8449 = vpop.f32.mrf.mxu0
  %v8450 = vadd.f32 %v8241, %v8449
  %8451 = vmatmul.f32.gmra.mxu0 %v7011
  %v8452 = vpop.f32.mrf.mxu0
  %v8453 = vadd.f32 %v8244, %v8452
  %8454 = vmatmul.f32.gmra.mxu0 %v7012
  %v8455 = vpop.f32.mrf.mxu0
  %v8456 = vadd.f32 %v8247, %v8455
  %8457 = vdwg.mxu0
  %8458 = vmatpush.msra.mxu0 %v7364
  %8459 = vmatpush.msra.mxu0 %v7363
  %8460 = vmatpush.msra.mxu0 %v7362
  %8461 = vmatpush.msra.mxu0 %v7361
  %8462 = vmatpush.msra.mxu0 %v7360
  %8463 = vmatpush.msra.mxu0 %v7359
  %8464 = vmatpush.msra.mxu0 %v7358
  %8465 = vmatpush.msra.mxu0 %v7357
  %8466 = vmatpush.msra.mxu0 %v7356
  %8467 = vmatpush.msra.mxu0 %v7355
  %8468 = vmatpush.msra.mxu0 %v7354
  %8469 = vmatpush.msra.mxu0 %v7353
  %8470 = vmatpush.msra.mxu0 %v7352
  %8471 = vmatpush.msra.mxu0 %v7351
  %8472 = vmatpush.msra.mxu0 %v7350
  %8473 = vmatpush.msra.mxu0 %v7349
  %8474 = vmatmul.f32.gmra.mxu0 %v7013
  %v8475 = vpop.f32.mrf.mxu0
  %v8476 = vadd.f32 %v8267, %v8475
  %8477 = vmatmul.f32.gmra.mxu0 %v7014
  %v8478 = vpop.f32.mrf.mxu0
  %v8479 = vadd.f32 %v8270, %v8478
  %8480 = vmatmul.f32.gmra.mxu0 %v7015
  %v8481 = vpop.f32.mrf.mxu0
  %v8482 = vadd.f32 %v8273, %v8481
  %8483 = vmatmul.f32.gmra.mxu0 %v7016
  %v8484 = vpop.f32.mrf.mxu0
  %v8485 = vadd.f32 %v8276, %v8484
  %8486 = vmatmul.f32.gmra.mxu0 %v7017
  %v8487 = vpop.f32.mrf.mxu0
  %v8488 = vadd.f32 %v8279, %v8487
  %8489 = vmatmul.f32.gmra.mxu0 %v7018
  %v8490 = vpop.f32.mrf.mxu0
  %v8491 = vadd.f32 %v8282, %v8490
  %8492 = vmatmul.f32.gmra.mxu0 %v7019
  %v8493 = vpop.f32.mrf.mxu0
  %v8494 = vadd.f32 %v8285, %v8493
  %8495 = vmatmul.f32.gmra.mxu0 %v7020
  %v8496 = vpop.f32.mrf.mxu0
  %v8497 = vadd.f32 %v8288, %v8496
  %8498 = vmatmul.f32.gmra.mxu0 %v7021
  %v8499 = vpop.f32.mrf.mxu0
  %v8500 = vadd.f32 %v8291, %v8499
  %8501 = vmatmul.f32.gmra.mxu0 %v7022
  %v8502 = vpop.f32.mrf.mxu0
  %v8503 = vadd.f32 %v8294, %v8502
  %8504 = vmatmul.f32.gmra.mxu0 %v7023
  %v8505 = vpop.f32.mrf.mxu0
  %v8506 = vadd.f32 %v8297, %v8505
  %8507 = vmatmul.f32.gmra.mxu0 %v7024
  %v8508 = vpop.f32.mrf.mxu0
  %v8509 = vadd.f32 %v8300, %v8508
  %8510 = vmatmul.f32.gmra.mxu0 %v7025
  %v8511 = vpop.f32.mrf.mxu0
  %v8512 = vadd.f32 %v8303, %v8511
  %8513 = vmatmul.f32.gmra.mxu0 %v7026
  %v8514 = vpop.f32.mrf.mxu0
  %v8515 = vadd.f32 %v8306, %v8514
  %8516 = vmatmul.f32.gmra.mxu0 %v7027
  %v8517 = vpop.f32.mrf.mxu0
  %v8518 = vadd.f32 %v8309, %v8517
  %8519 = vmatmul.f32.gmra.mxu0 %v7028
  %v8520 = vpop.f32.mrf.mxu0
  %v8521 = vadd.f32 %v8312, %v8520
  %8522 = vmatmul.f32.gmra.mxu0 %v7029
  %v8523 = vpop.f32.mrf.mxu0
  %v8524 = vadd.f32 %v8315, %v8523
  %8525 = vmatmul.f32.gmra.mxu0 %v7030
  %v8526 = vpop.f32.mrf.mxu0
  %v8527 = vadd.f32 %v8318, %v8526
  %8528 = vmatmul.f32.gmra.mxu0 %v7031
  %v8529 = vpop.f32.mrf.mxu0
  %v8530 = vadd.f32 %v8321, %v8529
  %8531 = vmatmul.f32.gmra.mxu0 %v7032
  %v8532 = vpop.f32.mrf.mxu0
  %v8533 = vadd.f32 %v8324, %v8532
  %8534 = vmatmul.f32.gmra.mxu0 %v7033
  %v8535 = vpop.f32.mrf.mxu0
  %v8536 = vadd.f32 %v8327, %v8535
  %8537 = vmatmul.f32.gmra.mxu0 %v7034
  %v8538 = vpop.f32.mrf.mxu0
  %v8539 = vadd.f32 %v8330, %v8538
  %8540 = vmatmul.f32.gmra.mxu0 %v7035
  %v8541 = vpop.f32.mrf.mxu0
  %v8542 = vadd.f32 %v8333, %v8541
  %8543 = vmatmul.f32.gmra.mxu0 %v7036
  %v8544 = vpop.f32.mrf.mxu0
  %v8545 = vadd.f32 %v8336, %v8544
  %8546 = vmatmul.f32.gmra.mxu0 %v7037
  %v8547 = vpop.f32.mrf.mxu0
  %v8548 = vadd.f32 %v8339, %v8547
  %8549 = vmatmul.f32.gmra.mxu0 %v7038
  %v8550 = vpop.f32.mrf.mxu0
  %v8551 = vadd.f32 %v8342, %v8550
  %8552 = vmatmul.f32.gmra.mxu0 %v7039
  %v8553 = vpop.f32.mrf.mxu0
  %v8554 = vadd.f32 %v8345, %v8553
  %8555 = vmatmul.f32.gmra.mxu0 %v7040
  %v8556 = vpop.f32.mrf.mxu0
  %v8557 = vadd.f32 %v8348, %v8556
  %8558 = vmatmul.f32.gmra.mxu0 %v7041
  %v8559 = vpop.f32.mrf.mxu0
  %v8560 = vadd.f32 %v8351, %v8559
  %8561 = vmatmul.f32.gmra.mxu0 %v7042
  %v8562 = vpop.f32.mrf.mxu0
  %v8563 = vadd.f32 %v8354, %v8562
  %8564 = vmatmul.f32.gmra.mxu0 %v7043
  %v8565 = vpop.f32.mrf.mxu0
  %v8566 = vadd.f32 %v8357, %v8565
  %8567 = vmatmul.f32.gmra.mxu0 %v7044
  %v8568 = vpop.f32.mrf.mxu0
  %v8569 = vadd.f32 %v8360, %v8568
  %8570 = vmatmul.f32.gmra.mxu0 %v7045
  %v8571 = vpop.f32.mrf.mxu0
  %v8572 = vadd.f32 %v8363, %v8571
  %8573 = vmatmul.f32.gmra.mxu0 %v7046
  %v8574 = vpop.f32.mrf.mxu0
  %v8575 = vadd.f32 %v8366, %v8574
  %8576 = vmatmul.f32.gmra.mxu0 %v7047
  %v8577 = vpop.f32.mrf.mxu0
  %v8578 = vadd.f32 %v8369, %v8577
  %8579 = vmatmul.f32.gmra.mxu0 %v7048
  %v8580 = vpop.f32.mrf.mxu0
  %v8581 = vadd.f32 %v8372, %v8580
  %8582 = vmatmul.f32.gmra.mxu0 %v7049
  %v8583 = vpop.f32.mrf.mxu0
  %v8584 = vadd.f32 %v8375, %v8583
  %8585 = vmatmul.f32.gmra.mxu0 %v7050
  %v8586 = vpop.f32.mrf.mxu0
  %v8587 = vadd.f32 %v8378, %v8586
  %8588 = vmatmul.f32.gmra.mxu0 %v7051
  %v8589 = vpop.f32.mrf.mxu0
  %v8590 = vadd.f32 %v8381, %v8589
  %8591 = vmatmul.f32.gmra.mxu0 %v7052
  %v8592 = vpop.f32.mrf.mxu0
  %v8593 = vadd.f32 %v8384, %v8592
  %8594 = vmatmul.f32.gmra.mxu0 %v7053
  %v8595 = vpop.f32.mrf.mxu0
  %v8596 = vadd.f32 %v8387, %v8595
  %8597 = vmatmul.f32.gmra.mxu0 %v7054
  %v8598 = vpop.f32.mrf.mxu0
  %v8599 = vadd.f32 %v8390, %v8598
  %8600 = vmatmul.f32.gmra.mxu0 %v7055
  %v8601 = vpop.f32.mrf.mxu0
  %v8602 = vadd.f32 %v8393, %v8601
  %8603 = vmatmul.f32.gmra.mxu0 %v7056
  %v8604 = vpop.f32.mrf.mxu0
  %v8605 = vadd.f32 %v8396, %v8604
  %8606 = vmatmul.f32.gmra.mxu0 %v7057
  %v8607 = vpop.f32.mrf.mxu0
  %v8608 = vadd.f32 %v8399, %v8607
  %8609 = vmatmul.f32.gmra.mxu0 %v7058
  %v8610 = vpop.f32.mrf.mxu0
  %v8611 = vadd.f32 %v8402, %v8610
  %8612 = vmatmul.f32.gmra.mxu0 %v7059
  %v8613 = vpop.f32.mrf.mxu0
  %v8614 = vadd.f32 %v8405, %v8613
  %8615 = vmatmul.f32.gmra.mxu0 %v7060
  %v8616 = vpop.f32.mrf.mxu0
  %v8617 = vadd.f32 %v8408, %v8616
  %8618 = vmatmul.f32.gmra.mxu0 %v7061
  %v8619 = vpop.f32.mrf.mxu0
  %v8620 = vadd.f32 %v8411, %v8619
  %8621 = vmatmul.f32.gmra.mxu0 %v7062
  %v8622 = vpop.f32.mrf.mxu0
  %v8623 = vadd.f32 %v8414, %v8622
  %8624 = vmatmul.f32.gmra.mxu0 %v7063
  %v8625 = vpop.f32.mrf.mxu0
  %v8626 = vadd.f32 %v8417, %v8625
  %8627 = vmatmul.f32.gmra.mxu0 %v7064
  %v8628 = vpop.f32.mrf.mxu0
  %v8629 = vadd.f32 %v8420, %v8628
  %8630 = vmatmul.f32.gmra.mxu0 %v7065
  %v8631 = vpop.f32.mrf.mxu0
  %v8632 = vadd.f32 %v8423, %v8631
  %8633 = vmatmul.f32.gmra.mxu0 %v7066
  %v8634 = vpop.f32.mrf.mxu0
  %v8635 = vadd.f32 %v8426, %v8634
  %8636 = vmatmul.f32.gmra.mxu0 %v7067
  %v8637 = vpop.f32.mrf.mxu0
  %v8638 = vadd.f32 %v8429, %v8637
  %8639 = vmatmul.f32.gmra.mxu0 %v7068
  %v8640 = vpop.f32.mrf.mxu0
  %v8641 = vadd.f32 %v8432, %v8640
  %8642 = vmatmul.f32.gmra.mxu0 %v7069
  %v8643 = vpop.f32.mrf.mxu0
  %v8644 = vadd.f32 %v8435, %v8643
  %8645 = vmatmul.f32.gmra.mxu0 %v7070
  %v8646 = vpop.f32.mrf.mxu0
  %v8647 = vadd.f32 %v8438, %v8646
  %8648 = vmatmul.f32.gmra.mxu0 %v7071
  %v8649 = vpop.f32.mrf.mxu0
  %v8650 = vadd.f32 %v8441, %v8649
  %8651 = vmatmul.f32.gmra.mxu0 %v7072
  %v8652 = vpop.f32.mrf.mxu0
  %v8653 = vadd.f32 %v8444, %v8652
  %8654 = vmatmul.f32.gmra.mxu0 %v7073
  %v8655 = vpop.f32.mrf.mxu0
  %v8656 = vadd.f32 %v8447, %v8655
  %8657 = vmatmul.f32.gmra.mxu0 %v7074
  %v8658 = vpop.f32.mrf.mxu0
  %v8659 = vadd.f32 %v8450, %v8658
  %8660 = vmatmul.f32.gmra.mxu0 %v7075
  %v8661 = vpop.f32.mrf.mxu0
  %v8662 = vadd.f32 %v8453, %v8661
  %8663 = vmatmul.f32.gmra.mxu0 %v7076
  %v8664 = vpop.f32.mrf.mxu0
  %v8665 = vadd.f32 %v8456, %v8664
  %8666 = vdwg.mxu0
  %8667 = vmatpush.msra.mxu0 %v7380
  %8668 = vmatpush.msra.mxu0 %v7379
  %8669 = vmatpush.msra.mxu0 %v7378
  %8670 = vmatpush.msra.mxu0 %v7377
  %8671 = vmatpush.msra.mxu0 %v7376
  %8672 = vmatpush.msra.mxu0 %v7375
  %8673 = vmatpush.msra.mxu0 %v7374
  %8674 = vmatpush.msra.mxu0 %v7373
  %8675 = vmatpush.msra.mxu0 %v7372
  %8676 = vmatpush.msra.mxu0 %v7371
  %8677 = vmatpush.msra.mxu0 %v7370
  %8678 = vmatpush.msra.mxu0 %v7369
  %8679 = vmatpush.msra.mxu0 %v7368
  %8680 = vmatpush.msra.mxu0 %v7367
  %8681 = vmatpush.msra.mxu0 %v7366
  %8682 = vmatpush.msra.mxu0 %v7365
  %8683 = vmatmul.f32.gmra.mxu0 %v7077
  %v8684 = vpop.f32.mrf.mxu0
  %v8685 = vadd.f32 %v8476, %v8684
  %8686 = vmatmul.f32.gmra.mxu0 %v7078
  %v8687 = vpop.f32.mrf.mxu0
  %v8688 = vadd.f32 %v8479, %v8687
  %8689 = vmatmul.f32.gmra.mxu0 %v7079
  %v8690 = vpop.f32.mrf.mxu0
  %v8691 = vadd.f32 %v8482, %v8690
  %8692 = vmatmul.f32.gmra.mxu0 %v7080
  %v8693 = vpop.f32.mrf.mxu0
  %v8694 = vadd.f32 %v8485, %v8693
  %8695 = vmatmul.f32.gmra.mxu0 %v7081
  %v8696 = vpop.f32.mrf.mxu0
  %v8697 = vadd.f32 %v8488, %v8696
  %8698 = vmatmul.f32.gmra.mxu0 %v7082
  %v8699 = vpop.f32.mrf.mxu0
  %v8700 = vadd.f32 %v8491, %v8699
  %8701 = vmatmul.f32.gmra.mxu0 %v7083
  %v8702 = vpop.f32.mrf.mxu0
  %v8703 = vadd.f32 %v8494, %v8702
  %8704 = vmatmul.f32.gmra.mxu0 %v7084
  %v8705 = vpop.f32.mrf.mxu0
  %v8706 = vadd.f32 %v8497, %v8705
  %8707 = vmatmul.f32.gmra.mxu0 %v7085
  %v8708 = vpop.f32.mrf.mxu0
  %v8709 = vadd.f32 %v8500, %v8708
  %8710 = vmatmul.f32.gmra.mxu0 %v7086
  %v8711 = vpop.f32.mrf.mxu0
  %v8712 = vadd.f32 %v8503, %v8711
  %8713 = vmatmul.f32.gmra.mxu0 %v7087
  %v8714 = vpop.f32.mrf.mxu0
  %v8715 = vadd.f32 %v8506, %v8714
  %8716 = vmatmul.f32.gmra.mxu0 %v7088
  %v8717 = vpop.f32.mrf.mxu0
  %v8718 = vadd.f32 %v8509, %v8717
  %8719 = vmatmul.f32.gmra.mxu0 %v7089
  %v8720 = vpop.f32.mrf.mxu0
  %v8721 = vadd.f32 %v8512, %v8720
  %8722 = vmatmul.f32.gmra.mxu0 %v7090
  %v8723 = vpop.f32.mrf.mxu0
  %v8724 = vadd.f32 %v8515, %v8723
  %8725 = vmatmul.f32.gmra.mxu0 %v7091
  %v8726 = vpop.f32.mrf.mxu0
  %v8727 = vadd.f32 %v8518, %v8726
  %8728 = vmatmul.f32.gmra.mxu0 %v7092
  %v8729 = vpop.f32.mrf.mxu0
  %v8730 = vadd.f32 %v8521, %v8729
  %8731 = vmatmul.f32.gmra.mxu0 %v7093
  %v8732 = vpop.f32.mrf.mxu0
  %v8733 = vadd.f32 %v8524, %v8732
  %8734 = vmatmul.f32.gmra.mxu0 %v7094
  %v8735 = vpop.f32.mrf.mxu0
  %v8736 = vadd.f32 %v8527, %v8735
  %8737 = vmatmul.f32.gmra.mxu0 %v7095
  %v8738 = vpop.f32.mrf.mxu0
  %v8739 = vadd.f32 %v8530, %v8738
  %8740 = vmatmul.f32.gmra.mxu0 %v7096
  %v8741 = vpop.f32.mrf.mxu0
  %v8742 = vadd.f32 %v8533, %v8741
  %8743 = vmatmul.f32.gmra.mxu0 %v7097
  %v8744 = vpop.f32.mrf.mxu0
  %v8745 = vadd.f32 %v8536, %v8744
  %8746 = vmatmul.f32.gmra.mxu0 %v7098
  %v8747 = vpop.f32.mrf.mxu0
  %v8748 = vadd.f32 %v8539, %v8747
  %8749 = vmatmul.f32.gmra.mxu0 %v7099
  %v8750 = vpop.f32.mrf.mxu0
  %v8751 = vadd.f32 %v8542, %v8750
  %8752 = vmatmul.f32.gmra.mxu0 %v7100
  %v8753 = vpop.f32.mrf.mxu0
  %v8754 = vadd.f32 %v8545, %v8753
  %8755 = vmatmul.f32.gmra.mxu0 %v7101
  %v8756 = vpop.f32.mrf.mxu0
  %v8757 = vadd.f32 %v8548, %v8756
  %8758 = vmatmul.f32.gmra.mxu0 %v7102
  %v8759 = vpop.f32.mrf.mxu0
  %v8760 = vadd.f32 %v8551, %v8759
  %8761 = vmatmul.f32.gmra.mxu0 %v7103
  %v8762 = vpop.f32.mrf.mxu0
  %v8763 = vadd.f32 %v8554, %v8762
  %8764 = vmatmul.f32.gmra.mxu0 %v7104
  %v8765 = vpop.f32.mrf.mxu0
  %v8766 = vadd.f32 %v8557, %v8765
  %8767 = vmatmul.f32.gmra.mxu0 %v7105
  %v8768 = vpop.f32.mrf.mxu0
  %v8769 = vadd.f32 %v8560, %v8768
  %8770 = vmatmul.f32.gmra.mxu0 %v7106
  %v8771 = vpop.f32.mrf.mxu0
  %v8772 = vadd.f32 %v8563, %v8771
  %8773 = vmatmul.f32.gmra.mxu0 %v7107
  %v8774 = vpop.f32.mrf.mxu0
  %v8775 = vadd.f32 %v8566, %v8774
  %8776 = vmatmul.f32.gmra.mxu0 %v7108
  %v8777 = vpop.f32.mrf.mxu0
  %v8778 = vadd.f32 %v8569, %v8777
  %8779 = vmatmul.f32.gmra.mxu0 %v7109
  %v8780 = vpop.f32.mrf.mxu0
  %v8781 = vadd.f32 %v8572, %v8780
  %8782 = vmatmul.f32.gmra.mxu0 %v7110
  %v8783 = vpop.f32.mrf.mxu0
  %v8784 = vadd.f32 %v8575, %v8783
  %8785 = vmatmul.f32.gmra.mxu0 %v7111
  %v8786 = vpop.f32.mrf.mxu0
  %v8787 = vadd.f32 %v8578, %v8786
  %8788 = vmatmul.f32.gmra.mxu0 %v7112
  %v8789 = vpop.f32.mrf.mxu0
  %v8790 = vadd.f32 %v8581, %v8789
  %8791 = vmatmul.f32.gmra.mxu0 %v7113
  %v8792 = vpop.f32.mrf.mxu0
  %v8793 = vadd.f32 %v8584, %v8792
  %8794 = vmatmul.f32.gmra.mxu0 %v7114
  %v8795 = vpop.f32.mrf.mxu0
  %v8796 = vadd.f32 %v8587, %v8795
  %8797 = vmatmul.f32.gmra.mxu0 %v7115
  %v8798 = vpop.f32.mrf.mxu0
  %v8799 = vadd.f32 %v8590, %v8798
  %8800 = vmatmul.f32.gmra.mxu0 %v7116
  %v8801 = vpop.f32.mrf.mxu0
  %v8802 = vadd.f32 %v8593, %v8801
  %8803 = vmatmul.f32.gmra.mxu0 %v7117
  %v8804 = vpop.f32.mrf.mxu0
  %v8805 = vadd.f32 %v8596, %v8804
  %8806 = vmatmul.f32.gmra.mxu0 %v7118
  %v8807 = vpop.f32.mrf.mxu0
  %v8808 = vadd.f32 %v8599, %v8807
  %8809 = vmatmul.f32.gmra.mxu0 %v7119
  %v8810 = vpop.f32.mrf.mxu0
  %v8811 = vadd.f32 %v8602, %v8810
  %8812 = vmatmul.f32.gmra.mxu0 %v7120
  %v8813 = vpop.f32.mrf.mxu0
  %v8814 = vadd.f32 %v8605, %v8813
  %8815 = vmatmul.f32.gmra.mxu0 %v7121
  %v8816 = vpop.f32.mrf.mxu0
  %v8817 = vadd.f32 %v8608, %v8816
  %8818 = vmatmul.f32.gmra.mxu0 %v7122
  %v8819 = vpop.f32.mrf.mxu0
  %v8820 = vadd.f32 %v8611, %v8819
  %8821 = vmatmul.f32.gmra.mxu0 %v7123
  %v8822 = vpop.f32.mrf.mxu0
  %v8823 = vadd.f32 %v8614, %v8822
  %8824 = vmatmul.f32.gmra.mxu0 %v7124
  %v8825 = vpop.f32.mrf.mxu0
  %v8826 = vadd.f32 %v8617, %v8825
  %8827 = vmatmul.f32.gmra.mxu0 %v7125
  %v8828 = vpop.f32.mrf.mxu0
  %v8829 = vadd.f32 %v8620, %v8828
  %8830 = vmatmul.f32.gmra.mxu0 %v7126
  %v8831 = vpop.f32.mrf.mxu0
  %v8832 = vadd.f32 %v8623, %v8831
  %8833 = vmatmul.f32.gmra.mxu0 %v7127
  %v8834 = vpop.f32.mrf.mxu0
  %v8835 = vadd.f32 %v8626, %v8834
  %8836 = vmatmul.f32.gmra.mxu0 %v7128
  %v8837 = vpop.f32.mrf.mxu0
  %v8838 = vadd.f32 %v8629, %v8837
  %8839 = vmatmul.f32.gmra.mxu0 %v7129
  %v8840 = vpop.f32.mrf.mxu0
  %v8841 = vadd.f32 %v8632, %v8840
  %8842 = vmatmul.f32.gmra.mxu0 %v7130
  %v8843 = vpop.f32.mrf.mxu0
  %v8844 = vadd.f32 %v8635, %v8843
  %8845 = vmatmul.f32.gmra.mxu0 %v7131
  %v8846 = vpop.f32.mrf.mxu0
  %v8847 = vadd.f32 %v8638, %v8846
  %8848 = vmatmul.f32.gmra.mxu0 %v7132
  %v8849 = vpop.f32.mrf.mxu0
  %v8850 = vadd.f32 %v8641, %v8849
  %8851 = vmatmul.f32.gmra.mxu0 %v7133
  %v8852 = vpop.f32.mrf.mxu0
  %v8853 = vadd.f32 %v8644, %v8852
  %8854 = vmatmul.f32.gmra.mxu0 %v7134
  %v8855 = vpop.f32.mrf.mxu0
  %v8856 = vadd.f32 %v8647, %v8855
  %8857 = vmatmul.f32.gmra.mxu0 %v7135
  %v8858 = vpop.f32.mrf.mxu0
  %v8859 = vadd.f32 %v8650, %v8858
  %8860 = vmatmul.f32.gmra.mxu0 %v7136
  %v8861 = vpop.f32.mrf.mxu0
  %v8862 = vadd.f32 %v8653, %v8861
  %8863 = vmatmul.f32.gmra.mxu0 %v7137
  %v8864 = vpop.f32.mrf.mxu0
  %v8865 = vadd.f32 %v8656, %v8864
  %8866 = vmatmul.f32.gmra.mxu0 %v7138
  %v8867 = vpop.f32.mrf.mxu0
  %v8868 = vadd.f32 %v8659, %v8867
  %8869 = vmatmul.f32.gmra.mxu0 %v7139
  %v8870 = vpop.f32.mrf.mxu0
  %v8871 = vadd.f32 %v8662, %v8870
  %8872 = vmatmul.f32.gmra.mxu0 %v7140
  %v8873 = vpop.f32.mrf.mxu0
  %v8874 = vadd.f32 %v8665, %v8873
  %8875 = vdwg.mxu0
  %8876 = vmatpush.msra.mxu0 %v7396
  %8877 = vmatpush.msra.mxu0 %v7395
  %8878 = vmatpush.msra.mxu0 %v7394
  %8879 = vmatpush.msra.mxu0 %v7393
  %8880 = vmatpush.msra.mxu0 %v7392
  %8881 = vmatpush.msra.mxu0 %v7391
  %8882 = vmatpush.msra.mxu0 %v7390
  %8883 = vmatpush.msra.mxu0 %v7389
  %8884 = vmatpush.msra.mxu0 %v7388
  %8885 = vmatpush.msra.mxu0 %v7387
  %8886 = vmatpush.msra.mxu0 %v7386
  %8887 = vmatpush.msra.mxu0 %v7385
  %8888 = vmatpush.msra.mxu0 %v7384
  %8889 = vmatpush.msra.mxu0 %v7383
  %8890 = vmatpush.msra.mxu0 %v7382
  %8891 = vmatpush.msra.mxu0 %v7381
  %8892 = vmatmul.f32.gmra.mxu0 %v7141
  %v8893 = vpop.f32.mrf.mxu0
  %v8894 = vadd.f32 %v8685, %v8893
  %8895 = vmatmul.f32.gmra.mxu0 %v7142
  %v8896 = vpop.f32.mrf.mxu0
  %v8897 = vadd.f32 %v8688, %v8896
  %8898 = vmatmul.f32.gmra.mxu0 %v7143
  %v8899 = vpop.f32.mrf.mxu0
  %v8900 = vadd.f32 %v8691, %v8899
  %8901 = vmatmul.f32.gmra.mxu0 %v7144
  %v8902 = vpop.f32.mrf.mxu0
  %v8903 = vadd.f32 %v8694, %v8902
  %8904 = vmatmul.f32.gmra.mxu0 %v7145
  %v8905 = vpop.f32.mrf.mxu0
  %v8906 = vadd.f32 %v8697, %v8905
  %8907 = vmatmul.f32.gmra.mxu0 %v7146
  %v8908 = vpop.f32.mrf.mxu0
  %v8909 = vadd.f32 %v8700, %v8908
  %8910 = vmatmul.f32.gmra.mxu0 %v7147
  %v8911 = vpop.f32.mrf.mxu0
  %v8912 = vadd.f32 %v8703, %v8911
  %8913 = vmatmul.f32.gmra.mxu0 %v7148
  %v8914 = vpop.f32.mrf.mxu0
  %v8915 = vadd.f32 %v8706, %v8914
  %8916 = vmatmul.f32.gmra.mxu0 %v7149
  %v8917 = vpop.f32.mrf.mxu0
  %v8918 = vadd.f32 %v8709, %v8917
  %8919 = vmatmul.f32.gmra.mxu0 %v7150
  %v8920 = vpop.f32.mrf.mxu0
  %v8921 = vadd.f32 %v8712, %v8920
  %8922 = vmatmul.f32.gmra.mxu0 %v7151
  %v8923 = vpop.f32.mrf.mxu0
  %v8924 = vadd.f32 %v8715, %v8923
  %8925 = vmatmul.f32.gmra.mxu0 %v7152
  %v8926 = vpop.f32.mrf.mxu0
  %v8927 = vadd.f32 %v8718, %v8926
  %8928 = vmatmul.f32.gmra.mxu0 %v7153
  %v8929 = vpop.f32.mrf.mxu0
  %v8930 = vadd.f32 %v8721, %v8929
  %8931 = vmatmul.f32.gmra.mxu0 %v7154
  %v8932 = vpop.f32.mrf.mxu0
  %v8933 = vadd.f32 %v8724, %v8932
  %8934 = vmatmul.f32.gmra.mxu0 %v7155
  %v8935 = vpop.f32.mrf.mxu0
  %v8936 = vadd.f32 %v8727, %v8935
  %8937 = vmatmul.f32.gmra.mxu0 %v7156
  %v8938 = vpop.f32.mrf.mxu0
  %v8939 = vadd.f32 %v8730, %v8938
  %8940 = vmatmul.f32.gmra.mxu0 %v7157
  %v8941 = vpop.f32.mrf.mxu0
  %v8942 = vadd.f32 %v8733, %v8941
  %8943 = vmatmul.f32.gmra.mxu0 %v7158
  %v8944 = vpop.f32.mrf.mxu0
  %v8945 = vadd.f32 %v8736, %v8944
  %8946 = vmatmul.f32.gmra.mxu0 %v7159
  %v8947 = vpop.f32.mrf.mxu0
  %v8948 = vadd.f32 %v8739, %v8947
  %8949 = vmatmul.f32.gmra.mxu0 %v7160
  %v8950 = vpop.f32.mrf.mxu0
  %v8951 = vadd.f32 %v8742, %v8950
  %8952 = vmatmul.f32.gmra.mxu0 %v7161
  %v8953 = vpop.f32.mrf.mxu0
  %v8954 = vadd.f32 %v8745, %v8953
  %8955 = vmatmul.f32.gmra.mxu0 %v7162
  %v8956 = vpop.f32.mrf.mxu0
  %v8957 = vadd.f32 %v8748, %v8956
  %8958 = vmatmul.f32.gmra.mxu0 %v7163
  %v8959 = vpop.f32.mrf.mxu0
  %v8960 = vadd.f32 %v8751, %v8959
  %8961 = vmatmul.f32.gmra.mxu0 %v7164
  %v8962 = vpop.f32.mrf.mxu0
  %v8963 = vadd.f32 %v8754, %v8962
  %8964 = vmatmul.f32.gmra.mxu0 %v7165
  %v8965 = vpop.f32.mrf.mxu0
  %v8966 = vadd.f32 %v8757, %v8965
  %8967 = vmatmul.f32.gmra.mxu0 %v7166
  %v8968 = vpop.f32.mrf.mxu0
  %v8969 = vadd.f32 %v8760, %v8968
  %8970 = vmatmul.f32.gmra.mxu0 %v7167
  %v8971 = vpop.f32.mrf.mxu0
  %v8972 = vadd.f32 %v8763, %v8971
  %8973 = vmatmul.f32.gmra.mxu0 %v7168
  %v8974 = vpop.f32.mrf.mxu0
  %v8975 = vadd.f32 %v8766, %v8974
  %8976 = vmatmul.f32.gmra.mxu0 %v7169
  %v8977 = vpop.f32.mrf.mxu0
  %v8978 = vadd.f32 %v8769, %v8977
  %8979 = vmatmul.f32.gmra.mxu0 %v7170
  %v8980 = vpop.f32.mrf.mxu0
  %v8981 = vadd.f32 %v8772, %v8980
  %8982 = vmatmul.f32.gmra.mxu0 %v7171
  %v8983 = vpop.f32.mrf.mxu0
  %v8984 = vadd.f32 %v8775, %v8983
  %8985 = vmatmul.f32.gmra.mxu0 %v7172
  %v8986 = vpop.f32.mrf.mxu0
  %v8987 = vadd.f32 %v8778, %v8986
  %8988 = vmatmul.f32.gmra.mxu0 %v7173
  %v8989 = vpop.f32.mrf.mxu0
  %v8990 = vadd.f32 %v8781, %v8989
  %8991 = vmatmul.f32.gmra.mxu0 %v7174
  %v8992 = vpop.f32.mrf.mxu0
  %v8993 = vadd.f32 %v8784, %v8992
  %8994 = vmatmul.f32.gmra.mxu0 %v7175
  %v8995 = vpop.f32.mrf.mxu0
  %v8996 = vadd.f32 %v8787, %v8995
  %8997 = vmatmul.f32.gmra.mxu0 %v7176
  %v8998 = vpop.f32.mrf.mxu0
  %v8999 = vadd.f32 %v8790, %v8998
  %9000 = vmatmul.f32.gmra.mxu0 %v7177
  %v9001 = vpop.f32.mrf.mxu0
  %v9002 = vadd.f32 %v8793, %v9001
  %9003 = vmatmul.f32.gmra.mxu0 %v7178
  %v9004 = vpop.f32.mrf.mxu0
  %v9005 = vadd.f32 %v8796, %v9004
  %9006 = vmatmul.f32.gmra.mxu0 %v7179
  %v9007 = vpop.f32.mrf.mxu0
  %v9008 = vadd.f32 %v8799, %v9007
  %9009 = vmatmul.f32.gmra.mxu0 %v7180
  %v9010 = vpop.f32.mrf.mxu0
  %v9011 = vadd.f32 %v8802, %v9010
  %9012 = vmatmul.f32.gmra.mxu0 %v7181
  %v9013 = vpop.f32.mrf.mxu0
  %v9014 = vadd.f32 %v8805, %v9013
  %9015 = vmatmul.f32.gmra.mxu0 %v7182
  %v9016 = vpop.f32.mrf.mxu0
  %v9017 = vadd.f32 %v8808, %v9016
  %9018 = vmatmul.f32.gmra.mxu0 %v7183
  %v9019 = vpop.f32.mrf.mxu0
  %v9020 = vadd.f32 %v8811, %v9019
  %9021 = vmatmul.f32.gmra.mxu0 %v7184
  %v9022 = vpop.f32.mrf.mxu0
  %v9023 = vadd.f32 %v8814, %v9022
  %9024 = vmatmul.f32.gmra.mxu0 %v7185
  %v9025 = vpop.f32.mrf.mxu0
  %v9026 = vadd.f32 %v8817, %v9025
  %9027 = vmatmul.f32.gmra.mxu0 %v7186
  %v9028 = vpop.f32.mrf.mxu0
  %v9029 = vadd.f32 %v8820, %v9028
  %9030 = vmatmul.f32.gmra.mxu0 %v7187
  %v9031 = vpop.f32.mrf.mxu0
  %v9032 = vadd.f32 %v8823, %v9031
  %9033 = vmatmul.f32.gmra.mxu0 %v7188
  %v9034 = vpop.f32.mrf.mxu0
  %v9035 = vadd.f32 %v8826, %v9034
  %9036 = vmatmul.f32.gmra.mxu0 %v7189
  %v9037 = vpop.f32.mrf.mxu0
  %v9038 = vadd.f32 %v8829, %v9037
  %9039 = vmatmul.f32.gmra.mxu0 %v7190
  %v9040 = vpop.f32.mrf.mxu0
  %v9041 = vadd.f32 %v8832, %v9040
  %9042 = vmatmul.f32.gmra.mxu0 %v7191
  %v9043 = vpop.f32.mrf.mxu0
  %v9044 = vadd.f32 %v8835, %v9043
  %9045 = vmatmul.f32.gmra.mxu0 %v7192
  %v9046 = vpop.f32.mrf.mxu0
  %v9047 = vadd.f32 %v8838, %v9046
  %9048 = vmatmul.f32.gmra.mxu0 %v7193
  %v9049 = vpop.f32.mrf.mxu0
  %v9050 = vadd.f32 %v8841, %v9049
  %9051 = vmatmul.f32.gmra.mxu0 %v7194
  %v9052 = vpop.f32.mrf.mxu0
  %v9053 = vadd.f32 %v8844, %v9052
  %9054 = vmatmul.f32.gmra.mxu0 %v7195
  %v9055 = vpop.f32.mrf.mxu0
  %v9056 = vadd.f32 %v8847, %v9055
  %9057 = vmatmul.f32.gmra.mxu0 %v7196
  %v9058 = vpop.f32.mrf.mxu0
  %v9059 = vadd.f32 %v8850, %v9058
  %9060 = vmatmul.f32.gmra.mxu0 %v7197
  %v9061 = vpop.f32.mrf.mxu0
  %v9062 = vadd.f32 %v8853, %v9061
  %9063 = vmatmul.f32.gmra.mxu0 %v7198
  %v9064 = vpop.f32.mrf.mxu0
  %v9065 = vadd.f32 %v8856, %v9064
  %9066 = vmatmul.f32.gmra.mxu0 %v7199
  %v9067 = vpop.f32.mrf.mxu0
  %v9068 = vadd.f32 %v8859, %v9067
  %9069 = vmatmul.f32.gmra.mxu0 %v7200
  %v9070 = vpop.f32.mrf.mxu0
  %v9071 = vadd.f32 %v8862, %v9070
  %9072 = vmatmul.f32.gmra.mxu0 %v7201
  %v9073 = vpop.f32.mrf.mxu0
  %v9074 = vadd.f32 %v8865, %v9073
  %9075 = vmatmul.f32.gmra.mxu0 %v7202
  %v9076 = vpop.f32.mrf.mxu0
  %v9077 = vadd.f32 %v8868, %v9076
  %9078 = vmatmul.f32.gmra.mxu0 %v7203
  %v9079 = vpop.f32.mrf.mxu0
  %v9080 = vadd.f32 %v8871, %v9079
  %9081 = vmatmul.f32.gmra.mxu0 %v7204
  %v9082 = vpop.f32.mrf.mxu0
  %v9083 = vadd.f32 %v8874, %v9082
  %9084 = vdwg.mxu0
  %9085 = vmatpush.msra.mxu0 %v7412
  %9086 = vmatpush.msra.mxu0 %v7411
  %9087 = vmatpush.msra.mxu0 %v7410
  %9088 = vmatpush.msra.mxu0 %v7409
  %9089 = vmatpush.msra.mxu0 %v7408
  %9090 = vmatpush.msra.mxu0 %v7407
  %9091 = vmatpush.msra.mxu0 %v7406
  %9092 = vmatpush.msra.mxu0 %v7405
  %9093 = vmatpush.msra.mxu0 %v7404
  %9094 = vmatpush.msra.mxu0 %v7403
  %9095 = vmatpush.msra.mxu0 %v7402
  %9096 = vmatpush.msra.mxu0 %v7401
  %9097 = vmatpush.msra.mxu0 %v7400
  %9098 = vmatpush.msra.mxu0 %v7399
  %9099 = vmatpush.msra.mxu0 %v7398
  %9100 = vmatpush.msra.mxu0 %v7397
  %9101 = vmatmul.f32.gmra.mxu0 %v7205
  %v9102 = vpop.f32.mrf.mxu0
  %v9103 = vadd.f32 %v8894, %v9102
  %9104 = vmatmul.f32.gmra.mxu0 %v7206
  %v9105 = vpop.f32.mrf.mxu0
  %v9106 = vadd.f32 %v8897, %v9105
  %9107 = vmatmul.f32.gmra.mxu0 %v7207
  %v9108 = vpop.f32.mrf.mxu0
  %v9109 = vadd.f32 %v8900, %v9108
  %9110 = vmatmul.f32.gmra.mxu0 %v7208
  %v9111 = vpop.f32.mrf.mxu0
  %v9112 = vadd.f32 %v8903, %v9111
  %9113 = vmatmul.f32.gmra.mxu0 %v7209
  %v9114 = vpop.f32.mrf.mxu0
  %v9115 = vadd.f32 %v8906, %v9114
  %9116 = vmatmul.f32.gmra.mxu0 %v7210
  %v9117 = vpop.f32.mrf.mxu0
  %v9118 = vadd.f32 %v8909, %v9117
  %9119 = vmatmul.f32.gmra.mxu0 %v7211
  %v9120 = vpop.f32.mrf.mxu0
  %v9121 = vadd.f32 %v8912, %v9120
  %9122 = vmatmul.f32.gmra.mxu0 %v7212
  %v9123 = vpop.f32.mrf.mxu0
  %v9124 = vadd.f32 %v8915, %v9123
  %9125 = vmatmul.f32.gmra.mxu0 %v7213
  %v9126 = vpop.f32.mrf.mxu0
  %v9127 = vadd.f32 %v8918, %v9126
  %9128 = vmatmul.f32.gmra.mxu0 %v7214
  %v9129 = vpop.f32.mrf.mxu0
  %v9130 = vadd.f32 %v8921, %v9129
  %9131 = vmatmul.f32.gmra.mxu0 %v7215
  %v9132 = vpop.f32.mrf.mxu0
  %v9133 = vadd.f32 %v8924, %v9132
  %9134 = vmatmul.f32.gmra.mxu0 %v7216
  %v9135 = vpop.f32.mrf.mxu0
  %v9136 = vadd.f32 %v8927, %v9135
  %9137 = vmatmul.f32.gmra.mxu0 %v7217
  %v9138 = vpop.f32.mrf.mxu0
  %v9139 = vadd.f32 %v8930, %v9138
  %9140 = vmatmul.f32.gmra.mxu0 %v7218
  %v9141 = vpop.f32.mrf.mxu0
  %v9142 = vadd.f32 %v8933, %v9141
  %9143 = vmatmul.f32.gmra.mxu0 %v7219
  %v9144 = vpop.f32.mrf.mxu0
  %v9145 = vadd.f32 %v8936, %v9144
  %9146 = vmatmul.f32.gmra.mxu0 %v7220
  %v9147 = vpop.f32.mrf.mxu0
  %v9148 = vadd.f32 %v8939, %v9147
  %9149 = vmatmul.f32.gmra.mxu0 %v7221
  %v9150 = vpop.f32.mrf.mxu0
  %v9151 = vadd.f32 %v8942, %v9150
  %9152 = vmatmul.f32.gmra.mxu0 %v7222
  %v9153 = vpop.f32.mrf.mxu0
  %v9154 = vadd.f32 %v8945, %v9153
  %9155 = vmatmul.f32.gmra.mxu0 %v7223
  %v9156 = vpop.f32.mrf.mxu0
  %v9157 = vadd.f32 %v8948, %v9156
  %9158 = vmatmul.f32.gmra.mxu0 %v7224
  %v9159 = vpop.f32.mrf.mxu0
  %v9160 = vadd.f32 %v8951, %v9159
  %9161 = vmatmul.f32.gmra.mxu0 %v7225
  %v9162 = vpop.f32.mrf.mxu0
  %v9163 = vadd.f32 %v8954, %v9162
  %9164 = vmatmul.f32.gmra.mxu0 %v7226
  %v9165 = vpop.f32.mrf.mxu0
  %v9166 = vadd.f32 %v8957, %v9165
  %9167 = vmatmul.f32.gmra.mxu0 %v7227
  %v9168 = vpop.f32.mrf.mxu0
  %v9169 = vadd.f32 %v8960, %v9168
  %9170 = vmatmul.f32.gmra.mxu0 %v7228
  %v9171 = vpop.f32.mrf.mxu0
  %v9172 = vadd.f32 %v8963, %v9171
  %9173 = vmatmul.f32.gmra.mxu0 %v7229
  %v9174 = vpop.f32.mrf.mxu0
  %v9175 = vadd.f32 %v8966, %v9174
  %9176 = vmatmul.f32.gmra.mxu0 %v7230
  %v9177 = vpop.f32.mrf.mxu0
  %v9178 = vadd.f32 %v8969, %v9177
  %9179 = vmatmul.f32.gmra.mxu0 %v7231
  %v9180 = vpop.f32.mrf.mxu0
  %v9181 = vadd.f32 %v8972, %v9180
  %9182 = vmatmul.f32.gmra.mxu0 %v7232
  %v9183 = vpop.f32.mrf.mxu0
  %v9184 = vadd.f32 %v8975, %v9183
  %9185 = vmatmul.f32.gmra.mxu0 %v7233
  %v9186 = vpop.f32.mrf.mxu0
  %v9187 = vadd.f32 %v8978, %v9186
  %9188 = vmatmul.f32.gmra.mxu0 %v7234
  %v9189 = vpop.f32.mrf.mxu0
  %v9190 = vadd.f32 %v8981, %v9189
  %9191 = vmatmul.f32.gmra.mxu0 %v7235
  %v9192 = vpop.f32.mrf.mxu0
  %v9193 = vadd.f32 %v8984, %v9192
  %9194 = vmatmul.f32.gmra.mxu0 %v7236
  %v9195 = vpop.f32.mrf.mxu0
  %v9196 = vadd.f32 %v8987, %v9195
  %9197 = vmatmul.f32.gmra.mxu0 %v7237
  %v9198 = vpop.f32.mrf.mxu0
  %v9199 = vadd.f32 %v8990, %v9198
  %9200 = vmatmul.f32.gmra.mxu0 %v7238
  %v9201 = vpop.f32.mrf.mxu0
  %v9202 = vadd.f32 %v8993, %v9201
  %9203 = vmatmul.f32.gmra.mxu0 %v7239
  %v9204 = vpop.f32.mrf.mxu0
  %v9205 = vadd.f32 %v8996, %v9204
  %9206 = vmatmul.f32.gmra.mxu0 %v7240
  %v9207 = vpop.f32.mrf.mxu0
  %v9208 = vadd.f32 %v8999, %v9207
  %9209 = vmatmul.f32.gmra.mxu0 %v7241
  %v9210 = vpop.f32.mrf.mxu0
  %v9211 = vadd.f32 %v9002, %v9210
  %9212 = vmatmul.f32.gmra.mxu0 %v7242
  %v9213 = vpop.f32.mrf.mxu0
  %v9214 = vadd.f32 %v9005, %v9213
  %9215 = vmatmul.f32.gmra.mxu0 %v7243
  %v9216 = vpop.f32.mrf.mxu0
  %v9217 = vadd.f32 %v9008, %v9216
  %9218 = vmatmul.f32.gmra.mxu0 %v7244
  %v9219 = vpop.f32.mrf.mxu0
  %v9220 = vadd.f32 %v9011, %v9219
  %9221 = vmatmul.f32.gmra.mxu0 %v7245
  %v9222 = vpop.f32.mrf.mxu0
  %v9223 = vadd.f32 %v9014, %v9222
  %9224 = vmatmul.f32.gmra.mxu0 %v7246
  %v9225 = vpop.f32.mrf.mxu0
  %v9226 = vadd.f32 %v9017, %v9225
  %9227 = vmatmul.f32.gmra.mxu0 %v7247
  %v9228 = vpop.f32.mrf.mxu0
  %v9229 = vadd.f32 %v9020, %v9228
  %9230 = vmatmul.f32.gmra.mxu0 %v7248
  %v9231 = vpop.f32.mrf.mxu0
  %v9232 = vadd.f32 %v9023, %v9231
  %9233 = vmatmul.f32.gmra.mxu0 %v7249
  %v9234 = vpop.f32.mrf.mxu0
  %v9235 = vadd.f32 %v9026, %v9234
  %9236 = vmatmul.f32.gmra.mxu0 %v7250
  %v9237 = vpop.f32.mrf.mxu0
  %v9238 = vadd.f32 %v9029, %v9237
  %9239 = vmatmul.f32.gmra.mxu0 %v7251
  %v9240 = vpop.f32.mrf.mxu0
  %v9241 = vadd.f32 %v9032, %v9240
  %9242 = vmatmul.f32.gmra.mxu0 %v7252
  %v9243 = vpop.f32.mrf.mxu0
  %v9244 = vadd.f32 %v9035, %v9243
  %9245 = vmatmul.f32.gmra.mxu0 %v7253
  %v9246 = vpop.f32.mrf.mxu0
  %v9247 = vadd.f32 %v9038, %v9246
  %9248 = vmatmul.f32.gmra.mxu0 %v7254
  %v9249 = vpop.f32.mrf.mxu0
  %v9250 = vadd.f32 %v9041, %v9249
  %9251 = vmatmul.f32.gmra.mxu0 %v7255
  %v9252 = vpop.f32.mrf.mxu0
  %v9253 = vadd.f32 %v9044, %v9252
  %9254 = vmatmul.f32.gmra.mxu0 %v7256
  %v9255 = vpop.f32.mrf.mxu0
  %v9256 = vadd.f32 %v9047, %v9255
  %9257 = vmatmul.f32.gmra.mxu0 %v7257
  %v9258 = vpop.f32.mrf.mxu0
  %v9259 = vadd.f32 %v9050, %v9258
  %9260 = vmatmul.f32.gmra.mxu0 %v7258
  %v9261 = vpop.f32.mrf.mxu0
  %v9262 = vadd.f32 %v9053, %v9261
  %9263 = vmatmul.f32.gmra.mxu0 %v7259
  %v9264 = vpop.f32.mrf.mxu0
  %v9265 = vadd.f32 %v9056, %v9264
  %9266 = vmatmul.f32.gmra.mxu0 %v7260
  %v9267 = vpop.f32.mrf.mxu0
  %v9268 = vadd.f32 %v9059, %v9267
  %9269 = vmatmul.f32.gmra.mxu0 %v7261
  %v9270 = vpop.f32.mrf.mxu0
  %v9271 = vadd.f32 %v9062, %v9270
  %9272 = vmatmul.f32.gmra.mxu0 %v7262
  %v9273 = vpop.f32.mrf.mxu0
  %v9274 = vadd.f32 %v9065, %v9273
  %9275 = vmatmul.f32.gmra.mxu0 %v7263
  %v9276 = vpop.f32.mrf.mxu0
  %v9277 = vadd.f32 %v9068, %v9276
  %9278 = vmatmul.f32.gmra.mxu0 %v7264
  %v9279 = vpop.f32.mrf.mxu0
  %v9280 = vadd.f32 %v9071, %v9279
  %9281 = vmatmul.f32.gmra.mxu0 %v7265
  %v9282 = vpop.f32.mrf.mxu0
  %v9283 = vadd.f32 %v9074, %v9282
  %9284 = vmatmul.f32.gmra.mxu0 %v7266
  %v9285 = vpop.f32.mrf.mxu0
  %v9286 = vadd.f32 %v9077, %v9285
  %9287 = vmatmul.f32.gmra.mxu0 %v7267
  %v9288 = vpop.f32.mrf.mxu0
  %v9289 = vadd.f32 %v9080, %v9288
  %9290 = vmatmul.f32.gmra.mxu0 %v7268
  %v9291 = vpop.f32.mrf.mxu0
  %v9292 = vadd.f32 %v9083, %v9291
  %9293 = vdwg.mxu0
  %v9294 = vadd.f32 %v9103, %v9106
  %v9295 = vadd.f32 %v9294, %v9109
  %v9296 = vadd.f32 %v9295, %v9112
  %v9297 = vadd.f32 %v9296, %v9115
  %v9298 = vadd.f32 %v9297, %v9118
  %v9299 = vadd.f32 %v9298, %v9121
  %v9300 = vadd.f32 %v9299, %v9124
  %v9301 = vadd.f32 %v9300, %v9127
  %v9302 = vadd.f32 %v9301, %v9130
  %v9303 = vadd.f32 %v9302, %v9133
  %v9304 = vadd.f32 %v9303, %v9136
  %v9305 = vadd.f32 %v9304, %v9139
  %v9306 = vadd.f32 %v9305, %v9142
  %v9307 = vadd.f32 %v9306, %v9145
  %v9308 = vadd.f32 %v9307, %v9148
  %v9309 = vadd.f32 %v9308, %v9151
  %v9310 = vadd.f32 %v9309, %v9154
  %v9311 = vadd.f32 %v9310, %v9157
  %v9312 = vadd.f32 %v9311, %v9160
  %v9313 = vadd.f32 %v9312, %v9163
  %v9314 = vadd.f32 %v9313, %v9166
  %v9315 = vadd.f32 %v9314, %v9169
  %v9316 = vadd.f32 %v9315, %v9172
  %v9317 = vadd.f32 %v9316, %v9175
  %v9318 = vadd.f32 %v9317, %v9178
  %v9319 = vadd.f32 %v9318, %v9181
  %v9320 = vadd.f32 %v9319, %v9184
  %v9321 = vadd.f32 %v9320, %v9187
  %v9322 = vadd.f32 %v9321, %v9190
  %v9323 = vadd.f32 %v9322, %v9193
  %v9324 = vadd.f32 %v9323, %v9196
  %v9325 = vadd.f32 %v9324, %v9199
  %v9326 = vadd.f32 %v9325, %v9202
  %v9327 = vadd.f32 %v9326, %v9205
  %v9328 = vadd.f32 %v9327, %v9208
  %v9329 = vadd.f32 %v9328, %v9211
  %v9330 = vadd.f32 %v9329, %v9214
  %v9331 = vadd.f32 %v9330, %v9217
  %v9332 = vadd.f32 %v9331, %v9220
  %v9333 = vadd.f32 %v9332, %v9223
  %v9334 = vadd.f32 %v9333, %v9226
  %v9335 = vadd.f32 %v9334, %v9229
  %v9336 = vadd.f32 %v9335, %v9232
  %v9337 = vadd.f32 %v9336, %v9235
  %v9338 = vadd.f32 %v9337, %v9238
  %v9339 = vadd.f32 %v9338, %v9241
  %v9340 = vadd.f32 %v9339, %v9244
  %v9341 = vadd.f32 %v9340, %v9247
  %v9342 = vadd.f32 %v9341, %v9250
  %v9343 = vadd.f32 %v9342, %v9253
  %v9344 = vadd.f32 %v9343, %v9256
  %v9345 = vadd.f32 %v9344, %v9259
  %v9346 = vadd.f32 %v9345, %v9262
  %v9347 = vadd.f32 %v9346, %v9265
  %v9348 = vadd.f32 %v9347, %v9268
  %v9349 = vadd.f32 %v9348, %v9271
  %v9350 = vadd.f32 %v9349, %v9274
  %v9351 = vadd.f32 %v9350, %v9277
  %v9352 = vadd.f32 %v9351, %v9280
  %v9353 = vadd.f32 %v9352, %v9283
  %v9354 = vadd.f32 %v9353, %v9286
  %v9355 = vadd.f32 %v9354, %v9289
  %v9356 = vadd.f32 %v9355, %v9292
  %v9357 = vrot.slane %v9356, 4
  %v9358 = vadd.f32 %v9356, %v9357
  %v9359 = vrot.slane %v9358, 2
  %v9360 = vadd.f32 %v9358, %v9359
  %v9361 = vrot.slane %v9360, 1
  %v9362 = vadd.f32 %v9360, %v9361
  %v9363 = vmul.f32 %v9103, %v9103
  %v9364 = vmul.f32 %v9106, %v9106
  %v9365 = vmul.f32 %v9109, %v9109
  %v9366 = vmul.f32 %v9112, %v9112
  %v9367 = vmul.f32 %v9115, %v9115
  %v9368 = vmul.f32 %v9118, %v9118
  %v9369 = vmul.f32 %v9121, %v9121
  %v9370 = vmul.f32 %v9124, %v9124
  %v9371 = vmul.f32 %v9127, %v9127
  %v9372 = vmul.f32 %v9130, %v9130
  %v9373 = vmul.f32 %v9133, %v9133
  %v9374 = vmul.f32 %v9136, %v9136
  %v9375 = vmul.f32 %v9139, %v9139
  %v9376 = vmul.f32 %v9142, %v9142
  %v9377 = vmul.f32 %v9145, %v9145
  %v9378 = vmul.f32 %v9148, %v9148
  %v9379 = vmul.f32 %v9151, %v9151
  %v9380 = vmul.f32 %v9154, %v9154
  %v9381 = vmul.f32 %v9157, %v9157
  %v9382 = vmul.f32 %v9160, %v9160
  %v9383 = vmul.f32 %v9163, %v9163
  %v9384 = vmul.f32 %v9166, %v9166
  %v9385 = vmul.f32 %v9169, %v9169
  %v9386 = vmul.f32 %v9172, %v9172
  %v9387 = vmul.f32 %v9175, %v9175
  %v9388 = vmul.f32 %v9178, %v9178
  %v9389 = vmul.f32 %v9181, %v9181
  %v9390 = vmul.f32 %v9184, %v9184
  %v9391 = vmul.f32 %v9187, %v9187
  %v9392 = vmul.f32 %v9190, %v9190
  %v9393 = vmul.f32 %v9193, %v9193
  %v9394 = vmul.f32 %v9196, %v9196
  %v9395 = vmul.f32 %v9199, %v9199
  %v9396 = vmul.f32 %v9202, %v9202
  %v9397 = vmul.f32 %v9205, %v9205
  %v9398 = vmul.f32 %v9208, %v9208
  %v9399 = vmul.f32 %v9211, %v9211
  %v9400 = vmul.f32 %v9214, %v9214
  %v9401 = vmul.f32 %v9217, %v9217
  %v9402 = vmul.f32 %v9220, %v9220
  %v9403 = vmul.f32 %v9223, %v9223
  %v9404 = vmul.f32 %v9226, %v9226
  %v9405 = vmul.f32 %v9229, %v9229
  %v9406 = vmul.f32 %v9232, %v9232
  %v9407 = vmul.f32 %v9235, %v9235
  %v9408 = vmul.f32 %v9238, %v9238
  %v9409 = vmul.f32 %v9241, %v9241
  %v9410 = vmul.f32 %v9244, %v9244
  %v9411 = vmul.f32 %v9247, %v9247
  %v9412 = vmul.f32 %v9250, %v9250
  %v9413 = vmul.f32 %v9253, %v9253
  %v9414 = vmul.f32 %v9256, %v9256
  %v9415 = vmul.f32 %v9259, %v9259
  %v9416 = vmul.f32 %v9262, %v9262
  %v9417 = vmul.f32 %v9265, %v9265
  %v9418 = vmul.f32 %v9268, %v9268
  %v9419 = vmul.f32 %v9271, %v9271
  %v9420 = vmul.f32 %v9274, %v9274
  %v9421 = vmul.f32 %v9277, %v9277
  %v9422 = vmul.f32 %v9280, %v9280
  %v9423 = vmul.f32 %v9283, %v9283
  %v9424 = vmul.f32 %v9286, %v9286
  %v9425 = vmul.f32 %v9289, %v9289
  %v9426 = vmul.f32 %v9292, %v9292
  %v9427 = vadd.f32 %v9363, %v9364
  %v9428 = vadd.f32 %v9427, %v9365
  %v9429 = vadd.f32 %v9428, %v9366
  %v9430 = vadd.f32 %v9429, %v9367
  %v9431 = vadd.f32 %v9430, %v9368
  %v9432 = vadd.f32 %v9431, %v9369
  %v9433 = vadd.f32 %v9432, %v9370
  %v9434 = vadd.f32 %v9433, %v9371
  %v9435 = vadd.f32 %v9434, %v9372
  %v9436 = vadd.f32 %v9435, %v9373
  %v9437 = vadd.f32 %v9436, %v9374
  %v9438 = vadd.f32 %v9437, %v9375
  %v9439 = vadd.f32 %v9438, %v9376
  %v9440 = vadd.f32 %v9439, %v9377
  %v9441 = vadd.f32 %v9440, %v9378
  %v9442 = vadd.f32 %v9441, %v9379
  %v9443 = vadd.f32 %v9442, %v9380
  %v9444 = vadd.f32 %v9443, %v9381
  %v9445 = vadd.f32 %v9444, %v9382
  %v9446 = vadd.f32 %v9445, %v9383
  %v9447 = vadd.f32 %v9446, %v9384
  %v9448 = vadd.f32 %v9447, %v9385
  %v9449 = vadd.f32 %v9448, %v9386
  %v9450 = vadd.f32 %v9449, %v9387
  %v9451 = vadd.f32 %v9450, %v9388
  %v9452 = vadd.f32 %v9451, %v9389
  %v9453 = vadd.f32 %v9452, %v9390
  %v9454 = vadd.f32 %v9453, %v9391
  %v9455 = vadd.f32 %v9454, %v9392
  %v9456 = vadd.f32 %v9455, %v9393
  %v9457 = vadd.f32 %v9456, %v9394
  %v9458 = vadd.f32 %v9457, %v9395
  %v9459 = vadd.f32 %v9458, %v9396
  %v9460 = vadd.f32 %v9459, %v9397
  %v9461 = vadd.f32 %v9460, %v9398
  %v9462 = vadd.f32 %v9461, %v9399
  %v9463 = vadd.f32 %v9462, %v9400
  %v9464 = vadd.f32 %v9463, %v9401
  %v9465 = vadd.f32 %v9464, %v9402
  %v9466 = vadd.f32 %v9465, %v9403
  %v9467 = vadd.f32 %v9466, %v9404
  %v9468 = vadd.f32 %v9467, %v9405
  %v9469 = vadd.f32 %v9468, %v9406
  %v9470 = vadd.f32 %v9469, %v9407
  %v9471 = vadd.f32 %v9470, %v9408
  %v9472 = vadd.f32 %v9471, %v9409
  %v9473 = vadd.f32 %v9472, %v9410
  %v9474 = vadd.f32 %v9473, %v9411
  %v9475 = vadd.f32 %v9474, %v9412
  %v9476 = vadd.f32 %v9475, %v9413
  %v9477 = vadd.f32 %v9476, %v9414
  %v9478 = vadd.f32 %v9477, %v9415
  %v9479 = vadd.f32 %v9478, %v9416
  %v9480 = vadd.f32 %v9479, %v9417
  %v9481 = vadd.f32 %v9480, %v9418
  %v9482 = vadd.f32 %v9481, %v9419
  %v9483 = vadd.f32 %v9482, %v9420
  %v9484 = vadd.f32 %v9483, %v9421
  %v9485 = vadd.f32 %v9484, %v9422
  %v9486 = vadd.f32 %v9485, %v9423
  %v9487 = vadd.f32 %v9486, %v9424
  %v9488 = vadd.f32 %v9487, %v9425
  %v9489 = vadd.f32 %v9488, %v9426
  %v9490 = vrot.slane %v9489, 4
  %v9491 = vadd.f32 %v9489, %v9490
  %v9492 = vrot.slane %v9491, 2
  %v9493 = vadd.f32 %v9491, %v9492
  %v9494 = vrot.slane %v9493, 1
  %v9495 = vadd.f32 %v9493, %v9494
  %v9496 = vmul.f32 %v9362, 0.001953125
  %v9497 = vmul.f32 %v9495, 0.001953125
  %v9498 = vmul.f32 %v9496, %v9496
  %v9499 = vsub.f32 %v9497, %v9498
  %v9500 = vsub.f32 %v9103, %v9496
  %v9501 = vsub.f32 %v9106, %v9496
  %v9502 = vsub.f32 %v9109, %v9496
  %v9503 = vsub.f32 %v9112, %v9496
  %v9504 = vsub.f32 %v9115, %v9496
  %v9505 = vsub.f32 %v9118, %v9496
  %v9506 = vsub.f32 %v9121, %v9496
  %v9507 = vsub.f32 %v9124, %v9496
  %v9508 = vsub.f32 %v9127, %v9496
  %v9509 = vsub.f32 %v9130, %v9496
  %v9510 = vsub.f32 %v9133, %v9496
  %v9511 = vsub.f32 %v9136, %v9496
  %v9512 = vsub.f32 %v9139, %v9496
  %v9513 = vsub.f32 %v9142, %v9496
  %v9514 = vsub.f32 %v9145, %v9496
  %v9515 = vsub.f32 %v9148, %v9496
  %v9516 = vsub.f32 %v9151, %v9496
  %v9517 = vsub.f32 %v9154, %v9496
  %v9518 = vsub.f32 %v9157, %v9496
  %v9519 = vsub.f32 %v9160, %v9496
  %v9520 = vsub.f32 %v9163, %v9496
  %v9521 = vsub.f32 %v9166, %v9496
  %v9522 = vsub.f32 %v9169, %v9496
  %v9523 = vsub.f32 %v9172, %v9496
  %v9524 = vsub.f32 %v9175, %v9496
  %v9525 = vsub.f32 %v9178, %v9496
  %v9526 = vsub.f32 %v9181, %v9496
  %v9527 = vsub.f32 %v9184, %v9496
  %v9528 = vsub.f32 %v9187, %v9496
  %v9529 = vsub.f32 %v9190, %v9496
  %v9530 = vsub.f32 %v9193, %v9496
  %v9531 = vsub.f32 %v9196, %v9496
  %v9532 = vsub.f32 %v9199, %v9496
  %v9533 = vsub.f32 %v9202, %v9496
  %v9534 = vsub.f32 %v9205, %v9496
  %v9535 = vsub.f32 %v9208, %v9496
  %v9536 = vsub.f32 %v9211, %v9496
  %v9537 = vsub.f32 %v9214, %v9496
  %v9538 = vsub.f32 %v9217, %v9496
  %v9539 = vsub.f32 %v9220, %v9496
  %v9540 = vsub.f32 %v9223, %v9496
  %v9541 = vsub.f32 %v9226, %v9496
  %v9542 = vsub.f32 %v9229, %v9496
  %v9543 = vsub.f32 %v9232, %v9496
  %v9544 = vsub.f32 %v9235, %v9496
  %v9545 = vsub.f32 %v9238, %v9496
  %v9546 = vsub.f32 %v9241, %v9496
  %v9547 = vsub.f32 %v9244, %v9496
  %v9548 = vsub.f32 %v9247, %v9496
  %v9549 = vsub.f32 %v9250, %v9496
  %v9550 = vsub.f32 %v9253, %v9496
  %v9551 = vsub.f32 %v9256, %v9496
  %v9552 = vsub.f32 %v9259, %v9496
  %v9553 = vsub.f32 %v9262, %v9496
  %v9554 = vsub.f32 %v9265, %v9496
  %v9555 = vsub.f32 %v9268, %v9496
  %v9556 = vsub.f32 %v9271, %v9496
  %v9557 = vsub.f32 %v9274, %v9496
  %v9558 = vsub.f32 %v9277, %v9496
  %v9559 = vsub.f32 %v9280, %v9496
  %v9560 = vsub.f32 %v9283, %v9496
  %v9561 = vsub.f32 %v9286, %v9496
  %v9562 = vsub.f32 %v9289, %v9496
  %v9563 = vsub.f32 %v9292, %v9496
  %v9564 = vadd.f32 %v9499, 1e-05
  %v9565 = vrsqrt.pop %v9564
  %v9566 = vmul.f32 %v9565, %v9564
  %v9567 = vmul.f32 %v9566, %v9565
  %v9568 = vmul.f32 0.5, %v9567
  %v9569 = vsub.f32 1.5, %v9568
  %v9570 = vmul.f32 %v9565, %v9569
  %vm9571 = vweird.f32 %v9564
  %vm9572 = vweird.f32 %v9565
  %vm9573 = vmor %vm9571, %vm9572
  %v9574 = vsel %vm9573, %v9565, %v9570
  %v9575 = vmul.f32 %v9500, %v9574
  %v9576 = vmul.f32 %v9501, %v9574
  %v9577 = vmul.f32 %v9502, %v9574
  %v9578 = vmul.f32 %v9503, %v9574
  %v9579 = vmul.f32 %v9504, %v9574
  %v9580 = vmul.f32 %v9505, %v9574
  %v9581 = vmul.f32 %v9506, %v9574
  %v9582 = vmul.f32 %v9507, %v9574
  %v9583 = vmul.f32 %v9508, %v9574
  %v9584 = vmul.f32 %v9509, %v9574
  %v9585 = vmul.f32 %v9510, %v9574
  %v9586 = vmul.f32 %v9511, %v9574
  %v9587 = vmul.f32 %v9512, %v9574
  %v9588 = vmul.f32 %v9513, %v9574
  %v9589 = vmul.f32 %v9514, %v9574
  %v9590 = vmul.f32 %v9515, %v9574
  %v9591 = vmul.f32 %v9516, %v9574
  %v9592 = vmul.f32 %v9517, %v9574
  %v9593 = vmul.f32 %v9518, %v9574
  %v9594 = vmul.f32 %v9519, %v9574
  %v9595 = vmul.f32 %v9520, %v9574
  %v9596 = vmul.f32 %v9521, %v9574
  %v9597 = vmul.f32 %v9522, %v9574
  %v9598 = vmul.f32 %v9523, %v9574
  %v9599 = vmul.f32 %v9524, %v9574
  %v9600 = vmul.f32 %v9525, %v9574
  %v9601 = vmul.f32 %v9526, %v9574
  %v9602 = vmul.f32 %v9527, %v9574
  %v9603 = vmul.f32 %v9528, %v9574
  %v9604 = vmul.f32 %v9529, %v9574
  %v9605 = vmul.f32 %v9530, %v9574
  %v9606 = vmul.f32 %v9531, %v9574
  %v9607 = vmul.f32 %v9532, %v9574
  %v9608 = vmul.f32 %v9533, %v9574
  %v9609 = vmul.f32 %v9534, %v9574
  %v9610 = vmul.f32 %v9535, %v9574
  %v9611 = vmul.f32 %v9536, %v9574
  %v9612 = vmul.f32 %v9537, %v9574
  %v9613 = vmul.f32 %v9538, %v9574
  %v9614 = vmul.f32 %v9539, %v9574
  %v9615 = vmul.f32 %v9540, %v9574
  %v9616 = vmul.f32 %v9541, %v9574
  %v9617 = vmul.f32 %v9542, %v9574
  %v9618 = vmul.f32 %v9543, %v9574
  %v9619 = vmul.f32 %v9544, %v9574
  %v9620 = vmul.f32 %v9545, %v9574
  %v9621 = vmul.f32 %v9546, %v9574
  %v9622 = vmul.f32 %v9547, %v9574
  %v9623 = vmul.f32 %v9548, %v9574
  %v9624 = vmul.f32 %v9549, %v9574
  %v9625 = vmul.f32 %v9550, %v9574
  %v9626 = vmul.f32 %v9551, %v9574
  %v9627 = vmul.f32 %v9552, %v9574
  %v9628 = vmul.f32 %v9553, %v9574
  %v9629 = vmul.f32 %v9554, %v9574
  %v9630 = vmul.f32 %v9555, %v9574
  %v9631 = vmul.f32 %v9556, %v9574
  %v9632 = vmul.f32 %v9557, %v9574
  %v9633 = vmul.f32 %v9558, %v9574
  %v9634 = vmul.f32 %v9559, %v9574
  %v9635 = vmul.f32 %v9560, %v9574
  %v9636 = vmul.f32 %v9561, %v9574
  %v9637 = vmul.f32 %v9562, %v9574
  %v9638 = vmul.f32 %v9563, %v9574
  %v9639 = vld [vmem:[%s8] sm:$0x1]
  %v9641 = vperm.slane %v9639, 0
  %v9643 = vmul.f32 %v9575, %v9641
  %v9644 = vmul.f32 %v9576, %v9641
  %v9645 = vmul.f32 %v9577, %v9641
  %v9646 = vmul.f32 %v9578, %v9641
  %v9647 = vmul.f32 %v9579, %v9641
  %v9648 = vmul.f32 %v9580, %v9641
  %v9649 = vmul.f32 %v9581, %v9641
  %v9650 = vmul.f32 %v9582, %v9641
  %v9651 = vmul.f32 %v9583, %v9641
  %v9652 = vmul.f32 %v9584, %v9641
  %v9653 = vmul.f32 %v9585, %v9641
  %v9654 = vmul.f32 %v9586, %v9641
  %v9655 = vmul.f32 %v9587, %v9641
  %v9656 = vmul.f32 %v9588, %v9641
  %v9657 = vmul.f32 %v9589, %v9641
  %v9658 = vmul.f32 %v9590, %v9641
  %v9659 = vmul.f32 %v9591, %v9641
  %v9660 = vmul.f32 %v9592, %v9641
  %v9661 = vmul.f32 %v9593, %v9641
  %v9662 = vmul.f32 %v9594, %v9641
  %v9663 = vmul.f32 %v9595, %v9641
  %v9664 = vmul.f32 %v9596, %v9641
  %v9665 = vmul.f32 %v9597, %v9641
  %v9666 = vmul.f32 %v9598, %v9641
  %v9667 = vmul.f32 %v9599, %v9641
  %v9668 = vmul.f32 %v9600, %v9641
  %v9669 = vmul.f32 %v9601, %v9641
  %v9670 = vmul.f32 %v9602, %v9641
  %v9671 = vmul.f32 %v9603, %v9641
  %v9672 = vmul.f32 %v9604, %v9641
  %v9673 = vmul.f32 %v9605, %v9641
  %v9674 = vmul.f32 %v9606, %v9641
  %v9675 = vmul.f32 %v9607, %v9641
  %v9676 = vmul.f32 %v9608, %v9641
  %v9677 = vmul.f32 %v9609, %v9641
  %v9678 = vmul.f32 %v9610, %v9641
  %v9679 = vmul.f32 %v9611, %v9641
  %v9680 = vmul.f32 %v9612, %v9641
  %v9681 = vmul.f32 %v9613, %v9641
  %v9682 = vmul.f32 %v9614, %v9641
  %v9683 = vmul.f32 %v9615, %v9641
  %v9684 = vmul.f32 %v9616, %v9641
  %v9685 = vmul.f32 %v9617, %v9641
  %v9686 = vmul.f32 %v9618, %v9641
  %v9687 = vmul.f32 %v9619, %v9641
  %v9688 = vmul.f32 %v9620, %v9641
  %v9689 = vmul.f32 %v9621, %v9641
  %v9690 = vmul.f32 %v9622, %v9641
  %v9691 = vmul.f32 %v9623, %v9641
  %v9692 = vmul.f32 %v9624, %v9641
  %v9693 = vmul.f32 %v9625, %v9641
  %v9694 = vmul.f32 %v9626, %v9641
  %v9695 = vmul.f32 %v9627, %v9641
  %v9696 = vmul.f32 %v9628, %v9641
  %v9697 = vmul.f32 %v9629, %v9641
  %v9698 = vmul.f32 %v9630, %v9641
  %v9699 = vmul.f32 %v9631, %v9641
  %v9700 = vmul.f32 %v9632, %v9641
  %v9701 = vmul.f32 %v9633, %v9641
  %v9702 = vmul.f32 %v9634, %v9641
  %v9703 = vmul.f32 %v9635, %v9641
  %v9704 = vmul.f32 %v9636, %v9641
  %v9705 = vmul.f32 %v9637, %v9641
  %v9706 = vmul.f32 %v9638, %v9641
  %v9707 = vld [vmem:[%s9] sm:$0x1]
  %v9709 = vperm.slane %v9707, 0
  %v9711 = vadd.f32 %v9643, %v9709
  %v9712 = vadd.f32 %v9644, %v9709
  %v9713 = vadd.f32 %v9645, %v9709
  %v9714 = vadd.f32 %v9646, %v9709
  %v9715 = vadd.f32 %v9647, %v9709
  %v9716 = vadd.f32 %v9648, %v9709
  %v9717 = vadd.f32 %v9649, %v9709
  %v9718 = vadd.f32 %v9650, %v9709
  %v9719 = vadd.f32 %v9651, %v9709
  %v9720 = vadd.f32 %v9652, %v9709
  %v9721 = vadd.f32 %v9653, %v9709
  %v9722 = vadd.f32 %v9654, %v9709
  %v9723 = vadd.f32 %v9655, %v9709
  %v9724 = vadd.f32 %v9656, %v9709
  %v9725 = vadd.f32 %v9657, %v9709
  %v9726 = vadd.f32 %v9658, %v9709
  %v9727 = vadd.f32 %v9659, %v9709
  %v9728 = vadd.f32 %v9660, %v9709
  %v9729 = vadd.f32 %v9661, %v9709
  %v9730 = vadd.f32 %v9662, %v9709
  %v9731 = vadd.f32 %v9663, %v9709
  %v9732 = vadd.f32 %v9664, %v9709
  %v9733 = vadd.f32 %v9665, %v9709
  %v9734 = vadd.f32 %v9666, %v9709
  %v9735 = vadd.f32 %v9667, %v9709
  %v9736 = vadd.f32 %v9668, %v9709
  %v9737 = vadd.f32 %v9669, %v9709
  %v9738 = vadd.f32 %v9670, %v9709
  %v9739 = vadd.f32 %v9671, %v9709
  %v9740 = vadd.f32 %v9672, %v9709
  %v9741 = vadd.f32 %v9673, %v9709
  %v9742 = vadd.f32 %v9674, %v9709
  %v9743 = vadd.f32 %v9675, %v9709
  %v9744 = vadd.f32 %v9676, %v9709
  %v9745 = vadd.f32 %v9677, %v9709
  %v9746 = vadd.f32 %v9678, %v9709
  %v9747 = vadd.f32 %v9679, %v9709
  %v9748 = vadd.f32 %v9680, %v9709
  %v9749 = vadd.f32 %v9681, %v9709
  %v9750 = vadd.f32 %v9682, %v9709
  %v9751 = vadd.f32 %v9683, %v9709
  %v9752 = vadd.f32 %v9684, %v9709
  %v9753 = vadd.f32 %v9685, %v9709
  %v9754 = vadd.f32 %v9686, %v9709
  %v9755 = vadd.f32 %v9687, %v9709
  %v9756 = vadd.f32 %v9688, %v9709
  %v9757 = vadd.f32 %v9689, %v9709
  %v9758 = vadd.f32 %v9690, %v9709
  %v9759 = vadd.f32 %v9691, %v9709
  %v9760 = vadd.f32 %v9692, %v9709
  %v9761 = vadd.f32 %v9693, %v9709
  %v9762 = vadd.f32 %v9694, %v9709
  %v9763 = vadd.f32 %v9695, %v9709
  %v9764 = vadd.f32 %v9696, %v9709
  %v9765 = vadd.f32 %v9697, %v9709
  %v9766 = vadd.f32 %v9698, %v9709
  %v9767 = vadd.f32 %v9699, %v9709
  %v9768 = vadd.f32 %v9700, %v9709
  %v9769 = vadd.f32 %v9701, %v9709
  %v9770 = vadd.f32 %v9702, %v9709
  %v9771 = vadd.f32 %v9703, %v9709
  %v9772 = vadd.f32 %v9704, %v9709
  %v9773 = vadd.f32 %v9705, %v9709
  %v9774 = vadd.f32 %v9706, %v9709
  %v9775 = vmax.f32 %v9711, 0.0
  %v9776 = vmax.f32 %v9712, 0.0
  %v9777 = vmax.f32 %v9713, 0.0
  %v9778 = vmax.f32 %v9714, 0.0
  %v9779 = vmax.f32 %v9715, 0.0
  %v9780 = vmax.f32 %v9716, 0.0
  %v9781 = vmax.f32 %v9717, 0.0
  %v9782 = vmax.f32 %v9718, 0.0
  %v9783 = vmax.f32 %v9719, 0.0
  %v9784 = vmax.f32 %v9720, 0.0
  %v9785 = vmax.f32 %v9721, 0.0
  %v9786 = vmax.f32 %v9722, 0.0
  %v9787 = vmax.f32 %v9723, 0.0
  %v9788 = vmax.f32 %v9724, 0.0
  %v9789 = vmax.f32 %v9725, 0.0
  %v9790 = vmax.f32 %v9726, 0.0
  %v9791 = vmax.f32 %v9727, 0.0
  %v9792 = vmax.f32 %v9728, 0.0
  %v9793 = vmax.f32 %v9729, 0.0
  %v9794 = vmax.f32 %v9730, 0.0
  %v9795 = vmax.f32 %v9731, 0.0
  %v9796 = vmax.f32 %v9732, 0.0
  %v9797 = vmax.f32 %v9733, 0.0
  %v9798 = vmax.f32 %v9734, 0.0
  %v9799 = vmax.f32 %v9735, 0.0
  %v9800 = vmax.f32 %v9736, 0.0
  %v9801 = vmax.f32 %v9737, 0.0
  %v9802 = vmax.f32 %v9738, 0.0
  %v9803 = vmax.f32 %v9739, 0.0
  %v9804 = vmax.f32 %v9740, 0.0
  %v9805 = vmax.f32 %v9741, 0.0
  %v9806 = vmax.f32 %v9742, 0.0
  %v9807 = vmax.f32 %v9743, 0.0
  %v9808 = vmax.f32 %v9744, 0.0
  %v9809 = vmax.f32 %v9745, 0.0
  %v9810 = vmax.f32 %v9746, 0.0
  %v9811 = vmax.f32 %v9747, 0.0
  %v9812 = vmax.f32 %v9748, 0.0
  %v9813 = vmax.f32 %v9749, 0.0
  %v9814 = vmax.f32 %v9750, 0.0
  %v9815 = vmax.f32 %v9751, 0.0
  %v9816 = vmax.f32 %v9752, 0.0
  %v9817 = vmax.f32 %v9753, 0.0
  %v9818 = vmax.f32 %v9754, 0.0
  %v9819 = vmax.f32 %v9755, 0.0
  %v9820 = vmax.f32 %v9756, 0.0
  %v9821 = vmax.f32 %v9757, 0.0
  %v9822 = vmax.f32 %v9758, 0.0
  %v9823 = vmax.f32 %v9759, 0.0
  %v9824 = vmax.f32 %v9760, 0.0
  %v9825 = vmax.f32 %v9761, 0.0
  %v9826 = vmax.f32 %v9762, 0.0
  %v9827 = vmax.f32 %v9763, 0.0
  %v9828 = vmax.f32 %v9764, 0.0
  %v9829 = vmax.f32 %v9765, 0.0
  %v9830 = vmax.f32 %v9766, 0.0
  %v9831 = vmax.f32 %v9767, 0.0
  %v9832 = vmax.f32 %v9768, 0.0
  %v9833 = vmax.f32 %v9769, 0.0
  %v9834 = vmax.f32 %v9770, 0.0
  %v9835 = vmax.f32 %v9771, 0.0
  %v9836 = vmax.f32 %v9772, 0.0
  %v9837 = vmax.f32 %v9773, 0.0
  %v9838 = vmax.f32 %v9774, 0.0
  %v9839 = vld [vmem:[%s0] sm:$0xff]
  %v9840 = vld [vmem:[%s0 + $0x8] sm:$0xff]
  %v9841 = vld [vmem:[%s0 + $0x10] sm:$0xff]
  %v9842 = vld [vmem:[%s0 + $0x18] sm:$0xff]
  %v9843 = vld [vmem:[%s0 + $0x20] sm:$0xff]
  %v9844 = vld [vmem:[%s0 + $0x28] sm:$0xff]
  %v9845 = vld [vmem:[%s0 + $0x30] sm:$0xff]
  %v9846 = vld [vmem:[%s0 + $0x38] sm:$0xff]
  %v9847 = vld [vmem:[%s0 + $0x40] sm:$0xff]
  %v9848 = vld [vmem:[%s0 + $0x48] sm:$0xff]
  %v9849 = vld [vmem:[%s0 + $0x50] sm:$0xff]
  %v9850 = vld [vmem:[%s0 + $0x58] sm:$0xff]
  %v9851 = vld [vmem:[%s0 + $0x60] sm:$0xff]
  %v9852 = vld [vmem:[%s0 + $0x68] sm:$0xff]
  %v9853 = vld [vmem:[%s0 + $0x70] sm:$0xff]
  %v9854 = vld [vmem:[%s0 + $0x78] sm:$0xff]
  %v9855 = vld [vmem:[%s0 + $0x80] sm:$0xff]
  %v9856 = vld [vmem:[%s0 + $0x88] sm:$0xff]
  %v9857 = vld [vmem:[%s0 + $0x90] sm:$0xff]
  %v9858 = vld [vmem:[%s0 + $0x98] sm:$0xff]
  %v9859 = vld [vmem:[%s0 + $0xa0] sm:$0xff]
  %v9860 = vld [vmem:[%s0 + $0xa8] sm:$0xff]
  %v9861 = vld [vmem:[%s0 + $0xb0] sm:$0xff]
  %v9862 = vld [vmem:[%s0 + $0xb8] sm:$0xff]
  %v9863 = vld [vmem:[%s0 + $0xc0] sm:$0xff]
  %v9864 = vld [vmem:[%s0 + $0xc8] sm:$0xff]
  %v9865 = vld [vmem:[%s0 + $0xd0] sm:$0xff]
  %v9866 = vld [vmem:[%s0 + $0xd8] sm:$0xff]
  %v9867 = vld [vmem:[%s0 + $0xe0] sm:$0xff]
  %v9868 = vld [vmem:[%s0 + $0xe8] sm:$0xff]
  %v9869 = vld [vmem:[%s0 + $0xf0] sm:$0xff]
  %v9870 = vld [vmem:[%s0 + $0xf8] sm:$0xff]
  %v9871 = vld [vmem:[%s0 + $0x100] sm:$0xff]
  %v9872 = vld [vmem:[%s0 + $0x108] sm:$0xff]
  %v9873 = vld [vmem:[%s0 + $0x110] sm:$0xff]
  %v9874 = vld [vmem:[%s0 + $0x118] sm:$0xff]
  %v9875 = vld [vmem:[%s0 + $0x120] sm:$0xff]
  %v9876 = vld [vmem:[%s0 + $0x128] sm:$0xff]
  %v9877 = vld [vmem:[%s0 + $0x130] sm:$0xff]
  %v9878 = vld [vmem:[%s0 + $0x138] sm:$0xff]
  %v9879 = vld [vmem:[%s0 + $0x140] sm:$0xff]
  %v9880 = vld [vmem:[%s0 + $0x148] sm:$0xff]
  %v9881 = vld [vmem:[%s0 + $0x150] sm:$0xff]
  %v9882 = vld [vmem:[%s0 + $0x158] sm:$0xff]
  %v9883 = vld [vmem:[%s0 + $0x160] sm:$0xff]
  %v9884 = vld [vmem:[%s0 + $0x168] sm:$0xff]
  %v9885 = vld [vmem:[%s0 + $0x170] sm:$0xff]
  %v9886 = vld [vmem:[%s0 + $0x178] sm:$0xff]
  %v9887 = vld [vmem:[%s0 + $0x180] sm:$0xff]
  %v9888 = vld [vmem:[%s0 + $0x188] sm:$0xff]
  %v9889 = vld [vmem:[%s0 + $0x190] sm:$0xff]
  %v9890 = vld [vmem:[%s0 + $0x198] sm:$0xff]
  %v9891 = vld [vmem:[%s0 + $0x1a0] sm:$0xff]
  %v9892 = vld [vmem:[%s0 + $0x1a8] sm:$0xff]
  %v9893 = vld [vmem:[%s0 + $0x1b0] sm:$0xff]
  %v9894 = vld [vmem:[%s0 + $0x1b8] sm:$0xff]
  %v9895 = vld [vmem:[%s0 + $0x1c0] sm:$0xff]
  %v9896 = vld [vmem:[%s0 + $0x1c8] sm:$0xff]
  %v9897 = vld [vmem:[%s0 + $0x1d0] sm:$0xff]
  %v9898 = vld [vmem:[%s0 + $0x1d8] sm:$0xff]
  %v9899 = vld [vmem:[%s0 + $0x1e0] sm:$0xff]
  %v9900 = vld [vmem:[%s0 + $0x1e8] sm:$0xff]
  %v9901 = vld [vmem:[%s0 + $0x1f0] sm:$0xff]
  %v9902 = vld [vmem:[%s0 + $0x1f8] sm:$0xff]
  %v9903 = vadd.f32 %v9775, %v9839
  %v9904 = vadd.f32 %v9776, %v9840
  %v9905 = vadd.f32 %v9777, %v9841
  %v9906 = vadd.f32 %v9778, %v9842
  %v9907 = vadd.f32 %v9779, %v9843
  %v9908 = vadd.f32 %v9780, %v9844
  %v9909 = vadd.f32 %v9781, %v9845
  %v9910 = vadd.f32 %v9782, %v9846
  %v9911 = vadd.f32 %v9783, %v9847
  %v9912 = vadd.f32 %v9784, %v9848
  %v9913 = vadd.f32 %v9785, %v9849
  %v9914 = vadd.f32 %v9786, %v9850
  %v9915 = vadd.f32 %v9787, %v9851
  %v9916 = vadd.f32 %v9788, %v9852
  %v9917 = vadd.f32 %v9789, %v9853
  %v9918 = vadd.f32 %v9790, %v9854
  %v9919 = vadd.f32 %v9791, %v9855
  %v9920 = vadd.f32 %v9792, %v9856
  %v9921 = vadd.f32 %v9793, %v9857
  %v9922 = vadd.f32 %v9794, %v9858
  %v9923 = vadd.f32 %v9795, %v9859
  %v9924 = vadd.f32 %v9796, %v9860
  %v9925 = vadd.f32 %v9797, %v9861
  %v9926 = vadd.f32 %v9798, %v9862
  %v9927 = vadd.f32 %v9799, %v9863
  %v9928 = vadd.f32 %v9800, %v9864
  %v9929 = vadd.f32 %v9801, %v9865
  %v9930 = vadd.f32 %v9802, %v9866
  %v9931 = vadd.f32 %v9803, %v9867
  %v9932 = vadd.f32 %v9804, %v9868
  %v9933 = vadd.f32 %v9805, %v9869
  %v9934 = vadd.f32 %v9806, %v9870
  %v9935 = vadd.f32 %v9807, %v9871
  %v9936 = vadd.f32 %v9808, %v9872
  %v9937 = vadd.f32 %v9809, %v9873
  %v9938 = vadd.f32 %v9810, %v9874
  %v9939 = vadd.f32 %v9811, %v9875
  %v9940 = vadd.f32 %v9812, %v9876
  %v9941 = vadd.f32 %v9813, %v9877
  %v9942 = vadd.f32 %v9814, %v9878
  %v9943 = vadd.f32 %v9815, %v9879
  %v9944 = vadd.f32 %v9816, %v9880
  %v9945 = vadd.f32 %v9817, %v9881
  %v9946 = vadd.f32 %v9818, %v9882
  %v9947 = vadd.f32 %v9819, %v9883
  %v9948 = vadd.f32 %v9820, %v9884
  %v9949 = vadd.f32 %v9821, %v9885
  %v9950 = vadd.f32 %v9822, %v9886
  %v9951 = vadd.f32 %v9823, %v9887
  %v9952 = vadd.f32 %v9824, %v9888
  %v9953 = vadd.f32 %v9825, %v9889
  %v9954 = vadd.f32 %v9826, %v9890
  %v9955 = vadd.f32 %v9827, %v9891
  %v9956 = vadd.f32 %v9828, %v9892
  %v9957 = vadd.f32 %v9829, %v9893
  %v9958 = vadd.f32 %v9830, %v9894
  %v9959 = vadd.f32 %v9831, %v9895
  %v9960 = vadd.f32 %v9832, %v9896
  %v9961 = vadd.f32 %v9833, %v9897
  %v9962 = vadd.f32 %v9834, %v9898
  %v9963 = vadd.f32 %v9835, %v9899
  %v9964 = vadd.f32 %v9836, %v9900
  %v9965 = vadd.f32 %v9837, %v9901
  %v9966 = vadd.f32 %v9838, %v9902
  %9967 = vst [vmem:[%s10] sm:$0xff] %v9903
  %9968 = vst [vmem:[%s10 + $0x8] sm:$0xff] %v9904
  %9969 = vst [vmem:[%s10 + $0x10] sm:$0xff] %v9905
  %9970 = vst [vmem:[%s10 + $0x18] sm:$0xff] %v9906
  %9971 = vst [vmem:[%s10 + $0x20] sm:$0xff] %v9907
  %9972 = vst [vmem:[%s10 + $0x28] sm:$0xff] %v9908
  %9973 = vst [vmem:[%s10 + $0x30] sm:$0xff] %v9909
  %9974 = vst [vmem:[%s10 + $0x38] sm:$0xff] %v9910
  %9975 = vst [vmem:[%s10 + $0x40] sm:$0xff] %v9911
  %9976 = vst [vmem:[%s10 + $0x48] sm:$0xff] %v9912
  %9977 = vst [vmem:[%s10 + $0x50] sm:$0xff] %v9913
  %9978 = vst [vmem:[%s10 + $0x58] sm:$0xff] %v9914
  %9979 = vst [vmem:[%s10 + $0x60] sm:$0xff] %v9915
  %9980 = vst [vmem:[%s10 + $0x68] sm:$0xff] %v9916
  %9981 = vst [vmem:[%s10 + $0x70] sm:$0xff] %v9917
  %9982 = vst [vmem:[%s10 + $0x78] sm:$0xff] %v9918
  %9983 = vst [vmem:[%s10 + $0x80] sm:$0xff] %v9919
  %9984 = vst [vmem:[%s10 + $0x88] sm:$0xff] %v9920
  %9985 = vst [vmem:[%s10 + $0x90] sm:$0xff] %v9921
  %9986 = vst [vmem:[%s10 + $0x98] sm:$0xff] %v9922
  %9987 = vst [vmem:[%s10 + $0xa0] sm:$0xff] %v9923
  %9988 = vst [vmem:[%s10 + $0xa8] sm:$0xff] %v9924
  %9989 = vst [vmem:[%s10 + $0xb0] sm:$0xff] %v9925
  %9990 = vst [vmem:[%s10 + $0xb8] sm:$0xff] %v9926
  %9991 = vst [vmem:[%s10 + $0xc0] sm:$0xff] %v9927
  %9992 = vst [vmem:[%s10 + $0xc8] sm:$0xff] %v9928
  %9993 = vst [vmem:[%s10 + $0xd0] sm:$0xff] %v9929
  %9994 = vst [vmem:[%s10 + $0xd8] sm:$0xff] %v9930
  %9995 = vst [vmem:[%s10 + $0xe0] sm:$0xff] %v9931
  %9996 = vst [vmem:[%s10 + $0xe8] sm:$0xff] %v9932
  %9997 = vst [vmem:[%s10 + $0xf0] sm:$0xff] %v9933
  %9998 = vst [vmem:[%s10 + $0xf8] sm:$0xff] %v9934
  %9999 = vst [vmem:[%s10 + $0x100] sm:$0xff] %v9935
  %10000 = vst [vmem:[%s10 + $0x108] sm:$0xff] %v9936
  %10001 = vst [vmem:[%s10 + $0x110] sm:$0xff] %v9937
  %10002 = vst [vmem:[%s10 + $0x118] sm:$0xff] %v9938
  %10003 = vst [vmem:[%s10 + $0x120] sm:$0xff] %v9939
  %10004 = vst [vmem:[%s10 + $0x128] sm:$0xff] %v9940
  %10005 = vst [vmem:[%s10 + $0x130] sm:$0xff] %v9941
  %10006 = vst [vmem:[%s10 + $0x138] sm:$0xff] %v9942
  %10007 = vst [vmem:[%s10 + $0x140] sm:$0xff] %v9943
  %10008 = vst [vmem:[%s10 + $0x148] sm:$0xff] %v9944
  %10009 = vst [vmem:[%s10 + $0x150] sm:$0xff] %v9945
  %10010 = vst [vmem:[%s10 + $0x158] sm:$0xff] %v9946
  %10011 = vst [vmem:[%s10 + $0x160] sm:$0xff] %v9947
  %10012 = vst [vmem:[%s10 + $0x168] sm:$0xff] %v9948
  %10013 = vst [vmem:[%s10 + $0x170] sm:$0xff] %v9949
  %10014 = vst [vmem:[%s10 + $0x178] sm:$0xff] %v9950
  %10015 = vst [vmem:[%s10 + $0x180] sm:$0xff] %v9951
  %10016 = vst [vmem:[%s10 + $0x188] sm:$0xff] %v9952
  %10017 = vst [vmem:[%s10 + $0x190] sm:$0xff] %v9953
  %10018 = vst [vmem:[%s10 + $0x198] sm:$0xff] %v9954
  %10019 = vst [vmem:[%s10 + $0x1a0] sm:$0xff] %v9955
  %10020 = vst [vmem:[%s10 + $0x1a8] sm:$0xff] %v9956
  %10021 = vst [vmem:[%s10 + $0x1b0] sm:$0xff] %v9957
  %10022 = vst [vmem:[%s10 + $0x1b8] sm:$0xff] %v9958
  %10023 = vst [vmem:[%s10 + $0x1c0] sm:$0xff] %v9959
  %10024 = vst [vmem:[%s10 + $0x1c8] sm:$0xff] %v9960
  %10025 = vst [vmem:[%s10 + $0x1d0] sm:$0xff] %v9961
  %10026 = vst [vmem:[%s10 + $0x1d8] sm:$0xff] %v9962
  %10027 = vst [vmem:[%s10 + $0x1e0] sm:$0xff] %v9963
  %10028 = vst [vmem:[%s10 + $0x1e8] sm:$0xff] %v9964
  %10029 = vst [vmem:[%s10 + $0x1f0] sm:$0xff] %v9965
  %10030 = vst [vmem:[%s10 + $0x1f8] sm:$0xff] %v9966
  // Predicated region
  $region42: #{resblock_forward.1} parent=0 // pred_check
    _
  $region43: #{resblock_forward.1} parent=0 // pred_check_branch
    %10032 = sbr.rel (0) target = $region45
  $region44: #{resblock_forward.1} parent=0 // pred_region
    _
  $region45: #{resblock_forward.1} parent=0 // pred_fallthru
    _
  // Predicated region
  $region46: #{resblock_forward.1} parent=0 // pred_check
    _
  $region47: #{resblock_forward.1} parent=0 // pred_check_branch
    %10034 = sbr.rel (0) target = $region49
  $region48: #{resblock_forward.1} parent=0 // pred_region
    _
  $region49: #{resblock_forward.1} parent=0 // pred_fallthru
    _

</llo_original>
